<compile_context>
chip_gen: v7x
topology: tpu7x:2x2x1
jax: 0.10.0
libtpu: 0.0.40
codegen_flags: <defaults>
</compile_context>

<pallas_src>
import functools

import jax
import jax.numpy as jnp
from jax.experimental import pallas as pl
from jax.experimental.pallas import tpu as pltpu

EPS = 1e-5

_PARALLEL_1D = pltpu.CompilerParams(dimension_semantics=("parallel",))


# ----------------------------------------------------------------------------
# in-kernel helpers (all f32)
# ----------------------------------------------------------------------------
def _erf_approx(x):
    # TODO(synk): exact erf has no guaranteed Mosaic lowering; A&S 7.1.26
    # polynomial (max abs err ~1.5e-7, i.e. ~f32 rounding) built from exp/mul.
    a1, a2, a3, a4, a5 = 0.254829592, -0.284496736, 1.421413741, -1.453152027, 1.061405429
    p = 0.3275911
    s = jnp.where(x >= 0.0, 1.0, -1.0)
    ax = jnp.abs(x)
    t = 1.0 / (1.0 + p * ax)
    poly = ((((a5 * t + a4) * t + a3) * t + a2) * t + a1) * t
    return s * (1.0 - poly * jnp.exp(-ax * ax))


def _gelu_exact(x):
    # matches torch nn.GELU() default (erf-based)
    return 0.5 * x * (1.0 + _erf_approx(x * 0.7071067811865476))


def _channel_ln(x, g, b, eps):
    # PyTorch custom LayerNorm: biased var / mean over the channel dim
    mean = jnp.mean(x, axis=-1, keepdims=True)
    var = jnp.mean((x - mean) ** 2, axis=-1, keepdims=True)
    return (x - mean) / jnp.sqrt(var + eps) * g + b


# ----------------------------------------------------------------------------
# Pallas kernels
# ----------------------------------------------------------------------------
def _ln_qkv_kernel(x_ref, g_ref, b_ref, w_ref, o_ref, *, eps):
    # (TP, Cin) f32 -> channel LayerNorm -> bf16 matmul -> (TP, Cout) bf16
    xn = _channel_ln(x_ref[...], g_ref[...], b_ref[...], eps)
    y = jnp.dot(xn.astype(jnp.bfloat16), w_ref[...],
                preferred_element_type=jnp.float32)
    o_ref[...] = y.astype(o_ref.dtype)


def _ff_res_kernel(x_ref, g_ref, b_ref, w1_ref, b1_ref, w2_ref, b2_ref, o_ref, *, eps):
    # LayerNorm -> conv1x1 -> GELU -> conv1x1 -> + residual (x), all in one pass
    x = x_ref[...]
    xn = _channel_ln(x, g_ref[...], b_ref[...], eps)
    h = jnp.dot(xn.astype(jnp.bfloat16), w1_ref[...],
                preferred_element_type=jnp.float32) + b1_ref[...]
    h = _gelu_exact(h)
    y = jnp.dot(h.astype(jnp.bfloat16), w2_ref[...],
                preferred_element_type=jnp.float32) + b2_ref[...]
    o_ref[...] = (y + x).astype(o_ref.dtype)


def _attn_out_kernel(qkv_ref, bias_ref, wo_ref, bo_ref, o_ref, *, scale, heads):
    # qkv_ref : (GW, 3*heads, N, dh) bf16  -- torch-"scrambled" per-window layout
    # bias_ref: (N, N) f32
    # wo_ref  : (heads, dh, dim) bf16      -- to_out weight, head-major
    # bo_ref  : (1, dim) f32               -- to_out bias
    # o_ref   : (GW, N, dim)               -- lane-dense (width = dim) output
    GW, _, N, dh = qkv_ref.shape
    dim = wo_ref.shape[-1]
    qkv = qkv_ref[...]
    q = qkv[:, :heads].reshape(GW * heads, N, dh)
    k = qkv[:, heads:2 * heads].reshape(GW * heads, N, dh)
    v = qkv[:, 2 * heads:].reshape(GW * heads, N, dh)

    sim = jax.lax.dot_general(q, k, (((2,), (2,)), ((0,), (0,))),
                              preferred_element_type=jnp.float32)
    sim = sim * scale + bias_ref[...]
    sim = sim - jnp.max(sim, axis=-1, keepdims=True)
    p = jnp.exp(sim)
    p = p * pl.reciprocal(jnp.sum(p, axis=-1, keepdims=True), approx=True)

    out_h = jax.lax.dot_general(p.astype(jnp.bfloat16), v,
                                (((2,), (1,)), ((0,), (0,))),
                                preferred_element_type=jnp.float32)
    out_h = out_h.reshape(GW, heads, N, dh)

    # fused to_out 1x1 conv: accumulate per-head contributions into (GW*N, dim)
    acc = jnp.dot(out_h[:, 0].reshape(GW * N, dh).astype(jnp.bfloat16), wo_ref[0],
                  preferred_element_type=jnp.float32)
    for hd in range(1, heads):
        acc = acc + jnp.dot(out_h[:, hd].reshape(GW * N, dh).astype(jnp.bfloat16),
                            wo_ref[hd], preferred_element_type=jnp.float32)
    acc = acc + bo_ref[...]
    o_ref[...] = acc.reshape(GW, N, dim).astype(o_ref.dtype)


# ----------------------------------------------------------------------------
# tiling helpers
# ----------------------------------------------------------------------------
def _row_tile(P, row_bytes, fixed_bytes=0, budget=12 * 1024 * 1024, max_tp=2048):
    # largest multiple-of-8 divisor of P whose (double-buffered) working set
    # fits a conservative VMEM budget (safe under default scoped limits on
    # v5e / v6e / v7x); prefer >=2 grid steps so megacore / 2-TC chips split it.
    avail = max(budget - fixed_bytes, 1 * 1024 * 1024)
    cap = int(max(8, min(max_tp, avail // max(row_bytes, 1))))
    cap = min(cap, P)
    tp = None
    for t in range(cap, 7, -1):
        if P % t == 0 and t % 8 == 0:
            tp = t
            break
    if tp is None:
        tp = P
    if tp == P and P >= 16:
        for t in range(min(cap, P // 2), 7, -1):
            if P % t == 0 and t % 8 == 0:
                tp = t
                break
    return tp


def _choose_window_group(BW, N, heads, dh, dim, budget=8 * 1024 * 1024, max_gw=64):
    # how many windows (all heads each) to batch per attention grid step
    per_win = (2 * 3 * heads * N * dh) * 2 + (4 * N * dim) * 2 + 4 * heads * N * (N + dh) * 2
    cap = max(1, min(max_gw, budget // max(per_win, 1), BW))
    gw = 1
    for g in range(1, cap + 1):
        if BW % g == 0:
            gw = g
    if BW // gw < 2:            # prefer >=2 grid steps (v7x 2-TC / megacore)
        for g in range(gw - 1, 0, -1):
            if BW % g == 0 and BW // g >= 2:
                gw = g
                break
    return gw


# ----------------------------------------------------------------------------
# pallas_call wrappers
# ----------------------------------------------------------------------------
def ln_qkv(x, g, b, w_bf16):
    P, Cin = x.shape
    Cout = w_bf16.shape[1]
    TP = _row_tile(P, row_bytes=12 * Cin + 8 * Cout, fixed_bytes=4 * Cin * Cout)
    return pl.pallas_call(
        functools.partial(_ln_qkv_kernel, eps=EPS),
        out_shape=jax.ShapeDtypeStruct((P, Cout), jnp.bfloat16),
        grid=(P // TP,),
        in_specs=[
            pl.BlockSpec((TP, Cin), lambda i: (i, 0)),
            pl.BlockSpec((1, Cin), lambda i: (0, 0)),
            pl.BlockSpec((1, Cin), lambda i: (0, 0)),
            pl.BlockSpec((Cin, Cout), lambda i: (0, 0)),
        ],
        out_specs=pl.BlockSpec((TP, Cout), lambda i: (i, 0)),
        compiler_params=_PARALLEL_1D,
    )(x, g, b, w_bf16)


def ff_block(x, g, b, w1_bf16, b1, w2_bf16, b2):
    P, C = x.shape
    Ch = w1_bf16.shape[1]
    TP = _row_tile(P, row_bytes=24 * C + 8 * Ch, fixed_bytes=4 * C * Ch)
    return pl.pallas_call(
        functools.partial(_ff_res_kernel, eps=EPS),
        out_shape=jax.ShapeDtypeStruct((P, C), x.dtype),
        grid=(P // TP,),
        in_specs=[
            pl.BlockSpec((TP, C), lambda i: (i, 0)),
            pl.BlockSpec((1, C), lambda i: (0, 0)),
            pl.BlockSpec((1, C), lambda i: (0, 0)),
            pl.BlockSpec((C, Ch), lambda i: (0, 0)),
            pl.BlockSpec((1, Ch), lambda i: (0, 0)),
            pl.BlockSpec((Ch, C), lambda i: (0, 0)),
            pl.BlockSpec((1, C), lambda i: (0, 0)),
        ],
        out_specs=pl.BlockSpec((TP, C), lambda i: (i, 0)),
        compiler_params=_PARALLEL_1D,
    )(x, g, b, w1_bf16, b1, w2_bf16, b2)


def window_attention_out(qkv_s, bias, wo3_bf16, out_b, scale):
    BW, th, N, dh = qkv_s.shape
    heads = th // 3
    dim = wo3_bf16.shape[-1]
    GW = _choose_window_group(BW, N, heads, dh, dim)
    return pl.pallas_call(
        functools.partial(_attn_out_kernel, scale=scale, heads=heads),
        out_shape=jax.ShapeDtypeStruct((BW, N, dim), jnp.float32),
        grid=(BW // GW,),
        in_specs=[
            pl.BlockSpec((GW, th, N, dh), lambda i: (i, 0, 0, 0)),
            pl.BlockSpec((N, N), lambda i: (0, 0)),
            pl.BlockSpec((heads, dh, dim), lambda i: (0, 0, 0)),
            pl.BlockSpec((1, dim), lambda i: (0, 0)),
        ],
        out_specs=pl.BlockSpec((GW, N, dim), lambda i: (i, 0, 0)),
        compiler_params=_PARALLEL_1D,
    )(qkv_s, bias, wo3_bf16, out_b)


# ----------------------------------------------------------------------------
# plain-JAX glue (DPB bias table, windowing / scrambled reshapes)
# ----------------------------------------------------------------------------
def _ln_last(x, g, b, eps=EPS):
    m = jnp.mean(x, axis=-1, keepdims=True)
    v = jnp.mean((x - m) ** 2, axis=-1, keepdims=True)
    return (x - m) / jnp.sqrt(v + eps) * g + b


def rel_pos_bias(dpb, wsz):
    # TODO(synk): DynamicPositionBias MLP + gather is a tiny (2w+1)^2 table
    # build; kept in plain JAX rather than a Pallas kernel.
    pos = jnp.arange(wsz)
    gy, gx = jnp.meshgrid(pos, pos, indexing="ij")
    grid = jnp.stack([gy, gx]).reshape(2, -1).T                   # (N, 2)
    rel = grid[:, None, :] - grid[None, :, :] + wsz - 1
    idx = (rel * jnp.array([2 * wsz - 1, 1])).sum(-1)             # (N, N)
    pos2 = jnp.arange(-wsz, wsz + 1)
    cy, cx = jnp.meshgrid(pos2, pos2, indexing="ij")
    coords = jnp.stack([cy, cx], axis=-1).reshape(-1, 2).astype(jnp.float32)
    h0 = jnp.maximum(_ln_last(coords @ dpb["w0"] + dpb["b0"], dpb["g0"], dpb["be0"]), 0.0)
    h1 = jnp.maximum(_ln_last(h0 @ dpb["w1"] + dpb["b1"], dpb["g1"], dpb["be1"]), 0.0)
    biases = (h1 @ dpb["w2"] + dpb["b2"]).reshape(-1)             # ((2*wsz+1)^2,)
    return biases[idx]                                            # (N, N)


def attention_forward(x_nhwc, p, wsz, dim_head):
    b, h, w, dim = x_nhwc.shape
    heads = dim // dim_head
    inner = heads * dim_head
    scale = dim_head ** (-0.5)
    N = wsz * wsz
    nwy, nwx = h // wsz, w // wsz
    BW = b * nwy * nwx

    # channel LayerNorm + to_qkv 1x1 conv (per-pixel -> commutes with windowing)
    x_pix = x_nhwc.reshape(b * h * w, dim)
    qkv_pix = ln_qkv(x_pix, p["norm_g"], p["norm_b"], p["qkv_w"].astype(jnp.bfloat16))

    # window partition + channel-major layout; the reshape below reproduces
    # torch's chunk(3, dim=1) + .view(-1, heads, wsz*wsz, dim_head) ordering.
    t = qkv_pix.reshape(b, nwy, wsz, nwx, wsz, 3 * inner)
    t = jnp.transpose(t, (0, 1, 3, 5, 2, 4))          # (b, nwy, nwx, 3*inner, wsz, wsz)
    qkv_s = t.reshape(BW, 3 * heads, N, dim_head)

    bias = rel_pos_bias(p["dpb"], wsz).astype(jnp.float32)
    wo3 = p["out_w"].reshape(heads, dim_head, dim).astype(jnp.bfloat16)

    # attention + fused to_out (bias included), lane-dense (BW, N, dim) output
    out_win = window_attention_out(qkv_s, bias, wo3, p["out_b"], scale)

    # window reverse (residual add is fused with this transpose by XLA)
    o = out_win.reshape(b, nwy, nwx, wsz, wsz, dim)
    o = jnp.transpose(o, (0, 1, 3, 2, 4, 5)).reshape(b, h, w, dim)
    return o


def ff_forward(x_nhwc, p):
    b, h, w, dim = x_nhwc.shape
    x_pix = x_nhwc.reshape(b * h * w, dim)
    y = ff_block(x_pix, p["g"], p["b"], p["w1"].astype(jnp.bfloat16), p["b1"],
                 p["w2"].astype(jnp.bfloat16), p["b2"])     # residual fused inside
    return y.reshape(b, h, w, dim)


def transformer_forward(x_nchw, layers, local_ws, global_ws, dim_head):
    x = jnp.transpose(x_nchw, (0, 2, 3, 1))   # NCHW -> NHWC once
    for lp in layers:
        x = x + attention_forward(x, lp["short_attn"], local_ws, dim_head)
        x = ff_forward(x, lp["short_ff"])     # FF residual fused in the kernel
        x = x + attention_forward(x, lp["long_attn"], global_ws, dim_head)
        x = ff_forward(x, lp["long_ff"])
    return jnp.transpose(x, (0, 3, 1, 2))     # back to NCHW


# ----------------------------------------------------------------------------
# deterministic parameter init (synthetic, shapes per the PyTorch __init__)
# ----------------------------------------------------------------------------
def _dense(key, shape, scale=0.02):
    return scale * jax.random.normal(key, shape, dtype=jnp.float32)


def init_attention_params(key, dim, dim_head):
    heads = dim // dim_head
    inner = heads * dim_head
    d4 = dim // 4
    ks = jax.random.split(key, 6)
    return {
        "norm_g": jnp.ones((1, dim), jnp.float32),
        "norm_b": jnp.zeros((1, dim), jnp.float32),
        "qkv_w": _dense(ks[0], (dim, 3 * inner)),
        "out_w": _dense(ks[1], (inner, dim)),
        "out_b": _dense(ks[2], (1, dim)),
        "dpb": {
            "w0": _dense(ks[3], (2, d4)), "b0": jnp.zeros((d4,), jnp.float32),
            "g0": jnp.ones((d4,), jnp.float32), "be0": jnp.zeros((d4,), jnp.float32),
            "w1": _dense(ks[4], (d4, d4)), "b1": jnp.zeros((d4,), jnp.float32),
            "g1": jnp.ones((d4,), jnp.float32), "be1": jnp.zeros((d4,), jnp.float32),
            "w2": _dense(ks[5], (d4, 1)), "b2": jnp.zeros((1,), jnp.float32),
        },
    }


def init_ff_params(key, dim, mult=4):
    ks = jax.random.split(key, 2)
    return {
        "g": jnp.ones((1, dim), jnp.float32),
        "b": jnp.zeros((1, dim), jnp.float32),
        "w1": _dense(ks[0], (dim, dim * mult)),
        "b1": jnp.zeros((1, dim * mult), jnp.float32),
        "w2": _dense(ks[1], (dim * mult, dim)),
        "b2": jnp.zeros((1, dim), jnp.float32),
    }


def init_transformer_params(key, dim, dim_head, depth):
    layers = []
    keys = jax.random.split(key, depth)
    for d in range(depth):
        k0, k1, k2, k3 = jax.random.split(keys[d], 4)
        layers.append({
            "short_attn": init_attention_params(k0, dim, dim_head),
            "short_ff": init_ff_params(k1, dim),
            "long_attn": init_attention_params(k2, dim, dim_head),
            "long_ff": init_ff_params(k3, dim),
        })
    return layers


# ----------------------------------------------------------------------------
if __name__ == "__main__":
    # small shapes consistent with the module: dim >= dim_head, h,w divisible
    # by both window sizes.
    b, dim, H, W = 2, 64, 8, 8
    dim_head = 32
    local_window_size, global_window_size = 4, 8
    depth = 2

    root = jax.random.PRNGKey(0)
    k_params, k_x = jax.random.split(root)
    params = init_transformer_params(k_params, dim, dim_head, depth)
    x = jax.random.normal(k_x, (b, dim, H, W), dtype=jnp.float32)

    fwd = jax.jit(functools.partial(transformer_forward,
                                    local_ws=local_window_size,
                                    global_ws=global_window_size,
                                    dim_head=dim_head))
    y = fwd(x, params)
    jax.block_until_ready(y)
    assert y.shape == (b, dim, H, W)
    print("KERNEL_OK")
</pallas_src>

<mosaic_0001>
module attributes {stable_mosaic.version = 11 : i64} {
  func.func @_ln_qkv_kernel(%arg0: i32, %arg1: memref<64x64xf32, #tpu.memory_space<vmem>>, %arg2: memref<1x64xf32, #tpu.memory_space<vmem>>, %arg3: memref<1x64xf32, #tpu.memory_space<vmem>>, %arg4: memref<64x192xbf16, #tpu.memory_space<vmem>>, %arg5: memref<64x192xbf16, #tpu.memory_space<vmem>>) attributes {dimension_semantics = [#tpu.dimension_semantics<parallel>], iteration_bounds = array<i64: 2>, scalar_prefetch = 0 : i64, scratch_operands = 0 : i64, tpu.core_type = #tpu.core_type<tc>, window_params = [{transform_indices = @transform_0, window_bounds = array<i64: 64, 64>}, {pipeline_mode = #tpu.pipeline_mode<synchronous>, transform_indices = @transform_1, window_bounds = array<i64: 1, 64>}, {pipeline_mode = #tpu.pipeline_mode<synchronous>, transform_indices = @transform_2, window_bounds = array<i64: 1, 64>}, {pipeline_mode = #tpu.pipeline_mode<synchronous>, transform_indices = @transform_3, window_bounds = array<i64: 64, 192>}, {transform_indices = @transform_4, window_bounds = array<i64: 64, 192>}]} {
    %c0 = arith.constant 0 : index
    %c0_0 = arith.constant 0 : index
    %0 = vector.load %arg1[%c0, %c0_0] : memref<64x64xf32, #tpu.memory_space<vmem>>, vector<64x64xf32>
    %c0_1 = arith.constant 0 : index
    %c0_2 = arith.constant 0 : index
    %1 = vector.load %arg2[%c0_1, %c0_2] : memref<1x64xf32, #tpu.memory_space<vmem>>, vector<1x64xf32>
    %c0_3 = arith.constant 0 : index
    %c0_4 = arith.constant 0 : index
    %2 = vector.load %arg3[%c0_3, %c0_4] : memref<1x64xf32, #tpu.memory_space<vmem>>, vector<1x64xf32>
    %cst = arith.constant dense<0.000000e+00> : vector<64xf32>
    %3 = vector.multi_reduction <add>, %0, %cst [1] : vector<64x64xf32> to vector<64xf32>
    %4 = vector.shape_cast %3 : vector<64xf32> to vector<64x1xf32>
    %cst_5 = arith.constant 6.400000e+01 : f32
    %5 = vector.broadcast %cst_5 : f32 to vector<64x1xf32>
    %6 = arith.divf %4, %5 : vector<64x1xf32>
    %7 = vector.broadcast %6 : vector<64x1xf32> to vector<64x64xf32>
    %8 = arith.subf %0, %7 : vector<64x64xf32>
    %9 = arith.mulf %8, %8 : vector<64x64xf32>
    %cst_6 = arith.constant dense<0.000000e+00> : vector<64xf32>
    %10 = vector.multi_reduction <add>, %9, %cst_6 [1] : vector<64x64xf32> to vector<64xf32>
    %11 = vector.shape_cast %10 : vector<64xf32> to vector<64x1xf32>
    %cst_7 = arith.constant 6.400000e+01 : f32
    %12 = vector.broadcast %cst_7 : f32 to vector<64x1xf32>
    %13 = arith.divf %11, %12 : vector<64x1xf32>
    %14 = vector.broadcast %6 : vector<64x1xf32> to vector<64x64xf32>
    %15 = arith.subf %0, %14 : vector<64x64xf32>
    %cst_8 = arith.constant 9.99999974E-6 : f32
    %16 = vector.broadcast %cst_8 : f32 to vector<64x1xf32>
    %17 = arith.addf %13, %16 : vector<64x1xf32>
    %18 = math.sqrt %17 : vector<64x1xf32>
    %19 = vector.broadcast %18 : vector<64x1xf32> to vector<64x64xf32>
    %20 = arith.divf %15, %19 : vector<64x64xf32>
    %21 = vector.broadcast %1 : vector<1x64xf32> to vector<64x64xf32>
    %22 = arith.mulf %20, %21 : vector<64x64xf32>
    %23 = vector.broadcast %2 : vector<1x64xf32> to vector<64x64xf32>
    %24 = arith.addf %22, %23 : vector<64x64xf32>
    %25 = arith.truncf %24 : vector<64x64xf32> to vector<64x64xbf16>
    %c0_9 = arith.constant 0 : index
    %c0_10 = arith.constant 0 : index
    %26 = vector.load %arg4[%c0_9, %c0_10] : memref<64x192xbf16, #tpu.memory_space<vmem>>, vector<64x192xbf16>
    %cst_11 = arith.constant dense<0.000000e+00> : vector<64x192xf32>
    %27 = tpu.matmul %25, %26, %cst_11 {dimension_numbers = #tpu.dot_dimension_numbers<[1], [0], [0], [1], [0, 0, 1, 1], [], []>} : vector<64x64xbf16>, vector<64x192xbf16>, vector<64x192xf32> -> vector<64x192xf32>
    %28 = arith.truncf %27 : vector<64x192xf32> to vector<64x192xbf16>
    %c0_12 = arith.constant 0 : index
    %c0_13 = arith.constant 0 : index
    %29 = vector.load %arg5[%c0_12, %c0_13] : memref<64x192xbf16, #tpu.memory_space<vmem>>, vector<64x192xbf16>
    tpu.vector_store %arg5[%c0_12, %c0_13], %28 {strides = array<i32>} : memref<64x192xbf16, #tpu.memory_space<vmem>>, vector<64x192xbf16>,
    return
  }
  func.func @transform_0(%arg0: i32) -> (i32, i32) {
    %c0_i32 = arith.constant 0 : i32
    %c0_i32_0 = arith.constant 0 : i32
    return %arg0, %c0_i32 : i32, i32
  }
  func.func @transform_1(%arg0: i32) -> (i32, i32) {
    %c0_i32 = arith.constant 0 : i32
    %c0_i32_0 = arith.constant 0 : i32
    %c0_i32_1 = arith.constant 0 : i32
    return %c0_i32, %c0_i32_0 : i32, i32
  }
  func.func @transform_2(%arg0: i32) -> (i32, i32) {
    %c0_i32 = arith.constant 0 : i32
    %c0_i32_0 = arith.constant 0 : i32
    %c0_i32_1 = arith.constant 0 : i32
    return %c0_i32, %c0_i32_0 : i32, i32
  }
  func.func @transform_3(%arg0: i32) -> (i32, i32) {
    %c0_i32 = arith.constant 0 : i32
    %c0_i32_0 = arith.constant 0 : i32
    %c0_i32_1 = arith.constant 0 : i32
    return %c0_i32, %c0_i32_0 : i32, i32
  }
  func.func @transform_4(%arg0: i32) -> (i32, i32) {
    %c0_i32 = arith.constant 0 : i32
    %c0_i32_0 = arith.constant 0 : i32
    return %arg0, %c0_i32 : i32, i32
  }
}

module attributes {stable_mosaic.version = 11 : i64} {
  func.func @_attn_out_kernel(%arg0: i32, %arg1: memref<4x6x16x32xbf16, #tpu.memory_space<vmem>>, %arg2: memref<16x16xf32, #tpu.memory_space<vmem>>, %arg3: memref<2x32x64xbf16, #tpu.memory_space<vmem>>, %arg4: memref<1x64xf32, #tpu.memory_space<vmem>>, %arg5: memref<4x16x64xf32, #tpu.memory_space<vmem>>) attributes {dimension_semantics = [#tpu.dimension_semantics<parallel>], iteration_bounds = array<i64: 2>, scalar_prefetch = 0 : i64, scratch_operands = 0 : i64, tpu.core_type = #tpu.core_type<tc>, window_params = [{transform_indices = @transform_0, window_bounds = array<i64: 4, 6, 16, 32>}, {pipeline_mode = #tpu.pipeline_mode<synchronous>, transform_indices = @transform_1, window_bounds = array<i64: 16, 16>}, {pipeline_mode = #tpu.pipeline_mode<synchronous>, transform_indices = @transform_2, window_bounds = array<i64: 2, 32, 64>}, {pipeline_mode = #tpu.pipeline_mode<synchronous>, transform_indices = @transform_3, window_bounds = array<i64: 1, 64>}, {transform_indices = @transform_4, window_bounds = array<i64: 4, 16, 64>}]} {
    %c0 = arith.constant 0 : index
    %c0_0 = arith.constant 0 : index
    %c0_1 = arith.constant 0 : index
    %c0_2 = arith.constant 0 : index
    %0 = vector.load %arg1[%c0, %c0_0, %c0_1, %c0_2] : memref<4x6x16x32xbf16, #tpu.memory_space<vmem>>, vector<4x6x16x32xbf16>
    %1 = vector.extract_strided_slice %0 {offsets = [0, 0, 0, 0], sizes = [4, 2, 16, 32], strides = [1, 1, 1, 1]} : vector<4x6x16x32xbf16> to vector<4x2x16x32xbf16>
    %2 = vector.shape_cast %1 : vector<4x2x16x32xbf16> to vector<8x16x32xbf16>
    %3 = vector.extract_strided_slice %0 {offsets = [0, 2, 0, 0], sizes = [4, 2, 16, 32], strides = [1, 1, 1, 1]} : vector<4x6x16x32xbf16> to vector<4x2x16x32xbf16>
    %4 = vector.shape_cast %3 : vector<4x2x16x32xbf16> to vector<8x16x32xbf16>
    %5 = vector.extract_strided_slice %0 {offsets = [0, 4, 0, 0], sizes = [4, 2, 16, 32], strides = [1, 1, 1, 1]} : vector<4x6x16x32xbf16> to vector<4x2x16x32xbf16>
    %6 = vector.shape_cast %5 : vector<4x2x16x32xbf16> to vector<8x16x32xbf16>
    %cst = arith.constant dense<0.000000e+00> : vector<8x16x16xf32>
    %7 = tpu.matmul %2, %4, %cst {dimension_numbers = #tpu.dot_dimension_numbers<[2], [2], [1], [1], [0, 0, 0, 1, 1, 1], [0], [0]>} : vector<8x16x32xbf16>, vector<8x16x32xbf16>, vector<8x16x16xf32> -> vector<8x16x16xf32>
    %cst_3 = arith.constant 0.176776692 : f32
    %8 = vector.broadcast %cst_3 : f32 to vector<8x16x16xf32>
    %9 = arith.mulf %7, %8 : vector<8x16x16xf32>
    %c0_4 = arith.constant 0 : index
    %c0_5 = arith.constant 0 : index
    %10 = vector.load %arg2[%c0_4, %c0_5] : memref<16x16xf32, #tpu.memory_space<vmem>>, vector<16x16xf32>
    %11 = vector.shape_cast %10 : vector<16x16xf32> to vector<1x16x16xf32>
    %12 = vector.broadcast %11 : vector<1x16x16xf32> to vector<8x16x16xf32>
    %13 = arith.addf %9, %12 : vector<8x16x16xf32>
    %cst_6 = arith.constant dense<0xFF800000> : vector<8x16xf32>
    %14 = vector.multi_reduction <maximumf>, %13, %cst_6 [2] : vector<8x16x16xf32> to vector<8x16xf32>
    %15 = vector.shape_cast %14 : vector<8x16xf32> to vector<8x16x1xf32>
    %16 = vector.broadcast %15 : vector<8x16x1xf32> to vector<8x16x16xf32>
    %17 = arith.subf %13, %16 : vector<8x16x16xf32>
    %18 = math.exp %17 : vector<8x16x16xf32>
    %cst_7 = arith.constant dense<0.000000e+00> : vector<8x16xf32>
    %19 = vector.multi_reduction <add>, %18, %cst_7 [2] : vector<8x16x16xf32> to vector<8x16xf32>
    %20 = vector.shape_cast %19 : vector<8x16xf32> to vector<8x16x1xf32>
    %21 = tpu.reciprocal %20 {approx = true} : vector<8x16x1xf32> -> vector<8x16x1xf32>
    %22 = vector.broadcast %21 : vector<8x16x1xf32> to vector<8x16x16xf32>
    %23 = arith.mulf %18, %22 : vector<8x16x16xf32>
    %24 = arith.truncf %23 : vector<8x16x16xf32> to vector<8x16x16xbf16>
    %cst_8 = arith.constant dense<0.000000e+00> : vector<8x16x32xf32>
    %25 = tpu.matmul %24, %6, %cst_8 {dimension_numbers = #tpu.dot_dimension_numbers<[2], [1], [1], [2], [0, 0, 0, 1, 1, 2], [0], [0]>} : vector<8x16x16xbf16>, vector<8x16x32xbf16>, vector<8x16x32xf32> -> vector<8x16x32xf32>
    %26 = vector.shape_cast %25 : vector<8x16x32xf32> to vector<4x2x16x32xf32>
    %27 = vector.extract_strided_slice %26 {offsets = [0, 0, 0, 0], sizes = [4, 1, 16, 32], strides = [1, 1, 1, 1]} : vector<4x2x16x32xf32> to vector<4x1x16x32xf32>
    %28 = vector.shape_cast %27 : vector<4x1x16x32xf32> to vector<4x16x32xf32>
    %29 = vector.shape_cast %28 : vector<4x16x32xf32> to vector<64x32xf32>
    %30 = arith.truncf %29 : vector<64x32xf32> to vector<64x32xbf16>
    %c0_9 = arith.constant 0 : index
    %c0_10 = arith.constant 0 : index
    %c0_11 = arith.constant 0 : index
    %31 = vector.load %arg3[%c0_9, %c0_10, %c0_11] : memref<2x32x64xbf16, #tpu.memory_space<vmem>>, vector<1x32x64xbf16>
    %32 = vector.shape_cast %31 : vector<1x32x64xbf16> to vector<32x64xbf16>
    %cst_12 = arith.constant dense<0.000000e+00> : vector<64x64xf32>
    %33 = tpu.matmul %30, %32, %cst_12 {dimension_numbers = #tpu.dot_dimension_numbers<[1], [0], [0], [1], [0, 0, 1, 1], [], []>} : vector<64x32xbf16>, vector<32x64xbf16>, vector<64x64xf32> -> vector<64x64xf32>
    %34 = vector.extract_strided_slice %26 {offsets = [0, 1, 0, 0], sizes = [4, 1, 16, 32], strides = [1, 1, 1, 1]} : vector<4x2x16x32xf32> to vector<4x1x16x32xf32>
    %35 = vector.shape_cast %34 : vector<4x1x16x32xf32> to vector<4x16x32xf32>
    %36 = vector.shape_cast %35 : vector<4x16x32xf32> to vector<64x32xf32>
    %37 = arith.truncf %36 : vector<64x32xf32> to vector<64x32xbf16>
    %c1 = arith.constant 1 : index
    %c0_13 = arith.constant 0 : index
    %c0_14 = arith.constant 0 : index
    %38 = vector.load %arg3[%c1, %c0_13, %c0_14] : memref<2x32x64xbf16, #tpu.memory_space<vmem>>, vector<1x32x64xbf16>
    %39 = vector.shape_cast %38 : vector<1x32x64xbf16> to vector<32x64xbf16>
    %cst_15 = arith.constant dense<0.000000e+00> : vector<64x64xf32>
    %40 = tpu.matmul %37, %39, %cst_15 {dimension_numbers = #tpu.dot_dimension_numbers<[1], [0], [0], [1], [0, 0, 1, 1], [], []>} : vector<64x32xbf16>, vector<32x64xbf16>, vector<64x64xf32> -> vector<64x64xf32>
    %41 = arith.addf %33, %40 : vector<64x64xf32>
    %c0_16 = arith.constant 0 : index
    %c0_17 = arith.constant 0 : index
    %42 = vector.load %arg4[%c0_16, %c0_17] : memref<1x64xf32, #tpu.memory_space<vmem>>, vector<1x64xf32>
    %43 = vector.broadcast %42 : vector<1x64xf32> to vector<64x64xf32>
    %44 = arith.addf %41, %43 : vector<64x64xf32>
    %45 = vector.shape_cast %44 : vector<64x64xf32> to vector<4x16x64xf32>
    %c0_18 = arith.constant 0 : index
    %c0_19 = arith.constant 0 : index
    %c0_20 = arith.constant 0 : index
    %46 = vector.load %arg5[%c0_18, %c0_19, %c0_20] : memref<4x16x64xf32, #tpu.memory_space<vmem>>, vector<4x16x64xf32>
    tpu.vector_store %arg5[%c0_18, %c0_19, %c0_20], %45 {strides = array<i32>} : memref<4x16x64xf32, #tpu.memory_space<vmem>>, vector<4x16x64xf32>,
    return
  }
  func.func @transform_0(%arg0: i32) -> (i32, i32, i32, i32) {
    %c0_i32 = arith.constant 0 : i32
    %c0_i32_0 = arith.constant 0 : i32
    %c0_i32_1 = arith.constant 0 : i32
    %c0_i32_2 = arith.constant 0 : i32
    return %arg0, %c0_i32, %c0_i32_0, %c0_i32_1 : i32, i32, i32, i32
  }
  func.func @transform_1(%arg0: i32) -> (i32, i32) {
    %c0_i32 = arith.constant 0 : i32
    %c0_i32_0 = arith.constant 0 : i32
    %c0_i32_1 = arith.constant 0 : i32
    return %c0_i32, %c0_i32_0 : i32, i32
  }
  func.func @transform_2(%arg0: i32) -> (i32, i32, i32) {
    %c0_i32 = arith.constant 0 : i32
    %c0_i32_0 = arith.constant 0 : i32
    %c0_i32_1 = arith.constant 0 : i32
    %c0_i32_2 = arith.constant 0 : i32
    return %c0_i32, %c0_i32_0, %c0_i32_1 : i32, i32, i32
  }
  func.func @transform_3(%arg0: i32) -> (i32, i32) {
    %c0_i32 = arith.constant 0 : i32
    %c0_i32_0 = arith.constant 0 : i32
    %c0_i32_1 = arith.constant 0 : i32
    return %c0_i32, %c0_i32_0 : i32, i32
  }
  func.func @transform_4(%arg0: i32) -> (i32, i32, i32) {
    %c0_i32 = arith.constant 0 : i32
    %c0_i32_0 = arith.constant 0 : i32
    %c0_i32_1 = arith.constant 0 : i32
    return %arg0, %c0_i32, %c0_i32_0 : i32, i32, i32
  }
}

module attributes {stable_mosaic.version = 11 : i64} {
  func.func @_ff_res_kernel(%arg0: i32, %arg1: memref<64x64xf32, #tpu.memory_space<vmem>>, %arg2: memref<1x64xf32, #tpu.memory_space<vmem>>, %arg3: memref<1x64xf32, #tpu.memory_space<vmem>>, %arg4: memref<64x256xbf16, #tpu.memory_space<vmem>>, %arg5: memref<1x256xf32, #tpu.memory_space<vmem>>, %arg6: memref<256x64xbf16, #tpu.memory_space<vmem>>, %arg7: memref<1x64xf32, #tpu.memory_space<vmem>>, %arg8: memref<64x64xf32, #tpu.memory_space<vmem>>) attributes {dimension_semantics = [#tpu.dimension_semantics<parallel>], iteration_bounds = array<i64: 2>, scalar_prefetch = 0 : i64, scratch_operands = 0 : i64, tpu.core_type = #tpu.core_type<tc>, window_params = [{transform_indices = @transform_0, window_bounds = array<i64: 64, 64>}, {pipeline_mode = #tpu.pipeline_mode<synchronous>, transform_indices = @transform_1, window_bounds = array<i64: 1, 64>}, {pipeline_mode = #tpu.pipeline_mode<synchronous>, transform_indices = @transform_2, window_bounds = array<i64: 1, 64>}, {pipeline_mode = #tpu.pipeline_mode<synchronous>, transform_indices = @transform_3, window_bounds = array<i64: 64, 256>}, {pipeline_mode = #tpu.pipeline_mode<synchronous>, transform_indices = @transform_4, window_bounds = array<i64: 1, 256>}, {pipeline_mode = #tpu.pipeline_mode<synchronous>, transform_indices = @transform_5, window_bounds = array<i64: 256, 64>}, {pipeline_mode = #tpu.pipeline_mode<synchronous>, transform_indices = @transform_6, window_bounds = array<i64: 1, 64>}, {transform_indices = @transform_7, window_bounds = array<i64: 64, 64>}]} {
    %c0 = arith.constant 0 : index
    %c0_0 = arith.constant 0 : index
    %0 = vector.load %arg1[%c0, %c0_0] : memref<64x64xf32, #tpu.memory_space<vmem>>, vector<64x64xf32>
    %c0_1 = arith.constant 0 : index
    %c0_2 = arith.constant 0 : index
    %1 = vector.load %arg2[%c0_1, %c0_2] : memref<1x64xf32, #tpu.memory_space<vmem>>, vector<1x64xf32>
    %c0_3 = arith.constant 0 : index
    %c0_4 = arith.constant 0 : index
    %2 = vector.load %arg3[%c0_3, %c0_4] : memref<1x64xf32, #tpu.memory_space<vmem>>, vector<1x64xf32>
    %cst = arith.constant dense<0.000000e+00> : vector<64xf32>
    %3 = vector.multi_reduction <add>, %0, %cst [1] : vector<64x64xf32> to vector<64xf32>
    %4 = vector.shape_cast %3 : vector<64xf32> to vector<64x1xf32>
    %cst_5 = arith.constant 6.400000e+01 : f32
    %5 = vector.broadcast %cst_5 : f32 to vector<64x1xf32>
    %6 = arith.divf %4, %5 : vector<64x1xf32>
    %7 = vector.broadcast %6 : vector<64x1xf32> to vector<64x64xf32>
    %8 = arith.subf %0, %7 : vector<64x64xf32>
    %9 = arith.mulf %8, %8 : vector<64x64xf32>
    %cst_6 = arith.constant dense<0.000000e+00> : vector<64xf32>
    %10 = vector.multi_reduction <add>, %9, %cst_6 [1] : vector<64x64xf32> to vector<64xf32>
    %11 = vector.shape_cast %10 : vector<64xf32> to vector<64x1xf32>
    %cst_7 = arith.constant 6.400000e+01 : f32
    %12 = vector.broadcast %cst_7 : f32 to vector<64x1xf32>
    %13 = arith.divf %11, %12 : vector<64x1xf32>
    %14 = vector.broadcast %6 : vector<64x1xf32> to vector<64x64xf32>
    %15 = arith.subf %0, %14 : vector<64x64xf32>
    %cst_8 = arith.constant 9.99999974E-6 : f32
    %16 = vector.broadcast %cst_8 : f32 to vector<64x1xf32>
    %17 = arith.addf %13, %16 : vector<64x1xf32>
    %18 = math.sqrt %17 : vector<64x1xf32>
    %19 = vector.broadcast %18 : vector<64x1xf32> to vector<64x64xf32>
    %20 = arith.divf %15, %19 : vector<64x64xf32>
    %21 = vector.broadcast %1 : vector<1x64xf32> to vector<64x64xf32>
    %22 = arith.mulf %20, %21 : vector<64x64xf32>
    %23 = vector.broadcast %2 : vector<1x64xf32> to vector<64x64xf32>
    %24 = arith.addf %22, %23 : vector<64x64xf32>
    %25 = arith.truncf %24 : vector<64x64xf32> to vector<64x64xbf16>
    %c0_9 = arith.constant 0 : index
    %c0_10 = arith.constant 0 : index
    %26 = vector.load %arg4[%c0_9, %c0_10] : memref<64x256xbf16, #tpu.memory_space<vmem>>, vector<64x256xbf16>
    %cst_11 = arith.constant dense<0.000000e+00> : vector<64x256xf32>
    %27 = tpu.matmul %25, %26, %cst_11 {dimension_numbers = #tpu.dot_dimension_numbers<[1], [0], [0], [1], [0, 0, 1, 1], [], []>} : vector<64x64xbf16>, vector<64x256xbf16>, vector<64x256xf32> -> vector<64x256xf32>
    %c0_12 = arith.constant 0 : index
    %c0_13 = arith.constant 0 : index
    %28 = vector.load %arg5[%c0_12, %c0_13] : memref<1x256xf32, #tpu.memory_space<vmem>>, vector<1x256xf32>
    %29 = vector.broadcast %28 : vector<1x256xf32> to vector<64x256xf32>
    %30 = arith.addf %27, %29 : vector<64x256xf32>
    %cst_14 = arith.constant 5.000000e-01 : f32
    %31 = vector.broadcast %cst_14 : f32 to vector<64x256xf32>
    %32 = arith.mulf %31, %30 : vector<64x256xf32>
    %cst_15 = arith.constant 0.707106769 : f32
    %33 = vector.broadcast %cst_15 : f32 to vector<64x256xf32>
    %34 = arith.mulf %30, %33 : vector<64x256xf32>
    %cst_16 = arith.constant 0.000000e+00 : f32
    %35 = vector.broadcast %cst_16 : f32 to vector<64x256xf32>
    %36 = arith.cmpf oge, %34, %35 : vector<64x256xf32>
    %cst_17 = arith.constant 1.000000e+00 : f32
    %cst_18 = arith.constant -1.000000e+00 : f32
    %37 = vector.broadcast %cst_17 : f32 to vector<64x256xf32>
    %38 = vector.broadcast %cst_18 : f32 to vector<64x256xf32>
    %39 = arith.select %36, %37, %38 : vector<64x256xi1>, vector<64x256xf32>
    %40 = math.absf %34 : vector<64x256xf32>
    %cst_19 = arith.constant 0.327591091 : f32
    %41 = vector.broadcast %cst_19 : f32 to vector<64x256xf32>
    %42 = arith.mulf %41, %40 : vector<64x256xf32>
    %cst_20 = arith.constant 1.000000e+00 : f32
    %43 = vector.broadcast %cst_20 : f32 to vector<64x256xf32>
    %44 = arith.addf %43, %42 : vector<64x256xf32>
    %cst_21 = arith.constant 1.000000e+00 : f32
    %45 = vector.broadcast %cst_21 : f32 to vector<64x256xf32>
    %46 = arith.divf %45, %44 : vector<64x256xf32>
    %cst_22 = arith.constant 1.06140542 : f32
    %47 = vector.broadcast %cst_22 : f32 to vector<64x256xf32>
    %48 = arith.mulf %47, %46 : vector<64x256xf32>
    %cst_23 = arith.constant -1.45315206 : f32
    %49 = vector.broadcast %cst_23 : f32 to vector<64x256xf32>
    %50 = arith.addf %48, %49 : vector<64x256xf32>
    %51 = arith.mulf %50, %46 : vector<64x256xf32>
    %cst_24 = arith.constant 1.42141378 : f32
    %52 = vector.broadcast %cst_24 : f32 to vector<64x256xf32>
    %53 = arith.addf %51, %52 : vector<64x256xf32>
    %54 = arith.mulf %53, %46 : vector<64x256xf32>
    %cst_25 = arith.constant -0.284496725 : f32
    %55 = vector.broadcast %cst_25 : f32 to vector<64x256xf32>
    %56 = arith.addf %54, %55 : vector<64x256xf32>
    %57 = arith.mulf %56, %46 : vector<64x256xf32>
    %cst_26 = arith.constant 0.254829586 : f32
    %58 = vector.broadcast %cst_26 : f32 to vector<64x256xf32>
    %59 = arith.addf %57, %58 : vector<64x256xf32>
    %60 = arith.mulf %59, %46 : vector<64x256xf32>
    %cst_27 = arith.constant 0.000000e+00 : f32
    %61 = vector.broadcast %cst_27 : f32 to vector<64x256xf32>
    %62 = arith.subf %61, %40 : vector<64x256xf32>
    %63 = arith.mulf %62, %40 : vector<64x256xf32>
    %64 = math.exp %63 : vector<64x256xf32>
    %65 = arith.mulf %60, %64 : vector<64x256xf32>
    %cst_28 = arith.constant 1.000000e+00 : f32
    %66 = vector.broadcast %cst_28 : f32 to vector<64x256xf32>
    %67 = arith.subf %66, %65 : vector<64x256xf32>
    %68 = arith.mulf %39, %67 : vector<64x256xf32>
    %cst_29 = arith.constant 1.000000e+00 : f32
    %69 = vector.broadcast %cst_29 : f32 to vector<64x256xf32>
    %70 = arith.addf %69, %68 : vector<64x256xf32>
    %71 = arith.mulf %32, %70 : vector<64x256xf32>
    %72 = arith.truncf %71 : vector<64x256xf32> to vector<64x256xbf16>
    %c0_30 = arith.constant 0 : index
    %c0_31 = arith.constant 0 : index
    %73 = vector.load %arg6[%c0_30, %c0_31] : memref<256x64xbf16, #tpu.memory_space<vmem>>, vector<256x64xbf16>
    %cst_32 = arith.constant dense<0.000000e+00> : vector<64x64xf32>
    %74 = tpu.matmul %72, %73, %cst_32 {dimension_numbers = #tpu.dot_dimension_numbers<[1], [0], [0], [1], [0, 0, 1, 1], [], []>} : vector<64x256xbf16>, vector<256x64xbf16>, vector<64x64xf32> -> vector<64x64xf32>
    %c0_33 = arith.constant 0 : index
    %c0_34 = arith.constant 0 : index
    %75 = vector.load %arg7[%c0_33, %c0_34] : memref<1x64xf32, #tpu.memory_space<vmem>>, vector<1x64xf32>
    %76 = vector.broadcast %75 : vector<1x64xf32> to vector<64x64xf32>
    %77 = arith.addf %74, %76 : vector<64x64xf32>
    %78 = arith.addf %77, %0 : vector<64x64xf32>
    %c0_35 = arith.constant 0 : index
    %c0_36 = arith.constant 0 : index
    %79 = vector.load %arg8[%c0_35, %c0_36] : memref<64x64xf32, #tpu.memory_space<vmem>>, vector<64x64xf32>
    tpu.vector_store %arg8[%c0_35, %c0_36], %78 {strides = array<i32>} : memref<64x64xf32, #tpu.memory_space<vmem>>, vector<64x64xf32>,
    return
  }
  func.func @transform_0(%arg0: i32) -> (i32, i32) {
    %c0_i32 = arith.constant 0 : i32
    %c0_i32_0 = arith.constant 0 : i32
    return %arg0, %c0_i32 : i32, i32
  }
  func.func @transform_1(%arg0: i32) -> (i32, i32) {
    %c0_i32 = arith.constant 0 : i32
    %c0_i32_0 = arith.constant 0 : i32
    %c0_i32_1 = arith.constant 0 : i32
    return %c0_i32, %c0_i32_0 : i32, i32
  }
  func.func @transform_2(%arg0: i32) -> (i32, i32) {
    %c0_i32 = arith.constant 0 : i32
    %c0_i32_0 = arith.constant 0 : i32
    %c0_i32_1 = arith.constant 0 : i32
    return %c0_i32, %c0_i32_0 : i32, i32
  }
  func.func @transform_3(%arg0: i32) -> (i32, i32) {
    %c0_i32 = arith.constant 0 : i32
    %c0_i32_0 = arith.constant 0 : i32
    %c0_i32_1 = arith.constant 0 : i32
    return %c0_i32, %c0_i32_0 : i32, i32
  }
  func.func @transform_4(%arg0: i32) -> (i32, i32) {
    %c0_i32 = arith.constant 0 : i32
    %c0_i32_0 = arith.constant 0 : i32
    %c0_i32_1 = arith.constant 0 : i32
    return %c0_i32, %c0_i32_0 : i32, i32
  }
  func.func @transform_5(%arg0: i32) -> (i32, i32) {
    %c0_i32 = arith.constant 0 : i32
    %c0_i32_0 = arith.constant 0 : i32
    %c0_i32_1 = arith.constant 0 : i32
    return %c0_i32, %c0_i32_0 : i32, i32
  }
  func.func @transform_6(%arg0: i32) -> (i32, i32) {
    %c0_i32 = arith.constant 0 : i32
    %c0_i32_0 = arith.constant 0 : i32
    %c0_i32_1 = arith.constant 0 : i32
    return %c0_i32, %c0_i32_0 : i32, i32
  }
  func.func @transform_7(%arg0: i32) -> (i32, i32) {
    %c0_i32 = arith.constant 0 : i32
    %c0_i32_0 = arith.constant 0 : i32
    return %arg0, %c0_i32 : i32, i32
  }
}

module attributes {stable_mosaic.version = 11 : i64} {
  func.func @_attn_out_kernel(%arg0: i32, %arg1: memref<1x6x64x32xbf16, #tpu.memory_space<vmem>>, %arg2: memref<64x64xf32, #tpu.memory_space<vmem>>, %arg3: memref<2x32x64xbf16, #tpu.memory_space<vmem>>, %arg4: memref<1x64xf32, #tpu.memory_space<vmem>>, %arg5: memref<1x64x64xf32, #tpu.memory_space<vmem>>) attributes {dimension_semantics = [#tpu.dimension_semantics<parallel>], iteration_bounds = array<i64: 2>, scalar_prefetch = 0 : i64, scratch_operands = 0 : i64, tpu.core_type = #tpu.core_type<tc>, window_params = [{transform_indices = @transform_0, window_bounds = array<i64: 1, 6, 64, 32>}, {pipeline_mode = #tpu.pipeline_mode<synchronous>, transform_indices = @transform_1, window_bounds = array<i64: 64, 64>}, {pipeline_mode = #tpu.pipeline_mode<synchronous>, transform_indices = @transform_2, window_bounds = array<i64: 2, 32, 64>}, {pipeline_mode = #tpu.pipeline_mode<synchronous>, transform_indices = @transform_3, window_bounds = array<i64: 1, 64>}, {transform_indices = @transform_4, window_bounds = array<i64: 1, 64, 64>}]} {
    %c0 = arith.constant 0 : index
    %c0_0 = arith.constant 0 : index
    %c0_1 = arith.constant 0 : index
    %c0_2 = arith.constant 0 : index
    %0 = vector.load %arg1[%c0, %c0_0, %c0_1, %c0_2] : memref<1x6x64x32xbf16, #tpu.memory_space<vmem>>, vector<1x6x64x32xbf16>
    %1 = vector.extract_strided_slice %0 {offsets = [0, 0, 0, 0], sizes = [1, 2, 64, 32], strides = [1, 1, 1, 1]} : vector<1x6x64x32xbf16> to vector<1x2x64x32xbf16>
    %2 = vector.shape_cast %1 : vector<1x2x64x32xbf16> to vector<2x64x32xbf16>
    %3 = vector.extract_strided_slice %0 {offsets = [0, 2, 0, 0], sizes = [1, 2, 64, 32], strides = [1, 1, 1, 1]} : vector<1x6x64x32xbf16> to vector<1x2x64x32xbf16>
    %4 = vector.shape_cast %3 : vector<1x2x64x32xbf16> to vector<2x64x32xbf16>
    %5 = vector.extract_strided_slice %0 {offsets = [0, 4, 0, 0], sizes = [1, 2, 64, 32], strides = [1, 1, 1, 1]} : vector<1x6x64x32xbf16> to vector<1x2x64x32xbf16>
    %6 = vector.shape_cast %5 : vector<1x2x64x32xbf16> to vector<2x64x32xbf16>
    %cst = arith.constant dense<0.000000e+00> : vector<2x64x64xf32>
    %7 = tpu.matmul %2, %4, %cst {dimension_numbers = #tpu.dot_dimension_numbers<[2], [2], [1], [1], [0, 0, 0, 1, 1, 1], [0], [0]>} : vector<2x64x32xbf16>, vector<2x64x32xbf16>, vector<2x64x64xf32> -> vector<2x64x64xf32>
    %cst_3 = arith.constant 0.176776692 : f32
    %8 = vector.broadcast %cst_3 : f32 to vector<2x64x64xf32>
    %9 = arith.mulf %7, %8 : vector<2x64x64xf32>
    %c0_4 = arith.constant 0 : index
    %c0_5 = arith.constant 0 : index
    %10 = vector.load %arg2[%c0_4, %c0_5] : memref<64x64xf32, #tpu.memory_space<vmem>>, vector<64x64xf32>
    %11 = vector.shape_cast %10 : vector<64x64xf32> to vector<1x64x64xf32>
    %12 = vector.broadcast %11 : vector<1x64x64xf32> to vector<2x64x64xf32>
    %13 = arith.addf %9, %12 : vector<2x64x64xf32>
    %cst_6 = arith.constant dense<0xFF800000> : vector<2x64xf32>
    %14 = vector.multi_reduction <maximumf>, %13, %cst_6 [2] : vector<2x64x64xf32> to vector<2x64xf32>
    %15 = vector.shape_cast %14 : vector<2x64xf32> to vector<2x64x1xf32>
    %16 = vector.broadcast %15 : vector<2x64x1xf32> to vector<2x64x64xf32>
    %17 = arith.subf %13, %16 : vector<2x64x64xf32>
    %18 = math.exp %17 : vector<2x64x64xf32>
    %cst_7 = arith.constant dense<0.000000e+00> : vector<2x64xf32>
    %19 = vector.multi_reduction <add>, %18, %cst_7 [2] : vector<2x64x64xf32> to vector<2x64xf32>
    %20 = vector.shape_cast %19 : vector<2x64xf32> to vector<2x64x1xf32>
    %21 = tpu.reciprocal %20 {approx = true} : vector<2x64x1xf32> -> vector<2x64x1xf32>
    %22 = vector.broadcast %21 : vector<2x64x1xf32> to vector<2x64x64xf32>
    %23 = arith.mulf %18, %22 : vector<2x64x64xf32>
    %24 = arith.truncf %23 : vector<2x64x64xf32> to vector<2x64x64xbf16>
    %cst_8 = arith.constant dense<0.000000e+00> : vector<2x64x32xf32>
    %25 = tpu.matmul %24, %6, %cst_8 {dimension_numbers = #tpu.dot_dimension_numbers<[2], [1], [1], [2], [0, 0, 0, 1, 1, 2], [0], [0]>} : vector<2x64x64xbf16>, vector<2x64x32xbf16>, vector<2x64x32xf32> -> vector<2x64x32xf32>
    %26 = vector.shape_cast %25 : vector<2x64x32xf32> to vector<1x2x64x32xf32>
    %27 = vector.extract_strided_slice %26 {offsets = [0, 0, 0, 0], sizes = [1, 1, 64, 32], strides = [1, 1, 1, 1]} : vector<1x2x64x32xf32> to vector<1x1x64x32xf32>
    %28 = vector.shape_cast %27 : vector<1x1x64x32xf32> to vector<1x64x32xf32>
    %29 = vector.shape_cast %28 : vector<1x64x32xf32> to vector<64x32xf32>
    %30 = arith.truncf %29 : vector<64x32xf32> to vector<64x32xbf16>
    %c0_9 = arith.constant 0 : index
    %c0_10 = arith.constant 0 : index
    %c0_11 = arith.constant 0 : index
    %31 = vector.load %arg3[%c0_9, %c0_10, %c0_11] : memref<2x32x64xbf16, #tpu.memory_space<vmem>>, vector<1x32x64xbf16>
    %32 = vector.shape_cast %31 : vector<1x32x64xbf16> to vector<32x64xbf16>
    %cst_12 = arith.constant dense<0.000000e+00> : vector<64x64xf32>
    %33 = tpu.matmul %30, %32, %cst_12 {dimension_numbers = #tpu.dot_dimension_numbers<[1], [0], [0], [1], [0, 0, 1, 1], [], []>} : vector<64x32xbf16>, vector<32x64xbf16>, vector<64x64xf32> -> vector<64x64xf32>
    %34 = vector.extract_strided_slice %26 {offsets = [0, 1, 0, 0], sizes = [1, 1, 64, 32], strides = [1, 1, 1, 1]} : vector<1x2x64x32xf32> to vector<1x1x64x32xf32>
    %35 = vector.shape_cast %34 : vector<1x1x64x32xf32> to vector<1x64x32xf32>
    %36 = vector.shape_cast %35 : vector<1x64x32xf32> to vector<64x32xf32>
    %37 = arith.truncf %36 : vector<64x32xf32> to vector<64x32xbf16>
    %c1 = arith.constant 1 : index
    %c0_13 = arith.constant 0 : index
    %c0_14 = arith.constant 0 : index
    %38 = vector.load %arg3[%c1, %c0_13, %c0_14] : memref<2x32x64xbf16, #tpu.memory_space<vmem>>, vector<1x32x64xbf16>
    %39 = vector.shape_cast %38 : vector<1x32x64xbf16> to vector<32x64xbf16>
    %cst_15 = arith.constant dense<0.000000e+00> : vector<64x64xf32>
    %40 = tpu.matmul %37, %39, %cst_15 {dimension_numbers = #tpu.dot_dimension_numbers<[1], [0], [0], [1], [0, 0, 1, 1], [], []>} : vector<64x32xbf16>, vector<32x64xbf16>, vector<64x64xf32> -> vector<64x64xf32>
    %41 = arith.addf %33, %40 : vector<64x64xf32>
    %c0_16 = arith.constant 0 : index
    %c0_17 = arith.constant 0 : index
    %42 = vector.load %arg4[%c0_16, %c0_17] : memref<1x64xf32, #tpu.memory_space<vmem>>, vector<1x64xf32>
    %43 = vector.broadcast %42 : vector<1x64xf32> to vector<64x64xf32>
    %44 = arith.addf %41, %43 : vector<64x64xf32>
    %45 = vector.shape_cast %44 : vector<64x64xf32> to vector<1x64x64xf32>
    %c0_18 = arith.constant 0 : index
    %c0_19 = arith.constant 0 : index
    %c0_20 = arith.constant 0 : index
    %46 = vector.load %arg5[%c0_18, %c0_19, %c0_20] : memref<1x64x64xf32, #tpu.memory_space<vmem>>, vector<1x64x64xf32>
    tpu.vector_store %arg5[%c0_18, %c0_19, %c0_20], %45 {strides = array<i32>} : memref<1x64x64xf32, #tpu.memory_space<vmem>>, vector<1x64x64xf32>,
    return
  }
  func.func @transform_0(%arg0: i32) -> (i32, i32, i32, i32) {
    %c0_i32 = arith.constant 0 : i32
    %c0_i32_0 = arith.constant 0 : i32
    %c0_i32_1 = arith.constant 0 : i32
    %c0_i32_2 = arith.constant 0 : i32
    return %arg0, %c0_i32, %c0_i32_0, %c0_i32_1 : i32, i32, i32, i32
  }
  func.func @transform_1(%arg0: i32) -> (i32, i32) {
    %c0_i32 = arith.constant 0 : i32
    %c0_i32_0 = arith.constant 0 : i32
    %c0_i32_1 = arith.constant 0 : i32
    return %c0_i32, %c0_i32_0 : i32, i32
  }
  func.func @transform_2(%arg0: i32) -> (i32, i32, i32) {
    %c0_i32 = arith.constant 0 : i32
    %c0_i32_0 = arith.constant 0 : i32
    %c0_i32_1 = arith.constant 0 : i32
    %c0_i32_2 = arith.constant 0 : i32
    return %c0_i32, %c0_i32_0, %c0_i32_1 : i32, i32, i32
  }
  func.func @transform_3(%arg0: i32) -> (i32, i32) {
    %c0_i32 = arith.constant 0 : i32
    %c0_i32_0 = arith.constant 0 : i32
    %c0_i32_1 = arith.constant 0 : i32
    return %c0_i32, %c0_i32_0 : i32, i32
  }
  func.func @transform_4(%arg0: i32) -> (i32, i32, i32) {
    %c0_i32 = arith.constant 0 : i32
    %c0_i32_0 = arith.constant 0 : i32
    %c0_i32_1 = arith.constant 0 : i32
    return %arg0, %c0_i32, %c0_i32_0 : i32, i32, i32
  }
}

module attributes {stable_mosaic.version = 11 : i64} {
  func.func @_ff_res_kernel(%arg0: i32, %arg1: memref<64x64xf32, #tpu.memory_space<vmem>>, %arg2: memref<1x64xf32, #tpu.memory_space<vmem>>, %arg3: memref<1x64xf32, #tpu.memory_space<vmem>>, %arg4: memref<64x256xbf16, #tpu.memory_space<vmem>>, %arg5: memref<1x256xf32, #tpu.memory_space<vmem>>, %arg6: memref<256x64xbf16, #tpu.memory_space<vmem>>, %arg7: memref<1x64xf32, #tpu.memory_space<vmem>>, %arg8: memref<64x64xf32, #tpu.memory_space<vmem>>) attributes {dimension_semantics = [#tpu.dimension_semantics<parallel>], iteration_bounds = array<i64: 2>, scalar_prefetch = 0 : i64, scratch_operands = 0 : i64, tpu.core_type = #tpu.core_type<tc>, window_params = [{transform_indices = @transform_0, window_bounds = array<i64: 64, 64>}, {pipeline_mode = #tpu.pipeline_mode<synchronous>, transform_indices = @transform_1, window_bounds = array<i64: 1, 64>}, {pipeline_mode = #tpu.pipeline_mode<synchronous>, transform_indices = @transform_2, window_bounds = array<i64: 1, 64>}, {pipeline_mode = #tpu.pipeline_mode<synchronous>, transform_indices = @transform_3, window_bounds = array<i64: 64, 256>}, {pipeline_mode = #tpu.pipeline_mode<synchronous>, transform_indices = @transform_4, window_bounds = array<i64: 1, 256>}, {pipeline_mode = #tpu.pipeline_mode<synchronous>, transform_indices = @transform_5, window_bounds = array<i64: 256, 64>}, {pipeline_mode = #tpu.pipeline_mode<synchronous>, transform_indices = @transform_6, window_bounds = array<i64: 1, 64>}, {transform_indices = @transform_7, window_bounds = array<i64: 64, 64>}]} {
    %c0 = arith.constant 0 : index
    %c0_0 = arith.constant 0 : index
    %0 = vector.load %arg1[%c0, %c0_0] : memref<64x64xf32, #tpu.memory_space<vmem>>, vector<64x64xf32>
    %c0_1 = arith.constant 0 : index
    %c0_2 = arith.constant 0 : index
    %1 = vector.load %arg2[%c0_1, %c0_2] : memref<1x64xf32, #tpu.memory_space<vmem>>, vector<1x64xf32>
    %c0_3 = arith.constant 0 : index
    %c0_4 = arith.constant 0 : index
    %2 = vector.load %arg3[%c0_3, %c0_4] : memref<1x64xf32, #tpu.memory_space<vmem>>, vector<1x64xf32>
    %cst = arith.constant dense<0.000000e+00> : vector<64xf32>
    %3 = vector.multi_reduction <add>, %0, %cst [1] : vector<64x64xf32> to vector<64xf32>
    %4 = vector.shape_cast %3 : vector<64xf32> to vector<64x1xf32>
    %cst_5 = arith.constant 6.400000e+01 : f32
    %5 = vector.broadcast %cst_5 : f32 to vector<64x1xf32>
    %6 = arith.divf %4, %5 : vector<64x1xf32>
    %7 = vector.broadcast %6 : vector<64x1xf32> to vector<64x64xf32>
    %8 = arith.subf %0, %7 : vector<64x64xf32>
    %9 = arith.mulf %8, %8 : vector<64x64xf32>
    %cst_6 = arith.constant dense<0.000000e+00> : vector<64xf32>
    %10 = vector.multi_reduction <add>, %9, %cst_6 [1] : vector<64x64xf32> to vector<64xf32>
    %11 = vector.shape_cast %10 : vector<64xf32> to vector<64x1xf32>
    %cst_7 = arith.constant 6.400000e+01 : f32
    %12 = vector.broadcast %cst_7 : f32 to vector<64x1xf32>
    %13 = arith.divf %11, %12 : vector<64x1xf32>
    %14 = vector.broadcast %6 : vector<64x1xf32> to vector<64x64xf32>
    %15 = arith.subf %0, %14 : vector<64x64xf32>
    %cst_8 = arith.constant 9.99999974E-6 : f32
    %16 = vector.broadcast %cst_8 : f32 to vector<64x1xf32>
    %17 = arith.addf %13, %16 : vector<64x1xf32>
    %18 = math.sqrt %17 : vector<64x1xf32>
    %19 = vector.broadcast %18 : vector<64x1xf32> to vector<64x64xf32>
    %20 = arith.divf %15, %19 : vector<64x64xf32>
    %21 = vector.broadcast %1 : vector<1x64xf32> to vector<64x64xf32>
    %22 = arith.mulf %20, %21 : vector<64x64xf32>
    %23 = vector.broadcast %2 : vector<1x64xf32> to vector<64x64xf32>
    %24 = arith.addf %22, %23 : vector<64x64xf32>
    %25 = arith.truncf %24 : vector<64x64xf32> to vector<64x64xbf16>
    %c0_9 = arith.constant 0 : index
    %c0_10 = arith.constant 0 : index
    %26 = vector.load %arg4[%c0_9, %c0_10] : memref<64x256xbf16, #tpu.memory_space<vmem>>, vector<64x256xbf16>
    %cst_11 = arith.constant dense<0.000000e+00> : vector<64x256xf32>
    %27 = tpu.matmul %25, %26, %cst_11 {dimension_numbers = #tpu.dot_dimension_numbers<[1], [0], [0], [1], [0, 0, 1, 1], [], []>} : vector<64x64xbf16>, vector<64x256xbf16>, vector<64x256xf32> -> vector<64x256xf32>
    %c0_12 = arith.constant 0 : index
    %c0_13 = arith.constant 0 : index
    %28 = vector.load %arg5[%c0_12, %c0_13] : memref<1x256xf32, #tpu.memory_space<vmem>>, vector<1x256xf32>
    %29 = vector.broadcast %28 : vector<1x256xf32> to vector<64x256xf32>
    %30 = arith.addf %27, %29 : vector<64x256xf32>
    %cst_14 = arith.constant 5.000000e-01 : f32
    %31 = vector.broadcast %cst_14 : f32 to vector<64x256xf32>
    %32 = arith.mulf %31, %30 : vector<64x256xf32>
    %cst_15 = arith.constant 0.707106769 : f32
    %33 = vector.broadcast %cst_15 : f32 to vector<64x256xf32>
    %34 = arith.mulf %30, %33 : vector<64x256xf32>
    %cst_16 = arith.constant 0.000000e+00 : f32
    %35 = vector.broadcast %cst_16 : f32 to vector<64x256xf32>
    %36 = arith.cmpf oge, %34, %35 : vector<64x256xf32>
    %cst_17 = arith.constant 1.000000e+00 : f32
    %cst_18 = arith.constant -1.000000e+00 : f32
    %37 = vector.broadcast %cst_17 : f32 to vector<64x256xf32>
    %38 = vector.broadcast %cst_18 : f32 to vector<64x256xf32>
    %39 = arith.select %36, %37, %38 : vector<64x256xi1>, vector<64x256xf32>
    %40 = math.absf %34 : vector<64x256xf32>
    %cst_19 = arith.constant 0.327591091 : f32
    %41 = vector.broadcast %cst_19 : f32 to vector<64x256xf32>
    %42 = arith.mulf %41, %40 : vector<64x256xf32>
    %cst_20 = arith.constant 1.000000e+00 : f32
    %43 = vector.broadcast %cst_20 : f32 to vector<64x256xf32>
    %44 = arith.addf %43, %42 : vector<64x256xf32>
    %cst_21 = arith.constant 1.000000e+00 : f32
    %45 = vector.broadcast %cst_21 : f32 to vector<64x256xf32>
    %46 = arith.divf %45, %44 : vector<64x256xf32>
    %cst_22 = arith.constant 1.06140542 : f32
    %47 = vector.broadcast %cst_22 : f32 to vector<64x256xf32>
    %48 = arith.mulf %47, %46 : vector<64x256xf32>
    %cst_23 = arith.constant -1.45315206 : f32
    %49 = vector.broadcast %cst_23 : f32 to vector<64x256xf32>
    %50 = arith.addf %48, %49 : vector<64x256xf32>
    %51 = arith.mulf %50, %46 : vector<64x256xf32>
    %cst_24 = arith.constant 1.42141378 : f32
    %52 = vector.broadcast %cst_24 : f32 to vector<64x256xf32>
    %53 = arith.addf %51, %52 : vector<64x256xf32>
    %54 = arith.mulf %53, %46 : vector<64x256xf32>
    %cst_25 = arith.constant -0.284496725 : f32
    %55 = vector.broadcast %cst_25 : f32 to vector<64x256xf32>
    %56 = arith.addf %54, %55 : vector<64x256xf32>
    %57 = arith.mulf %56, %46 : vector<64x256xf32>
    %cst_26 = arith.constant 0.254829586 : f32
    %58 = vector.broadcast %cst_26 : f32 to vector<64x256xf32>
    %59 = arith.addf %57, %58 : vector<64x256xf32>
    %60 = arith.mulf %59, %46 : vector<64x256xf32>
    %cst_27 = arith.constant 0.000000e+00 : f32
    %61 = vector.broadcast %cst_27 : f32 to vector<64x256xf32>
    %62 = arith.subf %61, %40 : vector<64x256xf32>
    %63 = arith.mulf %62, %40 : vector<64x256xf32>
    %64 = math.exp %63 : vector<64x256xf32>
    %65 = arith.mulf %60, %64 : vector<64x256xf32>
    %cst_28 = arith.constant 1.000000e+00 : f32
    %66 = vector.broadcast %cst_28 : f32 to vector<64x256xf32>
    %67 = arith.subf %66, %65 : vector<64x256xf32>
    %68 = arith.mulf %39, %67 : vector<64x256xf32>
    %cst_29 = arith.constant 1.000000e+00 : f32
    %69 = vector.broadcast %cst_29 : f32 to vector<64x256xf32>
    %70 = arith.addf %69, %68 : vector<64x256xf32>
    %71 = arith.mulf %32, %70 : vector<64x256xf32>
    %72 = arith.truncf %71 : vector<64x256xf32> to vector<64x256xbf16>
    %c0_30 = arith.constant 0 : index
    %c0_31 = arith.constant 0 : index
    %73 = vector.load %arg6[%c0_30, %c0_31] : memref<256x64xbf16, #tpu.memory_space<vmem>>, vector<256x64xbf16>
    %cst_32 = arith.constant dense<0.000000e+00> : vector<64x64xf32>
    %74 = tpu.matmul %72, %73, %cst_32 {dimension_numbers = #tpu.dot_dimension_numbers<[1], [0], [0], [1], [0, 0, 1, 1], [], []>} : vector<64x256xbf16>, vector<256x64xbf16>, vector<64x64xf32> -> vector<64x64xf32>
    %c0_33 = arith.constant 0 : index
    %c0_34 = arith.constant 0 : index
    %75 = vector.load %arg7[%c0_33, %c0_34] : memref<1x64xf32, #tpu.memory_space<vmem>>, vector<1x64xf32>
    %76 = vector.broadcast %75 : vector<1x64xf32> to vector<64x64xf32>
    %77 = arith.addf %74, %76 : vector<64x64xf32>
    %78 = arith.addf %77, %0 : vector<64x64xf32>
    %c0_35 = arith.constant 0 : index
    %c0_36 = arith.constant 0 : index
    %79 = vector.load %arg8[%c0_35, %c0_36] : memref<64x64xf32, #tpu.memory_space<vmem>>, vector<64x64xf32>
    tpu.vector_store %arg8[%c0_35, %c0_36], %78 {strides = array<i32>} : memref<64x64xf32, #tpu.memory_space<vmem>>, vector<64x64xf32>,
    return
  }
  func.func @transform_0(%arg0: i32) -> (i32, i32) {
    %c0_i32 = arith.constant 0 : i32
    %c0_i32_0 = arith.constant 0 : i32
    return %arg0, %c0_i32 : i32, i32
  }
  func.func @transform_1(%arg0: i32) -> (i32, i32) {
    %c0_i32 = arith.constant 0 : i32
    %c0_i32_0 = arith.constant 0 : i32
    %c0_i32_1 = arith.constant 0 : i32
    return %c0_i32, %c0_i32_0 : i32, i32
  }
  func.func @transform_2(%arg0: i32) -> (i32, i32) {
    %c0_i32 = arith.constant 0 : i32
    %c0_i32_0 = arith.constant 0 : i32
    %c0_i32_1 = arith.constant 0 : i32
    return %c0_i32, %c0_i32_0 : i32, i32
  }
  func.func @transform_3(%arg0: i32) -> (i32, i32) {
    %c0_i32 = arith.constant 0 : i32
    %c0_i32_0 = arith.constant 0 : i32
    %c0_i32_1 = arith.constant 0 : i32
    return %c0_i32, %c0_i32_0 : i32, i32
  }
  func.func @transform_4(%arg0: i32) -> (i32, i32) {
    %c0_i32 = arith.constant 0 : i32
    %c0_i32_0 = arith.constant 0 : i32
    %c0_i32_1 = arith.constant 0 : i32
    return %c0_i32, %c0_i32_0 : i32, i32
  }
  func.func @transform_5(%arg0: i32) -> (i32, i32) {
    %c0_i32 = arith.constant 0 : i32
    %c0_i32_0 = arith.constant 0 : i32
    %c0_i32_1 = arith.constant 0 : i32
    return %c0_i32, %c0_i32_0 : i32, i32
  }
  func.func @transform_6(%arg0: i32) -> (i32, i32) {
    %c0_i32 = arith.constant 0 : i32
    %c0_i32_0 = arith.constant 0 : i32
    %c0_i32_1 = arith.constant 0 : i32
    return %c0_i32, %c0_i32_0 : i32, i32
  }
  func.func @transform_7(%arg0: i32) -> (i32, i32) {
    %c0_i32 = arith.constant 0 : i32
    %c0_i32_0 = arith.constant 0 : i32
    return %arg0, %c0_i32 : i32, i32
  }
}

</mosaic_0001>

<llo_original>
// kernel: transformer_forward.12
$region0: #{transformer_forward.12}
  #allocation0 [shape = 'u32[]', space=smem, size = 0x4, offset = 0x4, fixed_abs, tag = 'smem constant byte address 0x4 - core index']
  #allocation1 [shape = 'u32[144,128]{1,0:T(1,128)}', space=vmem, size = 0x12000, scoped, tag = 'internal scratch']
  %s0 = inlined_call_operand.vmem [shape: f32[128,64], index: 0, kind: input, shape index: {}]
  %s1 = inlined_call_operand.vmem [shape: f32[1,64], index: 1, kind: input, shape index: {}]
  %s2 = inlined_call_operand.vmem [shape: f32[1,64], index: 2, kind: input, shape index: {}]
  %s3 = inlined_call_operand.vmem [shape: bf16[64,192], index: 3, kind: input, shape index: {}]
  %s4 = inlined_call_operand.vmem [shape: bf16[128,192], index: 4, kind: output, shape index: {}]
  %s5 = sld [smem:[#allocation0]]
  $region49: #{transformer_forward.12} parent=0
    _
  %s7 = ssub.s32 1, %s5
  %s8 = scalar_select 0, %s7, %s5
  loop: start=0, step=1, limit=4
  $region2: #{transformer_forward.12} parent=0 // loop_pre_header
    _
  $region3: #{transformer_forward.12} parent=0 // loop_header
    %s10 = sphi 0, %s14
    %p11 = scmp.ge.s32.totalorder %s10, 4
    %s20 = sphi 0, %s22
    %s23 = sphi 0, %s20
    %s24 = sphi 0, %s23
    %s40 = sphi 0, %s24
    %s44 = sphi 0, %s44
    %s46 = sphi 0, %s44
    %s47 = sphi 0, %s46
    %s61 = sphi 0, %s47
    %s65 = sphi 0, %s65
    %s67 = sphi 0, %s65
    %s68 = sphi 0, %s67
    %s82 = sphi 0, %s68
    %s86 = sphi 0, %s86
    %s88 = sphi 0, %s86
    %s89 = sphi 0, %s88
    %s103 = sphi 0, %s89
    %s109 = sphi 0, %s111
    %s112 = sphi 0, %s109
    %s113 = sphi 0, %s112
    %s129 = sphi 0, %s113
  $region4: #{transformer_forward.12} parent=0 // loop_header_branch
    %13 = sbr.rel (%p11) target = $region8
  $region5: #{transformer_forward.12} parent=0 // loop_body
    %s15 = ssub.s32 %s10, 1
    %s16 = ssub.s32 %s10, 2
    %s17 = sadd.s32 %s10, 1
    %s18 = ssub.s32 %s10, %s17
    %p19 = scmp.eq.s32.totalorder %s18, 0
    %s21 = sadd.s32 %s20, 1
    %s22 = scalar_select %p19, %s20, %s21
    %p25 = pneg %p19
    %p26 = scmp.eq.s32.totalorder %s10, 1
    %p27 = por %p25, %p26
    %p28 = scmp.ne.s32.totalorder %s20, %s23
    %p29 = scmp.eq.s32.totalorder %s10, 0
    %p30 = por %p28, %p29
    %p31 = scmp.ne.s32.totalorder %s20, %s23
    %p32 = scmp.eq.s32.totalorder %s15, 1
    %p33 = por %p31, %p32
    %p34 = scmp.ne.s32.totalorder %s23, %s24
    %p35 = scmp.eq.s32.totalorder %s15, 0
    %p36 = por %p34, %p35
    %p37 = scmp.ne.s32.totalorder %s23, %s24
    %p38 = scmp.eq.s32.totalorder %s16, 1
    %p39 = por %p37, %p38
    %p41 = scmp.ne.s32.totalorder %s24, %s40
    %p42 = scmp.eq.s32.totalorder %s16, 0
    %p43 = por %p41, %p42
    %s45 = sadd.s32 %s44, 1
    %p48 = scmp.eq.s32.totalorder %s10, 1
    %p49 = scmp.ne.s32.totalorder %s44, %s46
    %p50 = scmp.eq.s32.totalorder %s10, 0
    %p51 = por %p49, %p50
    %p52 = scmp.ne.s32.totalorder %s44, %s46
    %p53 = scmp.eq.s32.totalorder %s15, 1
    %p54 = por %p52, %p53
    %p55 = scmp.ne.s32.totalorder %s46, %s47
    %p56 = scmp.eq.s32.totalorder %s15, 0
    %p57 = por %p55, %p56
    %p58 = scmp.ne.s32.totalorder %s46, %s47
    %p59 = scmp.eq.s32.totalorder %s16, 1
    %p60 = por %p58, %p59
    %p62 = scmp.ne.s32.totalorder %s47, %s61
    %p63 = scmp.eq.s32.totalorder %s16, 0
    %p64 = por %p62, %p63
    %s66 = sadd.s32 %s65, 1
    %p69 = scmp.eq.s32.totalorder %s10, 1
    %p70 = scmp.ne.s32.totalorder %s65, %s67
    %p71 = scmp.eq.s32.totalorder %s10, 0
    %p72 = por %p70, %p71
    %p73 = scmp.ne.s32.totalorder %s65, %s67
    %p74 = scmp.eq.s32.totalorder %s15, 1
    %p75 = por %p73, %p74
    %p76 = scmp.ne.s32.totalorder %s67, %s68
    %p77 = scmp.eq.s32.totalorder %s15, 0
    %p78 = por %p76, %p77
    %p79 = scmp.ne.s32.totalorder %s67, %s68
    %p80 = scmp.eq.s32.totalorder %s16, 1
    %p81 = por %p79, %p80
    %p83 = scmp.ne.s32.totalorder %s68, %s82
    %p84 = scmp.eq.s32.totalorder %s16, 0
    %p85 = por %p83, %p84
    %s87 = sadd.s32 %s86, 1
    %p90 = scmp.eq.s32.totalorder %s10, 1
    %p91 = scmp.ne.s32.totalorder %s86, %s88
    %p92 = scmp.eq.s32.totalorder %s10, 0
    %p93 = por %p91, %p92
    %p94 = scmp.ne.s32.totalorder %s86, %s88
    %p95 = scmp.eq.s32.totalorder %s15, 1
    %p96 = por %p94, %p95
    %p97 = scmp.ne.s32.totalorder %s88, %s89
    %p98 = scmp.eq.s32.totalorder %s15, 0
    %p99 = por %p97, %p98
    %p100 = scmp.ne.s32.totalorder %s88, %s89
    %p101 = scmp.eq.s32.totalorder %s16, 1
    %p102 = por %p100, %p101
    %p104 = scmp.ne.s32.totalorder %s89, %s103
    %p105 = scmp.eq.s32.totalorder %s16, 0
    %p106 = por %p104, %p105
    %s107 = ssub.s32 %s10, %s17
    %p108 = scmp.eq.s32.totalorder %s107, 0
    %s110 = sadd.s32 %s109, 1
    %s111 = scalar_select %p108, %s109, %s110
    %p114 = pneg %p108
    %p115 = scmp.eq.s32.totalorder %s10, 1
    %p116 = por %p114, %p115
    %p117 = scmp.ne.s32.totalorder %s109, %s112
    %p118 = scmp.eq.s32.totalorder %s10, 0
    %p119 = por %p117, %p118
    %p120 = scmp.ne.s32.totalorder %s109, %s112
    %p121 = scmp.eq.s32.totalorder %s15, 1
    %p122 = por %p120, %p121
    %p123 = scmp.ne.s32.totalorder %s112, %s113
    %p124 = scmp.eq.s32.totalorder %s15, 0
    %p125 = por %p123, %p124
    %p126 = scmp.ne.s32.totalorder %s112, %s113
    %p127 = scmp.eq.s32.totalorder %s16, 1
    %p128 = por %p126, %p127
    %p130 = scmp.ne.s32.totalorder %s113, %s129
    %p131 = scmp.eq.s32.totalorder %s16, 0
    %p132 = por %p130, %p131
    %p133 = scmp.le.s32.totalorder 1, %s10
    %p134 = scmp.lt.s32.totalorder %s10, 3
    %p135 = pnand %p133, %p134
    %p136 = pneg %p135
    // Predicated region
    $region9: #{transformer_forward.12} parent=5 // pred_check
      _
    $region10: #{transformer_forward.12} parent=5 // pred_check_branch
      %138 = sbr.rel (%p135) target = $region12
    $region11: #{transformer_forward.12} parent=5 // pred_region
      %s139 = ssub.s32 %s10, 1
      // Predicated region
      $region13: #{transformer_forward.12} parent=11 // pred_check
        %p140 = pneg %p57
      $region14: #{transformer_forward.12} parent=11 // pred_check_branch
        %142 = sbr.rel (%p140) target = $region16
      $region15: #{transformer_forward.12} parent=11 // pred_region
        _
      $region16: #{transformer_forward.12} parent=11 // pred_fallthru
        _
      // Predicated region
      $region17: #{transformer_forward.12} parent=11 // pred_check
        %p143 = pneg %p78
      $region18: #{transformer_forward.12} parent=11 // pred_check_branch
        %145 = sbr.rel (%p143) target = $region20
      $region19: #{transformer_forward.12} parent=11 // pred_region
        _
      $region20: #{transformer_forward.12} parent=11 // pred_fallthru
        _
      // Predicated region
      $region21: #{transformer_forward.12} parent=11 // pred_check
        %p146 = pneg %p99
      $region22: #{transformer_forward.12} parent=11 // pred_check_branch
        %148 = sbr.rel (%p146) target = $region24
      $region23: #{transformer_forward.12} parent=11 // pred_region
        _
      $region24: #{transformer_forward.12} parent=11 // pred_fallthru
        _
    $region12: #{transformer_forward.12} parent=5 // pred_fallthru
      _
    %p149 = scmp.lt.s32.totalorder %s10, 2
    // Predicated region
    $region25: #{transformer_forward.12} parent=5 // pred_check
      %p150 = pneg %p149
    $region26: #{transformer_forward.12} parent=5 // pred_check_branch
      %152 = sbr.rel (%p150) target = $region28
    $region27: #{transformer_forward.12} parent=5 // pred_region
      // Predicated region
      $region29: #{transformer_forward.12} parent=27 // pred_check
        %p153 = pneg %p30
      $region30: #{transformer_forward.12} parent=27 // pred_check_branch
        %155 = sbr.rel (%p153) target = $region32
      $region31: #{transformer_forward.12} parent=27 // pred_region
        %s156 = smul.u32 8, %s10
        %p157 = scmp.lt.s32.totalorder %s156, 15
        %s158 = scalar_select %p157, %s156, 15
        %s159 = smul.addr %s158, 8
        %s160 = scalar_lea.vmem %s0, %s159
        %s161 = smul.u32 8, %s10
      $region32: #{transformer_forward.12} parent=27 // pred_fallthru
        _
    $region28: #{transformer_forward.12} parent=5 // pred_fallthru
      _
    %p162 = scmp.le.s32.totalorder 1, %s10
    %p163 = scmp.lt.s32.totalorder %s10, 3
    %p164 = pnand %p162, %p163
    %p165 = pneg %p164
    // Predicated region
    $region33: #{transformer_forward.12} parent=5 // pred_check
      _
    $region34: #{transformer_forward.12} parent=5 // pred_check_branch
      %167 = sbr.rel (%p164) target = $region36
    $region35: #{transformer_forward.12} parent=5 // pred_region
      %s168 = ssub.s32 %s10, 1
      %s169 = smul.u32 8, %s15
      %p170 = scmp.lt.s32.totalorder %s169, 15
      %s171 = scalar_select %p170, %s169, 15
      %s172 = smul.addr %s171, 8
      %s173 = scalar_lea.vmem %s0, %s172
      %p174 = pneg %p36
      %p175 = pneg %p33
      %p176 = pneg %p57
      %p177 = pneg %p54
      %p178 = pneg %p78
      %p179 = pneg %p75
      %p180 = pneg %p99
      %p181 = pneg %p96
      %p182 = pneg %p125
      %p183 = pneg %p122
      %s184 = smul.u32 8, %s15
      %p185 = scmp.lt.s32.totalorder %s184, 15
      %s186 = scalar_select %p185, %s184, 15
      %s187 = smul.addr %s186, 2
      %s188 = smul.addr %s187, 4
      %s189 = scalar_lea.vmem %s4, %s188
      %s190 = smul.u32 8, %s15
      %p191 = scmp.lt.s32.totalorder %s190, 15
      %s192 = scalar_select %p191, %s190, 15
      %s193 = smul.addr %s192, 8
      %s194 = scalar_lea.vmem %s0, %s193
      %s195 = smul.u32 8, %s15
      %s196 = smul.u32 8, %s15
      %p197 = scmp.lt.s32.totalorder %s196, 15
      %s198 = scalar_select %p197, %s196, 15
      %s199 = smul.addr %s198, 2
      %s200 = smul.addr %s199, 4
      %s201 = scalar_lea.vmem %s4, %s200
      %s202 = smul.u32 8, %s15
      %v204 = vld [vmem:[%s194] sm:$0xff]
      %v205 = vld [vmem:[%s194 + $0x8] sm:$0xff]
      %v206 = vld [vmem:[%s194 + $0x10] sm:$0xff]
      %v207 = vld [vmem:[%s194 + $0x18] sm:$0xff]
      %v208 = vld [vmem:[%s194 + $0x20] sm:$0xff]
      %v209 = vld [vmem:[%s194 + $0x28] sm:$0xff]
      %v210 = vld [vmem:[%s194 + $0x30] sm:$0xff]
      %v211 = vld [vmem:[%s194 + $0x38] sm:$0xff]
      %v212 = vld [vmem:[%s1] sm:$0x1]
      %v213 = vld [vmem:[%s2] sm:$0x1]
      %vm214 = vcmask 523264
      %v215 = vsel %vm214, %v204, 0.0
      %216 = vadd.xlane.f32.xlu0 %v215
      %v217 = vpop.xlane.xlu0 %216
      %v218 = vsel %vm214, %v205, 0.0
      %219 = vadd.xlane.f32.xlu0 %v218
      %v220 = vpop.xlane.xlu0 %219
      %v221 = vsel %vm214, %v206, 0.0
      %222 = vadd.xlane.f32.xlu0 %v221
      %v223 = vpop.xlane.xlu0 %222
      %v224 = vsel %vm214, %v207, 0.0
      %225 = vadd.xlane.f32.xlu0 %v224
      %v226 = vpop.xlane.xlu0 %225
      %v227 = vsel %vm214, %v208, 0.0
      %228 = vadd.xlane.f32.xlu0 %v227
      %v229 = vpop.xlane.xlu0 %228
      %v230 = vsel %vm214, %v209, 0.0
      %231 = vadd.xlane.f32.xlu0 %v230
      %v232 = vpop.xlane.xlu0 %231
      %v233 = vsel %vm214, %v210, 0.0
      %234 = vadd.xlane.f32.xlu0 %v233
      %v235 = vpop.xlane.xlu0 %234
      %v236 = vsel %vm214, %v211, 0.0
      %237 = vadd.xlane.f32.xlu0 %v236
      %v238 = vpop.xlane.xlu0 %237
      %v239 = vrcp.pop 64.0
      %v240 = vmul.f32 %v217, %v239
      %v241 = vmul.f32 %v220, %v239
      %v242 = vmul.f32 %v223, %v239
      %v243 = vmul.f32 %v226, %v239
      %v244 = vmul.f32 %v229, %v239
      %v245 = vmul.f32 %v232, %v239
      %v246 = vmul.f32 %v235, %v239
      %v247 = vmul.f32 %v238, %v239
      %v248 = vsub.f32 %v204, %v240
      %v249 = vsub.f32 %v205, %v241
      %v250 = vsub.f32 %v206, %v242
      %v251 = vsub.f32 %v207, %v243
      %v252 = vsub.f32 %v208, %v244
      %v253 = vsub.f32 %v209, %v245
      %v254 = vsub.f32 %v210, %v246
      %v255 = vsub.f32 %v211, %v247
      %v256 = vmul.f32 %v248, %v248
      %v257 = vmul.f32 %v249, %v249
      %v258 = vmul.f32 %v250, %v250
      %v259 = vmul.f32 %v251, %v251
      %v260 = vmul.f32 %v252, %v252
      %v261 = vmul.f32 %v253, %v253
      %v262 = vmul.f32 %v254, %v254
      %v263 = vmul.f32 %v255, %v255
      %v264 = vsel %vm214, %v256, 0.0
      %265 = vadd.xlane.f32.xlu0 %v264
      %v266 = vpop.xlane.xlu0 %265
      %v267 = vsel %vm214, %v257, 0.0
      %268 = vadd.xlane.f32.xlu0 %v267
      %v269 = vpop.xlane.xlu0 %268
      %v270 = vsel %vm214, %v258, 0.0
      %271 = vadd.xlane.f32.xlu0 %v270
      %v272 = vpop.xlane.xlu0 %271
      %v273 = vsel %vm214, %v259, 0.0
      %274 = vadd.xlane.f32.xlu0 %v273
      %v275 = vpop.xlane.xlu0 %274
      %v276 = vsel %vm214, %v260, 0.0
      %277 = vadd.xlane.f32.xlu0 %v276
      %v278 = vpop.xlane.xlu0 %277
      %v279 = vsel %vm214, %v261, 0.0
      %280 = vadd.xlane.f32.xlu0 %v279
      %v281 = vpop.xlane.xlu0 %280
      %v282 = vsel %vm214, %v262, 0.0
      %283 = vadd.xlane.f32.xlu0 %v282
      %v284 = vpop.xlane.xlu0 %283
      %v285 = vsel %vm214, %v263, 0.0
      %286 = vadd.xlane.f32.xlu0 %v285
      %v287 = vpop.xlane.xlu0 %286
      %v288 = vmul.f32 %v266, %v239
      %v289 = vmul.f32 %v269, %v239
      %v290 = vmul.f32 %v272, %v239
      %v291 = vmul.f32 %v275, %v239
      %v292 = vmul.f32 %v278, %v239
      %v293 = vmul.f32 %v281, %v239
      %v294 = vmul.f32 %v284, %v239
      %v295 = vmul.f32 %v287, %v239
      %v296 = vadd.f32 %v288, 1e-05
      %v297 = vadd.f32 %v289, 1e-05
      %v298 = vadd.f32 %v290, 1e-05
      %v299 = vadd.f32 %v291, 1e-05
      %v300 = vadd.f32 %v292, 1e-05
      %v301 = vadd.f32 %v293, 1e-05
      %v302 = vadd.f32 %v294, 1e-05
      %v303 = vadd.f32 %v295, 1e-05
      %v304 = vrsqrt.pop %v296
      %v305 = vmul.f32 %v296, %v304
      %vm306 = vcmp.eq.f32.partialorder %v296, inf
      %v307 = vsel %vm306, %v296, %v305
      %vm308 = vcmp.eq.f32.partialorder %v296, 0.0
      %v309 = vand.u32 %v296, 2147483648
      %v310 = vsel %vm308, %v309, %v307
      %v311 = vrsqrt.pop %v297
      %v312 = vmul.f32 %v297, %v311
      %vm313 = vcmp.eq.f32.partialorder %v297, inf
      %v314 = vsel %vm313, %v297, %v312
      %vm315 = vcmp.eq.f32.partialorder %v297, 0.0
      %v316 = vand.u32 %v297, 2147483648
      %v317 = vsel %vm315, %v316, %v314
      %v318 = vrsqrt.pop %v298
      %v319 = vmul.f32 %v298, %v318
      %vm320 = vcmp.eq.f32.partialorder %v298, inf
      %v321 = vsel %vm320, %v298, %v319
      %vm322 = vcmp.eq.f32.partialorder %v298, 0.0
      %v323 = vand.u32 %v298, 2147483648
      %v324 = vsel %vm322, %v323, %v321
      %v325 = vrsqrt.pop %v299
      %v326 = vmul.f32 %v299, %v325
      %vm327 = vcmp.eq.f32.partialorder %v299, inf
      %v328 = vsel %vm327, %v299, %v326
      %vm329 = vcmp.eq.f32.partialorder %v299, 0.0
      %v330 = vand.u32 %v299, 2147483648
      %v331 = vsel %vm329, %v330, %v328
      %v332 = vrsqrt.pop %v300
      %v333 = vmul.f32 %v300, %v332
      %vm334 = vcmp.eq.f32.partialorder %v300, inf
      %v335 = vsel %vm334, %v300, %v333
      %vm336 = vcmp.eq.f32.partialorder %v300, 0.0
      %v337 = vand.u32 %v300, 2147483648
      %v338 = vsel %vm336, %v337, %v335
      %v339 = vrsqrt.pop %v301
      %v340 = vmul.f32 %v301, %v339
      %vm341 = vcmp.eq.f32.partialorder %v301, inf
      %v342 = vsel %vm341, %v301, %v340
      %vm343 = vcmp.eq.f32.partialorder %v301, 0.0
      %v344 = vand.u32 %v301, 2147483648
      %v345 = vsel %vm343, %v344, %v342
      %v346 = vrsqrt.pop %v302
      %v347 = vmul.f32 %v302, %v346
      %vm348 = vcmp.eq.f32.partialorder %v302, inf
      %v349 = vsel %vm348, %v302, %v347
      %vm350 = vcmp.eq.f32.partialorder %v302, 0.0
      %v351 = vand.u32 %v302, 2147483648
      %v352 = vsel %vm350, %v351, %v349
      %v353 = vrsqrt.pop %v303
      %v354 = vmul.f32 %v303, %v353
      %vm355 = vcmp.eq.f32.partialorder %v303, inf
      %v356 = vsel %vm355, %v303, %v354
      %vm357 = vcmp.eq.f32.partialorder %v303, 0.0
      %v358 = vand.u32 %v303, 2147483648
      %v359 = vsel %vm357, %v358, %v356
      %v360 = vrcp.pop %v310
      %v361 = vmul.f32 %v248, %v360
      %v362 = vrcp.pop %v317
      %v363 = vmul.f32 %v249, %v362
      %v364 = vrcp.pop %v324
      %v365 = vmul.f32 %v250, %v364
      %v366 = vrcp.pop %v331
      %v367 = vmul.f32 %v251, %v366
      %v368 = vrcp.pop %v338
      %v369 = vmul.f32 %v252, %v368
      %v370 = vrcp.pop %v345
      %v371 = vmul.f32 %v253, %v370
      %v372 = vrcp.pop %v352
      %v373 = vmul.f32 %v254, %v372
      %v374 = vrcp.pop %v359
      %v375 = vmul.f32 %v255, %v374
      %v377 = vlaneseq
      %v378 = vshrl.u32 %v377, 7
      %v379 = vsub.s32 0, %v378
      %v380 = vrot.slane %v212, %v379
      %v382 = vmul.f32 %v361, %v380
      %v383 = vmul.f32 %v363, %v380
      %v384 = vmul.f32 %v365, %v380
      %v385 = vmul.f32 %v367, %v380
      %v386 = vmul.f32 %v369, %v380
      %v387 = vmul.f32 %v371, %v380
      %v388 = vmul.f32 %v373, %v380
      %v389 = vmul.f32 %v375, %v380
      %v391 = vlaneseq
      %v392 = vshrl.u32 %v391, 7
      %v393 = vsub.s32 0, %v392
      %v394 = vrot.slane %v213, %v393
      %v396 = vadd.f32 %v382, %v394
      %v397 = vadd.f32 %v383, %v394
      %v398 = vadd.f32 %v384, %v394
      %v399 = vadd.f32 %v385, %v394
      %v400 = vadd.f32 %v386, %v394
      %v401 = vadd.f32 %v387, %v394
      %v402 = vadd.f32 %v388, %v394
      %v403 = vadd.f32 %v389, %v394
      %v404 = vpack.c.bf16 %v397, %v396
      %v405 = vpack.c.bf16 %v399, %v398
      %v406 = vpack.c.bf16 %v401, %v400
      %v407 = vpack.c.bf16 %v403, %v402
      %v408 = vld [vmem:[%s3] sm:$0xff]
      %v409 = vld [vmem:[%s3 + $0x8] sm:$0xff]
      %v410 = vld [vmem:[%s3 + $0x10] sm:$0xff]
      %v411 = vld [vmem:[%s3 + $0x18] sm:$0xff]
      %v412 = vld [vmem:[%s3 + $0x20] sm:$0xff]
      %v413 = vld [vmem:[%s3 + $0x28] sm:$0xff]
      %v414 = vld [vmem:[%s3 + $0x30] sm:$0xff]
      %v415 = vld [vmem:[%s3 + $0x38] sm:$0xff]
      %v424 = vunpack.c.l.b16 %v408
      %v425 = vunpack.c.h.b16 %v408
      %v426 = vunpack.c.l.b16 %v409
      %v427 = vunpack.c.h.b16 %v409
      %v428 = vunpack.c.l.b16 %v410
      %v429 = vunpack.c.h.b16 %v410
      %v430 = vunpack.c.l.b16 %v411
      %v431 = vunpack.c.h.b16 %v411
      %v432 = vunpack.c.l.b16 %v412
      %v433 = vunpack.c.h.b16 %v412
      %v434 = vunpack.c.l.b16 %v413
      %v435 = vunpack.c.h.b16 %v413
      %v436 = vunpack.c.l.b16 %v414
      %v437 = vunpack.c.h.b16 %v414
      %v438 = vunpack.c.l.b16 %v415
      %v439 = vunpack.c.h.b16 %v415
      %v440 = vpack.c.b16 %v426, %v424
      %v441 = vpack.c.b16 %v427, %v425
      %v442 = vpack.c.b16 %v430, %v428
      %v443 = vpack.c.b16 %v431, %v429
      %v444 = vpack.c.b16 %v434, %v432
      %v445 = vpack.c.b16 %v435, %v433
      %v446 = vpack.c.b16 %v438, %v436
      %v447 = vpack.c.b16 %v439, %v437
      %v457 = vsel %vm214, %v404, 0
      %v460 = vsel %vm214, %v405, 0
      %v463 = vsel %vm214, %v406, 0
      %v466 = vsel %vm214, %v407, 0
      %468 = vmatprep.subr.bf16.mxu0 %v441
      %469 = vmatpush1.bf16.msra.mxu0 %v440
      %470 = vmatprep.subr.bf16.mxu0 %v443
      %471 = vmatpush1.bf16.msra.mxu0 %v442
      %472 = vmatprep.subr.bf16.mxu0 %v445
      %473 = vmatpush1.bf16.msra.mxu0 %v444
      %474 = vmatprep.subr.bf16.mxu0 %v447
      %475 = vmatpush1.bf16.msra.mxu0 %v446
      %476 = vmatprep.subr.bf16.mxu0 0
      %477 = vmatpush1.bf16.msra.mxu0 0
      %478 = vmatprep.subr.bf16.mxu0 0
      %479 = vmatpush1.bf16.msra.mxu0 0
      %480 = vmatprep.subr.bf16.mxu0 0
      %481 = vmatpush1.bf16.msra.mxu0 0
      %482 = vmatprep.subr.bf16.mxu0 0
      %483 = vmatpush1.bf16.msra.mxu0 0
      %484 = vmatprep.subr.bf16.mxu0 0
      %485 = vmatpush1.bf16.msra.mxu0 0
      %486 = vmatprep.subr.bf16.mxu0 0
      %487 = vmatpush1.bf16.msra.mxu0 0
      %488 = vmatprep.subr.bf16.mxu0 0
      %489 = vmatpush1.bf16.msra.mxu0 0
      %490 = vmatprep.subr.bf16.mxu0 0
      %491 = vmatpush1.bf16.msra.mxu0 0
      %492 = vmatprep.subr.bf16.mxu0 0
      %493 = vmatpush1.bf16.msra.mxu0 0
      %494 = vmatprep.subr.bf16.mxu0 0
      %495 = vmatpush1.bf16.msra.mxu0 0
      %496 = vmatprep.subr.bf16.mxu0 0
      %497 = vmatpush1.bf16.msra.mxu0 0
      %498 = vmatprep.subr.bf16.mxu0 0
      %499 = vmatpush1.bf16.msra.mxu0 0
      %500 = vmatprep.mubr.bf16.mxu0 0
      %501 = vmatmul.mubr.bf16.gmra.mrb[0].mxu0 %v457
      %v502 = vpop.f32.mrb[0].mxu0
      %v503 = vadd.f32 0.0, %v502
      %v504 = vpop.f32.mrb[0].mxu0
      %v505 = vadd.f32 0.0, %v504
      %v506 = vpop.f32.mrb[0].mxu0
      %v507 = vadd.f32 0.0, %v506
      %v508 = vpop.f32.mrb[0].mxu0
      %v509 = vadd.f32 0.0, %v508
      %510 = vmatprep.mubr.bf16.mxu0 0
      %511 = vmatmul.mubr.bf16.gmra.mrb[0].mxu0 %v460
      %v512 = vpop.f32.mrb[0].mxu0
      %v513 = vadd.f32 0.0, %v512
      %v514 = vpop.f32.mrb[0].mxu0
      %v515 = vadd.f32 0.0, %v514
      %v516 = vpop.f32.mrb[0].mxu0
      %v517 = vadd.f32 0.0, %v516
      %v518 = vpop.f32.mrb[0].mxu0
      %v519 = vadd.f32 0.0, %v518
      %520 = vmatprep.mubr.bf16.mxu0 0
      %521 = vmatmul.mubr.bf16.gmra.mrb[0].mxu0 %v463
      %v522 = vpop.f32.mrb[0].mxu0
      %v523 = vadd.f32 0.0, %v522
      %v524 = vpop.f32.mrb[0].mxu0
      %v525 = vadd.f32 0.0, %v524
      %v526 = vpop.f32.mrb[0].mxu0
      %v527 = vadd.f32 0.0, %v526
      %v528 = vpop.f32.mrb[0].mxu0
      %v529 = vadd.f32 0.0, %v528
      %530 = vmatprep.mubr.bf16.mxu0 0
      %531 = vmatmul.mubr.bf16.gmra.mrb[0].mxu0 %v466
      %v532 = vpop.f32.mrb[0].mxu0
      %v533 = vadd.f32 0.0, %v532
      %v534 = vpop.f32.mrb[0].mxu0
      %v535 = vadd.f32 0.0, %v534
      %v536 = vpop.f32.mrb[0].mxu0
      %v537 = vadd.f32 0.0, %v536
      %v538 = vpop.f32.mrb[0].mxu0
      %v539 = vadd.f32 0.0, %v538
      %540 = vdwg.mxu0
      %v541 = vpack.c.bf16 %v507, %v503
      %v542 = vpack.c.bf16 %v509, %v505
      %v543 = vpack.c.bf16 %v517, %v513
      %v544 = vpack.c.bf16 %v519, %v515
      %v545 = vpack.c.bf16 %v527, %v523
      %v546 = vpack.c.bf16 %v529, %v525
      %v547 = vpack.c.bf16 %v537, %v533
      %v548 = vpack.c.bf16 %v539, %v535
      %v557 = vunpack.c.l.b16 %v541
      %v558 = vunpack.c.l.b16 %v542
      %v559 = vunpack.c.h.b16 %v541
      %v560 = vunpack.c.h.b16 %v542
      %v561 = vunpack.c.l.b16 %v543
      %v562 = vunpack.c.l.b16 %v544
      %v563 = vunpack.c.h.b16 %v543
      %v564 = vunpack.c.h.b16 %v544
      %v565 = vunpack.c.l.b16 %v545
      %v566 = vunpack.c.l.b16 %v546
      %v567 = vunpack.c.h.b16 %v545
      %v568 = vunpack.c.h.b16 %v546
      %v569 = vunpack.c.l.b16 %v547
      %v570 = vunpack.c.l.b16 %v548
      %v571 = vunpack.c.h.b16 %v547
      %v572 = vunpack.c.h.b16 %v548
      %v573 = vpack.c.b16 %v558, %v557
      %v574 = vpack.c.b16 %v560, %v559
      %v575 = vpack.c.b16 %v562, %v561
      %v576 = vpack.c.b16 %v564, %v563
      %v577 = vpack.c.b16 %v566, %v565
      %v578 = vpack.c.b16 %v568, %v567
      %v579 = vpack.c.b16 %v570, %v569
      %v580 = vpack.c.b16 %v572, %v571
      %vm589 = vcmask 1043456
      %vm590 = vcmask 523268
      %vm591 = vmor %vm590, %vm589
      %592 = vst.msk [vmem:[%s201] sm:$0xff] %vm591, %v573
      %593 = vst.msk [vmem:[%s201 + $0x8] sm:$0xff] %vm591, %v574
      %594 = vst.msk [vmem:[%s201 + $0x10] sm:$0xff] %vm591, %v575
      %595 = vst.msk [vmem:[%s201 + $0x18] sm:$0xff] %vm591, %v576
      %596 = vst.msk [vmem:[%s201 + $0x20] sm:$0xff] %vm591, %v577
      %597 = vst.msk [vmem:[%s201 + $0x28] sm:$0xff] %vm591, %v578
      %598 = vst.msk [vmem:[%s201 + $0x30] sm:$0xff] %vm591, %v579
      %599 = vst.msk [vmem:[%s201 + $0x38] sm:$0xff] %vm591, %v580
      %s600 = smul.u32 8, %s15
      %p601 = scmp.lt.s32.totalorder %s600, 15
      %s602 = scalar_select %p601, %s600, 15
      %s603 = smul.addr %s602, 2
      %s604 = smul.addr %s603, 4
      %s605 = scalar_lea.vmem %s4, %s604
      // Predicated region
      $region37: #{transformer_forward.12} parent=35 // pred_check
        %p606 = pneg %p122
      $region38: #{transformer_forward.12} parent=35 // pred_check_branch
        %608 = sbr.rel (%p606) target = $region40
      $region39: #{transformer_forward.12} parent=35 // pred_region
        %s609 = smul.u32 8, %s15
      $region40: #{transformer_forward.12} parent=35 // pred_fallthru
        _
    $region36: #{transformer_forward.12} parent=5 // pred_fallthru
      _
    %p610 = scmp.le.s32.totalorder 2, %s10
    // Predicated region
    $region41: #{transformer_forward.12} parent=5 // pred_check
      %p611 = pneg %p610
    $region42: #{transformer_forward.12} parent=5 // pred_check_branch
      %613 = sbr.rel (%p611) target = $region44
    $region43: #{transformer_forward.12} parent=5 // pred_region
      %s614 = ssub.s32 %s10, 2
      // Predicated region
      $region45: #{transformer_forward.12} parent=43 // pred_check
        %p615 = pneg %p128
      $region46: #{transformer_forward.12} parent=43 // pred_check_branch
        %617 = sbr.rel (%p615) target = $region48
      $region47: #{transformer_forward.12} parent=43 // pred_region
        %s618 = smul.u32 8, %s16
        %p619 = scmp.lt.s32.totalorder %s618, 15
        %s620 = scalar_select %p619, %s618, 15
        %s621 = smul.addr %s620, 2
        %s622 = smul.addr %s621, 4
        %s623 = scalar_lea.vmem %s4, %s622
      $region48: #{transformer_forward.12} parent=43 // pred_fallthru
        _
    $region44: #{transformer_forward.12} parent=5 // pred_fallthru
      _
  $region6: #{transformer_forward.12} parent=0 // loop_footer
    %s14 = sadd.s32 1, %s10
  $region7: #{transformer_forward.12} parent=0 // loop_footer_branch
    %9 = sbr.rel target = $region3
  $region8: #{transformer_forward.12} parent=0 // loop_exit
    _

// kernel: transformer_forward.13
$region0: #{transformer_forward.13}
  #allocation0 [shape = 'u32[]', space=smem, size = 0x4, offset = 0x4, fixed_abs, tag = 'smem constant byte address 0x4 - core index']
  #allocation1 [shape = 'u32[144,128]{1,0:T(1,128)}', space=vmem, size = 0x12000, scoped, tag = 'internal scratch']
  %s0 = inlined_call_operand.vmem [shape: bf16[8,6,16,32], index: 0, kind: input, shape index: {}]
  %s1 = inlined_call_operand.vmem [shape: f32[16,16], index: 1, kind: input, shape index: {}]
  %s2 = inlined_call_operand.vmem [shape: bf16[2,32,64], index: 2, kind: input, shape index: {}]
  %s3 = inlined_call_operand.vmem [shape: f32[1,64], index: 3, kind: input, shape index: {}]
  %s4 = inlined_call_operand.vmem [shape: f32[8,16,64], index: 4, kind: output, shape index: {}]
  %s5 = sld [smem:[#allocation0]]
  $region49: #{transformer_forward.13} parent=0
    _
  %s7 = ssub.s32 1, %s5
  %s8 = scalar_select 0, %s7, %s5
  loop: start=0, step=1, limit=4
  $region2: #{transformer_forward.13} parent=0 // loop_pre_header
    _
  $region3: #{transformer_forward.13} parent=0 // loop_header
    %s10 = sphi 0, %s14
    %p11 = scmp.ge.s32.totalorder %s10, 4
    %s20 = sphi 0, %s22
    %s23 = sphi 0, %s20
    %s24 = sphi 0, %s23
    %s40 = sphi 0, %s24
    %s44 = sphi 0, %s44
    %s46 = sphi 0, %s44
    %s47 = sphi 0, %s46
    %s61 = sphi 0, %s47
    %s65 = sphi 0, %s65
    %s67 = sphi 0, %s65
    %s68 = sphi 0, %s67
    %s82 = sphi 0, %s68
    %s86 = sphi 0, %s86
    %s88 = sphi 0, %s86
    %s89 = sphi 0, %s88
    %s103 = sphi 0, %s89
    %s109 = sphi 0, %s111
    %s112 = sphi 0, %s109
    %s113 = sphi 0, %s112
    %s129 = sphi 0, %s113
  $region4: #{transformer_forward.13} parent=0 // loop_header_branch
    %13 = sbr.rel (%p11) target = $region8
  $region5: #{transformer_forward.13} parent=0 // loop_body
    %s15 = ssub.s32 %s10, 1
    %s16 = ssub.s32 %s10, 2
    %s17 = sadd.s32 %s10, 1
    %s18 = ssub.s32 %s10, %s17
    %p19 = scmp.eq.s32.totalorder %s18, 0
    %s21 = sadd.s32 %s20, 1
    %s22 = scalar_select %p19, %s20, %s21
    %p25 = pneg %p19
    %p26 = scmp.eq.s32.totalorder %s10, 1
    %p27 = por %p25, %p26
    %p28 = scmp.ne.s32.totalorder %s20, %s23
    %p29 = scmp.eq.s32.totalorder %s10, 0
    %p30 = por %p28, %p29
    %p31 = scmp.ne.s32.totalorder %s20, %s23
    %p32 = scmp.eq.s32.totalorder %s15, 1
    %p33 = por %p31, %p32
    %p34 = scmp.ne.s32.totalorder %s23, %s24
    %p35 = scmp.eq.s32.totalorder %s15, 0
    %p36 = por %p34, %p35
    %p37 = scmp.ne.s32.totalorder %s23, %s24
    %p38 = scmp.eq.s32.totalorder %s16, 1
    %p39 = por %p37, %p38
    %p41 = scmp.ne.s32.totalorder %s24, %s40
    %p42 = scmp.eq.s32.totalorder %s16, 0
    %p43 = por %p41, %p42
    %s45 = sadd.s32 %s44, 1
    %p48 = scmp.eq.s32.totalorder %s10, 1
    %p49 = scmp.ne.s32.totalorder %s44, %s46
    %p50 = scmp.eq.s32.totalorder %s10, 0
    %p51 = por %p49, %p50
    %p52 = scmp.ne.s32.totalorder %s44, %s46
    %p53 = scmp.eq.s32.totalorder %s15, 1
    %p54 = por %p52, %p53
    %p55 = scmp.ne.s32.totalorder %s46, %s47
    %p56 = scmp.eq.s32.totalorder %s15, 0
    %p57 = por %p55, %p56
    %p58 = scmp.ne.s32.totalorder %s46, %s47
    %p59 = scmp.eq.s32.totalorder %s16, 1
    %p60 = por %p58, %p59
    %p62 = scmp.ne.s32.totalorder %s47, %s61
    %p63 = scmp.eq.s32.totalorder %s16, 0
    %p64 = por %p62, %p63
    %s66 = sadd.s32 %s65, 1
    %p69 = scmp.eq.s32.totalorder %s10, 1
    %p70 = scmp.ne.s32.totalorder %s65, %s67
    %p71 = scmp.eq.s32.totalorder %s10, 0
    %p72 = por %p70, %p71
    %p73 = scmp.ne.s32.totalorder %s65, %s67
    %p74 = scmp.eq.s32.totalorder %s15, 1
    %p75 = por %p73, %p74
    %p76 = scmp.ne.s32.totalorder %s67, %s68
    %p77 = scmp.eq.s32.totalorder %s15, 0
    %p78 = por %p76, %p77
    %p79 = scmp.ne.s32.totalorder %s67, %s68
    %p80 = scmp.eq.s32.totalorder %s16, 1
    %p81 = por %p79, %p80
    %p83 = scmp.ne.s32.totalorder %s68, %s82
    %p84 = scmp.eq.s32.totalorder %s16, 0
    %p85 = por %p83, %p84
    %s87 = sadd.s32 %s86, 1
    %p90 = scmp.eq.s32.totalorder %s10, 1
    %p91 = scmp.ne.s32.totalorder %s86, %s88
    %p92 = scmp.eq.s32.totalorder %s10, 0
    %p93 = por %p91, %p92
    %p94 = scmp.ne.s32.totalorder %s86, %s88
    %p95 = scmp.eq.s32.totalorder %s15, 1
    %p96 = por %p94, %p95
    %p97 = scmp.ne.s32.totalorder %s88, %s89
    %p98 = scmp.eq.s32.totalorder %s15, 0
    %p99 = por %p97, %p98
    %p100 = scmp.ne.s32.totalorder %s88, %s89
    %p101 = scmp.eq.s32.totalorder %s16, 1
    %p102 = por %p100, %p101
    %p104 = scmp.ne.s32.totalorder %s89, %s103
    %p105 = scmp.eq.s32.totalorder %s16, 0
    %p106 = por %p104, %p105
    %s107 = ssub.s32 %s10, %s17
    %p108 = scmp.eq.s32.totalorder %s107, 0
    %s110 = sadd.s32 %s109, 1
    %s111 = scalar_select %p108, %s109, %s110
    %p114 = pneg %p108
    %p115 = scmp.eq.s32.totalorder %s10, 1
    %p116 = por %p114, %p115
    %p117 = scmp.ne.s32.totalorder %s109, %s112
    %p118 = scmp.eq.s32.totalorder %s10, 0
    %p119 = por %p117, %p118
    %p120 = scmp.ne.s32.totalorder %s109, %s112
    %p121 = scmp.eq.s32.totalorder %s15, 1
    %p122 = por %p120, %p121
    %p123 = scmp.ne.s32.totalorder %s112, %s113
    %p124 = scmp.eq.s32.totalorder %s15, 0
    %p125 = por %p123, %p124
    %p126 = scmp.ne.s32.totalorder %s112, %s113
    %p127 = scmp.eq.s32.totalorder %s16, 1
    %p128 = por %p126, %p127
    %p130 = scmp.ne.s32.totalorder %s113, %s129
    %p131 = scmp.eq.s32.totalorder %s16, 0
    %p132 = por %p130, %p131
    %p133 = scmp.le.s32.totalorder 1, %s10
    %p134 = scmp.lt.s32.totalorder %s10, 3
    %p135 = pnand %p133, %p134
    %p136 = pneg %p135
    // Predicated region
    $region9: #{transformer_forward.13} parent=5 // pred_check
      _
    $region10: #{transformer_forward.13} parent=5 // pred_check_branch
      %138 = sbr.rel (%p135) target = $region12
    $region11: #{transformer_forward.13} parent=5 // pred_region
      %s139 = ssub.s32 %s10, 1
      // Predicated region
      $region13: #{transformer_forward.13} parent=11 // pred_check
        %p140 = pneg %p57
      $region14: #{transformer_forward.13} parent=11 // pred_check_branch
        %142 = sbr.rel (%p140) target = $region16
      $region15: #{transformer_forward.13} parent=11 // pred_region
        _
      $region16: #{transformer_forward.13} parent=11 // pred_fallthru
        _
      // Predicated region
      $region17: #{transformer_forward.13} parent=11 // pred_check
        %p143 = pneg %p78
      $region18: #{transformer_forward.13} parent=11 // pred_check_branch
        %145 = sbr.rel (%p143) target = $region20
      $region19: #{transformer_forward.13} parent=11 // pred_region
        _
      $region20: #{transformer_forward.13} parent=11 // pred_fallthru
        _
      // Predicated region
      $region21: #{transformer_forward.13} parent=11 // pred_check
        %p146 = pneg %p99
      $region22: #{transformer_forward.13} parent=11 // pred_check_branch
        %148 = sbr.rel (%p146) target = $region24
      $region23: #{transformer_forward.13} parent=11 // pred_region
        _
      $region24: #{transformer_forward.13} parent=11 // pred_fallthru
        _
    $region12: #{transformer_forward.13} parent=5 // pred_fallthru
      _
    %p149 = scmp.lt.s32.totalorder %s10, 2
    // Predicated region
    $region25: #{transformer_forward.13} parent=5 // pred_check
      %p150 = pneg %p149
    $region26: #{transformer_forward.13} parent=5 // pred_check_branch
      %152 = sbr.rel (%p150) target = $region28
    $region27: #{transformer_forward.13} parent=5 // pred_region
      // Predicated region
      $region29: #{transformer_forward.13} parent=27 // pred_check
        %p153 = pneg %p30
      $region30: #{transformer_forward.13} parent=27 // pred_check_branch
        %155 = sbr.rel (%p153) target = $region32
      $region31: #{transformer_forward.13} parent=27 // pred_region
        %s156 = smul.u32 4, %s10
        %p157 = scmp.lt.s32.totalorder %s156, 7
        %s158 = scalar_select %p157, %s156, 7
        %s159 = smul.addr %s158, 12
        %s160 = smul.addr %s159, 4
        %s161 = scalar_lea.vmem %s0, %s160
        %s162 = smul.u32 4, %s10
      $region32: #{transformer_forward.13} parent=27 // pred_fallthru
        _
    $region28: #{transformer_forward.13} parent=5 // pred_fallthru
      _
    %p163 = scmp.le.s32.totalorder 1, %s10
    %p164 = scmp.lt.s32.totalorder %s10, 3
    %p165 = pnand %p163, %p164
    %p166 = pneg %p165
    // Predicated region
    $region33: #{transformer_forward.13} parent=5 // pred_check
      _
    $region34: #{transformer_forward.13} parent=5 // pred_check_branch
      %168 = sbr.rel (%p165) target = $region36
    $region35: #{transformer_forward.13} parent=5 // pred_region
      %s169 = ssub.s32 %s10, 1
      %s170 = smul.u32 4, %s15
      %p171 = scmp.lt.s32.totalorder %s170, 7
      %s172 = scalar_select %p171, %s170, 7
      %s173 = smul.addr %s172, 12
      %s174 = smul.addr %s173, 4
      %s175 = scalar_lea.vmem %s0, %s174
      %p176 = pneg %p36
      %p177 = pneg %p33
      %p178 = pneg %p57
      %p179 = pneg %p54
      %p180 = pneg %p78
      %p181 = pneg %p75
      %p182 = pneg %p99
      %p183 = pneg %p96
      %p184 = pneg %p125
      %p185 = pneg %p122
      %s186 = smul.u32 4, %s15
      %p187 = scmp.lt.s32.totalorder %s186, 7
      %s188 = scalar_select %p187, %s186, 7
      %s189 = smul.addr %s188, 2
      %s190 = smul.addr %s189, 8
      %s191 = scalar_lea.vmem %s4, %s190
      %s192 = smul.u32 4, %s15
      %p193 = scmp.lt.s32.totalorder %s192, 7
      %s194 = scalar_select %p193, %s192, 7
      %s195 = smul.addr %s194, 12
      %s196 = smul.addr %s195, 4
      %s197 = scalar_lea.vmem %s0, %s196
      %s198 = smul.u32 4, %s15
      %s199 = smul.u32 4, %s15
      %p200 = scmp.lt.s32.totalorder %s199, 7
      %s201 = scalar_select %p200, %s199, 7
      %s202 = smul.addr %s201, 2
      %s203 = smul.addr %s202, 8
      %s204 = scalar_lea.vmem %s4, %s203
      %s205 = smul.u32 4, %s15
      %v207 = vld [vmem:[%s197] sm:$0xf]
      %v208 = vld [vmem:[%s197 + $0x4] sm:$0xf]
      %v209 = vld [vmem:[%s197 + $0x8] sm:$0xf]
      %v210 = vld [vmem:[%s197 + $0xc] sm:$0xf]
      %v211 = vld [vmem:[%s197 + $0x10] sm:$0xf]
      %v212 = vld [vmem:[%s197 + $0x14] sm:$0xf]
      %v213 = vld [vmem:[%s197 + $0x18] sm:$0xf]
      %v214 = vld [vmem:[%s197 + $0x1c] sm:$0xf]
      %v215 = vld [vmem:[%s197 + $0x20] sm:$0xf]
      %v216 = vld [vmem:[%s197 + $0x24] sm:$0xf]
      %v217 = vld [vmem:[%s197 + $0x28] sm:$0xf]
      %v218 = vld [vmem:[%s197 + $0x2c] sm:$0xf]
      %v219 = vld [vmem:[%s197 + $0x30] sm:$0xf]
      %v220 = vld [vmem:[%s197 + $0x34] sm:$0xf]
      %v221 = vld [vmem:[%s197 + $0x38] sm:$0xf]
      %v222 = vld [vmem:[%s197 + $0x3c] sm:$0xf]
      %v223 = vld [vmem:[%s197 + $0x40] sm:$0xf]
      %v224 = vld [vmem:[%s197 + $0x44] sm:$0xf]
      %v225 = vld [vmem:[%s197 + $0x48] sm:$0xf]
      %v226 = vld [vmem:[%s197 + $0x4c] sm:$0xf]
      %v227 = vld [vmem:[%s197 + $0x50] sm:$0xf]
      %v228 = vld [vmem:[%s197 + $0x54] sm:$0xf]
      %v229 = vld [vmem:[%s197 + $0x58] sm:$0xf]
      %v230 = vld [vmem:[%s197 + $0x5c] sm:$0xf]
      %v231 = vld [vmem:[%s197 + $0x60] sm:$0xf]
      %v232 = vld [vmem:[%s197 + $0x64] sm:$0xf]
      %v233 = vld [vmem:[%s197 + $0x68] sm:$0xf]
      %v234 = vld [vmem:[%s197 + $0x6c] sm:$0xf]
      %v235 = vld [vmem:[%s197 + $0x70] sm:$0xf]
      %v236 = vld [vmem:[%s197 + $0x74] sm:$0xf]
      %v237 = vld [vmem:[%s197 + $0x78] sm:$0xf]
      %v238 = vld [vmem:[%s197 + $0x7c] sm:$0xf]
      %v239 = vld [vmem:[%s197 + $0x80] sm:$0xf]
      %v240 = vld [vmem:[%s197 + $0x84] sm:$0xf]
      %v241 = vld [vmem:[%s197 + $0x88] sm:$0xf]
      %v242 = vld [vmem:[%s197 + $0x8c] sm:$0xf]
      %v243 = vld [vmem:[%s197 + $0x90] sm:$0xf]
      %v244 = vld [vmem:[%s197 + $0x94] sm:$0xf]
      %v245 = vld [vmem:[%s197 + $0x98] sm:$0xf]
      %v246 = vld [vmem:[%s197 + $0x9c] sm:$0xf]
      %v247 = vld [vmem:[%s197 + $0xa0] sm:$0xf]
      %v248 = vld [vmem:[%s197 + $0xa4] sm:$0xf]
      %v249 = vld [vmem:[%s197 + $0xa8] sm:$0xf]
      %v250 = vld [vmem:[%s197 + $0xac] sm:$0xf]
      %v251 = vld [vmem:[%s197 + $0xb0] sm:$0xf]
      %v252 = vld [vmem:[%s197 + $0xb4] sm:$0xf]
      %v253 = vld [vmem:[%s197 + $0xb8] sm:$0xf]
      %v254 = vld [vmem:[%s197 + $0xbc] sm:$0xf]
      %v257 = vunpack.c.l.b16 %v207
      %v258 = vunpack.c.l.b16 %v208
      %v259 = vpack.c.b16 %v258, %v257
      %v262 = vunpack.c.l.b16 %v211
      %v263 = vunpack.c.l.b16 %v212
      %v264 = vpack.c.b16 %v263, %v262
      %vm265 = vcmask 261120
      %v267 = vsel %vm265, %v259, 0
      %v270 = vsel %vm265, %v264, 0
      %272 = vmatprep.subr.bf16.mxu0 0
      %273 = vmatpush1.bf16.xpose.msra.mxu0 %v270
      %274 = vmatprep.subr.bf16.mxu0 0
      %275 = vmatpush1.bf16.xpose.msra.mxu0 0
      %276 = vmatprep.subr.bf16.mxu0 0
      %277 = vmatpush1.bf16.xpose.msra.mxu0 0
      %278 = vmatprep.subr.bf16.mxu0 0
      %279 = vmatpush1.bf16.xpose.msra.mxu0 0
      %280 = vmatprep.subr.bf16.mxu0 0
      %281 = vmatpush1.bf16.xpose.msra.mxu0 0
      %282 = vmatprep.subr.bf16.mxu0 0
      %283 = vmatpush1.bf16.xpose.msra.mxu0 0
      %284 = vmatprep.subr.bf16.mxu0 0
      %285 = vmatpush1.bf16.xpose.msra.mxu0 0
      %286 = vmatprep.subr.bf16.mxu0 0
      %287 = vmatpush1.bf16.xpose.msra.mxu0 0
      %288 = vmatprep.subr.bf16.mxu0 0
      %289 = vmatpush1.bf16.xpose.msra.mxu0 0
      %290 = vmatprep.subr.bf16.mxu0 0
      %291 = vmatpush1.bf16.xpose.msra.mxu0 0
      %292 = vmatprep.subr.bf16.mxu0 0
      %293 = vmatpush1.bf16.xpose.msra.mxu0 0
      %294 = vmatprep.subr.bf16.mxu0 0
      %295 = vmatpush1.bf16.xpose.msra.mxu0 0
      %296 = vmatprep.subr.bf16.mxu0 0
      %297 = vmatpush1.bf16.xpose.msra.mxu0 0
      %298 = vmatprep.subr.bf16.mxu0 0
      %299 = vmatpush1.bf16.xpose.msra.mxu0 0
      %300 = vmatprep.subr.bf16.mxu0 0
      %301 = vmatpush1.bf16.xpose.msra.mxu0 0
      %302 = vmatprep.subr.bf16.mxu0 0
      %303 = vmatpush1.bf16.xpose.msra.mxu0 0
      %304 = vmatprep.mubr.bf16.mxu0 0
      %305 = vmatmul.mubr.bf16.gmra.mrb[0].mxu0 %v267
      %v306 = vpop.f32.mrb[0].mxu0
      %v307 = vadd.f32 0.0, %v306
      %v308 = vpop.f32.mrb[0].mxu0
      %v309 = vpop.f32.mrb[0].mxu0
      %v310 = vadd.f32 0.0, %v309
      %v311 = vpop.f32.mrb[0].mxu0
      %312 = vdwg.mxu0
      %v315 = vunpack.c.l.b16 %v209
      %v316 = vunpack.c.l.b16 %v210
      %v317 = vpack.c.b16 %v316, %v315
      %v320 = vunpack.c.l.b16 %v213
      %v321 = vunpack.c.l.b16 %v214
      %v322 = vpack.c.b16 %v321, %v320
      %v324 = vsel %vm265, %v317, 0
      %v327 = vsel %vm265, %v322, 0
      %329 = vmatprep.subr.bf16.mxu0 0
      %330 = vmatpush1.bf16.xpose.msra.mxu0 %v327
      %331 = vmatprep.subr.bf16.mxu0 0
      %332 = vmatpush1.bf16.xpose.msra.mxu0 0
      %333 = vmatprep.subr.bf16.mxu0 0
      %334 = vmatpush1.bf16.xpose.msra.mxu0 0
      %335 = vmatprep.subr.bf16.mxu0 0
      %336 = vmatpush1.bf16.xpose.msra.mxu0 0
      %337 = vmatprep.subr.bf16.mxu0 0
      %338 = vmatpush1.bf16.xpose.msra.mxu0 0
      %339 = vmatprep.subr.bf16.mxu0 0
      %340 = vmatpush1.bf16.xpose.msra.mxu0 0
      %341 = vmatprep.subr.bf16.mxu0 0
      %342 = vmatpush1.bf16.xpose.msra.mxu0 0
      %343 = vmatprep.subr.bf16.mxu0 0
      %344 = vmatpush1.bf16.xpose.msra.mxu0 0
      %345 = vmatprep.subr.bf16.mxu0 0
      %346 = vmatpush1.bf16.xpose.msra.mxu0 0
      %347 = vmatprep.subr.bf16.mxu0 0
      %348 = vmatpush1.bf16.xpose.msra.mxu0 0
      %349 = vmatprep.subr.bf16.mxu0 0
      %350 = vmatpush1.bf16.xpose.msra.mxu0 0
      %351 = vmatprep.subr.bf16.mxu0 0
      %352 = vmatpush1.bf16.xpose.msra.mxu0 0
      %353 = vmatprep.subr.bf16.mxu0 0
      %354 = vmatpush1.bf16.xpose.msra.mxu0 0
      %355 = vmatprep.subr.bf16.mxu0 0
      %356 = vmatpush1.bf16.xpose.msra.mxu0 0
      %357 = vmatprep.subr.bf16.mxu0 0
      %358 = vmatpush1.bf16.xpose.msra.mxu0 0
      %359 = vmatprep.subr.bf16.mxu0 0
      %360 = vmatpush1.bf16.xpose.msra.mxu0 0
      %361 = vmatprep.mubr.bf16.mxu0 0
      %362 = vmatmul.mubr.bf16.gmra.mrb[0].mxu0 %v324
      %v363 = vpop.f32.mrb[0].mxu0
      %v364 = vadd.f32 0.0, %v363
      %v365 = vpop.f32.mrb[0].mxu0
      %v366 = vpop.f32.mrb[0].mxu0
      %v367 = vadd.f32 0.0, %v366
      %v368 = vpop.f32.mrb[0].mxu0
      %369 = vdwg.mxu0
      %v372 = vunpack.c.l.b16 %v219
      %v373 = vunpack.c.l.b16 %v220
      %v374 = vpack.c.b16 %v373, %v372
      %v377 = vunpack.c.l.b16 %v223
      %v378 = vunpack.c.l.b16 %v224
      %v379 = vpack.c.b16 %v378, %v377
      %v381 = vsel %vm265, %v374, 0
      %v384 = vsel %vm265, %v379, 0
      %386 = vmatprep.subr.bf16.mxu0 0
      %387 = vmatpush1.bf16.xpose.msra.mxu0 %v384
      %388 = vmatprep.subr.bf16.mxu0 0
      %389 = vmatpush1.bf16.xpose.msra.mxu0 0
      %390 = vmatprep.subr.bf16.mxu0 0
      %391 = vmatpush1.bf16.xpose.msra.mxu0 0
      %392 = vmatprep.subr.bf16.mxu0 0
      %393 = vmatpush1.bf16.xpose.msra.mxu0 0
      %394 = vmatprep.subr.bf16.mxu0 0
      %395 = vmatpush1.bf16.xpose.msra.mxu0 0
      %396 = vmatprep.subr.bf16.mxu0 0
      %397 = vmatpush1.bf16.xpose.msra.mxu0 0
      %398 = vmatprep.subr.bf16.mxu0 0
      %399 = vmatpush1.bf16.xpose.msra.mxu0 0
      %400 = vmatprep.subr.bf16.mxu0 0
      %401 = vmatpush1.bf16.xpose.msra.mxu0 0
      %402 = vmatprep.subr.bf16.mxu0 0
      %403 = vmatpush1.bf16.xpose.msra.mxu0 0
      %404 = vmatprep.subr.bf16.mxu0 0
      %405 = vmatpush1.bf16.xpose.msra.mxu0 0
      %406 = vmatprep.subr.bf16.mxu0 0
      %407 = vmatpush1.bf16.xpose.msra.mxu0 0
      %408 = vmatprep.subr.bf16.mxu0 0
      %409 = vmatpush1.bf16.xpose.msra.mxu0 0
      %410 = vmatprep.subr.bf16.mxu0 0
      %411 = vmatpush1.bf16.xpose.msra.mxu0 0
      %412 = vmatprep.subr.bf16.mxu0 0
      %413 = vmatpush1.bf16.xpose.msra.mxu0 0
      %414 = vmatprep.subr.bf16.mxu0 0
      %415 = vmatpush1.bf16.xpose.msra.mxu0 0
      %416 = vmatprep.subr.bf16.mxu0 0
      %417 = vmatpush1.bf16.xpose.msra.mxu0 0
      %418 = vmatprep.mubr.bf16.mxu0 0
      %419 = vmatmul.mubr.bf16.gmra.mrb[0].mxu0 %v381
      %v420 = vpop.f32.mrb[0].mxu0
      %v421 = vadd.f32 0.0, %v420
      %v422 = vpop.f32.mrb[0].mxu0
      %v423 = vpop.f32.mrb[0].mxu0
      %v424 = vadd.f32 0.0, %v423
      %v425 = vpop.f32.mrb[0].mxu0
      %426 = vdwg.mxu0
      %v429 = vunpack.c.l.b16 %v221
      %v430 = vunpack.c.l.b16 %v222
      %v431 = vpack.c.b16 %v430, %v429
      %v434 = vunpack.c.l.b16 %v225
      %v435 = vunpack.c.l.b16 %v226
      %v436 = vpack.c.b16 %v435, %v434
      %v438 = vsel %vm265, %v431, 0
      %v441 = vsel %vm265, %v436, 0
      %443 = vmatprep.subr.bf16.mxu0 0
      %444 = vmatpush1.bf16.xpose.msra.mxu0 %v441
      %445 = vmatprep.subr.bf16.mxu0 0
      %446 = vmatpush1.bf16.xpose.msra.mxu0 0
      %447 = vmatprep.subr.bf16.mxu0 0
      %448 = vmatpush1.bf16.xpose.msra.mxu0 0
      %449 = vmatprep.subr.bf16.mxu0 0
      %450 = vmatpush1.bf16.xpose.msra.mxu0 0
      %451 = vmatprep.subr.bf16.mxu0 0
      %452 = vmatpush1.bf16.xpose.msra.mxu0 0
      %453 = vmatprep.subr.bf16.mxu0 0
      %454 = vmatpush1.bf16.xpose.msra.mxu0 0
      %455 = vmatprep.subr.bf16.mxu0 0
      %456 = vmatpush1.bf16.xpose.msra.mxu0 0
      %457 = vmatprep.subr.bf16.mxu0 0
      %458 = vmatpush1.bf16.xpose.msra.mxu0 0
      %459 = vmatprep.subr.bf16.mxu0 0
      %460 = vmatpush1.bf16.xpose.msra.mxu0 0
      %461 = vmatprep.subr.bf16.mxu0 0
      %462 = vmatpush1.bf16.xpose.msra.mxu0 0
      %463 = vmatprep.subr.bf16.mxu0 0
      %464 = vmatpush1.bf16.xpose.msra.mxu0 0
      %465 = vmatprep.subr.bf16.mxu0 0
      %466 = vmatpush1.bf16.xpose.msra.mxu0 0
      %467 = vmatprep.subr.bf16.mxu0 0
      %468 = vmatpush1.bf16.xpose.msra.mxu0 0
      %469 = vmatprep.subr.bf16.mxu0 0
      %470 = vmatpush1.bf16.xpose.msra.mxu0 0
      %471 = vmatprep.subr.bf16.mxu0 0
      %472 = vmatpush1.bf16.xpose.msra.mxu0 0
      %473 = vmatprep.subr.bf16.mxu0 0
      %474 = vmatpush1.bf16.xpose.msra.mxu0 0
      %475 = vmatprep.mubr.bf16.mxu0 0
      %476 = vmatmul.mubr.bf16.gmra.mrb[0].mxu0 %v438
      %v477 = vpop.f32.mrb[0].mxu0
      %v478 = vadd.f32 0.0, %v477
      %v479 = vpop.f32.mrb[0].mxu0
      %v480 = vpop.f32.mrb[0].mxu0
      %v481 = vadd.f32 0.0, %v480
      %v482 = vpop.f32.mrb[0].mxu0
      %483 = vdwg.mxu0
      %v486 = vunpack.c.l.b16 %v231
      %v487 = vunpack.c.l.b16 %v232
      %v488 = vpack.c.b16 %v487, %v486
      %v491 = vunpack.c.l.b16 %v235
      %v492 = vunpack.c.l.b16 %v236
      %v493 = vpack.c.b16 %v492, %v491
      %v495 = vsel %vm265, %v488, 0
      %v498 = vsel %vm265, %v493, 0
      %500 = vmatprep.subr.bf16.mxu0 0
      %501 = vmatpush1.bf16.xpose.msra.mxu0 %v498
      %502 = vmatprep.subr.bf16.mxu0 0
      %503 = vmatpush1.bf16.xpose.msra.mxu0 0
      %504 = vmatprep.subr.bf16.mxu0 0
      %505 = vmatpush1.bf16.xpose.msra.mxu0 0
      %506 = vmatprep.subr.bf16.mxu0 0
      %507 = vmatpush1.bf16.xpose.msra.mxu0 0
      %508 = vmatprep.subr.bf16.mxu0 0
      %509 = vmatpush1.bf16.xpose.msra.mxu0 0
      %510 = vmatprep.subr.bf16.mxu0 0
      %511 = vmatpush1.bf16.xpose.msra.mxu0 0
      %512 = vmatprep.subr.bf16.mxu0 0
      %513 = vmatpush1.bf16.xpose.msra.mxu0 0
      %514 = vmatprep.subr.bf16.mxu0 0
      %515 = vmatpush1.bf16.xpose.msra.mxu0 0
      %516 = vmatprep.subr.bf16.mxu0 0
      %517 = vmatpush1.bf16.xpose.msra.mxu0 0
      %518 = vmatprep.subr.bf16.mxu0 0
      %519 = vmatpush1.bf16.xpose.msra.mxu0 0
      %520 = vmatprep.subr.bf16.mxu0 0
      %521 = vmatpush1.bf16.xpose.msra.mxu0 0
      %522 = vmatprep.subr.bf16.mxu0 0
      %523 = vmatpush1.bf16.xpose.msra.mxu0 0
      %524 = vmatprep.subr.bf16.mxu0 0
      %525 = vmatpush1.bf16.xpose.msra.mxu0 0
      %526 = vmatprep.subr.bf16.mxu0 0
      %527 = vmatpush1.bf16.xpose.msra.mxu0 0
      %528 = vmatprep.subr.bf16.mxu0 0
      %529 = vmatpush1.bf16.xpose.msra.mxu0 0
      %530 = vmatprep.subr.bf16.mxu0 0
      %531 = vmatpush1.bf16.xpose.msra.mxu0 0
      %532 = vmatprep.mubr.bf16.mxu0 0
      %533 = vmatmul.mubr.bf16.gmra.mrb[0].mxu0 %v495
      %v534 = vpop.f32.mrb[0].mxu0
      %v535 = vadd.f32 0.0, %v534
      %v536 = vpop.f32.mrb[0].mxu0
      %v537 = vpop.f32.mrb[0].mxu0
      %v538 = vadd.f32 0.0, %v537
      %v539 = vpop.f32.mrb[0].mxu0
      %540 = vdwg.mxu0
      %v543 = vunpack.c.l.b16 %v233
      %v544 = vunpack.c.l.b16 %v234
      %v545 = vpack.c.b16 %v544, %v543
      %v548 = vunpack.c.l.b16 %v237
      %v549 = vunpack.c.l.b16 %v238
      %v550 = vpack.c.b16 %v549, %v548
      %v552 = vsel %vm265, %v545, 0
      %v555 = vsel %vm265, %v550, 0
      %557 = vmatprep.subr.bf16.mxu0 0
      %558 = vmatpush1.bf16.xpose.msra.mxu0 %v555
      %559 = vmatprep.subr.bf16.mxu0 0
      %560 = vmatpush1.bf16.xpose.msra.mxu0 0
      %561 = vmatprep.subr.bf16.mxu0 0
      %562 = vmatpush1.bf16.xpose.msra.mxu0 0
      %563 = vmatprep.subr.bf16.mxu0 0
      %564 = vmatpush1.bf16.xpose.msra.mxu0 0
      %565 = vmatprep.subr.bf16.mxu0 0
      %566 = vmatpush1.bf16.xpose.msra.mxu0 0
      %567 = vmatprep.subr.bf16.mxu0 0
      %568 = vmatpush1.bf16.xpose.msra.mxu0 0
      %569 = vmatprep.subr.bf16.mxu0 0
      %570 = vmatpush1.bf16.xpose.msra.mxu0 0
      %571 = vmatprep.subr.bf16.mxu0 0
      %572 = vmatpush1.bf16.xpose.msra.mxu0 0
      %573 = vmatprep.subr.bf16.mxu0 0
      %574 = vmatpush1.bf16.xpose.msra.mxu0 0
      %575 = vmatprep.subr.bf16.mxu0 0
      %576 = vmatpush1.bf16.xpose.msra.mxu0 0
      %577 = vmatprep.subr.bf16.mxu0 0
      %578 = vmatpush1.bf16.xpose.msra.mxu0 0
      %579 = vmatprep.subr.bf16.mxu0 0
      %580 = vmatpush1.bf16.xpose.msra.mxu0 0
      %581 = vmatprep.subr.bf16.mxu0 0
      %582 = vmatpush1.bf16.xpose.msra.mxu0 0
      %583 = vmatprep.subr.bf16.mxu0 0
      %584 = vmatpush1.bf16.xpose.msra.mxu0 0
      %585 = vmatprep.subr.bf16.mxu0 0
      %586 = vmatpush1.bf16.xpose.msra.mxu0 0
      %587 = vmatprep.subr.bf16.mxu0 0
      %588 = vmatpush1.bf16.xpose.msra.mxu0 0
      %589 = vmatprep.mubr.bf16.mxu0 0
      %590 = vmatmul.mubr.bf16.gmra.mrb[0].mxu0 %v552
      %v591 = vpop.f32.mrb[0].mxu0
      %v592 = vadd.f32 0.0, %v591
      %v593 = vpop.f32.mrb[0].mxu0
      %v594 = vpop.f32.mrb[0].mxu0
      %v595 = vadd.f32 0.0, %v594
      %v596 = vpop.f32.mrb[0].mxu0
      %597 = vdwg.mxu0
      %v600 = vunpack.c.l.b16 %v243
      %v601 = vunpack.c.l.b16 %v244
      %v602 = vpack.c.b16 %v601, %v600
      %v605 = vunpack.c.l.b16 %v247
      %v606 = vunpack.c.l.b16 %v248
      %v607 = vpack.c.b16 %v606, %v605
      %v609 = vsel %vm265, %v602, 0
      %v612 = vsel %vm265, %v607, 0
      %614 = vmatprep.subr.bf16.mxu0 0
      %615 = vmatpush1.bf16.xpose.msra.mxu0 %v612
      %616 = vmatprep.subr.bf16.mxu0 0
      %617 = vmatpush1.bf16.xpose.msra.mxu0 0
      %618 = vmatprep.subr.bf16.mxu0 0
      %619 = vmatpush1.bf16.xpose.msra.mxu0 0
      %620 = vmatprep.subr.bf16.mxu0 0
      %621 = vmatpush1.bf16.xpose.msra.mxu0 0
      %622 = vmatprep.subr.bf16.mxu0 0
      %623 = vmatpush1.bf16.xpose.msra.mxu0 0
      %624 = vmatprep.subr.bf16.mxu0 0
      %625 = vmatpush1.bf16.xpose.msra.mxu0 0
      %626 = vmatprep.subr.bf16.mxu0 0
      %627 = vmatpush1.bf16.xpose.msra.mxu0 0
      %628 = vmatprep.subr.bf16.mxu0 0
      %629 = vmatpush1.bf16.xpose.msra.mxu0 0
      %630 = vmatprep.subr.bf16.mxu0 0
      %631 = vmatpush1.bf16.xpose.msra.mxu0 0
      %632 = vmatprep.subr.bf16.mxu0 0
      %633 = vmatpush1.bf16.xpose.msra.mxu0 0
      %634 = vmatprep.subr.bf16.mxu0 0
      %635 = vmatpush1.bf16.xpose.msra.mxu0 0
      %636 = vmatprep.subr.bf16.mxu0 0
      %637 = vmatpush1.bf16.xpose.msra.mxu0 0
      %638 = vmatprep.subr.bf16.mxu0 0
      %639 = vmatpush1.bf16.xpose.msra.mxu0 0
      %640 = vmatprep.subr.bf16.mxu0 0
      %641 = vmatpush1.bf16.xpose.msra.mxu0 0
      %642 = vmatprep.subr.bf16.mxu0 0
      %643 = vmatpush1.bf16.xpose.msra.mxu0 0
      %644 = vmatprep.subr.bf16.mxu0 0
      %645 = vmatpush1.bf16.xpose.msra.mxu0 0
      %646 = vmatprep.mubr.bf16.mxu0 0
      %647 = vmatmul.mubr.bf16.gmra.mrb[0].mxu0 %v609
      %v648 = vpop.f32.mrb[0].mxu0
      %v649 = vadd.f32 0.0, %v648
      %v650 = vpop.f32.mrb[0].mxu0
      %v651 = vpop.f32.mrb[0].mxu0
      %v652 = vadd.f32 0.0, %v651
      %v653 = vpop.f32.mrb[0].mxu0
      %654 = vdwg.mxu0
      %v657 = vunpack.c.l.b16 %v245
      %v658 = vunpack.c.l.b16 %v246
      %v659 = vpack.c.b16 %v658, %v657
      %v662 = vunpack.c.l.b16 %v249
      %v663 = vunpack.c.l.b16 %v250
      %v664 = vpack.c.b16 %v663, %v662
      %v666 = vsel %vm265, %v659, 0
      %v669 = vsel %vm265, %v664, 0
      %671 = vmatprep.subr.bf16.mxu0 0
      %672 = vmatpush1.bf16.xpose.msra.mxu0 %v669
      %673 = vmatprep.subr.bf16.mxu0 0
      %674 = vmatpush1.bf16.xpose.msra.mxu0 0
      %675 = vmatprep.subr.bf16.mxu0 0
      %676 = vmatpush1.bf16.xpose.msra.mxu0 0
      %677 = vmatprep.subr.bf16.mxu0 0
      %678 = vmatpush1.bf16.xpose.msra.mxu0 0
      %679 = vmatprep.subr.bf16.mxu0 0
      %680 = vmatpush1.bf16.xpose.msra.mxu0 0
      %681 = vmatprep.subr.bf16.mxu0 0
      %682 = vmatpush1.bf16.xpose.msra.mxu0 0
      %683 = vmatprep.subr.bf16.mxu0 0
      %684 = vmatpush1.bf16.xpose.msra.mxu0 0
      %685 = vmatprep.subr.bf16.mxu0 0
      %686 = vmatpush1.bf16.xpose.msra.mxu0 0
      %687 = vmatprep.subr.bf16.mxu0 0
      %688 = vmatpush1.bf16.xpose.msra.mxu0 0
      %689 = vmatprep.subr.bf16.mxu0 0
      %690 = vmatpush1.bf16.xpose.msra.mxu0 0
      %691 = vmatprep.subr.bf16.mxu0 0
      %692 = vmatpush1.bf16.xpose.msra.mxu0 0
      %693 = vmatprep.subr.bf16.mxu0 0
      %694 = vmatpush1.bf16.xpose.msra.mxu0 0
      %695 = vmatprep.subr.bf16.mxu0 0
      %696 = vmatpush1.bf16.xpose.msra.mxu0 0
      %697 = vmatprep.subr.bf16.mxu0 0
      %698 = vmatpush1.bf16.xpose.msra.mxu0 0
      %699 = vmatprep.subr.bf16.mxu0 0
      %700 = vmatpush1.bf16.xpose.msra.mxu0 0
      %701 = vmatprep.subr.bf16.mxu0 0
      %702 = vmatpush1.bf16.xpose.msra.mxu0 0
      %703 = vmatprep.mubr.bf16.mxu0 0
      %704 = vmatmul.mubr.bf16.gmra.mrb[0].mxu0 %v666
      %v705 = vpop.f32.mrb[0].mxu0
      %v706 = vadd.f32 0.0, %v705
      %v707 = vpop.f32.mrb[0].mxu0
      %v708 = vpop.f32.mrb[0].mxu0
      %v709 = vadd.f32 0.0, %v708
      %v710 = vpop.f32.mrb[0].mxu0
      %711 = vdwg.mxu0
      %v712 = vmul.f32 %v307, 0.17677669
      %v713 = vmul.f32 %v310, 0.17677669
      %v714 = vmul.f32 %v364, 0.17677669
      %v715 = vmul.f32 %v367, 0.17677669
      %v716 = vmul.f32 %v421, 0.17677669
      %v717 = vmul.f32 %v424, 0.17677669
      %v718 = vmul.f32 %v478, 0.17677669
      %v719 = vmul.f32 %v481, 0.17677669
      %v720 = vmul.f32 %v535, 0.17677669
      %v721 = vmul.f32 %v538, 0.17677669
      %v722 = vmul.f32 %v592, 0.17677669
      %v723 = vmul.f32 %v595, 0.17677669
      %v724 = vmul.f32 %v649, 0.17677669
      %v725 = vmul.f32 %v652, 0.17677669
      %v726 = vmul.f32 %v706, 0.17677669
      %v727 = vmul.f32 %v709, 0.17677669
      %v728 = vld [vmem:[%s1] sm:$0xff]
      %v729 = vld [vmem:[%s1 + $0x8] sm:$0xff]
      %v730 = vadd.f32 %v712, %v728
      %v731 = vadd.f32 %v713, %v729
      %v732 = vadd.f32 %v714, %v728
      %v733 = vadd.f32 %v715, %v729
      %v734 = vadd.f32 %v716, %v728
      %v735 = vadd.f32 %v717, %v729
      %v736 = vadd.f32 %v718, %v728
      %v737 = vadd.f32 %v719, %v729
      %v738 = vadd.f32 %v720, %v728
      %v739 = vadd.f32 %v721, %v729
      %v740 = vadd.f32 %v722, %v728
      %v741 = vadd.f32 %v723, %v729
      %v742 = vadd.f32 %v724, %v728
      %v743 = vadd.f32 %v725, %v729
      %v744 = vadd.f32 %v726, %v728
      %v745 = vadd.f32 %v727, %v729
      %vm746 = vcmask 130048
      %v747 = vsel %vm746, %v730, -inf
      %748 = vmax.xlane.f32.xlu0 %v747
      %v749 = vpop.xlane.xlu0 %748
      %v750 = vsel %vm746, %v731, -inf
      %751 = vmax.xlane.f32.xlu0 %v750
      %v752 = vpop.xlane.xlu0 %751
      %v753 = vsel %vm746, %v732, -inf
      %754 = vmax.xlane.f32.xlu0 %v753
      %v755 = vpop.xlane.xlu0 %754
      %v756 = vsel %vm746, %v733, -inf
      %757 = vmax.xlane.f32.xlu0 %v756
      %v758 = vpop.xlane.xlu0 %757
      %v759 = vsel %vm746, %v734, -inf
      %760 = vmax.xlane.f32.xlu0 %v759
      %v761 = vpop.xlane.xlu0 %760
      %v762 = vsel %vm746, %v735, -inf
      %763 = vmax.xlane.f32.xlu0 %v762
      %v764 = vpop.xlane.xlu0 %763
      %v765 = vsel %vm746, %v736, -inf
      %766 = vmax.xlane.f32.xlu0 %v765
      %v767 = vpop.xlane.xlu0 %766
      %v768 = vsel %vm746, %v737, -inf
      %769 = vmax.xlane.f32.xlu0 %v768
      %v770 = vpop.xlane.xlu0 %769
      %v771 = vsel %vm746, %v738, -inf
      %772 = vmax.xlane.f32.xlu0 %v771
      %v773 = vpop.xlane.xlu0 %772
      %v774 = vsel %vm746, %v739, -inf
      %775 = vmax.xlane.f32.xlu0 %v774
      %v776 = vpop.xlane.xlu0 %775
      %v777 = vsel %vm746, %v740, -inf
      %778 = vmax.xlane.f32.xlu0 %v777
      %v779 = vpop.xlane.xlu0 %778
      %v780 = vsel %vm746, %v741, -inf
      %781 = vmax.xlane.f32.xlu0 %v780
      %v782 = vpop.xlane.xlu0 %781
      %v783 = vsel %vm746, %v742, -inf
      %784 = vmax.xlane.f32.xlu0 %v783
      %v785 = vpop.xlane.xlu0 %784
      %v786 = vsel %vm746, %v743, -inf
      %787 = vmax.xlane.f32.xlu0 %v786
      %v788 = vpop.xlane.xlu0 %787
      %v789 = vsel %vm746, %v744, -inf
      %790 = vmax.xlane.f32.xlu0 %v789
      %v791 = vpop.xlane.xlu0 %790
      %v792 = vsel %vm746, %v745, -inf
      %793 = vmax.xlane.f32.xlu0 %v792
      %v794 = vpop.xlane.xlu0 %793
      %v795 = vsub.f32 %v730, %v749
      %v796 = vsub.f32 %v731, %v752
      %v797 = vsub.f32 %v732, %v755
      %v798 = vsub.f32 %v733, %v758
      %v799 = vsub.f32 %v734, %v761
      %v800 = vsub.f32 %v735, %v764
      %v801 = vsub.f32 %v736, %v767
      %v802 = vsub.f32 %v737, %v770
      %v803 = vsub.f32 %v738, %v773
      %v804 = vsub.f32 %v739, %v776
      %v805 = vsub.f32 %v740, %v779
      %v806 = vsub.f32 %v741, %v782
      %v807 = vsub.f32 %v742, %v785
      %v808 = vsub.f32 %v743, %v788
      %v809 = vsub.f32 %v744, %v791
      %v810 = vsub.f32 %v745, %v794
      %v811 = vmul.f32 %v795, 1.442695
      %v812 = vpow.pop %v811
      %v813 = vmul.f32 %v796, 1.442695
      %v814 = vpow.pop %v813
      %v815 = vmul.f32 %v797, 1.442695
      %v816 = vpow.pop %v815
      %v817 = vmul.f32 %v798, 1.442695
      %v818 = vpow.pop %v817
      %v819 = vmul.f32 %v799, 1.442695
      %v820 = vpow.pop %v819
      %v821 = vmul.f32 %v800, 1.442695
      %v822 = vpow.pop %v821
      %v823 = vmul.f32 %v801, 1.442695
      %v824 = vpow.pop %v823
      %v825 = vmul.f32 %v802, 1.442695
      %v826 = vpow.pop %v825
      %v827 = vmul.f32 %v803, 1.442695
      %v828 = vpow.pop %v827
      %v829 = vmul.f32 %v804, 1.442695
      %v830 = vpow.pop %v829
      %v831 = vmul.f32 %v805, 1.442695
      %v832 = vpow.pop %v831
      %v833 = vmul.f32 %v806, 1.442695
      %v834 = vpow.pop %v833
      %v835 = vmul.f32 %v807, 1.442695
      %v836 = vpow.pop %v835
      %v837 = vmul.f32 %v808, 1.442695
      %v838 = vpow.pop %v837
      %v839 = vmul.f32 %v809, 1.442695
      %v840 = vpow.pop %v839
      %v841 = vmul.f32 %v810, 1.442695
      %v842 = vpow.pop %v841
      %v843 = vsel %vm746, %v812, 0.0
      %844 = vadd.xlane.f32.xlu0 %v843
      %v845 = vpop.xlane.xlu0 %844
      %v846 = vsel %vm746, %v814, 0.0
      %847 = vadd.xlane.f32.xlu0 %v846
      %v848 = vpop.xlane.xlu0 %847
      %v849 = vsel %vm746, %v816, 0.0
      %850 = vadd.xlane.f32.xlu0 %v849
      %v851 = vpop.xlane.xlu0 %850
      %v852 = vsel %vm746, %v818, 0.0
      %853 = vadd.xlane.f32.xlu0 %v852
      %v854 = vpop.xlane.xlu0 %853
      %v855 = vsel %vm746, %v820, 0.0
      %856 = vadd.xlane.f32.xlu0 %v855
      %v857 = vpop.xlane.xlu0 %856
      %v858 = vsel %vm746, %v822, 0.0
      %859 = vadd.xlane.f32.xlu0 %v858
      %v860 = vpop.xlane.xlu0 %859
      %v861 = vsel %vm746, %v824, 0.0
      %862 = vadd.xlane.f32.xlu0 %v861
      %v863 = vpop.xlane.xlu0 %862
      %v864 = vsel %vm746, %v826, 0.0
      %865 = vadd.xlane.f32.xlu0 %v864
      %v866 = vpop.xlane.xlu0 %865
      %v867 = vsel %vm746, %v828, 0.0
      %868 = vadd.xlane.f32.xlu0 %v867
      %v869 = vpop.xlane.xlu0 %868
      %v870 = vsel %vm746, %v830, 0.0
      %871 = vadd.xlane.f32.xlu0 %v870
      %v872 = vpop.xlane.xlu0 %871
      %v873 = vsel %vm746, %v832, 0.0
      %874 = vadd.xlane.f32.xlu0 %v873
      %v875 = vpop.xlane.xlu0 %874
      %v876 = vsel %vm746, %v834, 0.0
      %877 = vadd.xlane.f32.xlu0 %v876
      %v878 = vpop.xlane.xlu0 %877
      %v879 = vsel %vm746, %v836, 0.0
      %880 = vadd.xlane.f32.xlu0 %v879
      %v881 = vpop.xlane.xlu0 %880
      %v882 = vsel %vm746, %v838, 0.0
      %883 = vadd.xlane.f32.xlu0 %v882
      %v884 = vpop.xlane.xlu0 %883
      %v885 = vsel %vm746, %v840, 0.0
      %886 = vadd.xlane.f32.xlu0 %v885
      %v887 = vpop.xlane.xlu0 %886
      %v888 = vsel %vm746, %v842, 0.0
      %889 = vadd.xlane.f32.xlu0 %v888
      %v890 = vpop.xlane.xlu0 %889
      %v891 = vrcp.pop %v845
      %v892 = vrcp.pop %v848
      %v893 = vrcp.pop %v851
      %v894 = vrcp.pop %v854
      %v895 = vrcp.pop %v857
      %v896 = vrcp.pop %v860
      %v897 = vrcp.pop %v863
      %v898 = vrcp.pop %v866
      %v899 = vrcp.pop %v869
      %v900 = vrcp.pop %v872
      %v901 = vrcp.pop %v875
      %v902 = vrcp.pop %v878
      %v903 = vrcp.pop %v881
      %v904 = vrcp.pop %v884
      %v905 = vrcp.pop %v887
      %v906 = vrcp.pop %v890
      %v907 = vmul.f32 %v812, %v891
      %v908 = vmul.f32 %v814, %v892
      %v909 = vmul.f32 %v816, %v893
      %v910 = vmul.f32 %v818, %v894
      %v911 = vmul.f32 %v820, %v895
      %v912 = vmul.f32 %v822, %v896
      %v913 = vmul.f32 %v824, %v897
      %v914 = vmul.f32 %v826, %v898
      %v915 = vmul.f32 %v828, %v899
      %v916 = vmul.f32 %v830, %v900
      %v917 = vmul.f32 %v832, %v901
      %v918 = vmul.f32 %v834, %v902
      %v919 = vmul.f32 %v836, %v903
      %v920 = vmul.f32 %v838, %v904
      %v921 = vmul.f32 %v840, %v905
      %v922 = vmul.f32 %v842, %v906
      %v923 = vpack.c.bf16 %v908, %v907
      %v924 = vpack.c.bf16 %v910, %v909
      %v925 = vpack.c.bf16 %v912, %v911
      %v926 = vpack.c.bf16 %v914, %v913
      %v927 = vpack.c.bf16 %v916, %v915
      %v928 = vpack.c.bf16 %v918, %v917
      %v929 = vpack.c.bf16 %v920, %v919
      %v930 = vpack.c.bf16 %v922, %v921
      %v933 = vunpack.c.l.b16 %v215
      %v934 = vunpack.c.l.b16 %v216
      %v935 = vpack.c.b16 %v934, %v933
      %v938 = vsel %vm746, %v923, 0
      %940 = vmatprep.subr.bf16.mxu0 0
      %941 = vmatpush1.bf16.msra.mxu0 %v935
      %942 = vmatprep.subr.bf16.mxu0 0
      %943 = vmatpush1.bf16.msra.mxu0 0
      %944 = vmatprep.subr.bf16.mxu0 0
      %945 = vmatpush1.bf16.msra.mxu0 0
      %946 = vmatprep.subr.bf16.mxu0 0
      %947 = vmatpush1.bf16.msra.mxu0 0
      %948 = vmatprep.subr.bf16.mxu0 0
      %949 = vmatpush1.bf16.msra.mxu0 0
      %950 = vmatprep.subr.bf16.mxu0 0
      %951 = vmatpush1.bf16.msra.mxu0 0
      %952 = vmatprep.subr.bf16.mxu0 0
      %953 = vmatpush1.bf16.msra.mxu0 0
      %954 = vmatprep.subr.bf16.mxu0 0
      %955 = vmatpush1.bf16.msra.mxu0 0
      %956 = vmatprep.subr.bf16.mxu0 0
      %957 = vmatpush1.bf16.msra.mxu0 0
      %958 = vmatprep.subr.bf16.mxu0 0
      %959 = vmatpush1.bf16.msra.mxu0 0
      %960 = vmatprep.subr.bf16.mxu0 0
      %961 = vmatpush1.bf16.msra.mxu0 0
      %962 = vmatprep.subr.bf16.mxu0 0
      %963 = vmatpush1.bf16.msra.mxu0 0
      %964 = vmatprep.subr.bf16.mxu0 0
      %965 = vmatpush1.bf16.msra.mxu0 0
      %966 = vmatprep.subr.bf16.mxu0 0
      %967 = vmatpush1.bf16.msra.mxu0 0
      %968 = vmatprep.subr.bf16.mxu0 0
      %969 = vmatpush1.bf16.msra.mxu0 0
      %970 = vmatprep.subr.bf16.mxu0 0
      %971 = vmatpush1.bf16.msra.mxu0 0
      %972 = vmatprep.mubr.bf16.mxu0 0
      %973 = vmatmul.mubr.bf16.gmra.mrb[0].mxu0 %v938
      %v974 = vpop.f32.mrb[0].mxu0
      %v975 = vadd.f32 0.0, %v974
      %v976 = vpop.f32.mrb[0].mxu0
      %v977 = vpop.f32.mrb[0].mxu0
      %v978 = vadd.f32 0.0, %v977
      %v979 = vpop.f32.mrb[0].mxu0
      %980 = vdwg.mxu0
      %v983 = vunpack.c.l.b16 %v217
      %v984 = vunpack.c.l.b16 %v218
      %v985 = vpack.c.b16 %v984, %v983
      %v988 = vsel %vm746, %v924, 0
      %990 = vmatprep.subr.bf16.mxu0 0
      %991 = vmatpush1.bf16.msra.mxu0 %v985
      %992 = vmatprep.subr.bf16.mxu0 0
      %993 = vmatpush1.bf16.msra.mxu0 0
      %994 = vmatprep.subr.bf16.mxu0 0
      %995 = vmatpush1.bf16.msra.mxu0 0
      %996 = vmatprep.subr.bf16.mxu0 0
      %997 = vmatpush1.bf16.msra.mxu0 0
      %998 = vmatprep.subr.bf16.mxu0 0
      %999 = vmatpush1.bf16.msra.mxu0 0
      %1000 = vmatprep.subr.bf16.mxu0 0
      %1001 = vmatpush1.bf16.msra.mxu0 0
      %1002 = vmatprep.subr.bf16.mxu0 0
      %1003 = vmatpush1.bf16.msra.mxu0 0
      %1004 = vmatprep.subr.bf16.mxu0 0
      %1005 = vmatpush1.bf16.msra.mxu0 0
      %1006 = vmatprep.subr.bf16.mxu0 0
      %1007 = vmatpush1.bf16.msra.mxu0 0
      %1008 = vmatprep.subr.bf16.mxu0 0
      %1009 = vmatpush1.bf16.msra.mxu0 0
      %1010 = vmatprep.subr.bf16.mxu0 0
      %1011 = vmatpush1.bf16.msra.mxu0 0
      %1012 = vmatprep.subr.bf16.mxu0 0
      %1013 = vmatpush1.bf16.msra.mxu0 0
      %1014 = vmatprep.subr.bf16.mxu0 0
      %1015 = vmatpush1.bf16.msra.mxu0 0
      %1016 = vmatprep.subr.bf16.mxu0 0
      %1017 = vmatpush1.bf16.msra.mxu0 0
      %1018 = vmatprep.subr.bf16.mxu0 0
      %1019 = vmatpush1.bf16.msra.mxu0 0
      %1020 = vmatprep.subr.bf16.mxu0 0
      %1021 = vmatpush1.bf16.msra.mxu0 0
      %1022 = vmatprep.mubr.bf16.mxu0 0
      %1023 = vmatmul.mubr.bf16.gmra.mrb[0].mxu0 %v988
      %v1024 = vpop.f32.mrb[0].mxu0
      %v1025 = vadd.f32 0.0, %v1024
      %v1026 = vpop.f32.mrb[0].mxu0
      %v1027 = vpop.f32.mrb[0].mxu0
      %v1028 = vadd.f32 0.0, %v1027
      %v1029 = vpop.f32.mrb[0].mxu0
      %1030 = vdwg.mxu0
      %v1033 = vunpack.c.l.b16 %v227
      %v1034 = vunpack.c.l.b16 %v228
      %v1035 = vpack.c.b16 %v1034, %v1033
      %v1038 = vsel %vm746, %v925, 0
      %1040 = vmatprep.subr.bf16.mxu0 0
      %1041 = vmatpush1.bf16.msra.mxu0 %v1035
      %1042 = vmatprep.subr.bf16.mxu0 0
      %1043 = vmatpush1.bf16.msra.mxu0 0
      %1044 = vmatprep.subr.bf16.mxu0 0
      %1045 = vmatpush1.bf16.msra.mxu0 0
      %1046 = vmatprep.subr.bf16.mxu0 0
      %1047 = vmatpush1.bf16.msra.mxu0 0
      %1048 = vmatprep.subr.bf16.mxu0 0
      %1049 = vmatpush1.bf16.msra.mxu0 0
      %1050 = vmatprep.subr.bf16.mxu0 0
      %1051 = vmatpush1.bf16.msra.mxu0 0
      %1052 = vmatprep.subr.bf16.mxu0 0
      %1053 = vmatpush1.bf16.msra.mxu0 0
      %1054 = vmatprep.subr.bf16.mxu0 0
      %1055 = vmatpush1.bf16.msra.mxu0 0
      %1056 = vmatprep.subr.bf16.mxu0 0
      %1057 = vmatpush1.bf16.msra.mxu0 0
      %1058 = vmatprep.subr.bf16.mxu0 0
      %1059 = vmatpush1.bf16.msra.mxu0 0
      %1060 = vmatprep.subr.bf16.mxu0 0
      %1061 = vmatpush1.bf16.msra.mxu0 0
      %1062 = vmatprep.subr.bf16.mxu0 0
      %1063 = vmatpush1.bf16.msra.mxu0 0
      %1064 = vmatprep.subr.bf16.mxu0 0
      %1065 = vmatpush1.bf16.msra.mxu0 0
      %1066 = vmatprep.subr.bf16.mxu0 0
      %1067 = vmatpush1.bf16.msra.mxu0 0
      %1068 = vmatprep.subr.bf16.mxu0 0
      %1069 = vmatpush1.bf16.msra.mxu0 0
      %1070 = vmatprep.subr.bf16.mxu0 0
      %1071 = vmatpush1.bf16.msra.mxu0 0
      %1072 = vmatprep.mubr.bf16.mxu0 0
      %1073 = vmatmul.mubr.bf16.gmra.mrb[0].mxu0 %v1038
      %v1074 = vpop.f32.mrb[0].mxu0
      %v1075 = vadd.f32 0.0, %v1074
      %v1076 = vpop.f32.mrb[0].mxu0
      %v1077 = vpop.f32.mrb[0].mxu0
      %v1078 = vadd.f32 0.0, %v1077
      %v1079 = vpop.f32.mrb[0].mxu0
      %1080 = vdwg.mxu0
      %v1083 = vunpack.c.l.b16 %v229
      %v1084 = vunpack.c.l.b16 %v230
      %v1085 = vpack.c.b16 %v1084, %v1083
      %v1088 = vsel %vm746, %v926, 0
      %1090 = vmatprep.subr.bf16.mxu0 0
      %1091 = vmatpush1.bf16.msra.mxu0 %v1085
      %1092 = vmatprep.subr.bf16.mxu0 0
      %1093 = vmatpush1.bf16.msra.mxu0 0
      %1094 = vmatprep.subr.bf16.mxu0 0
      %1095 = vmatpush1.bf16.msra.mxu0 0
      %1096 = vmatprep.subr.bf16.mxu0 0
      %1097 = vmatpush1.bf16.msra.mxu0 0
      %1098 = vmatprep.subr.bf16.mxu0 0
      %1099 = vmatpush1.bf16.msra.mxu0 0
      %1100 = vmatprep.subr.bf16.mxu0 0
      %1101 = vmatpush1.bf16.msra.mxu0 0
      %1102 = vmatprep.subr.bf16.mxu0 0
      %1103 = vmatpush1.bf16.msra.mxu0 0
      %1104 = vmatprep.subr.bf16.mxu0 0
      %1105 = vmatpush1.bf16.msra.mxu0 0
      %1106 = vmatprep.subr.bf16.mxu0 0
      %1107 = vmatpush1.bf16.msra.mxu0 0
      %1108 = vmatprep.subr.bf16.mxu0 0
      %1109 = vmatpush1.bf16.msra.mxu0 0
      %1110 = vmatprep.subr.bf16.mxu0 0
      %1111 = vmatpush1.bf16.msra.mxu0 0
      %1112 = vmatprep.subr.bf16.mxu0 0
      %1113 = vmatpush1.bf16.msra.mxu0 0
      %1114 = vmatprep.subr.bf16.mxu0 0
      %1115 = vmatpush1.bf16.msra.mxu0 0
      %1116 = vmatprep.subr.bf16.mxu0 0
      %1117 = vmatpush1.bf16.msra.mxu0 0
      %1118 = vmatprep.subr.bf16.mxu0 0
      %1119 = vmatpush1.bf16.msra.mxu0 0
      %1120 = vmatprep.subr.bf16.mxu0 0
      %1121 = vmatpush1.bf16.msra.mxu0 0
      %1122 = vmatprep.mubr.bf16.mxu0 0
      %1123 = vmatmul.mubr.bf16.gmra.mrb[0].mxu0 %v1088
      %v1124 = vpop.f32.mrb[0].mxu0
      %v1125 = vadd.f32 0.0, %v1124
      %v1126 = vpop.f32.mrb[0].mxu0
      %v1127 = vpop.f32.mrb[0].mxu0
      %v1128 = vadd.f32 0.0, %v1127
      %v1129 = vpop.f32.mrb[0].mxu0
      %1130 = vdwg.mxu0
      %v1133 = vunpack.c.l.b16 %v239
      %v1134 = vunpack.c.l.b16 %v240
      %v1135 = vpack.c.b16 %v1134, %v1133
      %v1138 = vsel %vm746, %v927, 0
      %1140 = vmatprep.subr.bf16.mxu0 0
      %1141 = vmatpush1.bf16.msra.mxu0 %v1135
      %1142 = vmatprep.subr.bf16.mxu0 0
      %1143 = vmatpush1.bf16.msra.mxu0 0
      %1144 = vmatprep.subr.bf16.mxu0 0
      %1145 = vmatpush1.bf16.msra.mxu0 0
      %1146 = vmatprep.subr.bf16.mxu0 0
      %1147 = vmatpush1.bf16.msra.mxu0 0
      %1148 = vmatprep.subr.bf16.mxu0 0
      %1149 = vmatpush1.bf16.msra.mxu0 0
      %1150 = vmatprep.subr.bf16.mxu0 0
      %1151 = vmatpush1.bf16.msra.mxu0 0
      %1152 = vmatprep.subr.bf16.mxu0 0
      %1153 = vmatpush1.bf16.msra.mxu0 0
      %1154 = vmatprep.subr.bf16.mxu0 0
      %1155 = vmatpush1.bf16.msra.mxu0 0
      %1156 = vmatprep.subr.bf16.mxu0 0
      %1157 = vmatpush1.bf16.msra.mxu0 0
      %1158 = vmatprep.subr.bf16.mxu0 0
      %1159 = vmatpush1.bf16.msra.mxu0 0
      %1160 = vmatprep.subr.bf16.mxu0 0
      %1161 = vmatpush1.bf16.msra.mxu0 0
      %1162 = vmatprep.subr.bf16.mxu0 0
      %1163 = vmatpush1.bf16.msra.mxu0 0
      %1164 = vmatprep.subr.bf16.mxu0 0
      %1165 = vmatpush1.bf16.msra.mxu0 0
      %1166 = vmatprep.subr.bf16.mxu0 0
      %1167 = vmatpush1.bf16.msra.mxu0 0
      %1168 = vmatprep.subr.bf16.mxu0 0
      %1169 = vmatpush1.bf16.msra.mxu0 0
      %1170 = vmatprep.subr.bf16.mxu0 0
      %1171 = vmatpush1.bf16.msra.mxu0 0
      %1172 = vmatprep.mubr.bf16.mxu0 0
      %1173 = vmatmul.mubr.bf16.gmra.mrb[0].mxu0 %v1138
      %v1174 = vpop.f32.mrb[0].mxu0
      %v1175 = vadd.f32 0.0, %v1174
      %v1176 = vpop.f32.mrb[0].mxu0
      %v1177 = vpop.f32.mrb[0].mxu0
      %v1178 = vadd.f32 0.0, %v1177
      %v1179 = vpop.f32.mrb[0].mxu0
      %1180 = vdwg.mxu0
      %v1183 = vunpack.c.l.b16 %v241
      %v1184 = vunpack.c.l.b16 %v242
      %v1185 = vpack.c.b16 %v1184, %v1183
      %v1188 = vsel %vm746, %v928, 0
      %1190 = vmatprep.subr.bf16.mxu0 0
      %1191 = vmatpush1.bf16.msra.mxu0 %v1185
      %1192 = vmatprep.subr.bf16.mxu0 0
      %1193 = vmatpush1.bf16.msra.mxu0 0
      %1194 = vmatprep.subr.bf16.mxu0 0
      %1195 = vmatpush1.bf16.msra.mxu0 0
      %1196 = vmatprep.subr.bf16.mxu0 0
      %1197 = vmatpush1.bf16.msra.mxu0 0
      %1198 = vmatprep.subr.bf16.mxu0 0
      %1199 = vmatpush1.bf16.msra.mxu0 0
      %1200 = vmatprep.subr.bf16.mxu0 0
      %1201 = vmatpush1.bf16.msra.mxu0 0
      %1202 = vmatprep.subr.bf16.mxu0 0
      %1203 = vmatpush1.bf16.msra.mxu0 0
      %1204 = vmatprep.subr.bf16.mxu0 0
      %1205 = vmatpush1.bf16.msra.mxu0 0
      %1206 = vmatprep.subr.bf16.mxu0 0
      %1207 = vmatpush1.bf16.msra.mxu0 0
      %1208 = vmatprep.subr.bf16.mxu0 0
      %1209 = vmatpush1.bf16.msra.mxu0 0
      %1210 = vmatprep.subr.bf16.mxu0 0
      %1211 = vmatpush1.bf16.msra.mxu0 0
      %1212 = vmatprep.subr.bf16.mxu0 0
      %1213 = vmatpush1.bf16.msra.mxu0 0
      %1214 = vmatprep.subr.bf16.mxu0 0
      %1215 = vmatpush1.bf16.msra.mxu0 0
      %1216 = vmatprep.subr.bf16.mxu0 0
      %1217 = vmatpush1.bf16.msra.mxu0 0
      %1218 = vmatprep.subr.bf16.mxu0 0
      %1219 = vmatpush1.bf16.msra.mxu0 0
      %1220 = vmatprep.subr.bf16.mxu0 0
      %1221 = vmatpush1.bf16.msra.mxu0 0
      %1222 = vmatprep.mubr.bf16.mxu0 0
      %1223 = vmatmul.mubr.bf16.gmra.mrb[0].mxu0 %v1188
      %v1224 = vpop.f32.mrb[0].mxu0
      %v1225 = vadd.f32 0.0, %v1224
      %v1226 = vpop.f32.mrb[0].mxu0
      %v1227 = vpop.f32.mrb[0].mxu0
      %v1228 = vadd.f32 0.0, %v1227
      %v1229 = vpop.f32.mrb[0].mxu0
      %1230 = vdwg.mxu0
      %v1233 = vunpack.c.l.b16 %v251
      %v1234 = vunpack.c.l.b16 %v252
      %v1235 = vpack.c.b16 %v1234, %v1233
      %v1238 = vsel %vm746, %v929, 0
      %1240 = vmatprep.subr.bf16.mxu0 0
      %1241 = vmatpush1.bf16.msra.mxu0 %v1235
      %1242 = vmatprep.subr.bf16.mxu0 0
      %1243 = vmatpush1.bf16.msra.mxu0 0
      %1244 = vmatprep.subr.bf16.mxu0 0
      %1245 = vmatpush1.bf16.msra.mxu0 0
      %1246 = vmatprep.subr.bf16.mxu0 0
      %1247 = vmatpush1.bf16.msra.mxu0 0
      %1248 = vmatprep.subr.bf16.mxu0 0
      %1249 = vmatpush1.bf16.msra.mxu0 0
      %1250 = vmatprep.subr.bf16.mxu0 0
      %1251 = vmatpush1.bf16.msra.mxu0 0
      %1252 = vmatprep.subr.bf16.mxu0 0
      %1253 = vmatpush1.bf16.msra.mxu0 0
      %1254 = vmatprep.subr.bf16.mxu0 0
      %1255 = vmatpush1.bf16.msra.mxu0 0
      %1256 = vmatprep.subr.bf16.mxu0 0
      %1257 = vmatpush1.bf16.msra.mxu0 0
      %1258 = vmatprep.subr.bf16.mxu0 0
      %1259 = vmatpush1.bf16.msra.mxu0 0
      %1260 = vmatprep.subr.bf16.mxu0 0
      %1261 = vmatpush1.bf16.msra.mxu0 0
      %1262 = vmatprep.subr.bf16.mxu0 0
      %1263 = vmatpush1.bf16.msra.mxu0 0
      %1264 = vmatprep.subr.bf16.mxu0 0
      %1265 = vmatpush1.bf16.msra.mxu0 0
      %1266 = vmatprep.subr.bf16.mxu0 0
      %1267 = vmatpush1.bf16.msra.mxu0 0
      %1268 = vmatprep.subr.bf16.mxu0 0
      %1269 = vmatpush1.bf16.msra.mxu0 0
      %1270 = vmatprep.subr.bf16.mxu0 0
      %1271 = vmatpush1.bf16.msra.mxu0 0
      %1272 = vmatprep.mubr.bf16.mxu0 0
      %1273 = vmatmul.mubr.bf16.gmra.mrb[0].mxu0 %v1238
      %v1274 = vpop.f32.mrb[0].mxu0
      %v1275 = vadd.f32 0.0, %v1274
      %v1276 = vpop.f32.mrb[0].mxu0
      %v1277 = vpop.f32.mrb[0].mxu0
      %v1278 = vadd.f32 0.0, %v1277
      %v1279 = vpop.f32.mrb[0].mxu0
      %1280 = vdwg.mxu0
      %v1283 = vunpack.c.l.b16 %v253
      %v1284 = vunpack.c.l.b16 %v254
      %v1285 = vpack.c.b16 %v1284, %v1283
      %v1288 = vsel %vm746, %v930, 0
      %1290 = vmatprep.subr.bf16.mxu0 0
      %1291 = vmatpush1.bf16.msra.mxu0 %v1285
      %1292 = vmatprep.subr.bf16.mxu0 0
      %1293 = vmatpush1.bf16.msra.mxu0 0
      %1294 = vmatprep.subr.bf16.mxu0 0
      %1295 = vmatpush1.bf16.msra.mxu0 0
      %1296 = vmatprep.subr.bf16.mxu0 0
      %1297 = vmatpush1.bf16.msra.mxu0 0
      %1298 = vmatprep.subr.bf16.mxu0 0
      %1299 = vmatpush1.bf16.msra.mxu0 0
      %1300 = vmatprep.subr.bf16.mxu0 0
      %1301 = vmatpush1.bf16.msra.mxu0 0
      %1302 = vmatprep.subr.bf16.mxu0 0
      %1303 = vmatpush1.bf16.msra.mxu0 0
      %1304 = vmatprep.subr.bf16.mxu0 0
      %1305 = vmatpush1.bf16.msra.mxu0 0
      %1306 = vmatprep.subr.bf16.mxu0 0
      %1307 = vmatpush1.bf16.msra.mxu0 0
      %1308 = vmatprep.subr.bf16.mxu0 0
      %1309 = vmatpush1.bf16.msra.mxu0 0
      %1310 = vmatprep.subr.bf16.mxu0 0
      %1311 = vmatpush1.bf16.msra.mxu0 0
      %1312 = vmatprep.subr.bf16.mxu0 0
      %1313 = vmatpush1.bf16.msra.mxu0 0
      %1314 = vmatprep.subr.bf16.mxu0 0
      %1315 = vmatpush1.bf16.msra.mxu0 0
      %1316 = vmatprep.subr.bf16.mxu0 0
      %1317 = vmatpush1.bf16.msra.mxu0 0
      %1318 = vmatprep.subr.bf16.mxu0 0
      %1319 = vmatpush1.bf16.msra.mxu0 0
      %1320 = vmatprep.subr.bf16.mxu0 0
      %1321 = vmatpush1.bf16.msra.mxu0 0
      %1322 = vmatprep.mubr.bf16.mxu0 0
      %1323 = vmatmul.mubr.bf16.gmra.mrb[0].mxu0 %v1288
      %v1324 = vpop.f32.mrb[0].mxu0
      %v1325 = vadd.f32 0.0, %v1324
      %v1326 = vpop.f32.mrb[0].mxu0
      %v1327 = vpop.f32.mrb[0].mxu0
      %v1328 = vadd.f32 0.0, %v1327
      %v1329 = vpop.f32.mrb[0].mxu0
      %1330 = vdwg.mxu0
      %v1331 = vpack.c.bf16 %v978, %v975
      %v1332 = vpack.c.bf16 %v1078, %v1075
      %v1333 = vpack.c.bf16 %v1178, %v1175
      %v1334 = vpack.c.bf16 %v1278, %v1275
      %v1335 = vld [vmem:[%s2] sm:$0xf]
      %v1336 = vld [vmem:[%s2 + $0x4] sm:$0xf]
      %v1337 = vld [vmem:[%s2 + $0x8] sm:$0xf]
      %v1338 = vld [vmem:[%s2 + $0xc] sm:$0xf]
      %v1339 = vpack.c.bf16 %v1028, %v1025
      %v1340 = vpack.c.bf16 %v1128, %v1125
      %v1341 = vpack.c.bf16 %v1228, %v1225
      %v1342 = vpack.c.bf16 %v1328, %v1325
      %s1343 = scalar_lea.vmem %s2, 16
      %v1344 = vld [vmem:[%s1343] sm:$0xf]
      %v1345 = vld [vmem:[%s1343 + $0x4] sm:$0xf]
      %v1346 = vld [vmem:[%s1343 + $0x8] sm:$0xf]
      %v1347 = vld [vmem:[%s1343 + $0xc] sm:$0xf]
      %v1352 = vunpack.c.l.b16 %v1344
      %v1353 = vunpack.c.l.b16 %v1345
      %v1354 = vunpack.c.l.b16 %v1346
      %v1355 = vunpack.c.l.b16 %v1347
      %v1356 = vpack.c.b16 %v1353, %v1352
      %v1357 = vpack.c.b16 %v1355, %v1354
      %v1361 = vsel %vm265, %v1339, 0
      %v1364 = vsel %vm265, %v1340, 0
      %v1367 = vsel %vm265, %v1341, 0
      %v1370 = vsel %vm265, %v1342, 0
      %1372 = vmatprep.subr.bf16.mxu0 0
      %1373 = vmatpush1.bf16.msra.mxu0 %v1356
      %1374 = vmatprep.subr.bf16.mxu0 0
      %1375 = vmatpush1.bf16.msra.mxu0 %v1357
      %1376 = vmatprep.subr.bf16.mxu0 0
      %1377 = vmatpush1.bf16.msra.mxu0 0
      %1378 = vmatprep.subr.bf16.mxu0 0
      %1379 = vmatpush1.bf16.msra.mxu0 0
      %1380 = vmatprep.subr.bf16.mxu0 0
      %1381 = vmatpush1.bf16.msra.mxu0 0
      %1382 = vmatprep.subr.bf16.mxu0 0
      %1383 = vmatpush1.bf16.msra.mxu0 0
      %1384 = vmatprep.subr.bf16.mxu0 0
      %1385 = vmatpush1.bf16.msra.mxu0 0
      %1386 = vmatprep.subr.bf16.mxu0 0
      %1387 = vmatpush1.bf16.msra.mxu0 0
      %1388 = vmatprep.subr.bf16.mxu0 0
      %1389 = vmatpush1.bf16.msra.mxu0 0
      %1390 = vmatprep.subr.bf16.mxu0 0
      %1391 = vmatpush1.bf16.msra.mxu0 0
      %1392 = vmatprep.subr.bf16.mxu0 0
      %1393 = vmatpush1.bf16.msra.mxu0 0
      %1394 = vmatprep.subr.bf16.mxu0 0
      %1395 = vmatpush1.bf16.msra.mxu0 0
      %1396 = vmatprep.subr.bf16.mxu0 0
      %1397 = vmatpush1.bf16.msra.mxu0 0
      %1398 = vmatprep.subr.bf16.mxu0 0
      %1399 = vmatpush1.bf16.msra.mxu0 0
      %1400 = vmatprep.subr.bf16.mxu0 0
      %1401 = vmatpush1.bf16.msra.mxu0 0
      %1402 = vmatprep.subr.bf16.mxu0 0
      %1403 = vmatpush1.bf16.msra.mxu0 0
      %1404 = vmatprep.mubr.bf16.mxu0 0
      %1405 = vmatmul.mubr.bf16.gmra.mrb[0].mxu0 %v1361
      %v1406 = vpop.f32.mrb[0].mxu0
      %v1407 = vadd.f32 0.0, %v1406
      %v1408 = vpop.f32.mrb[0].mxu0
      %v1409 = vpop.f32.mrb[0].mxu0
      %v1410 = vadd.f32 0.0, %v1409
      %v1411 = vpop.f32.mrb[0].mxu0
      %1412 = vmatprep.mubr.bf16.mxu0 0
      %1413 = vmatmul.mubr.bf16.gmra.mrb[0].mxu0 %v1364
      %v1414 = vpop.f32.mrb[0].mxu0
      %v1415 = vadd.f32 0.0, %v1414
      %v1416 = vpop.f32.mrb[0].mxu0
      %v1417 = vpop.f32.mrb[0].mxu0
      %v1418 = vadd.f32 0.0, %v1417
      %v1419 = vpop.f32.mrb[0].mxu0
      %1420 = vmatprep.mubr.bf16.mxu0 0
      %1421 = vmatmul.mubr.bf16.gmra.mrb[0].mxu0 %v1367
      %v1422 = vpop.f32.mrb[0].mxu0
      %v1423 = vadd.f32 0.0, %v1422
      %v1424 = vpop.f32.mrb[0].mxu0
      %v1425 = vpop.f32.mrb[0].mxu0
      %v1426 = vadd.f32 0.0, %v1425
      %v1427 = vpop.f32.mrb[0].mxu0
      %1428 = vmatprep.mubr.bf16.mxu0 0
      %1429 = vmatmul.mubr.bf16.gmra.mrb[0].mxu0 %v1370
      %v1430 = vpop.f32.mrb[0].mxu0
      %v1431 = vadd.f32 0.0, %v1430
      %v1432 = vpop.f32.mrb[0].mxu0
      %v1433 = vpop.f32.mrb[0].mxu0
      %v1434 = vadd.f32 0.0, %v1433
      %v1435 = vpop.f32.mrb[0].mxu0
      %1436 = vdwg.mxu0
      %v1441 = vunpack.c.l.b16 %v1335
      %v1442 = vunpack.c.l.b16 %v1336
      %v1443 = vunpack.c.l.b16 %v1337
      %v1444 = vunpack.c.l.b16 %v1338
      %v1445 = vpack.c.b16 %v1442, %v1441
      %v1446 = vpack.c.b16 %v1444, %v1443
      %v1450 = vsel %vm265, %v1331, 0
      %v1453 = vsel %vm265, %v1332, 0
      %v1456 = vsel %vm265, %v1333, 0
      %v1459 = vsel %vm265, %v1334, 0
      %1461 = vmatprep.subr.bf16.mxu0 0
      %1462 = vmatpush1.bf16.msra.mxu0 %v1445
      %1463 = vmatprep.subr.bf16.mxu0 0
      %1464 = vmatpush1.bf16.msra.mxu0 %v1446
      %1465 = vmatprep.subr.bf16.mxu0 0
      %1466 = vmatpush1.bf16.msra.mxu0 0
      %1467 = vmatprep.subr.bf16.mxu0 0
      %1468 = vmatpush1.bf16.msra.mxu0 0
      %1469 = vmatprep.subr.bf16.mxu0 0
      %1470 = vmatpush1.bf16.msra.mxu0 0
      %1471 = vmatprep.subr.bf16.mxu0 0
      %1472 = vmatpush1.bf16.msra.mxu0 0
      %1473 = vmatprep.subr.bf16.mxu0 0
      %1474 = vmatpush1.bf16.msra.mxu0 0
      %1475 = vmatprep.subr.bf16.mxu0 0
      %1476 = vmatpush1.bf16.msra.mxu0 0
      %1477 = vmatprep.subr.bf16.mxu0 0
      %1478 = vmatpush1.bf16.msra.mxu0 0
      %1479 = vmatprep.subr.bf16.mxu0 0
      %1480 = vmatpush1.bf16.msra.mxu0 0
      %1481 = vmatprep.subr.bf16.mxu0 0
      %1482 = vmatpush1.bf16.msra.mxu0 0
      %1483 = vmatprep.subr.bf16.mxu0 0
      %1484 = vmatpush1.bf16.msra.mxu0 0
      %1485 = vmatprep.subr.bf16.mxu0 0
      %1486 = vmatpush1.bf16.msra.mxu0 0
      %1487 = vmatprep.subr.bf16.mxu0 0
      %1488 = vmatpush1.bf16.msra.mxu0 0
      %1489 = vmatprep.subr.bf16.mxu0 0
      %1490 = vmatpush1.bf16.msra.mxu0 0
      %1491 = vmatprep.subr.bf16.mxu0 0
      %1492 = vmatpush1.bf16.msra.mxu0 0
      %1493 = vmatprep.mubr.bf16.mxu0 0
      %1494 = vmatmul.mubr.bf16.gmra.mrb[0].mxu0 %v1450
      %v1495 = vpop.f32.mrb[0].mxu0
      %v1496 = vadd.f32 %v1407, %v1495
      %v1497 = vpop.f32.mrb[0].mxu0
      %v1498 = vpop.f32.mrb[0].mxu0
      %v1499 = vadd.f32 %v1410, %v1498
      %v1500 = vpop.f32.mrb[0].mxu0
      %1501 = vmatprep.mubr.bf16.mxu0 0
      %1502 = vmatmul.mubr.bf16.gmra.mrb[0].mxu0 %v1453
      %v1503 = vpop.f32.mrb[0].mxu0
      %v1504 = vadd.f32 %v1415, %v1503
      %v1505 = vpop.f32.mrb[0].mxu0
      %v1506 = vpop.f32.mrb[0].mxu0
      %v1507 = vadd.f32 %v1418, %v1506
      %v1508 = vpop.f32.mrb[0].mxu0
      %1509 = vmatprep.mubr.bf16.mxu0 0
      %1510 = vmatmul.mubr.bf16.gmra.mrb[0].mxu0 %v1456
      %v1511 = vpop.f32.mrb[0].mxu0
      %v1512 = vadd.f32 %v1423, %v1511
      %v1513 = vpop.f32.mrb[0].mxu0
      %v1514 = vpop.f32.mrb[0].mxu0
      %v1515 = vadd.f32 %v1426, %v1514
      %v1516 = vpop.f32.mrb[0].mxu0
      %1517 = vmatprep.mubr.bf16.mxu0 0
      %1518 = vmatmul.mubr.bf16.gmra.mrb[0].mxu0 %v1459
      %v1519 = vpop.f32.mrb[0].mxu0
      %v1520 = vadd.f32 %v1431, %v1519
      %v1521 = vpop.f32.mrb[0].mxu0
      %v1522 = vpop.f32.mrb[0].mxu0
      %v1523 = vadd.f32 %v1434, %v1522
      %v1524 = vpop.f32.mrb[0].mxu0
      %1525 = vdwg.mxu0
      %v1526 = vld [vmem:[%s3] sm:$0x1]
      %v1528 = vlaneseq
      %v1529 = vshrl.u32 %v1528, 7
      %v1530 = vsub.s32 0, %v1529
      %v1531 = vrot.slane %v1526, %v1530
      %v1533 = vadd.f32 %v1496, %v1531
      %v1534 = vadd.f32 %v1499, %v1531
      %v1535 = vadd.f32 %v1504, %v1531
      %v1536 = vadd.f32 %v1507, %v1531
      %v1537 = vadd.f32 %v1512, %v1531
      %v1538 = vadd.f32 %v1515, %v1531
      %v1539 = vadd.f32 %v1520, %v1531
      %v1540 = vadd.f32 %v1523, %v1531
      %vm1541 = vcmask 523264
      %1542 = vst.msk [vmem:[%s204] sm:$0xff] %vm1541, %v1533
      %1543 = vst.msk [vmem:[%s204 + $0x8] sm:$0xff] %vm1541, %v1534
      %1544 = vst.msk [vmem:[%s204 + $0x10] sm:$0xff] %vm1541, %v1535
      %1545 = vst.msk [vmem:[%s204 + $0x18] sm:$0xff] %vm1541, %v1536
      %1546 = vst.msk [vmem:[%s204 + $0x20] sm:$0xff] %vm1541, %v1537
      %1547 = vst.msk [vmem:[%s204 + $0x28] sm:$0xff] %vm1541, %v1538
      %1548 = vst.msk [vmem:[%s204 + $0x30] sm:$0xff] %vm1541, %v1539
      %1549 = vst.msk [vmem:[%s204 + $0x38] sm:$0xff] %vm1541, %v1540
      %s1550 = smul.u32 4, %s15
      %p1551 = scmp.lt.s32.totalorder %s1550, 7
      %s1552 = scalar_select %p1551, %s1550, 7
      %s1553 = smul.addr %s1552, 2
      %s1554 = smul.addr %s1553, 8
      %s1555 = scalar_lea.vmem %s4, %s1554
      // Predicated region
      $region37: #{transformer_forward.13} parent=35 // pred_check
        %p1556 = pneg %p122
      $region38: #{transformer_forward.13} parent=35 // pred_check_branch
        %1558 = sbr.rel (%p1556) target = $region40
      $region39: #{transformer_forward.13} parent=35 // pred_region
        %s1559 = smul.u32 4, %s15
      $region40: #{transformer_forward.13} parent=35 // pred_fallthru
        _
    $region36: #{transformer_forward.13} parent=5 // pred_fallthru
      _
    %p1560 = scmp.le.s32.totalorder 2, %s10
    // Predicated region
    $region41: #{transformer_forward.13} parent=5 // pred_check
      %p1561 = pneg %p1560
    $region42: #{transformer_forward.13} parent=5 // pred_check_branch
      %1563 = sbr.rel (%p1561) target = $region44
    $region43: #{transformer_forward.13} parent=5 // pred_region
      %s1564 = ssub.s32 %s10, 2
      // Predicated region
      $region45: #{transformer_forward.13} parent=43 // pred_check
        %p1565 = pneg %p128
      $region46: #{transformer_forward.13} parent=43 // pred_check_branch
        %1567 = sbr.rel (%p1565) target = $region48
      $region47: #{transformer_forward.13} parent=43 // pred_region
        %s1568 = smul.u32 4, %s16
        %p1569 = scmp.lt.s32.totalorder %s1568, 7
        %s1570 = scalar_select %p1569, %s1568, 7
        %s1571 = smul.addr %s1570, 2
        %s1572 = smul.addr %s1571, 8
        %s1573 = scalar_lea.vmem %s4, %s1572
      $region48: #{transformer_forward.13} parent=43 // pred_fallthru
        _
    $region44: #{transformer_forward.13} parent=5 // pred_fallthru
      _
  $region6: #{transformer_forward.13} parent=0 // loop_footer
    %s14 = sadd.s32 1, %s10
  $region7: #{transformer_forward.13} parent=0 // loop_footer_branch
    %9 = sbr.rel target = $region3
  $region8: #{transformer_forward.13} parent=0 // loop_exit
    _

// kernel: transformer_forward.14
$region0: #{transformer_forward.14}
  #allocation0 [shape = 'u32[]', space=smem, size = 0x4, offset = 0x4, fixed_abs, tag = 'smem constant byte address 0x4 - core index']
  #allocation1 [shape = 'u32[144,128]{1,0:T(1,128)}', space=vmem, size = 0x12000, scoped, tag = 'internal scratch']
  %s0 = inlined_call_operand.vmem [shape: f32[128,64], index: 0, kind: input, shape index: {}]
  %s1 = inlined_call_operand.vmem [shape: f32[1,64], index: 1, kind: input, shape index: {}]
  %s2 = inlined_call_operand.vmem [shape: f32[1,64], index: 2, kind: input, shape index: {}]
  %s3 = inlined_call_operand.vmem [shape: bf16[64,256], index: 3, kind: input, shape index: {}]
  %s4 = inlined_call_operand.vmem [shape: f32[1,256], index: 4, kind: input, shape index: {}]
  %s5 = inlined_call_operand.vmem [shape: bf16[256,64], index: 5, kind: input, shape index: {}]
  %s6 = inlined_call_operand.vmem [shape: f32[1,64], index: 6, kind: input, shape index: {}]
  %s7 = inlined_call_operand.vmem [shape: f32[128,64], index: 7, kind: output, shape index: {}]
  %s8 = sld [smem:[#allocation0]]
  $region61: #{transformer_forward.14} parent=0
    _
  %s10 = ssub.s32 1, %s8
  %s11 = scalar_select 0, %s10, %s8
  loop: start=0, step=1, limit=4
  $region2: #{transformer_forward.14} parent=0 // loop_pre_header
    _
  $region3: #{transformer_forward.14} parent=0 // loop_header
    %s13 = sphi 0, %s17
    %p14 = scmp.ge.s32.totalorder %s13, 4
    %s23 = sphi 0, %s25
    %s26 = sphi 0, %s23
    %s27 = sphi 0, %s26
    %s43 = sphi 0, %s27
    %s47 = sphi 0, %s47
    %s49 = sphi 0, %s47
    %s50 = sphi 0, %s49
    %s64 = sphi 0, %s50
    %s68 = sphi 0, %s68
    %s70 = sphi 0, %s68
    %s71 = sphi 0, %s70
    %s85 = sphi 0, %s71
    %s89 = sphi 0, %s89
    %s91 = sphi 0, %s89
    %s92 = sphi 0, %s91
    %s106 = sphi 0, %s92
    %s110 = sphi 0, %s110
    %s112 = sphi 0, %s110
    %s113 = sphi 0, %s112
    %s127 = sphi 0, %s113
    %s131 = sphi 0, %s131
    %s133 = sphi 0, %s131
    %s134 = sphi 0, %s133
    %s148 = sphi 0, %s134
    %s152 = sphi 0, %s152
    %s154 = sphi 0, %s152
    %s155 = sphi 0, %s154
    %s169 = sphi 0, %s155
    %s175 = sphi 0, %s177
    %s178 = sphi 0, %s175
    %s179 = sphi 0, %s178
    %s195 = sphi 0, %s179
  $region4: #{transformer_forward.14} parent=0 // loop_header_branch
    %16 = sbr.rel (%p14) target = $region8
  $region5: #{transformer_forward.14} parent=0 // loop_body
    %s18 = ssub.s32 %s13, 1
    %s19 = ssub.s32 %s13, 2
    %s20 = sadd.s32 %s13, 1
    %s21 = ssub.s32 %s13, %s20
    %p22 = scmp.eq.s32.totalorder %s21, 0
    %s24 = sadd.s32 %s23, 1
    %s25 = scalar_select %p22, %s23, %s24
    %p28 = pneg %p22
    %p29 = scmp.eq.s32.totalorder %s13, 1
    %p30 = por %p28, %p29
    %p31 = scmp.ne.s32.totalorder %s23, %s26
    %p32 = scmp.eq.s32.totalorder %s13, 0
    %p33 = por %p31, %p32
    %p34 = scmp.ne.s32.totalorder %s23, %s26
    %p35 = scmp.eq.s32.totalorder %s18, 1
    %p36 = por %p34, %p35
    %p37 = scmp.ne.s32.totalorder %s26, %s27
    %p38 = scmp.eq.s32.totalorder %s18, 0
    %p39 = por %p37, %p38
    %p40 = scmp.ne.s32.totalorder %s26, %s27
    %p41 = scmp.eq.s32.totalorder %s19, 1
    %p42 = por %p40, %p41
    %p44 = scmp.ne.s32.totalorder %s27, %s43
    %p45 = scmp.eq.s32.totalorder %s19, 0
    %p46 = por %p44, %p45
    %s48 = sadd.s32 %s47, 1
    %p51 = scmp.eq.s32.totalorder %s13, 1
    %p52 = scmp.ne.s32.totalorder %s47, %s49
    %p53 = scmp.eq.s32.totalorder %s13, 0
    %p54 = por %p52, %p53
    %p55 = scmp.ne.s32.totalorder %s47, %s49
    %p56 = scmp.eq.s32.totalorder %s18, 1
    %p57 = por %p55, %p56
    %p58 = scmp.ne.s32.totalorder %s49, %s50
    %p59 = scmp.eq.s32.totalorder %s18, 0
    %p60 = por %p58, %p59
    %p61 = scmp.ne.s32.totalorder %s49, %s50
    %p62 = scmp.eq.s32.totalorder %s19, 1
    %p63 = por %p61, %p62
    %p65 = scmp.ne.s32.totalorder %s50, %s64
    %p66 = scmp.eq.s32.totalorder %s19, 0
    %p67 = por %p65, %p66
    %s69 = sadd.s32 %s68, 1
    %p72 = scmp.eq.s32.totalorder %s13, 1
    %p73 = scmp.ne.s32.totalorder %s68, %s70
    %p74 = scmp.eq.s32.totalorder %s13, 0
    %p75 = por %p73, %p74
    %p76 = scmp.ne.s32.totalorder %s68, %s70
    %p77 = scmp.eq.s32.totalorder %s18, 1
    %p78 = por %p76, %p77
    %p79 = scmp.ne.s32.totalorder %s70, %s71
    %p80 = scmp.eq.s32.totalorder %s18, 0
    %p81 = por %p79, %p80
    %p82 = scmp.ne.s32.totalorder %s70, %s71
    %p83 = scmp.eq.s32.totalorder %s19, 1
    %p84 = por %p82, %p83
    %p86 = scmp.ne.s32.totalorder %s71, %s85
    %p87 = scmp.eq.s32.totalorder %s19, 0
    %p88 = por %p86, %p87
    %s90 = sadd.s32 %s89, 1
    %p93 = scmp.eq.s32.totalorder %s13, 1
    %p94 = scmp.ne.s32.totalorder %s89, %s91
    %p95 = scmp.eq.s32.totalorder %s13, 0
    %p96 = por %p94, %p95
    %p97 = scmp.ne.s32.totalorder %s89, %s91
    %p98 = scmp.eq.s32.totalorder %s18, 1
    %p99 = por %p97, %p98
    %p100 = scmp.ne.s32.totalorder %s91, %s92
    %p101 = scmp.eq.s32.totalorder %s18, 0
    %p102 = por %p100, %p101
    %p103 = scmp.ne.s32.totalorder %s91, %s92
    %p104 = scmp.eq.s32.totalorder %s19, 1
    %p105 = por %p103, %p104
    %p107 = scmp.ne.s32.totalorder %s92, %s106
    %p108 = scmp.eq.s32.totalorder %s19, 0
    %p109 = por %p107, %p108
    %s111 = sadd.s32 %s110, 1
    %p114 = scmp.eq.s32.totalorder %s13, 1
    %p115 = scmp.ne.s32.totalorder %s110, %s112
    %p116 = scmp.eq.s32.totalorder %s13, 0
    %p117 = por %p115, %p116
    %p118 = scmp.ne.s32.totalorder %s110, %s112
    %p119 = scmp.eq.s32.totalorder %s18, 1
    %p120 = por %p118, %p119
    %p121 = scmp.ne.s32.totalorder %s112, %s113
    %p122 = scmp.eq.s32.totalorder %s18, 0
    %p123 = por %p121, %p122
    %p124 = scmp.ne.s32.totalorder %s112, %s113
    %p125 = scmp.eq.s32.totalorder %s19, 1
    %p126 = por %p124, %p125
    %p128 = scmp.ne.s32.totalorder %s113, %s127
    %p129 = scmp.eq.s32.totalorder %s19, 0
    %p130 = por %p128, %p129
    %s132 = sadd.s32 %s131, 1
    %p135 = scmp.eq.s32.totalorder %s13, 1
    %p136 = scmp.ne.s32.totalorder %s131, %s133
    %p137 = scmp.eq.s32.totalorder %s13, 0
    %p138 = por %p136, %p137
    %p139 = scmp.ne.s32.totalorder %s131, %s133
    %p140 = scmp.eq.s32.totalorder %s18, 1
    %p141 = por %p139, %p140
    %p142 = scmp.ne.s32.totalorder %s133, %s134
    %p143 = scmp.eq.s32.totalorder %s18, 0
    %p144 = por %p142, %p143
    %p145 = scmp.ne.s32.totalorder %s133, %s134
    %p146 = scmp.eq.s32.totalorder %s19, 1
    %p147 = por %p145, %p146
    %p149 = scmp.ne.s32.totalorder %s134, %s148
    %p150 = scmp.eq.s32.totalorder %s19, 0
    %p151 = por %p149, %p150
    %s153 = sadd.s32 %s152, 1
    %p156 = scmp.eq.s32.totalorder %s13, 1
    %p157 = scmp.ne.s32.totalorder %s152, %s154
    %p158 = scmp.eq.s32.totalorder %s13, 0
    %p159 = por %p157, %p158
    %p160 = scmp.ne.s32.totalorder %s152, %s154
    %p161 = scmp.eq.s32.totalorder %s18, 1
    %p162 = por %p160, %p161
    %p163 = scmp.ne.s32.totalorder %s154, %s155
    %p164 = scmp.eq.s32.totalorder %s18, 0
    %p165 = por %p163, %p164
    %p166 = scmp.ne.s32.totalorder %s154, %s155
    %p167 = scmp.eq.s32.totalorder %s19, 1
    %p168 = por %p166, %p167
    %p170 = scmp.ne.s32.totalorder %s155, %s169
    %p171 = scmp.eq.s32.totalorder %s19, 0
    %p172 = por %p170, %p171
    %s173 = ssub.s32 %s13, %s20
    %p174 = scmp.eq.s32.totalorder %s173, 0
    %s176 = sadd.s32 %s175, 1
    %s177 = scalar_select %p174, %s175, %s176
    %p180 = pneg %p174
    %p181 = scmp.eq.s32.totalorder %s13, 1
    %p182 = por %p180, %p181
    %p183 = scmp.ne.s32.totalorder %s175, %s178
    %p184 = scmp.eq.s32.totalorder %s13, 0
    %p185 = por %p183, %p184
    %p186 = scmp.ne.s32.totalorder %s175, %s178
    %p187 = scmp.eq.s32.totalorder %s18, 1
    %p188 = por %p186, %p187
    %p189 = scmp.ne.s32.totalorder %s178, %s179
    %p190 = scmp.eq.s32.totalorder %s18, 0
    %p191 = por %p189, %p190
    %p192 = scmp.ne.s32.totalorder %s178, %s179
    %p193 = scmp.eq.s32.totalorder %s19, 1
    %p194 = por %p192, %p193
    %p196 = scmp.ne.s32.totalorder %s179, %s195
    %p197 = scmp.eq.s32.totalorder %s19, 0
    %p198 = por %p196, %p197
    %p199 = scmp.le.s32.totalorder 1, %s13
    %p200 = scmp.lt.s32.totalorder %s13, 3
    %p201 = pnand %p199, %p200
    %p202 = pneg %p201
    // Predicated region
    $region9: #{transformer_forward.14} parent=5 // pred_check
      _
    $region10: #{transformer_forward.14} parent=5 // pred_check_branch
      %204 = sbr.rel (%p201) target = $region12
    $region11: #{transformer_forward.14} parent=5 // pred_region
      %s205 = ssub.s32 %s13, 1
      // Predicated region
      $region13: #{transformer_forward.14} parent=11 // pred_check
        %p206 = pneg %p60
      $region14: #{transformer_forward.14} parent=11 // pred_check_branch
        %208 = sbr.rel (%p206) target = $region16
      $region15: #{transformer_forward.14} parent=11 // pred_region
        _
      $region16: #{transformer_forward.14} parent=11 // pred_fallthru
        _
      // Predicated region
      $region17: #{transformer_forward.14} parent=11 // pred_check
        %p209 = pneg %p81
      $region18: #{transformer_forward.14} parent=11 // pred_check_branch
        %211 = sbr.rel (%p209) target = $region20
      $region19: #{transformer_forward.14} parent=11 // pred_region
        _
      $region20: #{transformer_forward.14} parent=11 // pred_fallthru
        _
      // Predicated region
      $region21: #{transformer_forward.14} parent=11 // pred_check
        %p212 = pneg %p102
      $region22: #{transformer_forward.14} parent=11 // pred_check_branch
        %214 = sbr.rel (%p212) target = $region24
      $region23: #{transformer_forward.14} parent=11 // pred_region
        _
      $region24: #{transformer_forward.14} parent=11 // pred_fallthru
        _
      // Predicated region
      $region25: #{transformer_forward.14} parent=11 // pred_check
        %p215 = pneg %p123
      $region26: #{transformer_forward.14} parent=11 // pred_check_branch
        %217 = sbr.rel (%p215) target = $region28
      $region27: #{transformer_forward.14} parent=11 // pred_region
        _
      $region28: #{transformer_forward.14} parent=11 // pred_fallthru
        _
      // Predicated region
      $region29: #{transformer_forward.14} parent=11 // pred_check
        %p218 = pneg %p144
      $region30: #{transformer_forward.14} parent=11 // pred_check_branch
        %220 = sbr.rel (%p218) target = $region32
      $region31: #{transformer_forward.14} parent=11 // pred_region
        _
      $region32: #{transformer_forward.14} parent=11 // pred_fallthru
        _
      // Predicated region
      $region33: #{transformer_forward.14} parent=11 // pred_check
        %p221 = pneg %p165
      $region34: #{transformer_forward.14} parent=11 // pred_check_branch
        %223 = sbr.rel (%p221) target = $region36
      $region35: #{transformer_forward.14} parent=11 // pred_region
        _
      $region36: #{transformer_forward.14} parent=11 // pred_fallthru
        _
    $region12: #{transformer_forward.14} parent=5 // pred_fallthru
      _
    %p224 = scmp.lt.s32.totalorder %s13, 2
    // Predicated region
    $region37: #{transformer_forward.14} parent=5 // pred_check
      %p225 = pneg %p224
    $region38: #{transformer_forward.14} parent=5 // pred_check_branch
      %227 = sbr.rel (%p225) target = $region40
    $region39: #{transformer_forward.14} parent=5 // pred_region
      // Predicated region
      $region41: #{transformer_forward.14} parent=39 // pred_check
        %p228 = pneg %p33
      $region42: #{transformer_forward.14} parent=39 // pred_check_branch
        %230 = sbr.rel (%p228) target = $region44
      $region43: #{transformer_forward.14} parent=39 // pred_region
        %s231 = smul.u32 8, %s13
        %p232 = scmp.lt.s32.totalorder %s231, 15
        %s233 = scalar_select %p232, %s231, 15
        %s234 = smul.addr %s233, 8
        %s235 = scalar_lea.vmem %s0, %s234
        %s236 = smul.u32 8, %s13
      $region44: #{transformer_forward.14} parent=39 // pred_fallthru
        _
    $region40: #{transformer_forward.14} parent=5 // pred_fallthru
      _
    %p237 = scmp.le.s32.totalorder 1, %s13
    %p238 = scmp.lt.s32.totalorder %s13, 3
    %p239 = pnand %p237, %p238
    %p240 = pneg %p239
    // Predicated region
    $region45: #{transformer_forward.14} parent=5 // pred_check
      _
    $region46: #{transformer_forward.14} parent=5 // pred_check_branch
      %242 = sbr.rel (%p239) target = $region48
    $region47: #{transformer_forward.14} parent=5 // pred_region
      %s243 = ssub.s32 %s13, 1
      %s244 = smul.u32 8, %s18
      %p245 = scmp.lt.s32.totalorder %s244, 15
      %s246 = scalar_select %p245, %s244, 15
      %s247 = smul.addr %s246, 8
      %s248 = scalar_lea.vmem %s0, %s247
      %p249 = pneg %p39
      %p250 = pneg %p36
      %p251 = pneg %p60
      %p252 = pneg %p57
      %p253 = pneg %p81
      %p254 = pneg %p78
      %p255 = pneg %p102
      %p256 = pneg %p99
      %p257 = pneg %p123
      %p258 = pneg %p120
      %p259 = pneg %p144
      %p260 = pneg %p141
      %p261 = pneg %p165
      %p262 = pneg %p162
      %p263 = pneg %p191
      %p264 = pneg %p188
      %s265 = smul.u32 8, %s18
      %p266 = scmp.lt.s32.totalorder %s265, 15
      %s267 = scalar_select %p266, %s265, 15
      %s268 = smul.addr %s267, 8
      %s269 = scalar_lea.vmem %s7, %s268
      %s270 = smul.u32 8, %s18
      %p271 = scmp.lt.s32.totalorder %s270, 15
      %s272 = scalar_select %p271, %s270, 15
      %s273 = smul.addr %s272, 8
      %s274 = scalar_lea.vmem %s0, %s273
      %s275 = smul.u32 8, %s18
      %s276 = smul.u32 8, %s18
      %p277 = scmp.lt.s32.totalorder %s276, 15
      %s278 = scalar_select %p277, %s276, 15
      %s279 = smul.addr %s278, 8
      %s280 = scalar_lea.vmem %s7, %s279
      %s281 = smul.u32 8, %s18
      %v283 = vld [vmem:[%s274] sm:$0xff]
      %v284 = vld [vmem:[%s274 + $0x8] sm:$0xff]
      %v285 = vld [vmem:[%s274 + $0x10] sm:$0xff]
      %v286 = vld [vmem:[%s274 + $0x18] sm:$0xff]
      %v287 = vld [vmem:[%s274 + $0x20] sm:$0xff]
      %v288 = vld [vmem:[%s274 + $0x28] sm:$0xff]
      %v289 = vld [vmem:[%s274 + $0x30] sm:$0xff]
      %v290 = vld [vmem:[%s274 + $0x38] sm:$0xff]
      %v291 = vld [vmem:[%s1] sm:$0x1]
      %v292 = vld [vmem:[%s2] sm:$0x1]
      %vm293 = vcmask 523264
      %v294 = vsel %vm293, %v283, 0.0
      %295 = vadd.xlane.f32.xlu0 %v294
      %v296 = vpop.xlane.xlu0 %295
      %v297 = vsel %vm293, %v284, 0.0
      %298 = vadd.xlane.f32.xlu0 %v297
      %v299 = vpop.xlane.xlu0 %298
      %v300 = vsel %vm293, %v285, 0.0
      %301 = vadd.xlane.f32.xlu0 %v300
      %v302 = vpop.xlane.xlu0 %301
      %v303 = vsel %vm293, %v286, 0.0
      %304 = vadd.xlane.f32.xlu0 %v303
      %v305 = vpop.xlane.xlu0 %304
      %v306 = vsel %vm293, %v287, 0.0
      %307 = vadd.xlane.f32.xlu0 %v306
      %v308 = vpop.xlane.xlu0 %307
      %v309 = vsel %vm293, %v288, 0.0
      %310 = vadd.xlane.f32.xlu0 %v309
      %v311 = vpop.xlane.xlu0 %310
      %v312 = vsel %vm293, %v289, 0.0
      %313 = vadd.xlane.f32.xlu0 %v312
      %v314 = vpop.xlane.xlu0 %313
      %v315 = vsel %vm293, %v290, 0.0
      %316 = vadd.xlane.f32.xlu0 %v315
      %v317 = vpop.xlane.xlu0 %316
      %v318 = vrcp.pop 64.0
      %v319 = vmul.f32 %v296, %v318
      %v320 = vmul.f32 %v299, %v318
      %v321 = vmul.f32 %v302, %v318
      %v322 = vmul.f32 %v305, %v318
      %v323 = vmul.f32 %v308, %v318
      %v324 = vmul.f32 %v311, %v318
      %v325 = vmul.f32 %v314, %v318
      %v326 = vmul.f32 %v317, %v318
      %v327 = vsub.f32 %v283, %v319
      %v328 = vsub.f32 %v284, %v320
      %v329 = vsub.f32 %v285, %v321
      %v330 = vsub.f32 %v286, %v322
      %v331 = vsub.f32 %v287, %v323
      %v332 = vsub.f32 %v288, %v324
      %v333 = vsub.f32 %v289, %v325
      %v334 = vsub.f32 %v290, %v326
      %v335 = vmul.f32 %v327, %v327
      %v336 = vmul.f32 %v328, %v328
      %v337 = vmul.f32 %v329, %v329
      %v338 = vmul.f32 %v330, %v330
      %v339 = vmul.f32 %v331, %v331
      %v340 = vmul.f32 %v332, %v332
      %v341 = vmul.f32 %v333, %v333
      %v342 = vmul.f32 %v334, %v334
      %v343 = vsel %vm293, %v335, 0.0
      %344 = vadd.xlane.f32.xlu0 %v343
      %v345 = vpop.xlane.xlu0 %344
      %v346 = vsel %vm293, %v336, 0.0
      %347 = vadd.xlane.f32.xlu0 %v346
      %v348 = vpop.xlane.xlu0 %347
      %v349 = vsel %vm293, %v337, 0.0
      %350 = vadd.xlane.f32.xlu0 %v349
      %v351 = vpop.xlane.xlu0 %350
      %v352 = vsel %vm293, %v338, 0.0
      %353 = vadd.xlane.f32.xlu0 %v352
      %v354 = vpop.xlane.xlu0 %353
      %v355 = vsel %vm293, %v339, 0.0
      %356 = vadd.xlane.f32.xlu0 %v355
      %v357 = vpop.xlane.xlu0 %356
      %v358 = vsel %vm293, %v340, 0.0
      %359 = vadd.xlane.f32.xlu0 %v358
      %v360 = vpop.xlane.xlu0 %359
      %v361 = vsel %vm293, %v341, 0.0
      %362 = vadd.xlane.f32.xlu0 %v361
      %v363 = vpop.xlane.xlu0 %362
      %v364 = vsel %vm293, %v342, 0.0
      %365 = vadd.xlane.f32.xlu0 %v364
      %v366 = vpop.xlane.xlu0 %365
      %v367 = vmul.f32 %v345, %v318
      %v368 = vmul.f32 %v348, %v318
      %v369 = vmul.f32 %v351, %v318
      %v370 = vmul.f32 %v354, %v318
      %v371 = vmul.f32 %v357, %v318
      %v372 = vmul.f32 %v360, %v318
      %v373 = vmul.f32 %v363, %v318
      %v374 = vmul.f32 %v366, %v318
      %v375 = vadd.f32 %v367, 1e-05
      %v376 = vadd.f32 %v368, 1e-05
      %v377 = vadd.f32 %v369, 1e-05
      %v378 = vadd.f32 %v370, 1e-05
      %v379 = vadd.f32 %v371, 1e-05
      %v380 = vadd.f32 %v372, 1e-05
      %v381 = vadd.f32 %v373, 1e-05
      %v382 = vadd.f32 %v374, 1e-05
      %v383 = vrsqrt.pop %v375
      %v384 = vmul.f32 %v375, %v383
      %vm385 = vcmp.eq.f32.partialorder %v375, inf
      %v386 = vsel %vm385, %v375, %v384
      %vm387 = vcmp.eq.f32.partialorder %v375, 0.0
      %v388 = vand.u32 %v375, 2147483648
      %v389 = vsel %vm387, %v388, %v386
      %v390 = vrsqrt.pop %v376
      %v391 = vmul.f32 %v376, %v390
      %vm392 = vcmp.eq.f32.partialorder %v376, inf
      %v393 = vsel %vm392, %v376, %v391
      %vm394 = vcmp.eq.f32.partialorder %v376, 0.0
      %v395 = vand.u32 %v376, 2147483648
      %v396 = vsel %vm394, %v395, %v393
      %v397 = vrsqrt.pop %v377
      %v398 = vmul.f32 %v377, %v397
      %vm399 = vcmp.eq.f32.partialorder %v377, inf
      %v400 = vsel %vm399, %v377, %v398
      %vm401 = vcmp.eq.f32.partialorder %v377, 0.0
      %v402 = vand.u32 %v377, 2147483648
      %v403 = vsel %vm401, %v402, %v400
      %v404 = vrsqrt.pop %v378
      %v405 = vmul.f32 %v378, %v404
      %vm406 = vcmp.eq.f32.partialorder %v378, inf
      %v407 = vsel %vm406, %v378, %v405
      %vm408 = vcmp.eq.f32.partialorder %v378, 0.0
      %v409 = vand.u32 %v378, 2147483648
      %v410 = vsel %vm408, %v409, %v407
      %v411 = vrsqrt.pop %v379
      %v412 = vmul.f32 %v379, %v411
      %vm413 = vcmp.eq.f32.partialorder %v379, inf
      %v414 = vsel %vm413, %v379, %v412
      %vm415 = vcmp.eq.f32.partialorder %v379, 0.0
      %v416 = vand.u32 %v379, 2147483648
      %v417 = vsel %vm415, %v416, %v414
      %v418 = vrsqrt.pop %v380
      %v419 = vmul.f32 %v380, %v418
      %vm420 = vcmp.eq.f32.partialorder %v380, inf
      %v421 = vsel %vm420, %v380, %v419
      %vm422 = vcmp.eq.f32.partialorder %v380, 0.0
      %v423 = vand.u32 %v380, 2147483648
      %v424 = vsel %vm422, %v423, %v421
      %v425 = vrsqrt.pop %v381
      %v426 = vmul.f32 %v381, %v425
      %vm427 = vcmp.eq.f32.partialorder %v381, inf
      %v428 = vsel %vm427, %v381, %v426
      %vm429 = vcmp.eq.f32.partialorder %v381, 0.0
      %v430 = vand.u32 %v381, 2147483648
      %v431 = vsel %vm429, %v430, %v428
      %v432 = vrsqrt.pop %v382
      %v433 = vmul.f32 %v382, %v432
      %vm434 = vcmp.eq.f32.partialorder %v382, inf
      %v435 = vsel %vm434, %v382, %v433
      %vm436 = vcmp.eq.f32.partialorder %v382, 0.0
      %v437 = vand.u32 %v382, 2147483648
      %v438 = vsel %vm436, %v437, %v435
      %v439 = vrcp.pop %v389
      %v440 = vmul.f32 %v327, %v439
      %v441 = vrcp.pop %v396
      %v442 = vmul.f32 %v328, %v441
      %v443 = vrcp.pop %v403
      %v444 = vmul.f32 %v329, %v443
      %v445 = vrcp.pop %v410
      %v446 = vmul.f32 %v330, %v445
      %v447 = vrcp.pop %v417
      %v448 = vmul.f32 %v331, %v447
      %v449 = vrcp.pop %v424
      %v450 = vmul.f32 %v332, %v449
      %v451 = vrcp.pop %v431
      %v452 = vmul.f32 %v333, %v451
      %v453 = vrcp.pop %v438
      %v454 = vmul.f32 %v334, %v453
      %v456 = vlaneseq
      %v457 = vshrl.u32 %v456, 7
      %v458 = vsub.s32 0, %v457
      %v459 = vrot.slane %v291, %v458
      %v461 = vmul.f32 %v440, %v459
      %v462 = vmul.f32 %v442, %v459
      %v463 = vmul.f32 %v444, %v459
      %v464 = vmul.f32 %v446, %v459
      %v465 = vmul.f32 %v448, %v459
      %v466 = vmul.f32 %v450, %v459
      %v467 = vmul.f32 %v452, %v459
      %v468 = vmul.f32 %v454, %v459
      %v470 = vlaneseq
      %v471 = vshrl.u32 %v470, 7
      %v472 = vsub.s32 0, %v471
      %v473 = vrot.slane %v292, %v472
      %v475 = vadd.f32 %v461, %v473
      %v476 = vadd.f32 %v462, %v473
      %v477 = vadd.f32 %v463, %v473
      %v478 = vadd.f32 %v464, %v473
      %v479 = vadd.f32 %v465, %v473
      %v480 = vadd.f32 %v466, %v473
      %v481 = vadd.f32 %v467, %v473
      %v482 = vadd.f32 %v468, %v473
      %v483 = vpack.c.bf16 %v476, %v475
      %v484 = vpack.c.bf16 %v478, %v477
      %v485 = vpack.c.bf16 %v480, %v479
      %v486 = vpack.c.bf16 %v482, %v481
      %v487 = vld [vmem:[%s3] sm:$0xff]
      %v488 = vld [vmem:[%s3 + $0x8] sm:$0xff]
      %v489 = vld [vmem:[%s3 + $0x10] sm:$0xff]
      %v490 = vld [vmem:[%s3 + $0x18] sm:$0xff]
      %v491 = vld [vmem:[%s3 + $0x20] sm:$0xff]
      %v492 = vld [vmem:[%s3 + $0x28] sm:$0xff]
      %v493 = vld [vmem:[%s3 + $0x30] sm:$0xff]
      %v494 = vld [vmem:[%s3 + $0x38] sm:$0xff]
      %v495 = vld [vmem:[%s4] sm:$0x3]
      %v497 = vlaneseq
      %v498 = vshrl.u32 %v497, 7
      %v499 = vsub.s32 0, %v498
      %v500 = vrot.slane %v495, %v499
      %v501 = vlaneseq
      %v502 = vshrl.u32 %v501, 7
      %v503 = vsub.s32 1, %v502
      %v504 = vrot.slane %v495, %v503
      %v515 = vunpack.c.l.b16 %v487
      %v516 = vunpack.c.h.b16 %v487
      %v517 = vunpack.c.l.b16 %v488
      %v518 = vunpack.c.h.b16 %v488
      %v519 = vunpack.c.l.b16 %v489
      %v520 = vunpack.c.h.b16 %v489
      %v521 = vunpack.c.l.b16 %v490
      %v522 = vunpack.c.h.b16 %v490
      %v523 = vunpack.c.l.b16 %v491
      %v524 = vunpack.c.h.b16 %v491
      %v525 = vunpack.c.l.b16 %v492
      %v526 = vunpack.c.h.b16 %v492
      %v527 = vunpack.c.l.b16 %v493
      %v528 = vunpack.c.h.b16 %v493
      %v529 = vunpack.c.l.b16 %v494
      %v530 = vunpack.c.h.b16 %v494
      %v531 = vpack.c.b16 %v517, %v515
      %v532 = vpack.c.b16 %v518, %v516
      %v533 = vpack.c.b16 %v521, %v519
      %v534 = vpack.c.b16 %v522, %v520
      %v535 = vpack.c.b16 %v525, %v523
      %v536 = vpack.c.b16 %v526, %v524
      %v537 = vpack.c.b16 %v529, %v527
      %v538 = vpack.c.b16 %v530, %v528
      %v548 = vsel %vm293, %v483, 0
      %v551 = vsel %vm293, %v484, 0
      %v554 = vsel %vm293, %v485, 0
      %v557 = vsel %vm293, %v486, 0
      %559 = vmatprep.subr.bf16.mxu0 %v532
      %560 = vmatpush1.bf16.msra.mxu0 %v531
      %561 = vmatprep.subr.bf16.mxu0 %v534
      %562 = vmatpush1.bf16.msra.mxu0 %v533
      %563 = vmatprep.subr.bf16.mxu0 %v536
      %564 = vmatpush1.bf16.msra.mxu0 %v535
      %565 = vmatprep.subr.bf16.mxu0 %v538
      %566 = vmatpush1.bf16.msra.mxu0 %v537
      %567 = vmatprep.subr.bf16.mxu0 0
      %568 = vmatpush1.bf16.msra.mxu0 0
      %569 = vmatprep.subr.bf16.mxu0 0
      %570 = vmatpush1.bf16.msra.mxu0 0
      %571 = vmatprep.subr.bf16.mxu0 0
      %572 = vmatpush1.bf16.msra.mxu0 0
      %573 = vmatprep.subr.bf16.mxu0 0
      %574 = vmatpush1.bf16.msra.mxu0 0
      %575 = vmatprep.subr.bf16.mxu0 0
      %576 = vmatpush1.bf16.msra.mxu0 0
      %577 = vmatprep.subr.bf16.mxu0 0
      %578 = vmatpush1.bf16.msra.mxu0 0
      %579 = vmatprep.subr.bf16.mxu0 0
      %580 = vmatpush1.bf16.msra.mxu0 0
      %581 = vmatprep.subr.bf16.mxu0 0
      %582 = vmatpush1.bf16.msra.mxu0 0
      %583 = vmatprep.subr.bf16.mxu0 0
      %584 = vmatpush1.bf16.msra.mxu0 0
      %585 = vmatprep.subr.bf16.mxu0 0
      %586 = vmatpush1.bf16.msra.mxu0 0
      %587 = vmatprep.subr.bf16.mxu0 0
      %588 = vmatpush1.bf16.msra.mxu0 0
      %589 = vmatprep.subr.bf16.mxu0 0
      %590 = vmatpush1.bf16.msra.mxu0 0
      %591 = vmatprep.mubr.bf16.mxu0 0
      %592 = vmatmul.mubr.bf16.gmra.mrb[0].mxu0 %v548
      %v593 = vpop.f32.mrb[0].mxu0
      %v594 = vadd.f32 %v500, %v593
      %v595 = vpop.f32.mrb[0].mxu0
      %v596 = vadd.f32 %v504, %v595
      %v597 = vpop.f32.mrb[0].mxu0
      %v598 = vadd.f32 %v500, %v597
      %v599 = vpop.f32.mrb[0].mxu0
      %v600 = vadd.f32 %v504, %v599
      %601 = vmatprep.mubr.bf16.mxu0 0
      %602 = vmatmul.mubr.bf16.gmra.mrb[0].mxu0 %v551
      %v603 = vpop.f32.mrb[0].mxu0
      %v604 = vadd.f32 %v500, %v603
      %v605 = vpop.f32.mrb[0].mxu0
      %v606 = vadd.f32 %v504, %v605
      %v607 = vpop.f32.mrb[0].mxu0
      %v608 = vadd.f32 %v500, %v607
      %v609 = vpop.f32.mrb[0].mxu0
      %v610 = vadd.f32 %v504, %v609
      %611 = vmatprep.mubr.bf16.mxu0 0
      %612 = vmatmul.mubr.bf16.gmra.mrb[0].mxu0 %v554
      %v613 = vpop.f32.mrb[0].mxu0
      %v614 = vadd.f32 %v500, %v613
      %v615 = vpop.f32.mrb[0].mxu0
      %v616 = vadd.f32 %v504, %v615
      %v617 = vpop.f32.mrb[0].mxu0
      %v618 = vadd.f32 %v500, %v617
      %v619 = vpop.f32.mrb[0].mxu0
      %v620 = vadd.f32 %v504, %v619
      %621 = vmatprep.mubr.bf16.mxu0 0
      %622 = vmatmul.mubr.bf16.gmra.mrb[0].mxu0 %v557
      %v623 = vpop.f32.mrb[0].mxu0
      %v624 = vadd.f32 %v500, %v623
      %v625 = vpop.f32.mrb[0].mxu0
      %v626 = vadd.f32 %v504, %v625
      %v627 = vpop.f32.mrb[0].mxu0
      %v628 = vadd.f32 %v500, %v627
      %v629 = vpop.f32.mrb[0].mxu0
      %v630 = vadd.f32 %v504, %v629
      %631 = vdwg.mxu0
      %v632 = vmul.f32 %v594, 0.5
      %v633 = vmul.f32 %v596, 0.5
      %v634 = vmul.f32 %v598, 0.5
      %v635 = vmul.f32 %v600, 0.5
      %v636 = vmul.f32 %v604, 0.5
      %v637 = vmul.f32 %v606, 0.5
      %v638 = vmul.f32 %v608, 0.5
      %v639 = vmul.f32 %v610, 0.5
      %v640 = vmul.f32 %v614, 0.5
      %v641 = vmul.f32 %v616, 0.5
      %v642 = vmul.f32 %v618, 0.5
      %v643 = vmul.f32 %v620, 0.5
      %v644 = vmul.f32 %v624, 0.5
      %v645 = vmul.f32 %v626, 0.5
      %v646 = vmul.f32 %v628, 0.5
      %v647 = vmul.f32 %v630, 0.5
      %v648 = vmul.f32 %v594, 0.70710677
      %v649 = vmul.f32 %v596, 0.70710677
      %v650 = vmul.f32 %v598, 0.70710677
      %v651 = vmul.f32 %v600, 0.70710677
      %v652 = vmul.f32 %v604, 0.70710677
      %v653 = vmul.f32 %v606, 0.70710677
      %v654 = vmul.f32 %v608, 0.70710677
      %v655 = vmul.f32 %v610, 0.70710677
      %v656 = vmul.f32 %v614, 0.70710677
      %v657 = vmul.f32 %v616, 0.70710677
      %v658 = vmul.f32 %v618, 0.70710677
      %v659 = vmul.f32 %v620, 0.70710677
      %v660 = vmul.f32 %v624, 0.70710677
      %v661 = vmul.f32 %v626, 0.70710677
      %v662 = vmul.f32 %v628, 0.70710677
      %v663 = vmul.f32 %v630, 0.70710677
      %vm664 = vcmp.ge.f32.partialorder %v648, 0.0
      %vm665 = vcmp.ge.f32.partialorder %v649, 0.0
      %vm666 = vcmp.ge.f32.partialorder %v650, 0.0
      %vm667 = vcmp.ge.f32.partialorder %v651, 0.0
      %vm668 = vcmp.ge.f32.partialorder %v652, 0.0
      %vm669 = vcmp.ge.f32.partialorder %v653, 0.0
      %vm670 = vcmp.ge.f32.partialorder %v654, 0.0
      %vm671 = vcmp.ge.f32.partialorder %v655, 0.0
      %vm672 = vcmp.ge.f32.partialorder %v656, 0.0
      %vm673 = vcmp.ge.f32.partialorder %v657, 0.0
      %vm674 = vcmp.ge.f32.partialorder %v658, 0.0
      %vm675 = vcmp.ge.f32.partialorder %v659, 0.0
      %vm676 = vcmp.ge.f32.partialorder %v660, 0.0
      %vm677 = vcmp.ge.f32.partialorder %v661, 0.0
      %vm678 = vcmp.ge.f32.partialorder %v662, 0.0
      %vm679 = vcmp.ge.f32.partialorder %v663, 0.0
      %v680 = vsel %vm664, 1.0, -1.0
      %v681 = vsel %vm665, 1.0, -1.0
      %v682 = vsel %vm666, 1.0, -1.0
      %v683 = vsel %vm667, 1.0, -1.0
      %v684 = vsel %vm668, 1.0, -1.0
      %v685 = vsel %vm669, 1.0, -1.0
      %v686 = vsel %vm670, 1.0, -1.0
      %v687 = vsel %vm671, 1.0, -1.0
      %v688 = vsel %vm672, 1.0, -1.0
      %v689 = vsel %vm673, 1.0, -1.0
      %v690 = vsel %vm674, 1.0, -1.0
      %v691 = vsel %vm675, 1.0, -1.0
      %v692 = vsel %vm676, 1.0, -1.0
      %v693 = vsel %vm677, 1.0, -1.0
      %v694 = vsel %vm678, 1.0, -1.0
      %v695 = vsel %vm679, 1.0, -1.0
      %v696 = vand.u32 2147483647, %v648
      %v697 = vand.u32 2147483647, %v649
      %v698 = vand.u32 2147483647, %v650
      %v699 = vand.u32 2147483647, %v651
      %v700 = vand.u32 2147483647, %v652
      %v701 = vand.u32 2147483647, %v653
      %v702 = vand.u32 2147483647, %v654
      %v703 = vand.u32 2147483647, %v655
      %v704 = vand.u32 2147483647, %v656
      %v705 = vand.u32 2147483647, %v657
      %v706 = vand.u32 2147483647, %v658
      %v707 = vand.u32 2147483647, %v659
      %v708 = vand.u32 2147483647, %v660
      %v709 = vand.u32 2147483647, %v661
      %v710 = vand.u32 2147483647, %v662
      %v711 = vand.u32 2147483647, %v663
      %v712 = vmul.f32 %v696, 0.3275911
      %v713 = vmul.f32 %v697, 0.3275911
      %v714 = vmul.f32 %v698, 0.3275911
      %v715 = vmul.f32 %v699, 0.3275911
      %v716 = vmul.f32 %v700, 0.3275911
      %v717 = vmul.f32 %v701, 0.3275911
      %v718 = vmul.f32 %v702, 0.3275911
      %v719 = vmul.f32 %v703, 0.3275911
      %v720 = vmul.f32 %v704, 0.3275911
      %v721 = vmul.f32 %v705, 0.3275911
      %v722 = vmul.f32 %v706, 0.3275911
      %v723 = vmul.f32 %v707, 0.3275911
      %v724 = vmul.f32 %v708, 0.3275911
      %v725 = vmul.f32 %v709, 0.3275911
      %v726 = vmul.f32 %v710, 0.3275911
      %v727 = vmul.f32 %v711, 0.3275911
      %v728 = vadd.f32 %v712, 1.0
      %v729 = vadd.f32 %v713, 1.0
      %v730 = vadd.f32 %v714, 1.0
      %v731 = vadd.f32 %v715, 1.0
      %v732 = vadd.f32 %v716, 1.0
      %v733 = vadd.f32 %v717, 1.0
      %v734 = vadd.f32 %v718, 1.0
      %v735 = vadd.f32 %v719, 1.0
      %v736 = vadd.f32 %v720, 1.0
      %v737 = vadd.f32 %v721, 1.0
      %v738 = vadd.f32 %v722, 1.0
      %v739 = vadd.f32 %v723, 1.0
      %v740 = vadd.f32 %v724, 1.0
      %v741 = vadd.f32 %v725, 1.0
      %v742 = vadd.f32 %v726, 1.0
      %v743 = vadd.f32 %v727, 1.0
      %v744 = vrcp.pop %v728
      %v745 = vmul.f32 1.0, %v744
      %v746 = vrcp.pop %v729
      %v747 = vmul.f32 1.0, %v746
      %v748 = vrcp.pop %v730
      %v749 = vmul.f32 1.0, %v748
      %v750 = vrcp.pop %v731
      %v751 = vmul.f32 1.0, %v750
      %v752 = vrcp.pop %v732
      %v753 = vmul.f32 1.0, %v752
      %v754 = vrcp.pop %v733
      %v755 = vmul.f32 1.0, %v754
      %v756 = vrcp.pop %v734
      %v757 = vmul.f32 1.0, %v756
      %v758 = vrcp.pop %v735
      %v759 = vmul.f32 1.0, %v758
      %v760 = vrcp.pop %v736
      %v761 = vmul.f32 1.0, %v760
      %v762 = vrcp.pop %v737
      %v763 = vmul.f32 1.0, %v762
      %v764 = vrcp.pop %v738
      %v765 = vmul.f32 1.0, %v764
      %v766 = vrcp.pop %v739
      %v767 = vmul.f32 1.0, %v766
      %v768 = vrcp.pop %v740
      %v769 = vmul.f32 1.0, %v768
      %v770 = vrcp.pop %v741
      %v771 = vmul.f32 1.0, %v770
      %v772 = vrcp.pop %v742
      %v773 = vmul.f32 1.0, %v772
      %v774 = vrcp.pop %v743
      %v775 = vmul.f32 1.0, %v774
      %v776 = vmul.f32 %v745, 1.0614054
      %v777 = vmul.f32 %v747, 1.0614054
      %v778 = vmul.f32 %v749, 1.0614054
      %v779 = vmul.f32 %v751, 1.0614054
      %v780 = vmul.f32 %v753, 1.0614054
      %v781 = vmul.f32 %v755, 1.0614054
      %v782 = vmul.f32 %v757, 1.0614054
      %v783 = vmul.f32 %v759, 1.0614054
      %v784 = vmul.f32 %v761, 1.0614054
      %v785 = vmul.f32 %v763, 1.0614054
      %v786 = vmul.f32 %v765, 1.0614054
      %v787 = vmul.f32 %v767, 1.0614054
      %v788 = vmul.f32 %v769, 1.0614054
      %v789 = vmul.f32 %v771, 1.0614054
      %v790 = vmul.f32 %v773, 1.0614054
      %v791 = vmul.f32 %v775, 1.0614054
      %v792 = vadd.f32 %v776, -1.4531521
      %v793 = vadd.f32 %v777, -1.4531521
      %v794 = vadd.f32 %v778, -1.4531521
      %v795 = vadd.f32 %v779, -1.4531521
      %v796 = vadd.f32 %v780, -1.4531521
      %v797 = vadd.f32 %v781, -1.4531521
      %v798 = vadd.f32 %v782, -1.4531521
      %v799 = vadd.f32 %v783, -1.4531521
      %v800 = vadd.f32 %v784, -1.4531521
      %v801 = vadd.f32 %v785, -1.4531521
      %v802 = vadd.f32 %v786, -1.4531521
      %v803 = vadd.f32 %v787, -1.4531521
      %v804 = vadd.f32 %v788, -1.4531521
      %v805 = vadd.f32 %v789, -1.4531521
      %v806 = vadd.f32 %v790, -1.4531521
      %v807 = vadd.f32 %v791, -1.4531521
      %v808 = vmul.f32 %v792, %v745
      %v809 = vmul.f32 %v793, %v747
      %v810 = vmul.f32 %v794, %v749
      %v811 = vmul.f32 %v795, %v751
      %v812 = vmul.f32 %v796, %v753
      %v813 = vmul.f32 %v797, %v755
      %v814 = vmul.f32 %v798, %v757
      %v815 = vmul.f32 %v799, %v759
      %v816 = vmul.f32 %v800, %v761
      %v817 = vmul.f32 %v801, %v763
      %v818 = vmul.f32 %v802, %v765
      %v819 = vmul.f32 %v803, %v767
      %v820 = vmul.f32 %v804, %v769
      %v821 = vmul.f32 %v805, %v771
      %v822 = vmul.f32 %v806, %v773
      %v823 = vmul.f32 %v807, %v775
      %v824 = vadd.f32 %v808, 1.4214138
      %v825 = vadd.f32 %v809, 1.4214138
      %v826 = vadd.f32 %v810, 1.4214138
      %v827 = vadd.f32 %v811, 1.4214138
      %v828 = vadd.f32 %v812, 1.4214138
      %v829 = vadd.f32 %v813, 1.4214138
      %v830 = vadd.f32 %v814, 1.4214138
      %v831 = vadd.f32 %v815, 1.4214138
      %v832 = vadd.f32 %v816, 1.4214138
      %v833 = vadd.f32 %v817, 1.4214138
      %v834 = vadd.f32 %v818, 1.4214138
      %v835 = vadd.f32 %v819, 1.4214138
      %v836 = vadd.f32 %v820, 1.4214138
      %v837 = vadd.f32 %v821, 1.4214138
      %v838 = vadd.f32 %v822, 1.4214138
      %v839 = vadd.f32 %v823, 1.4214138
      %v840 = vmul.f32 %v824, %v745
      %v841 = vmul.f32 %v825, %v747
      %v842 = vmul.f32 %v826, %v749
      %v843 = vmul.f32 %v827, %v751
      %v844 = vmul.f32 %v828, %v753
      %v845 = vmul.f32 %v829, %v755
      %v846 = vmul.f32 %v830, %v757
      %v847 = vmul.f32 %v831, %v759
      %v848 = vmul.f32 %v832, %v761
      %v849 = vmul.f32 %v833, %v763
      %v850 = vmul.f32 %v834, %v765
      %v851 = vmul.f32 %v835, %v767
      %v852 = vmul.f32 %v836, %v769
      %v853 = vmul.f32 %v837, %v771
      %v854 = vmul.f32 %v838, %v773
      %v855 = vmul.f32 %v839, %v775
      %v856 = vadd.f32 %v840, -0.28449672
      %v857 = vadd.f32 %v841, -0.28449672
      %v858 = vadd.f32 %v842, -0.28449672
      %v859 = vadd.f32 %v843, -0.28449672
      %v860 = vadd.f32 %v844, -0.28449672
      %v861 = vadd.f32 %v845, -0.28449672
      %v862 = vadd.f32 %v846, -0.28449672
      %v863 = vadd.f32 %v847, -0.28449672
      %v864 = vadd.f32 %v848, -0.28449672
      %v865 = vadd.f32 %v849, -0.28449672
      %v866 = vadd.f32 %v850, -0.28449672
      %v867 = vadd.f32 %v851, -0.28449672
      %v868 = vadd.f32 %v852, -0.28449672
      %v869 = vadd.f32 %v853, -0.28449672
      %v870 = vadd.f32 %v854, -0.28449672
      %v871 = vadd.f32 %v855, -0.28449672
      %v872 = vmul.f32 %v856, %v745
      %v873 = vmul.f32 %v857, %v747
      %v874 = vmul.f32 %v858, %v749
      %v875 = vmul.f32 %v859, %v751
      %v876 = vmul.f32 %v860, %v753
      %v877 = vmul.f32 %v861, %v755
      %v878 = vmul.f32 %v862, %v757
      %v879 = vmul.f32 %v863, %v759
      %v880 = vmul.f32 %v864, %v761
      %v881 = vmul.f32 %v865, %v763
      %v882 = vmul.f32 %v866, %v765
      %v883 = vmul.f32 %v867, %v767
      %v884 = vmul.f32 %v868, %v769
      %v885 = vmul.f32 %v869, %v771
      %v886 = vmul.f32 %v870, %v773
      %v887 = vmul.f32 %v871, %v775
      %v888 = vadd.f32 %v872, 0.2548296
      %v889 = vadd.f32 %v873, 0.2548296
      %v890 = vadd.f32 %v874, 0.2548296
      %v891 = vadd.f32 %v875, 0.2548296
      %v892 = vadd.f32 %v876, 0.2548296
      %v893 = vadd.f32 %v877, 0.2548296
      %v894 = vadd.f32 %v878, 0.2548296
      %v895 = vadd.f32 %v879, 0.2548296
      %v896 = vadd.f32 %v880, 0.2548296
      %v897 = vadd.f32 %v881, 0.2548296
      %v898 = vadd.f32 %v882, 0.2548296
      %v899 = vadd.f32 %v883, 0.2548296
      %v900 = vadd.f32 %v884, 0.2548296
      %v901 = vadd.f32 %v885, 0.2548296
      %v902 = vadd.f32 %v886, 0.2548296
      %v903 = vadd.f32 %v887, 0.2548296
      %v904 = vmul.f32 %v888, %v745
      %v905 = vmul.f32 %v889, %v747
      %v906 = vmul.f32 %v890, %v749
      %v907 = vmul.f32 %v891, %v751
      %v908 = vmul.f32 %v892, %v753
      %v909 = vmul.f32 %v893, %v755
      %v910 = vmul.f32 %v894, %v757
      %v911 = vmul.f32 %v895, %v759
      %v912 = vmul.f32 %v896, %v761
      %v913 = vmul.f32 %v897, %v763
      %v914 = vmul.f32 %v898, %v765
      %v915 = vmul.f32 %v899, %v767
      %v916 = vmul.f32 %v900, %v769
      %v917 = vmul.f32 %v901, %v771
      %v918 = vmul.f32 %v902, %v773
      %v919 = vmul.f32 %v903, %v775
      %v920 = vsub.f32 0.0, %v696
      %v921 = vsub.f32 0.0, %v697
      %v922 = vsub.f32 0.0, %v698
      %v923 = vsub.f32 0.0, %v699
      %v924 = vsub.f32 0.0, %v700
      %v925 = vsub.f32 0.0, %v701
      %v926 = vsub.f32 0.0, %v702
      %v927 = vsub.f32 0.0, %v703
      %v928 = vsub.f32 0.0, %v704
      %v929 = vsub.f32 0.0, %v705
      %v930 = vsub.f32 0.0, %v706
      %v931 = vsub.f32 0.0, %v707
      %v932 = vsub.f32 0.0, %v708
      %v933 = vsub.f32 0.0, %v709
      %v934 = vsub.f32 0.0, %v710
      %v935 = vsub.f32 0.0, %v711
      %v936 = vmul.f32 %v920, %v696
      %v937 = vmul.f32 %v921, %v697
      %v938 = vmul.f32 %v922, %v698
      %v939 = vmul.f32 %v923, %v699
      %v940 = vmul.f32 %v924, %v700
      %v941 = vmul.f32 %v925, %v701
      %v942 = vmul.f32 %v926, %v702
      %v943 = vmul.f32 %v927, %v703
      %v944 = vmul.f32 %v928, %v704
      %v945 = vmul.f32 %v929, %v705
      %v946 = vmul.f32 %v930, %v706
      %v947 = vmul.f32 %v931, %v707
      %v948 = vmul.f32 %v932, %v708
      %v949 = vmul.f32 %v933, %v709
      %v950 = vmul.f32 %v934, %v710
      %v951 = vmul.f32 %v935, %v711
      %v952 = vmul.f32 %v936, 1.442695
      %v953 = vpow.pop %v952
      %v954 = vmul.f32 %v937, 1.442695
      %v955 = vpow.pop %v954
      %v956 = vmul.f32 %v938, 1.442695
      %v957 = vpow.pop %v956
      %v958 = vmul.f32 %v939, 1.442695
      %v959 = vpow.pop %v958
      %v960 = vmul.f32 %v940, 1.442695
      %v961 = vpow.pop %v960
      %v962 = vmul.f32 %v941, 1.442695
      %v963 = vpow.pop %v962
      %v964 = vmul.f32 %v942, 1.442695
      %v965 = vpow.pop %v964
      %v966 = vmul.f32 %v943, 1.442695
      %v967 = vpow.pop %v966
      %v968 = vmul.f32 %v944, 1.442695
      %v969 = vpow.pop %v968
      %v970 = vmul.f32 %v945, 1.442695
      %v971 = vpow.pop %v970
      %v972 = vmul.f32 %v946, 1.442695
      %v973 = vpow.pop %v972
      %v974 = vmul.f32 %v947, 1.442695
      %v975 = vpow.pop %v974
      %v976 = vmul.f32 %v948, 1.442695
      %v977 = vpow.pop %v976
      %v978 = vmul.f32 %v949, 1.442695
      %v979 = vpow.pop %v978
      %v980 = vmul.f32 %v950, 1.442695
      %v981 = vpow.pop %v980
      %v982 = vmul.f32 %v951, 1.442695
      %v983 = vpow.pop %v982
      %v984 = vmul.f32 %v904, %v953
      %v985 = vmul.f32 %v905, %v955
      %v986 = vmul.f32 %v906, %v957
      %v987 = vmul.f32 %v907, %v959
      %v988 = vmul.f32 %v908, %v961
      %v989 = vmul.f32 %v909, %v963
      %v990 = vmul.f32 %v910, %v965
      %v991 = vmul.f32 %v911, %v967
      %v992 = vmul.f32 %v912, %v969
      %v993 = vmul.f32 %v913, %v971
      %v994 = vmul.f32 %v914, %v973
      %v995 = vmul.f32 %v915, %v975
      %v996 = vmul.f32 %v916, %v977
      %v997 = vmul.f32 %v917, %v979
      %v998 = vmul.f32 %v918, %v981
      %v999 = vmul.f32 %v919, %v983
      %v1000 = vsub.f32 1.0, %v984
      %v1001 = vsub.f32 1.0, %v985
      %v1002 = vsub.f32 1.0, %v986
      %v1003 = vsub.f32 1.0, %v987
      %v1004 = vsub.f32 1.0, %v988
      %v1005 = vsub.f32 1.0, %v989
      %v1006 = vsub.f32 1.0, %v990
      %v1007 = vsub.f32 1.0, %v991
      %v1008 = vsub.f32 1.0, %v992
      %v1009 = vsub.f32 1.0, %v993
      %v1010 = vsub.f32 1.0, %v994
      %v1011 = vsub.f32 1.0, %v995
      %v1012 = vsub.f32 1.0, %v996
      %v1013 = vsub.f32 1.0, %v997
      %v1014 = vsub.f32 1.0, %v998
      %v1015 = vsub.f32 1.0, %v999
      %v1016 = vmul.f32 %v680, %v1000
      %v1017 = vmul.f32 %v681, %v1001
      %v1018 = vmul.f32 %v682, %v1002
      %v1019 = vmul.f32 %v683, %v1003
      %v1020 = vmul.f32 %v684, %v1004
      %v1021 = vmul.f32 %v685, %v1005
      %v1022 = vmul.f32 %v686, %v1006
      %v1023 = vmul.f32 %v687, %v1007
      %v1024 = vmul.f32 %v688, %v1008
      %v1025 = vmul.f32 %v689, %v1009
      %v1026 = vmul.f32 %v690, %v1010
      %v1027 = vmul.f32 %v691, %v1011
      %v1028 = vmul.f32 %v692, %v1012
      %v1029 = vmul.f32 %v693, %v1013
      %v1030 = vmul.f32 %v694, %v1014
      %v1031 = vmul.f32 %v695, %v1015
      %v1032 = vadd.f32 %v1016, 1.0
      %v1033 = vadd.f32 %v1017, 1.0
      %v1034 = vadd.f32 %v1018, 1.0
      %v1035 = vadd.f32 %v1019, 1.0
      %v1036 = vadd.f32 %v1020, 1.0
      %v1037 = vadd.f32 %v1021, 1.0
      %v1038 = vadd.f32 %v1022, 1.0
      %v1039 = vadd.f32 %v1023, 1.0
      %v1040 = vadd.f32 %v1024, 1.0
      %v1041 = vadd.f32 %v1025, 1.0
      %v1042 = vadd.f32 %v1026, 1.0
      %v1043 = vadd.f32 %v1027, 1.0
      %v1044 = vadd.f32 %v1028, 1.0
      %v1045 = vadd.f32 %v1029, 1.0
      %v1046 = vadd.f32 %v1030, 1.0
      %v1047 = vadd.f32 %v1031, 1.0
      %v1048 = vmul.f32 %v632, %v1032
      %v1049 = vmul.f32 %v633, %v1033
      %v1050 = vmul.f32 %v634, %v1034
      %v1051 = vmul.f32 %v635, %v1035
      %v1052 = vmul.f32 %v636, %v1036
      %v1053 = vmul.f32 %v637, %v1037
      %v1054 = vmul.f32 %v638, %v1038
      %v1055 = vmul.f32 %v639, %v1039
      %v1056 = vmul.f32 %v640, %v1040
      %v1057 = vmul.f32 %v641, %v1041
      %v1058 = vmul.f32 %v642, %v1042
      %v1059 = vmul.f32 %v643, %v1043
      %v1060 = vmul.f32 %v644, %v1044
      %v1061 = vmul.f32 %v645, %v1045
      %v1062 = vmul.f32 %v646, %v1046
      %v1063 = vmul.f32 %v647, %v1047
      %v1064 = vpack.c.bf16 %v1050, %v1048
      %v1065 = vpack.c.bf16 %v1051, %v1049
      %v1066 = vpack.c.bf16 %v1054, %v1052
      %v1067 = vpack.c.bf16 %v1055, %v1053
      %v1068 = vpack.c.bf16 %v1058, %v1056
      %v1069 = vpack.c.bf16 %v1059, %v1057
      %v1070 = vpack.c.bf16 %v1062, %v1060
      %v1071 = vpack.c.bf16 %v1063, %v1061
      %v1072 = vld [vmem:[%s5] sm:$0xf]
      %v1073 = vld [vmem:[%s5 + $0x4] sm:$0xf]
      %v1074 = vld [vmem:[%s5 + $0x8] sm:$0xf]
      %v1075 = vld [vmem:[%s5 + $0xc] sm:$0xf]
      %v1076 = vld [vmem:[%s5 + $0x10] sm:$0xf]
      %v1077 = vld [vmem:[%s5 + $0x14] sm:$0xf]
      %v1078 = vld [vmem:[%s5 + $0x18] sm:$0xf]
      %v1079 = vld [vmem:[%s5 + $0x1c] sm:$0xf]
      %v1080 = vld [vmem:[%s5 + $0x20] sm:$0xf]
      %v1081 = vld [vmem:[%s5 + $0x24] sm:$0xf]
      %v1082 = vld [vmem:[%s5 + $0x28] sm:$0xf]
      %v1083 = vld [vmem:[%s5 + $0x2c] sm:$0xf]
      %v1084 = vld [vmem:[%s5 + $0x30] sm:$0xf]
      %v1085 = vld [vmem:[%s5 + $0x34] sm:$0xf]
      %v1086 = vld [vmem:[%s5 + $0x38] sm:$0xf]
      %v1087 = vld [vmem:[%s5 + $0x3c] sm:$0xf]
      %v1088 = vld [vmem:[%s5 + $0x40] sm:$0xf]
      %v1089 = vld [vmem:[%s5 + $0x44] sm:$0xf]
      %v1090 = vld [vmem:[%s5 + $0x48] sm:$0xf]
      %v1091 = vld [vmem:[%s5 + $0x4c] sm:$0xf]
      %v1092 = vld [vmem:[%s5 + $0x50] sm:$0xf]
      %v1093 = vld [vmem:[%s5 + $0x54] sm:$0xf]
      %v1094 = vld [vmem:[%s5 + $0x58] sm:$0xf]
      %v1095 = vld [vmem:[%s5 + $0x5c] sm:$0xf]
      %v1096 = vld [vmem:[%s5 + $0x60] sm:$0xf]
      %v1097 = vld [vmem:[%s5 + $0x64] sm:$0xf]
      %v1098 = vld [vmem:[%s5 + $0x68] sm:$0xf]
      %v1099 = vld [vmem:[%s5 + $0x6c] sm:$0xf]
      %v1100 = vld [vmem:[%s5 + $0x70] sm:$0xf]
      %v1101 = vld [vmem:[%s5 + $0x74] sm:$0xf]
      %v1102 = vld [vmem:[%s5 + $0x78] sm:$0xf]
      %v1103 = vld [vmem:[%s5 + $0x7c] sm:$0xf]
      %v1104 = vld [vmem:[%s6] sm:$0x1]
      %v1106 = vlaneseq
      %v1107 = vshrl.u32 %v1106, 7
      %v1108 = vsub.s32 0, %v1107
      %v1109 = vrot.slane %v1104, %v1108
      %v1143 = vunpack.c.l.b16 %v1072
      %v1144 = vunpack.c.l.b16 %v1073
      %v1145 = vunpack.c.l.b16 %v1074
      %v1146 = vunpack.c.l.b16 %v1075
      %v1147 = vunpack.c.l.b16 %v1076
      %v1148 = vunpack.c.l.b16 %v1077
      %v1149 = vunpack.c.l.b16 %v1078
      %v1150 = vunpack.c.l.b16 %v1079
      %v1151 = vunpack.c.l.b16 %v1080
      %v1152 = vunpack.c.l.b16 %v1081
      %v1153 = vunpack.c.l.b16 %v1082
      %v1154 = vunpack.c.l.b16 %v1083
      %v1155 = vunpack.c.l.b16 %v1084
      %v1156 = vunpack.c.l.b16 %v1085
      %v1157 = vunpack.c.l.b16 %v1086
      %v1158 = vunpack.c.l.b16 %v1087
      %v1159 = vunpack.c.l.b16 %v1088
      %v1160 = vunpack.c.l.b16 %v1089
      %v1161 = vunpack.c.l.b16 %v1090
      %v1162 = vunpack.c.l.b16 %v1091
      %v1163 = vunpack.c.l.b16 %v1092
      %v1164 = vunpack.c.l.b16 %v1093
      %v1165 = vunpack.c.l.b16 %v1094
      %v1166 = vunpack.c.l.b16 %v1095
      %v1167 = vunpack.c.l.b16 %v1096
      %v1168 = vunpack.c.l.b16 %v1097
      %v1169 = vunpack.c.l.b16 %v1098
      %v1170 = vunpack.c.l.b16 %v1099
      %v1171 = vunpack.c.l.b16 %v1100
      %v1172 = vunpack.c.l.b16 %v1101
      %v1173 = vunpack.c.l.b16 %v1102
      %v1174 = vunpack.c.l.b16 %v1103
      %v1175 = vpack.c.b16 %v1144, %v1143
      %v1176 = vpack.c.b16 %v1146, %v1145
      %v1177 = vpack.c.b16 %v1148, %v1147
      %v1178 = vpack.c.b16 %v1150, %v1149
      %v1179 = vpack.c.b16 %v1152, %v1151
      %v1180 = vpack.c.b16 %v1154, %v1153
      %v1181 = vpack.c.b16 %v1156, %v1155
      %v1182 = vpack.c.b16 %v1158, %v1157
      %v1183 = vpack.c.b16 %v1160, %v1159
      %v1184 = vpack.c.b16 %v1162, %v1161
      %v1185 = vpack.c.b16 %v1164, %v1163
      %v1186 = vpack.c.b16 %v1166, %v1165
      %v1187 = vpack.c.b16 %v1168, %v1167
      %v1188 = vpack.c.b16 %v1170, %v1169
      %v1189 = vpack.c.b16 %v1172, %v1171
      %v1190 = vpack.c.b16 %v1174, %v1173
      %1207 = vmatprep.subr.bf16.mxu0 0
      %1208 = vmatpush1.bf16.msra.mxu0 %v1175
      %1209 = vmatprep.subr.bf16.mxu0 0
      %1210 = vmatpush1.bf16.msra.mxu0 %v1176
      %1211 = vmatprep.subr.bf16.mxu0 0
      %1212 = vmatpush1.bf16.msra.mxu0 %v1177
      %1213 = vmatprep.subr.bf16.mxu0 0
      %1214 = vmatpush1.bf16.msra.mxu0 %v1178
      %1215 = vmatprep.subr.bf16.mxu0 0
      %1216 = vmatpush1.bf16.msra.mxu0 %v1179
      %1217 = vmatprep.subr.bf16.mxu0 0
      %1218 = vmatpush1.bf16.msra.mxu0 %v1180
      %1219 = vmatprep.subr.bf16.mxu0 0
      %1220 = vmatpush1.bf16.msra.mxu0 %v1181
      %1221 = vmatprep.subr.bf16.mxu0 0
      %1222 = vmatpush1.bf16.msra.mxu0 %v1182
      %1223 = vmatprep.subr.bf16.mxu0 0
      %1224 = vmatpush1.bf16.msra.mxu0 %v1183
      %1225 = vmatprep.subr.bf16.mxu0 0
      %1226 = vmatpush1.bf16.msra.mxu0 %v1184
      %1227 = vmatprep.subr.bf16.mxu0 0
      %1228 = vmatpush1.bf16.msra.mxu0 %v1185
      %1229 = vmatprep.subr.bf16.mxu0 0
      %1230 = vmatpush1.bf16.msra.mxu0 %v1186
      %1231 = vmatprep.subr.bf16.mxu0 0
      %1232 = vmatpush1.bf16.msra.mxu0 %v1187
      %1233 = vmatprep.subr.bf16.mxu0 0
      %1234 = vmatpush1.bf16.msra.mxu0 %v1188
      %1235 = vmatprep.subr.bf16.mxu0 0
      %1236 = vmatpush1.bf16.msra.mxu0 %v1189
      %1237 = vmatprep.subr.bf16.mxu0 0
      %1238 = vmatpush1.bf16.msra.mxu0 %v1190
      %1239 = vmatprep.mubr.bf16.mxu0 %v1065
      %1240 = vmatmul.mubr.bf16.gmra.mrb[0].mxu0 %v1064
      %v1241 = vpop.f32.mrb[0].mxu0
      %v1242 = vadd.f32 %v1109, %v1241
      %v1243 = vpop.f32.mrb[0].mxu0
      %v1244 = vpop.f32.mrb[0].mxu0
      %v1245 = vadd.f32 %v1109, %v1244
      %v1246 = vpop.f32.mrb[0].mxu0
      %1247 = vmatprep.mubr.bf16.mxu0 %v1067
      %1248 = vmatmul.mubr.bf16.gmra.mrb[0].mxu0 %v1066
      %v1249 = vpop.f32.mrb[0].mxu0
      %v1250 = vadd.f32 %v1109, %v1249
      %v1251 = vpop.f32.mrb[0].mxu0
      %v1252 = vpop.f32.mrb[0].mxu0
      %v1253 = vadd.f32 %v1109, %v1252
      %v1254 = vpop.f32.mrb[0].mxu0
      %1255 = vmatprep.mubr.bf16.mxu0 %v1069
      %1256 = vmatmul.mubr.bf16.gmra.mrb[0].mxu0 %v1068
      %v1257 = vpop.f32.mrb[0].mxu0
      %v1258 = vadd.f32 %v1109, %v1257
      %v1259 = vpop.f32.mrb[0].mxu0
      %v1260 = vpop.f32.mrb[0].mxu0
      %v1261 = vadd.f32 %v1109, %v1260
      %v1262 = vpop.f32.mrb[0].mxu0
      %1263 = vmatprep.mubr.bf16.mxu0 %v1071
      %1264 = vmatmul.mubr.bf16.gmra.mrb[0].mxu0 %v1070
      %v1265 = vpop.f32.mrb[0].mxu0
      %v1266 = vadd.f32 %v1109, %v1265
      %v1267 = vpop.f32.mrb[0].mxu0
      %v1268 = vpop.f32.mrb[0].mxu0
      %v1269 = vadd.f32 %v1109, %v1268
      %v1270 = vpop.f32.mrb[0].mxu0
      %1271 = vdwg.mxu0
      %v1272 = vadd.f32 %v1242, %v283
      %v1273 = vadd.f32 %v1245, %v284
      %v1274 = vadd.f32 %v1250, %v285
      %v1275 = vadd.f32 %v1253, %v286
      %v1276 = vadd.f32 %v1258, %v287
      %v1277 = vadd.f32 %v1261, %v288
      %v1278 = vadd.f32 %v1266, %v289
      %v1279 = vadd.f32 %v1269, %v290
      %1280 = vst.msk [vmem:[%s280] sm:$0xff] %vm293, %v1272
      %1281 = vst.msk [vmem:[%s280 + $0x8] sm:$0xff] %vm293, %v1273
      %1282 = vst.msk [vmem:[%s280 + $0x10] sm:$0xff] %vm293, %v1274
      %1283 = vst.msk [vmem:[%s280 + $0x18] sm:$0xff] %vm293, %v1275
      %1284 = vst.msk [vmem:[%s280 + $0x20] sm:$0xff] %vm293, %v1276
      %1285 = vst.msk [vmem:[%s280 + $0x28] sm:$0xff] %vm293, %v1277
      %1286 = vst.msk [vmem:[%s280 + $0x30] sm:$0xff] %vm293, %v1278
      %1287 = vst.msk [vmem:[%s280 + $0x38] sm:$0xff] %vm293, %v1279
      %s1288 = smul.u32 8, %s18
      %p1289 = scmp.lt.s32.totalorder %s1288, 15
      %s1290 = scalar_select %p1289, %s1288, 15
      %s1291 = smul.addr %s1290, 8
      %s1292 = scalar_lea.vmem %s7, %s1291
      // Predicated region
      $region49: #{transformer_forward.14} parent=47 // pred_check
        %p1293 = pneg %p188
      $region50: #{transformer_forward.14} parent=47 // pred_check_branch
        %1295 = sbr.rel (%p1293) target = $region52
      $region51: #{transformer_forward.14} parent=47 // pred_region
        %s1296 = smul.u32 8, %s18
      $region52: #{transformer_forward.14} parent=47 // pred_fallthru
        _
    $region48: #{transformer_forward.14} parent=5 // pred_fallthru
      _
    %p1297 = scmp.le.s32.totalorder 2, %s13
    // Predicated region
    $region53: #{transformer_forward.14} parent=5 // pred_check
      %p1298 = pneg %p1297
    $region54: #{transformer_forward.14} parent=5 // pred_check_branch
      %1300 = sbr.rel (%p1298) target = $region56
    $region55: #{transformer_forward.14} parent=5 // pred_region
      %s1301 = ssub.s32 %s13, 2
      // Predicated region
      $region57: #{transformer_forward.14} parent=55 // pred_check
        %p1302 = pneg %p194
      $region58: #{transformer_forward.14} parent=55 // pred_check_branch
        %1304 = sbr.rel (%p1302) target = $region60
      $region59: #{transformer_forward.14} parent=55 // pred_region
        %s1305 = smul.u32 8, %s19
        %p1306 = scmp.lt.s32.totalorder %s1305, 15
        %s1307 = scalar_select %p1306, %s1305, 15
        %s1308 = smul.addr %s1307, 8
        %s1309 = scalar_lea.vmem %s7, %s1308
      $region60: #{transformer_forward.14} parent=55 // pred_fallthru
        _
    $region56: #{transformer_forward.14} parent=5 // pred_fallthru
      _
  $region6: #{transformer_forward.14} parent=0 // loop_footer
    %s17 = sadd.s32 1, %s13
  $region7: #{transformer_forward.14} parent=0 // loop_footer_branch
    %12 = sbr.rel target = $region3
  $region8: #{transformer_forward.14} parent=0 // loop_exit
    _

// kernel: transformer_forward.16
$region0: #{transformer_forward.16}
  #allocation0 [shape = 'u32[]', space=smem, size = 0x4, offset = 0x4, fixed_abs, tag = 'smem constant byte address 0x4 - core index']
  #allocation1 [shape = 'u32[144,128]{1,0:T(1,128)}', space=vmem, size = 0x12000, scoped, tag = 'internal scratch']
  %s0 = inlined_call_operand.vmem [shape: bf16[2,6,64,32], index: 0, kind: input, shape index: {}]
  %s1 = inlined_call_operand.vmem [shape: f32[64,64], index: 1, kind: input, shape index: {}]
  %s2 = inlined_call_operand.vmem [shape: bf16[2,32,64], index: 2, kind: input, shape index: {}]
  %s3 = inlined_call_operand.vmem [shape: f32[1,64], index: 3, kind: input, shape index: {}]
  %s4 = inlined_call_operand.vmem [shape: f32[2,64,64], index: 4, kind: output, shape index: {}]
  %s5 = sld [smem:[#allocation0]]
  $region49: #{transformer_forward.16} parent=0
    _
  %s7 = ssub.s32 1, %s5
  %s8 = scalar_select 0, %s7, %s5
  loop: start=0, step=1, limit=4
  $region2: #{transformer_forward.16} parent=0 // loop_pre_header
    _
  $region3: #{transformer_forward.16} parent=0 // loop_header
    %s10 = sphi 0, %s14
    %p11 = scmp.ge.s32.totalorder %s10, 4
    %s20 = sphi 0, %s22
    %s23 = sphi 0, %s20
    %s24 = sphi 0, %s23
    %s40 = sphi 0, %s24
    %s44 = sphi 0, %s44
    %s46 = sphi 0, %s44
    %s47 = sphi 0, %s46
    %s61 = sphi 0, %s47
    %s65 = sphi 0, %s65
    %s67 = sphi 0, %s65
    %s68 = sphi 0, %s67
    %s82 = sphi 0, %s68
    %s86 = sphi 0, %s86
    %s88 = sphi 0, %s86
    %s89 = sphi 0, %s88
    %s103 = sphi 0, %s89
    %s109 = sphi 0, %s111
    %s112 = sphi 0, %s109
    %s113 = sphi 0, %s112
    %s129 = sphi 0, %s113
  $region4: #{transformer_forward.16} parent=0 // loop_header_branch
    %13 = sbr.rel (%p11) target = $region8
  $region5: #{transformer_forward.16} parent=0 // loop_body
    %s15 = ssub.s32 %s10, 1
    %s16 = ssub.s32 %s10, 2
    %s17 = sadd.s32 %s10, 1
    %s18 = ssub.s32 %s10, %s17
    %p19 = scmp.eq.s32.totalorder %s18, 0
    %s21 = sadd.s32 %s20, 1
    %s22 = scalar_select %p19, %s20, %s21
    %p25 = pneg %p19
    %p26 = scmp.eq.s32.totalorder %s10, 1
    %p27 = por %p25, %p26
    %p28 = scmp.ne.s32.totalorder %s20, %s23
    %p29 = scmp.eq.s32.totalorder %s10, 0
    %p30 = por %p28, %p29
    %p31 = scmp.ne.s32.totalorder %s20, %s23
    %p32 = scmp.eq.s32.totalorder %s15, 1
    %p33 = por %p31, %p32
    %p34 = scmp.ne.s32.totalorder %s23, %s24
    %p35 = scmp.eq.s32.totalorder %s15, 0
    %p36 = por %p34, %p35
    %p37 = scmp.ne.s32.totalorder %s23, %s24
    %p38 = scmp.eq.s32.totalorder %s16, 1
    %p39 = por %p37, %p38
    %p41 = scmp.ne.s32.totalorder %s24, %s40
    %p42 = scmp.eq.s32.totalorder %s16, 0
    %p43 = por %p41, %p42
    %s45 = sadd.s32 %s44, 1
    %p48 = scmp.eq.s32.totalorder %s10, 1
    %p49 = scmp.ne.s32.totalorder %s44, %s46
    %p50 = scmp.eq.s32.totalorder %s10, 0
    %p51 = por %p49, %p50
    %p52 = scmp.ne.s32.totalorder %s44, %s46
    %p53 = scmp.eq.s32.totalorder %s15, 1
    %p54 = por %p52, %p53
    %p55 = scmp.ne.s32.totalorder %s46, %s47
    %p56 = scmp.eq.s32.totalorder %s15, 0
    %p57 = por %p55, %p56
    %p58 = scmp.ne.s32.totalorder %s46, %s47
    %p59 = scmp.eq.s32.totalorder %s16, 1
    %p60 = por %p58, %p59
    %p62 = scmp.ne.s32.totalorder %s47, %s61
    %p63 = scmp.eq.s32.totalorder %s16, 0
    %p64 = por %p62, %p63
    %s66 = sadd.s32 %s65, 1
    %p69 = scmp.eq.s32.totalorder %s10, 1
    %p70 = scmp.ne.s32.totalorder %s65, %s67
    %p71 = scmp.eq.s32.totalorder %s10, 0
    %p72 = por %p70, %p71
    %p73 = scmp.ne.s32.totalorder %s65, %s67
    %p74 = scmp.eq.s32.totalorder %s15, 1
    %p75 = por %p73, %p74
    %p76 = scmp.ne.s32.totalorder %s67, %s68
    %p77 = scmp.eq.s32.totalorder %s15, 0
    %p78 = por %p76, %p77
    %p79 = scmp.ne.s32.totalorder %s67, %s68
    %p80 = scmp.eq.s32.totalorder %s16, 1
    %p81 = por %p79, %p80
    %p83 = scmp.ne.s32.totalorder %s68, %s82
    %p84 = scmp.eq.s32.totalorder %s16, 0
    %p85 = por %p83, %p84
    %s87 = sadd.s32 %s86, 1
    %p90 = scmp.eq.s32.totalorder %s10, 1
    %p91 = scmp.ne.s32.totalorder %s86, %s88
    %p92 = scmp.eq.s32.totalorder %s10, 0
    %p93 = por %p91, %p92
    %p94 = scmp.ne.s32.totalorder %s86, %s88
    %p95 = scmp.eq.s32.totalorder %s15, 1
    %p96 = por %p94, %p95
    %p97 = scmp.ne.s32.totalorder %s88, %s89
    %p98 = scmp.eq.s32.totalorder %s15, 0
    %p99 = por %p97, %p98
    %p100 = scmp.ne.s32.totalorder %s88, %s89
    %p101 = scmp.eq.s32.totalorder %s16, 1
    %p102 = por %p100, %p101
    %p104 = scmp.ne.s32.totalorder %s89, %s103
    %p105 = scmp.eq.s32.totalorder %s16, 0
    %p106 = por %p104, %p105
    %s107 = ssub.s32 %s10, %s17
    %p108 = scmp.eq.s32.totalorder %s107, 0
    %s110 = sadd.s32 %s109, 1
    %s111 = scalar_select %p108, %s109, %s110
    %p114 = pneg %p108
    %p115 = scmp.eq.s32.totalorder %s10, 1
    %p116 = por %p114, %p115
    %p117 = scmp.ne.s32.totalorder %s109, %s112
    %p118 = scmp.eq.s32.totalorder %s10, 0
    %p119 = por %p117, %p118
    %p120 = scmp.ne.s32.totalorder %s109, %s112
    %p121 = scmp.eq.s32.totalorder %s15, 1
    %p122 = por %p120, %p121
    %p123 = scmp.ne.s32.totalorder %s112, %s113
    %p124 = scmp.eq.s32.totalorder %s15, 0
    %p125 = por %p123, %p124
    %p126 = scmp.ne.s32.totalorder %s112, %s113
    %p127 = scmp.eq.s32.totalorder %s16, 1
    %p128 = por %p126, %p127
    %p130 = scmp.ne.s32.totalorder %s113, %s129
    %p131 = scmp.eq.s32.totalorder %s16, 0
    %p132 = por %p130, %p131
    %p133 = scmp.le.s32.totalorder 1, %s10
    %p134 = scmp.lt.s32.totalorder %s10, 3
    %p135 = pnand %p133, %p134
    %p136 = pneg %p135
    // Predicated region
    $region9: #{transformer_forward.16} parent=5 // pred_check
      _
    $region10: #{transformer_forward.16} parent=5 // pred_check_branch
      %138 = sbr.rel (%p135) target = $region12
    $region11: #{transformer_forward.16} parent=5 // pred_region
      %s139 = ssub.s32 %s10, 1
      // Predicated region
      $region13: #{transformer_forward.16} parent=11 // pred_check
        %p140 = pneg %p57
      $region14: #{transformer_forward.16} parent=11 // pred_check_branch
        %142 = sbr.rel (%p140) target = $region16
      $region15: #{transformer_forward.16} parent=11 // pred_region
        _
      $region16: #{transformer_forward.16} parent=11 // pred_fallthru
        _
      // Predicated region
      $region17: #{transformer_forward.16} parent=11 // pred_check
        %p143 = pneg %p78
      $region18: #{transformer_forward.16} parent=11 // pred_check_branch
        %145 = sbr.rel (%p143) target = $region20
      $region19: #{transformer_forward.16} parent=11 // pred_region
        _
      $region20: #{transformer_forward.16} parent=11 // pred_fallthru
        _
      // Predicated region
      $region21: #{transformer_forward.16} parent=11 // pred_check
        %p146 = pneg %p99
      $region22: #{transformer_forward.16} parent=11 // pred_check_branch
        %148 = sbr.rel (%p146) target = $region24
      $region23: #{transformer_forward.16} parent=11 // pred_region
        _
      $region24: #{transformer_forward.16} parent=11 // pred_fallthru
        _
    $region12: #{transformer_forward.16} parent=5 // pred_fallthru
      _
    %p149 = scmp.lt.s32.totalorder %s10, 2
    // Predicated region
    $region25: #{transformer_forward.16} parent=5 // pred_check
      %p150 = pneg %p149
    $region26: #{transformer_forward.16} parent=5 // pred_check_branch
      %152 = sbr.rel (%p150) target = $region28
    $region27: #{transformer_forward.16} parent=5 // pred_region
      // Predicated region
      $region29: #{transformer_forward.16} parent=27 // pred_check
        %p153 = pneg %p30
      $region30: #{transformer_forward.16} parent=27 // pred_check_branch
        %155 = sbr.rel (%p153) target = $region32
      $region31: #{transformer_forward.16} parent=27 // pred_region
        %p156 = scmp.lt.s32.totalorder %s10, 1
        %s157 = scalar_select %p156, %s10, 1
        %s158 = smul.addr %s157, 48
        %s159 = smul.addr %s158, 4
        %s160 = scalar_lea.vmem %s0, %s159
      $region32: #{transformer_forward.16} parent=27 // pred_fallthru
        _
    $region28: #{transformer_forward.16} parent=5 // pred_fallthru
      _
    %p161 = scmp.le.s32.totalorder 1, %s10
    %p162 = scmp.lt.s32.totalorder %s10, 3
    %p163 = pnand %p161, %p162
    %p164 = pneg %p163
    // Predicated region
    $region33: #{transformer_forward.16} parent=5 // pred_check
      _
    $region34: #{transformer_forward.16} parent=5 // pred_check_branch
      %166 = sbr.rel (%p163) target = $region36
    $region35: #{transformer_forward.16} parent=5 // pred_region
      %s167 = ssub.s32 %s10, 1
      %p168 = scmp.lt.s32.totalorder %s15, 1
      %s169 = scalar_select %p168, %s15, 1
      %s170 = smul.addr %s169, 48
      %s171 = smul.addr %s170, 4
      %s172 = scalar_lea.vmem %s0, %s171
      %p173 = pneg %p36
      %p174 = pneg %p33
      %p175 = pneg %p57
      %p176 = pneg %p54
      %p177 = pneg %p78
      %p178 = pneg %p75
      %p179 = pneg %p99
      %p180 = pneg %p96
      %p181 = pneg %p125
      %p182 = pneg %p122
      %p183 = scmp.lt.s32.totalorder %s15, 1
      %s184 = scalar_select %p183, %s15, 1
      %s185 = smul.addr %s184, 8
      %s186 = smul.addr %s185, 8
      %s187 = scalar_lea.vmem %s4, %s186
      %p188 = scmp.lt.s32.totalorder %s15, 1
      %s189 = scalar_select %p188, %s15, 1
      %s190 = smul.addr %s189, 48
      %s191 = smul.addr %s190, 4
      %s192 = scalar_lea.vmem %s0, %s191
      %p193 = scmp.lt.s32.totalorder %s15, 1
      %s194 = scalar_select %p193, %s15, 1
      %s195 = smul.addr %s194, 8
      %s196 = smul.addr %s195, 8
      %s197 = scalar_lea.vmem %s4, %s196
      %v199 = vld [vmem:[%s192] sm:$0xf]
      %v200 = vld [vmem:[%s192 + $0x4] sm:$0xf]
      %v201 = vld [vmem:[%s192 + $0x8] sm:$0xf]
      %v202 = vld [vmem:[%s192 + $0xc] sm:$0xf]
      %v203 = vld [vmem:[%s192 + $0x10] sm:$0xf]
      %v204 = vld [vmem:[%s192 + $0x14] sm:$0xf]
      %v205 = vld [vmem:[%s192 + $0x18] sm:$0xf]
      %v206 = vld [vmem:[%s192 + $0x1c] sm:$0xf]
      %v207 = vld [vmem:[%s192 + $0x20] sm:$0xf]
      %v208 = vld [vmem:[%s192 + $0x24] sm:$0xf]
      %v209 = vld [vmem:[%s192 + $0x28] sm:$0xf]
      %v210 = vld [vmem:[%s192 + $0x2c] sm:$0xf]
      %v211 = vld [vmem:[%s192 + $0x30] sm:$0xf]
      %v212 = vld [vmem:[%s192 + $0x34] sm:$0xf]
      %v213 = vld [vmem:[%s192 + $0x38] sm:$0xf]
      %v214 = vld [vmem:[%s192 + $0x3c] sm:$0xf]
      %v215 = vld [vmem:[%s192 + $0x40] sm:$0xf]
      %v216 = vld [vmem:[%s192 + $0x44] sm:$0xf]
      %v217 = vld [vmem:[%s192 + $0x48] sm:$0xf]
      %v218 = vld [vmem:[%s192 + $0x4c] sm:$0xf]
      %v219 = vld [vmem:[%s192 + $0x50] sm:$0xf]
      %v220 = vld [vmem:[%s192 + $0x54] sm:$0xf]
      %v221 = vld [vmem:[%s192 + $0x58] sm:$0xf]
      %v222 = vld [vmem:[%s192 + $0x5c] sm:$0xf]
      %v223 = vld [vmem:[%s192 + $0x60] sm:$0xf]
      %v224 = vld [vmem:[%s192 + $0x64] sm:$0xf]
      %v225 = vld [vmem:[%s192 + $0x68] sm:$0xf]
      %v226 = vld [vmem:[%s192 + $0x6c] sm:$0xf]
      %v227 = vld [vmem:[%s192 + $0x70] sm:$0xf]
      %v228 = vld [vmem:[%s192 + $0x74] sm:$0xf]
      %v229 = vld [vmem:[%s192 + $0x78] sm:$0xf]
      %v230 = vld [vmem:[%s192 + $0x7c] sm:$0xf]
      %v231 = vld [vmem:[%s192 + $0x80] sm:$0xf]
      %v232 = vld [vmem:[%s192 + $0x84] sm:$0xf]
      %v233 = vld [vmem:[%s192 + $0x88] sm:$0xf]
      %v234 = vld [vmem:[%s192 + $0x8c] sm:$0xf]
      %v235 = vld [vmem:[%s192 + $0x90] sm:$0xf]
      %v236 = vld [vmem:[%s192 + $0x94] sm:$0xf]
      %v237 = vld [vmem:[%s192 + $0x98] sm:$0xf]
      %v238 = vld [vmem:[%s192 + $0x9c] sm:$0xf]
      %v239 = vld [vmem:[%s192 + $0xa0] sm:$0xf]
      %v240 = vld [vmem:[%s192 + $0xa4] sm:$0xf]
      %v241 = vld [vmem:[%s192 + $0xa8] sm:$0xf]
      %v242 = vld [vmem:[%s192 + $0xac] sm:$0xf]
      %v243 = vld [vmem:[%s192 + $0xb0] sm:$0xf]
      %v244 = vld [vmem:[%s192 + $0xb4] sm:$0xf]
      %v245 = vld [vmem:[%s192 + $0xb8] sm:$0xf]
      %v246 = vld [vmem:[%s192 + $0xbc] sm:$0xf]
      %v255 = vunpack.c.l.b16 %v199
      %v256 = vunpack.c.l.b16 %v200
      %v257 = vunpack.c.l.b16 %v201
      %v258 = vunpack.c.l.b16 %v202
      %v259 = vunpack.c.l.b16 %v203
      %v260 = vunpack.c.l.b16 %v204
      %v261 = vunpack.c.l.b16 %v205
      %v262 = vunpack.c.l.b16 %v206
      %v263 = vpack.c.b16 %v256, %v255
      %v264 = vpack.c.b16 %v258, %v257
      %v265 = vpack.c.b16 %v260, %v259
      %v266 = vpack.c.b16 %v262, %v261
      %v275 = vunpack.c.l.b16 %v215
      %v276 = vunpack.c.l.b16 %v216
      %v277 = vunpack.c.l.b16 %v217
      %v278 = vunpack.c.l.b16 %v218
      %v279 = vunpack.c.l.b16 %v219
      %v280 = vunpack.c.l.b16 %v220
      %v281 = vunpack.c.l.b16 %v221
      %v282 = vunpack.c.l.b16 %v222
      %v283 = vpack.c.b16 %v276, %v275
      %v284 = vpack.c.b16 %v278, %v277
      %v285 = vpack.c.b16 %v280, %v279
      %v286 = vpack.c.b16 %v282, %v281
      %vm287 = vcmask 261120
      %v289 = vsel %vm287, %v263, 0
      %v292 = vsel %vm287, %v264, 0
      %v295 = vsel %vm287, %v265, 0
      %v298 = vsel %vm287, %v266, 0
      %v301 = vsel %vm287, %v283, 0
      %v304 = vsel %vm287, %v284, 0
      %v307 = vsel %vm287, %v285, 0
      %v310 = vsel %vm287, %v286, 0
      %312 = vmatprep.subr.bf16.mxu0 0
      %313 = vmatpush1.bf16.xpose.msra.mxu0 %v301
      %314 = vmatprep.subr.bf16.mxu0 0
      %315 = vmatpush1.bf16.xpose.msra.mxu0 %v304
      %316 = vmatprep.subr.bf16.mxu0 0
      %317 = vmatpush1.bf16.xpose.msra.mxu0 %v307
      %318 = vmatprep.subr.bf16.mxu0 0
      %319 = vmatpush1.bf16.xpose.msra.mxu0 %v310
      %320 = vmatprep.subr.bf16.mxu0 0
      %321 = vmatpush1.bf16.xpose.msra.mxu0 0
      %322 = vmatprep.subr.bf16.mxu0 0
      %323 = vmatpush1.bf16.xpose.msra.mxu0 0
      %324 = vmatprep.subr.bf16.mxu0 0
      %325 = vmatpush1.bf16.xpose.msra.mxu0 0
      %326 = vmatprep.subr.bf16.mxu0 0
      %327 = vmatpush1.bf16.xpose.msra.mxu0 0
      %328 = vmatprep.subr.bf16.mxu0 0
      %329 = vmatpush1.bf16.xpose.msra.mxu0 0
      %330 = vmatprep.subr.bf16.mxu0 0
      %331 = vmatpush1.bf16.xpose.msra.mxu0 0
      %332 = vmatprep.subr.bf16.mxu0 0
      %333 = vmatpush1.bf16.xpose.msra.mxu0 0
      %334 = vmatprep.subr.bf16.mxu0 0
      %335 = vmatpush1.bf16.xpose.msra.mxu0 0
      %336 = vmatprep.subr.bf16.mxu0 0
      %337 = vmatpush1.bf16.xpose.msra.mxu0 0
      %338 = vmatprep.subr.bf16.mxu0 0
      %339 = vmatpush1.bf16.xpose.msra.mxu0 0
      %340 = vmatprep.subr.bf16.mxu0 0
      %341 = vmatpush1.bf16.xpose.msra.mxu0 0
      %342 = vmatprep.subr.bf16.mxu0 0
      %343 = vmatpush1.bf16.xpose.msra.mxu0 0
      %344 = vmatprep.mubr.bf16.mxu0 0
      %345 = vmatmul.mubr.bf16.gmra.mrb[0].mxu0 %v289
      %v346 = vpop.f32.mrb[0].mxu0
      %v347 = vadd.f32 0.0, %v346
      %v348 = vpop.f32.mrb[0].mxu0
      %v349 = vpop.f32.mrb[0].mxu0
      %v350 = vadd.f32 0.0, %v349
      %v351 = vpop.f32.mrb[0].mxu0
      %352 = vmatprep.mubr.bf16.mxu0 0
      %353 = vmatmul.mubr.bf16.gmra.mrb[0].mxu0 %v292
      %v354 = vpop.f32.mrb[0].mxu0
      %v355 = vadd.f32 0.0, %v354
      %v356 = vpop.f32.mrb[0].mxu0
      %v357 = vpop.f32.mrb[0].mxu0
      %v358 = vadd.f32 0.0, %v357
      %v359 = vpop.f32.mrb[0].mxu0
      %360 = vmatprep.mubr.bf16.mxu0 0
      %361 = vmatmul.mubr.bf16.gmra.mrb[0].mxu0 %v295
      %v362 = vpop.f32.mrb[0].mxu0
      %v363 = vadd.f32 0.0, %v362
      %v364 = vpop.f32.mrb[0].mxu0
      %v365 = vpop.f32.mrb[0].mxu0
      %v366 = vadd.f32 0.0, %v365
      %v367 = vpop.f32.mrb[0].mxu0
      %368 = vmatprep.mubr.bf16.mxu0 0
      %369 = vmatmul.mubr.bf16.gmra.mrb[0].mxu0 %v298
      %v370 = vpop.f32.mrb[0].mxu0
      %v371 = vadd.f32 0.0, %v370
      %v372 = vpop.f32.mrb[0].mxu0
      %v373 = vpop.f32.mrb[0].mxu0
      %v374 = vadd.f32 0.0, %v373
      %v375 = vpop.f32.mrb[0].mxu0
      %376 = vdwg.mxu0
      %v385 = vunpack.c.l.b16 %v207
      %v386 = vunpack.c.l.b16 %v208
      %v387 = vunpack.c.l.b16 %v209
      %v388 = vunpack.c.l.b16 %v210
      %v389 = vunpack.c.l.b16 %v211
      %v390 = vunpack.c.l.b16 %v212
      %v391 = vunpack.c.l.b16 %v213
      %v392 = vunpack.c.l.b16 %v214
      %v393 = vpack.c.b16 %v386, %v385
      %v394 = vpack.c.b16 %v388, %v387
      %v395 = vpack.c.b16 %v390, %v389
      %v396 = vpack.c.b16 %v392, %v391
      %v405 = vunpack.c.l.b16 %v223
      %v406 = vunpack.c.l.b16 %v224
      %v407 = vunpack.c.l.b16 %v225
      %v408 = vunpack.c.l.b16 %v226
      %v409 = vunpack.c.l.b16 %v227
      %v410 = vunpack.c.l.b16 %v228
      %v411 = vunpack.c.l.b16 %v229
      %v412 = vunpack.c.l.b16 %v230
      %v413 = vpack.c.b16 %v406, %v405
      %v414 = vpack.c.b16 %v408, %v407
      %v415 = vpack.c.b16 %v410, %v409
      %v416 = vpack.c.b16 %v412, %v411
      %v418 = vsel %vm287, %v393, 0
      %v421 = vsel %vm287, %v394, 0
      %v424 = vsel %vm287, %v395, 0
      %v427 = vsel %vm287, %v396, 0
      %v430 = vsel %vm287, %v413, 0
      %v433 = vsel %vm287, %v414, 0
      %v436 = vsel %vm287, %v415, 0
      %v439 = vsel %vm287, %v416, 0
      %441 = vmatprep.subr.bf16.mxu0 0
      %442 = vmatpush1.bf16.xpose.msra.mxu0 %v430
      %443 = vmatprep.subr.bf16.mxu0 0
      %444 = vmatpush1.bf16.xpose.msra.mxu0 %v433
      %445 = vmatprep.subr.bf16.mxu0 0
      %446 = vmatpush1.bf16.xpose.msra.mxu0 %v436
      %447 = vmatprep.subr.bf16.mxu0 0
      %448 = vmatpush1.bf16.xpose.msra.mxu0 %v439
      %449 = vmatprep.subr.bf16.mxu0 0
      %450 = vmatpush1.bf16.xpose.msra.mxu0 0
      %451 = vmatprep.subr.bf16.mxu0 0
      %452 = vmatpush1.bf16.xpose.msra.mxu0 0
      %453 = vmatprep.subr.bf16.mxu0 0
      %454 = vmatpush1.bf16.xpose.msra.mxu0 0
      %455 = vmatprep.subr.bf16.mxu0 0
      %456 = vmatpush1.bf16.xpose.msra.mxu0 0
      %457 = vmatprep.subr.bf16.mxu0 0
      %458 = vmatpush1.bf16.xpose.msra.mxu0 0
      %459 = vmatprep.subr.bf16.mxu0 0
      %460 = vmatpush1.bf16.xpose.msra.mxu0 0
      %461 = vmatprep.subr.bf16.mxu0 0
      %462 = vmatpush1.bf16.xpose.msra.mxu0 0
      %463 = vmatprep.subr.bf16.mxu0 0
      %464 = vmatpush1.bf16.xpose.msra.mxu0 0
      %465 = vmatprep.subr.bf16.mxu0 0
      %466 = vmatpush1.bf16.xpose.msra.mxu0 0
      %467 = vmatprep.subr.bf16.mxu0 0
      %468 = vmatpush1.bf16.xpose.msra.mxu0 0
      %469 = vmatprep.subr.bf16.mxu0 0
      %470 = vmatpush1.bf16.xpose.msra.mxu0 0
      %471 = vmatprep.subr.bf16.mxu0 0
      %472 = vmatpush1.bf16.xpose.msra.mxu0 0
      %473 = vmatprep.mubr.bf16.mxu0 0
      %474 = vmatmul.mubr.bf16.gmra.mrb[0].mxu0 %v418
      %v475 = vpop.f32.mrb[0].mxu0
      %v476 = vadd.f32 0.0, %v475
      %v477 = vpop.f32.mrb[0].mxu0
      %v478 = vpop.f32.mrb[0].mxu0
      %v479 = vadd.f32 0.0, %v478
      %v480 = vpop.f32.mrb[0].mxu0
      %481 = vmatprep.mubr.bf16.mxu0 0
      %482 = vmatmul.mubr.bf16.gmra.mrb[0].mxu0 %v421
      %v483 = vpop.f32.mrb[0].mxu0
      %v484 = vadd.f32 0.0, %v483
      %v485 = vpop.f32.mrb[0].mxu0
      %v486 = vpop.f32.mrb[0].mxu0
      %v487 = vadd.f32 0.0, %v486
      %v488 = vpop.f32.mrb[0].mxu0
      %489 = vmatprep.mubr.bf16.mxu0 0
      %490 = vmatmul.mubr.bf16.gmra.mrb[0].mxu0 %v424
      %v491 = vpop.f32.mrb[0].mxu0
      %v492 = vadd.f32 0.0, %v491
      %v493 = vpop.f32.mrb[0].mxu0
      %v494 = vpop.f32.mrb[0].mxu0
      %v495 = vadd.f32 0.0, %v494
      %v496 = vpop.f32.mrb[0].mxu0
      %497 = vmatprep.mubr.bf16.mxu0 0
      %498 = vmatmul.mubr.bf16.gmra.mrb[0].mxu0 %v427
      %v499 = vpop.f32.mrb[0].mxu0
      %v500 = vadd.f32 0.0, %v499
      %v501 = vpop.f32.mrb[0].mxu0
      %v502 = vpop.f32.mrb[0].mxu0
      %v503 = vadd.f32 0.0, %v502
      %v504 = vpop.f32.mrb[0].mxu0
      %505 = vdwg.mxu0
      %v506 = vmul.f32 %v347, 0.17677669
      %v507 = vmul.f32 %v350, 0.17677669
      %v508 = vmul.f32 %v355, 0.17677669
      %v509 = vmul.f32 %v358, 0.17677669
      %v510 = vmul.f32 %v363, 0.17677669
      %v511 = vmul.f32 %v366, 0.17677669
      %v512 = vmul.f32 %v371, 0.17677669
      %v513 = vmul.f32 %v374, 0.17677669
      %v514 = vmul.f32 %v476, 0.17677669
      %v515 = vmul.f32 %v479, 0.17677669
      %v516 = vmul.f32 %v484, 0.17677669
      %v517 = vmul.f32 %v487, 0.17677669
      %v518 = vmul.f32 %v492, 0.17677669
      %v519 = vmul.f32 %v495, 0.17677669
      %v520 = vmul.f32 %v500, 0.17677669
      %v521 = vmul.f32 %v503, 0.17677669
      %v522 = vld [vmem:[%s1] sm:$0xff]
      %v523 = vld [vmem:[%s1 + $0x8] sm:$0xff]
      %v524 = vld [vmem:[%s1 + $0x10] sm:$0xff]
      %v525 = vld [vmem:[%s1 + $0x18] sm:$0xff]
      %v526 = vld [vmem:[%s1 + $0x20] sm:$0xff]
      %v527 = vld [vmem:[%s1 + $0x28] sm:$0xff]
      %v528 = vld [vmem:[%s1 + $0x30] sm:$0xff]
      %v529 = vld [vmem:[%s1 + $0x38] sm:$0xff]
      %v530 = vadd.f32 %v506, %v522
      %v531 = vadd.f32 %v507, %v523
      %v532 = vadd.f32 %v508, %v524
      %v533 = vadd.f32 %v509, %v525
      %v534 = vadd.f32 %v510, %v526
      %v535 = vadd.f32 %v511, %v527
      %v536 = vadd.f32 %v512, %v528
      %v537 = vadd.f32 %v513, %v529
      %v538 = vadd.f32 %v514, %v522
      %v539 = vadd.f32 %v515, %v523
      %v540 = vadd.f32 %v516, %v524
      %v541 = vadd.f32 %v517, %v525
      %v542 = vadd.f32 %v518, %v526
      %v543 = vadd.f32 %v519, %v527
      %v544 = vadd.f32 %v520, %v528
      %v545 = vadd.f32 %v521, %v529
      %vm546 = vcmask 523264
      %v547 = vsel %vm546, %v530, -inf
      %548 = vmax.xlane.f32.xlu0 %v547
      %v549 = vpop.xlane.xlu0 %548
      %v550 = vsel %vm546, %v531, -inf
      %551 = vmax.xlane.f32.xlu0 %v550
      %v552 = vpop.xlane.xlu0 %551
      %v553 = vsel %vm546, %v532, -inf
      %554 = vmax.xlane.f32.xlu0 %v553
      %v555 = vpop.xlane.xlu0 %554
      %v556 = vsel %vm546, %v533, -inf
      %557 = vmax.xlane.f32.xlu0 %v556
      %v558 = vpop.xlane.xlu0 %557
      %v559 = vsel %vm546, %v534, -inf
      %560 = vmax.xlane.f32.xlu0 %v559
      %v561 = vpop.xlane.xlu0 %560
      %v562 = vsel %vm546, %v535, -inf
      %563 = vmax.xlane.f32.xlu0 %v562
      %v564 = vpop.xlane.xlu0 %563
      %v565 = vsel %vm546, %v536, -inf
      %566 = vmax.xlane.f32.xlu0 %v565
      %v567 = vpop.xlane.xlu0 %566
      %v568 = vsel %vm546, %v537, -inf
      %569 = vmax.xlane.f32.xlu0 %v568
      %v570 = vpop.xlane.xlu0 %569
      %v571 = vsel %vm546, %v538, -inf
      %572 = vmax.xlane.f32.xlu0 %v571
      %v573 = vpop.xlane.xlu0 %572
      %v574 = vsel %vm546, %v539, -inf
      %575 = vmax.xlane.f32.xlu0 %v574
      %v576 = vpop.xlane.xlu0 %575
      %v577 = vsel %vm546, %v540, -inf
      %578 = vmax.xlane.f32.xlu0 %v577
      %v579 = vpop.xlane.xlu0 %578
      %v580 = vsel %vm546, %v541, -inf
      %581 = vmax.xlane.f32.xlu0 %v580
      %v582 = vpop.xlane.xlu0 %581
      %v583 = vsel %vm546, %v542, -inf
      %584 = vmax.xlane.f32.xlu0 %v583
      %v585 = vpop.xlane.xlu0 %584
      %v586 = vsel %vm546, %v543, -inf
      %587 = vmax.xlane.f32.xlu0 %v586
      %v588 = vpop.xlane.xlu0 %587
      %v589 = vsel %vm546, %v544, -inf
      %590 = vmax.xlane.f32.xlu0 %v589
      %v591 = vpop.xlane.xlu0 %590
      %v592 = vsel %vm546, %v545, -inf
      %593 = vmax.xlane.f32.xlu0 %v592
      %v594 = vpop.xlane.xlu0 %593
      %v595 = vsub.f32 %v530, %v549
      %v596 = vsub.f32 %v531, %v552
      %v597 = vsub.f32 %v532, %v555
      %v598 = vsub.f32 %v533, %v558
      %v599 = vsub.f32 %v534, %v561
      %v600 = vsub.f32 %v535, %v564
      %v601 = vsub.f32 %v536, %v567
      %v602 = vsub.f32 %v537, %v570
      %v603 = vsub.f32 %v538, %v573
      %v604 = vsub.f32 %v539, %v576
      %v605 = vsub.f32 %v540, %v579
      %v606 = vsub.f32 %v541, %v582
      %v607 = vsub.f32 %v542, %v585
      %v608 = vsub.f32 %v543, %v588
      %v609 = vsub.f32 %v544, %v591
      %v610 = vsub.f32 %v545, %v594
      %v611 = vmul.f32 %v595, 1.442695
      %v612 = vpow.pop %v611
      %v613 = vmul.f32 %v596, 1.442695
      %v614 = vpow.pop %v613
      %v615 = vmul.f32 %v597, 1.442695
      %v616 = vpow.pop %v615
      %v617 = vmul.f32 %v598, 1.442695
      %v618 = vpow.pop %v617
      %v619 = vmul.f32 %v599, 1.442695
      %v620 = vpow.pop %v619
      %v621 = vmul.f32 %v600, 1.442695
      %v622 = vpow.pop %v621
      %v623 = vmul.f32 %v601, 1.442695
      %v624 = vpow.pop %v623
      %v625 = vmul.f32 %v602, 1.442695
      %v626 = vpow.pop %v625
      %v627 = vmul.f32 %v603, 1.442695
      %v628 = vpow.pop %v627
      %v629 = vmul.f32 %v604, 1.442695
      %v630 = vpow.pop %v629
      %v631 = vmul.f32 %v605, 1.442695
      %v632 = vpow.pop %v631
      %v633 = vmul.f32 %v606, 1.442695
      %v634 = vpow.pop %v633
      %v635 = vmul.f32 %v607, 1.442695
      %v636 = vpow.pop %v635
      %v637 = vmul.f32 %v608, 1.442695
      %v638 = vpow.pop %v637
      %v639 = vmul.f32 %v609, 1.442695
      %v640 = vpow.pop %v639
      %v641 = vmul.f32 %v610, 1.442695
      %v642 = vpow.pop %v641
      %v643 = vsel %vm546, %v612, 0.0
      %644 = vadd.xlane.f32.xlu0 %v643
      %v645 = vpop.xlane.xlu0 %644
      %v646 = vsel %vm546, %v614, 0.0
      %647 = vadd.xlane.f32.xlu0 %v646
      %v648 = vpop.xlane.xlu0 %647
      %v649 = vsel %vm546, %v616, 0.0
      %650 = vadd.xlane.f32.xlu0 %v649
      %v651 = vpop.xlane.xlu0 %650
      %v652 = vsel %vm546, %v618, 0.0
      %653 = vadd.xlane.f32.xlu0 %v652
      %v654 = vpop.xlane.xlu0 %653
      %v655 = vsel %vm546, %v620, 0.0
      %656 = vadd.xlane.f32.xlu0 %v655
      %v657 = vpop.xlane.xlu0 %656
      %v658 = vsel %vm546, %v622, 0.0
      %659 = vadd.xlane.f32.xlu0 %v658
      %v660 = vpop.xlane.xlu0 %659
      %v661 = vsel %vm546, %v624, 0.0
      %662 = vadd.xlane.f32.xlu0 %v661
      %v663 = vpop.xlane.xlu0 %662
      %v664 = vsel %vm546, %v626, 0.0
      %665 = vadd.xlane.f32.xlu0 %v664
      %v666 = vpop.xlane.xlu0 %665
      %v667 = vsel %vm546, %v628, 0.0
      %668 = vadd.xlane.f32.xlu0 %v667
      %v669 = vpop.xlane.xlu0 %668
      %v670 = vsel %vm546, %v630, 0.0
      %671 = vadd.xlane.f32.xlu0 %v670
      %v672 = vpop.xlane.xlu0 %671
      %v673 = vsel %vm546, %v632, 0.0
      %674 = vadd.xlane.f32.xlu0 %v673
      %v675 = vpop.xlane.xlu0 %674
      %v676 = vsel %vm546, %v634, 0.0
      %677 = vadd.xlane.f32.xlu0 %v676
      %v678 = vpop.xlane.xlu0 %677
      %v679 = vsel %vm546, %v636, 0.0
      %680 = vadd.xlane.f32.xlu0 %v679
      %v681 = vpop.xlane.xlu0 %680
      %v682 = vsel %vm546, %v638, 0.0
      %683 = vadd.xlane.f32.xlu0 %v682
      %v684 = vpop.xlane.xlu0 %683
      %v685 = vsel %vm546, %v640, 0.0
      %686 = vadd.xlane.f32.xlu0 %v685
      %v687 = vpop.xlane.xlu0 %686
      %v688 = vsel %vm546, %v642, 0.0
      %689 = vadd.xlane.f32.xlu0 %v688
      %v690 = vpop.xlane.xlu0 %689
      %v691 = vrcp.pop %v645
      %v692 = vrcp.pop %v648
      %v693 = vrcp.pop %v651
      %v694 = vrcp.pop %v654
      %v695 = vrcp.pop %v657
      %v696 = vrcp.pop %v660
      %v697 = vrcp.pop %v663
      %v698 = vrcp.pop %v666
      %v699 = vrcp.pop %v669
      %v700 = vrcp.pop %v672
      %v701 = vrcp.pop %v675
      %v702 = vrcp.pop %v678
      %v703 = vrcp.pop %v681
      %v704 = vrcp.pop %v684
      %v705 = vrcp.pop %v687
      %v706 = vrcp.pop %v690
      %v707 = vmul.f32 %v612, %v691
      %v708 = vmul.f32 %v614, %v692
      %v709 = vmul.f32 %v616, %v693
      %v710 = vmul.f32 %v618, %v694
      %v711 = vmul.f32 %v620, %v695
      %v712 = vmul.f32 %v622, %v696
      %v713 = vmul.f32 %v624, %v697
      %v714 = vmul.f32 %v626, %v698
      %v715 = vmul.f32 %v628, %v699
      %v716 = vmul.f32 %v630, %v700
      %v717 = vmul.f32 %v632, %v701
      %v718 = vmul.f32 %v634, %v702
      %v719 = vmul.f32 %v636, %v703
      %v720 = vmul.f32 %v638, %v704
      %v721 = vmul.f32 %v640, %v705
      %v722 = vmul.f32 %v642, %v706
      %v723 = vpack.c.bf16 %v708, %v707
      %v724 = vpack.c.bf16 %v710, %v709
      %v725 = vpack.c.bf16 %v712, %v711
      %v726 = vpack.c.bf16 %v714, %v713
      %v727 = vpack.c.bf16 %v716, %v715
      %v728 = vpack.c.bf16 %v718, %v717
      %v729 = vpack.c.bf16 %v720, %v719
      %v730 = vpack.c.bf16 %v722, %v721
      %v739 = vunpack.c.l.b16 %v231
      %v740 = vunpack.c.l.b16 %v232
      %v741 = vunpack.c.l.b16 %v233
      %v742 = vunpack.c.l.b16 %v234
      %v743 = vunpack.c.l.b16 %v235
      %v744 = vunpack.c.l.b16 %v236
      %v745 = vunpack.c.l.b16 %v237
      %v746 = vunpack.c.l.b16 %v238
      %v747 = vpack.c.b16 %v740, %v739
      %v748 = vpack.c.b16 %v742, %v741
      %v749 = vpack.c.b16 %v744, %v743
      %v750 = vpack.c.b16 %v746, %v745
      %v756 = vsel %vm546, %v723, 0
      %v759 = vsel %vm546, %v724, 0
      %v762 = vsel %vm546, %v725, 0
      %v765 = vsel %vm546, %v726, 0
      %767 = vmatprep.subr.bf16.mxu0 0
      %768 = vmatpush1.bf16.msra.mxu0 %v747
      %769 = vmatprep.subr.bf16.mxu0 0
      %770 = vmatpush1.bf16.msra.mxu0 %v748
      %771 = vmatprep.subr.bf16.mxu0 0
      %772 = vmatpush1.bf16.msra.mxu0 %v749
      %773 = vmatprep.subr.bf16.mxu0 0
      %774 = vmatpush1.bf16.msra.mxu0 %v750
      %775 = vmatprep.subr.bf16.mxu0 0
      %776 = vmatpush1.bf16.msra.mxu0 0
      %777 = vmatprep.subr.bf16.mxu0 0
      %778 = vmatpush1.bf16.msra.mxu0 0
      %779 = vmatprep.subr.bf16.mxu0 0
      %780 = vmatpush1.bf16.msra.mxu0 0
      %781 = vmatprep.subr.bf16.mxu0 0
      %782 = vmatpush1.bf16.msra.mxu0 0
      %783 = vmatprep.subr.bf16.mxu0 0
      %784 = vmatpush1.bf16.msra.mxu0 0
      %785 = vmatprep.subr.bf16.mxu0 0
      %786 = vmatpush1.bf16.msra.mxu0 0
      %787 = vmatprep.subr.bf16.mxu0 0
      %788 = vmatpush1.bf16.msra.mxu0 0
      %789 = vmatprep.subr.bf16.mxu0 0
      %790 = vmatpush1.bf16.msra.mxu0 0
      %791 = vmatprep.subr.bf16.mxu0 0
      %792 = vmatpush1.bf16.msra.mxu0 0
      %793 = vmatprep.subr.bf16.mxu0 0
      %794 = vmatpush1.bf16.msra.mxu0 0
      %795 = vmatprep.subr.bf16.mxu0 0
      %796 = vmatpush1.bf16.msra.mxu0 0
      %797 = vmatprep.subr.bf16.mxu0 0
      %798 = vmatpush1.bf16.msra.mxu0 0
      %799 = vmatprep.mubr.bf16.mxu0 0
      %800 = vmatmul.mubr.bf16.gmra.mrb[0].mxu0 %v756
      %v801 = vpop.f32.mrb[0].mxu0
      %v802 = vadd.f32 0.0, %v801
      %v803 = vpop.f32.mrb[0].mxu0
      %v804 = vpop.f32.mrb[0].mxu0
      %v805 = vadd.f32 0.0, %v804
      %v806 = vpop.f32.mrb[0].mxu0
      %807 = vmatprep.mubr.bf16.mxu0 0
      %808 = vmatmul.mubr.bf16.gmra.mrb[0].mxu0 %v759
      %v809 = vpop.f32.mrb[0].mxu0
      %v810 = vadd.f32 0.0, %v809
      %v811 = vpop.f32.mrb[0].mxu0
      %v812 = vpop.f32.mrb[0].mxu0
      %v813 = vadd.f32 0.0, %v812
      %v814 = vpop.f32.mrb[0].mxu0
      %815 = vmatprep.mubr.bf16.mxu0 0
      %816 = vmatmul.mubr.bf16.gmra.mrb[0].mxu0 %v762
      %v817 = vpop.f32.mrb[0].mxu0
      %v818 = vadd.f32 0.0, %v817
      %v819 = vpop.f32.mrb[0].mxu0
      %v820 = vpop.f32.mrb[0].mxu0
      %v821 = vadd.f32 0.0, %v820
      %v822 = vpop.f32.mrb[0].mxu0
      %823 = vmatprep.mubr.bf16.mxu0 0
      %824 = vmatmul.mubr.bf16.gmra.mrb[0].mxu0 %v765
      %v825 = vpop.f32.mrb[0].mxu0
      %v826 = vadd.f32 0.0, %v825
      %v827 = vpop.f32.mrb[0].mxu0
      %v828 = vpop.f32.mrb[0].mxu0
      %v829 = vadd.f32 0.0, %v828
      %v830 = vpop.f32.mrb[0].mxu0
      %831 = vdwg.mxu0
      %v840 = vunpack.c.l.b16 %v239
      %v841 = vunpack.c.l.b16 %v240
      %v842 = vunpack.c.l.b16 %v241
      %v843 = vunpack.c.l.b16 %v242
      %v844 = vunpack.c.l.b16 %v243
      %v845 = vunpack.c.l.b16 %v244
      %v846 = vunpack.c.l.b16 %v245
      %v847 = vunpack.c.l.b16 %v246
      %v848 = vpack.c.b16 %v841, %v840
      %v849 = vpack.c.b16 %v843, %v842
      %v850 = vpack.c.b16 %v845, %v844
      %v851 = vpack.c.b16 %v847, %v846
      %v857 = vsel %vm546, %v727, 0
      %v860 = vsel %vm546, %v728, 0
      %v863 = vsel %vm546, %v729, 0
      %v866 = vsel %vm546, %v730, 0
      %868 = vmatprep.subr.bf16.mxu0 0
      %869 = vmatpush1.bf16.msra.mxu0 %v848
      %870 = vmatprep.subr.bf16.mxu0 0
      %871 = vmatpush1.bf16.msra.mxu0 %v849
      %872 = vmatprep.subr.bf16.mxu0 0
      %873 = vmatpush1.bf16.msra.mxu0 %v850
      %874 = vmatprep.subr.bf16.mxu0 0
      %875 = vmatpush1.bf16.msra.mxu0 %v851
      %876 = vmatprep.subr.bf16.mxu0 0
      %877 = vmatpush1.bf16.msra.mxu0 0
      %878 = vmatprep.subr.bf16.mxu0 0
      %879 = vmatpush1.bf16.msra.mxu0 0
      %880 = vmatprep.subr.bf16.mxu0 0
      %881 = vmatpush1.bf16.msra.mxu0 0
      %882 = vmatprep.subr.bf16.mxu0 0
      %883 = vmatpush1.bf16.msra.mxu0 0
      %884 = vmatprep.subr.bf16.mxu0 0
      %885 = vmatpush1.bf16.msra.mxu0 0
      %886 = vmatprep.subr.bf16.mxu0 0
      %887 = vmatpush1.bf16.msra.mxu0 0
      %888 = vmatprep.subr.bf16.mxu0 0
      %889 = vmatpush1.bf16.msra.mxu0 0
      %890 = vmatprep.subr.bf16.mxu0 0
      %891 = vmatpush1.bf16.msra.mxu0 0
      %892 = vmatprep.subr.bf16.mxu0 0
      %893 = vmatpush1.bf16.msra.mxu0 0
      %894 = vmatprep.subr.bf16.mxu0 0
      %895 = vmatpush1.bf16.msra.mxu0 0
      %896 = vmatprep.subr.bf16.mxu0 0
      %897 = vmatpush1.bf16.msra.mxu0 0
      %898 = vmatprep.subr.bf16.mxu0 0
      %899 = vmatpush1.bf16.msra.mxu0 0
      %900 = vmatprep.mubr.bf16.mxu0 0
      %901 = vmatmul.mubr.bf16.gmra.mrb[0].mxu0 %v857
      %v902 = vpop.f32.mrb[0].mxu0
      %v903 = vadd.f32 0.0, %v902
      %v904 = vpop.f32.mrb[0].mxu0
      %v905 = vpop.f32.mrb[0].mxu0
      %v906 = vadd.f32 0.0, %v905
      %v907 = vpop.f32.mrb[0].mxu0
      %908 = vmatprep.mubr.bf16.mxu0 0
      %909 = vmatmul.mubr.bf16.gmra.mrb[0].mxu0 %v860
      %v910 = vpop.f32.mrb[0].mxu0
      %v911 = vadd.f32 0.0, %v910
      %v912 = vpop.f32.mrb[0].mxu0
      %v913 = vpop.f32.mrb[0].mxu0
      %v914 = vadd.f32 0.0, %v913
      %v915 = vpop.f32.mrb[0].mxu0
      %916 = vmatprep.mubr.bf16.mxu0 0
      %917 = vmatmul.mubr.bf16.gmra.mrb[0].mxu0 %v863
      %v918 = vpop.f32.mrb[0].mxu0
      %v919 = vadd.f32 0.0, %v918
      %v920 = vpop.f32.mrb[0].mxu0
      %v921 = vpop.f32.mrb[0].mxu0
      %v922 = vadd.f32 0.0, %v921
      %v923 = vpop.f32.mrb[0].mxu0
      %924 = vmatprep.mubr.bf16.mxu0 0
      %925 = vmatmul.mubr.bf16.gmra.mrb[0].mxu0 %v866
      %v926 = vpop.f32.mrb[0].mxu0
      %v927 = vadd.f32 0.0, %v926
      %v928 = vpop.f32.mrb[0].mxu0
      %v929 = vpop.f32.mrb[0].mxu0
      %v930 = vadd.f32 0.0, %v929
      %v931 = vpop.f32.mrb[0].mxu0
      %932 = vdwg.mxu0
      %v933 = vpack.c.bf16 %v805, %v802
      %v934 = vpack.c.bf16 %v813, %v810
      %v935 = vpack.c.bf16 %v821, %v818
      %v936 = vpack.c.bf16 %v829, %v826
      %v937 = vld [vmem:[%s2] sm:$0xf]
      %v938 = vld [vmem:[%s2 + $0x4] sm:$0xf]
      %v939 = vld [vmem:[%s2 + $0x8] sm:$0xf]
      %v940 = vld [vmem:[%s2 + $0xc] sm:$0xf]
      %v941 = vpack.c.bf16 %v906, %v903
      %v942 = vpack.c.bf16 %v914, %v911
      %v943 = vpack.c.bf16 %v922, %v919
      %v944 = vpack.c.bf16 %v930, %v927
      %s945 = scalar_lea.vmem %s2, 16
      %v946 = vld [vmem:[%s945] sm:$0xf]
      %v947 = vld [vmem:[%s945 + $0x4] sm:$0xf]
      %v948 = vld [vmem:[%s945 + $0x8] sm:$0xf]
      %v949 = vld [vmem:[%s945 + $0xc] sm:$0xf]
      %v954 = vunpack.c.l.b16 %v946
      %v955 = vunpack.c.l.b16 %v947
      %v956 = vunpack.c.l.b16 %v948
      %v957 = vunpack.c.l.b16 %v949
      %v958 = vpack.c.b16 %v955, %v954
      %v959 = vpack.c.b16 %v957, %v956
      %v963 = vsel %vm287, %v941, 0
      %v966 = vsel %vm287, %v942, 0
      %v969 = vsel %vm287, %v943, 0
      %v972 = vsel %vm287, %v944, 0
      %974 = vmatprep.subr.bf16.mxu0 0
      %975 = vmatpush1.bf16.msra.mxu0 %v958
      %976 = vmatprep.subr.bf16.mxu0 0
      %977 = vmatpush1.bf16.msra.mxu0 %v959
      %978 = vmatprep.subr.bf16.mxu0 0
      %979 = vmatpush1.bf16.msra.mxu0 0
      %980 = vmatprep.subr.bf16.mxu0 0
      %981 = vmatpush1.bf16.msra.mxu0 0
      %982 = vmatprep.subr.bf16.mxu0 0
      %983 = vmatpush1.bf16.msra.mxu0 0
      %984 = vmatprep.subr.bf16.mxu0 0
      %985 = vmatpush1.bf16.msra.mxu0 0
      %986 = vmatprep.subr.bf16.mxu0 0
      %987 = vmatpush1.bf16.msra.mxu0 0
      %988 = vmatprep.subr.bf16.mxu0 0
      %989 = vmatpush1.bf16.msra.mxu0 0
      %990 = vmatprep.subr.bf16.mxu0 0
      %991 = vmatpush1.bf16.msra.mxu0 0
      %992 = vmatprep.subr.bf16.mxu0 0
      %993 = vmatpush1.bf16.msra.mxu0 0
      %994 = vmatprep.subr.bf16.mxu0 0
      %995 = vmatpush1.bf16.msra.mxu0 0
      %996 = vmatprep.subr.bf16.mxu0 0
      %997 = vmatpush1.bf16.msra.mxu0 0
      %998 = vmatprep.subr.bf16.mxu0 0
      %999 = vmatpush1.bf16.msra.mxu0 0
      %1000 = vmatprep.subr.bf16.mxu0 0
      %1001 = vmatpush1.bf16.msra.mxu0 0
      %1002 = vmatprep.subr.bf16.mxu0 0
      %1003 = vmatpush1.bf16.msra.mxu0 0
      %1004 = vmatprep.subr.bf16.mxu0 0
      %1005 = vmatpush1.bf16.msra.mxu0 0
      %1006 = vmatprep.mubr.bf16.mxu0 0
      %1007 = vmatmul.mubr.bf16.gmra.mrb[0].mxu0 %v963
      %v1008 = vpop.f32.mrb[0].mxu0
      %v1009 = vadd.f32 0.0, %v1008
      %v1010 = vpop.f32.mrb[0].mxu0
      %v1011 = vpop.f32.mrb[0].mxu0
      %v1012 = vadd.f32 0.0, %v1011
      %v1013 = vpop.f32.mrb[0].mxu0
      %1014 = vmatprep.mubr.bf16.mxu0 0
      %1015 = vmatmul.mubr.bf16.gmra.mrb[0].mxu0 %v966
      %v1016 = vpop.f32.mrb[0].mxu0
      %v1017 = vadd.f32 0.0, %v1016
      %v1018 = vpop.f32.mrb[0].mxu0
      %v1019 = vpop.f32.mrb[0].mxu0
      %v1020 = vadd.f32 0.0, %v1019
      %v1021 = vpop.f32.mrb[0].mxu0
      %1022 = vmatprep.mubr.bf16.mxu0 0
      %1023 = vmatmul.mubr.bf16.gmra.mrb[0].mxu0 %v969
      %v1024 = vpop.f32.mrb[0].mxu0
      %v1025 = vadd.f32 0.0, %v1024
      %v1026 = vpop.f32.mrb[0].mxu0
      %v1027 = vpop.f32.mrb[0].mxu0
      %v1028 = vadd.f32 0.0, %v1027
      %v1029 = vpop.f32.mrb[0].mxu0
      %1030 = vmatprep.mubr.bf16.mxu0 0
      %1031 = vmatmul.mubr.bf16.gmra.mrb[0].mxu0 %v972
      %v1032 = vpop.f32.mrb[0].mxu0
      %v1033 = vadd.f32 0.0, %v1032
      %v1034 = vpop.f32.mrb[0].mxu0
      %v1035 = vpop.f32.mrb[0].mxu0
      %v1036 = vadd.f32 0.0, %v1035
      %v1037 = vpop.f32.mrb[0].mxu0
      %1038 = vdwg.mxu0
      %v1043 = vunpack.c.l.b16 %v937
      %v1044 = vunpack.c.l.b16 %v938
      %v1045 = vunpack.c.l.b16 %v939
      %v1046 = vunpack.c.l.b16 %v940
      %v1047 = vpack.c.b16 %v1044, %v1043
      %v1048 = vpack.c.b16 %v1046, %v1045
      %v1052 = vsel %vm287, %v933, 0
      %v1055 = vsel %vm287, %v934, 0
      %v1058 = vsel %vm287, %v935, 0
      %v1061 = vsel %vm287, %v936, 0
      %1063 = vmatprep.subr.bf16.mxu0 0
      %1064 = vmatpush1.bf16.msra.mxu0 %v1047
      %1065 = vmatprep.subr.bf16.mxu0 0
      %1066 = vmatpush1.bf16.msra.mxu0 %v1048
      %1067 = vmatprep.subr.bf16.mxu0 0
      %1068 = vmatpush1.bf16.msra.mxu0 0
      %1069 = vmatprep.subr.bf16.mxu0 0
      %1070 = vmatpush1.bf16.msra.mxu0 0
      %1071 = vmatprep.subr.bf16.mxu0 0
      %1072 = vmatpush1.bf16.msra.mxu0 0
      %1073 = vmatprep.subr.bf16.mxu0 0
      %1074 = vmatpush1.bf16.msra.mxu0 0
      %1075 = vmatprep.subr.bf16.mxu0 0
      %1076 = vmatpush1.bf16.msra.mxu0 0
      %1077 = vmatprep.subr.bf16.mxu0 0
      %1078 = vmatpush1.bf16.msra.mxu0 0
      %1079 = vmatprep.subr.bf16.mxu0 0
      %1080 = vmatpush1.bf16.msra.mxu0 0
      %1081 = vmatprep.subr.bf16.mxu0 0
      %1082 = vmatpush1.bf16.msra.mxu0 0
      %1083 = vmatprep.subr.bf16.mxu0 0
      %1084 = vmatpush1.bf16.msra.mxu0 0
      %1085 = vmatprep.subr.bf16.mxu0 0
      %1086 = vmatpush1.bf16.msra.mxu0 0
      %1087 = vmatprep.subr.bf16.mxu0 0
      %1088 = vmatpush1.bf16.msra.mxu0 0
      %1089 = vmatprep.subr.bf16.mxu0 0
      %1090 = vmatpush1.bf16.msra.mxu0 0
      %1091 = vmatprep.subr.bf16.mxu0 0
      %1092 = vmatpush1.bf16.msra.mxu0 0
      %1093 = vmatprep.subr.bf16.mxu0 0
      %1094 = vmatpush1.bf16.msra.mxu0 0
      %1095 = vmatprep.mubr.bf16.mxu0 0
      %1096 = vmatmul.mubr.bf16.gmra.mrb[0].mxu0 %v1052
      %v1097 = vpop.f32.mrb[0].mxu0
      %v1098 = vadd.f32 %v1009, %v1097
      %v1099 = vpop.f32.mrb[0].mxu0
      %v1100 = vpop.f32.mrb[0].mxu0
      %v1101 = vadd.f32 %v1012, %v1100
      %v1102 = vpop.f32.mrb[0].mxu0
      %1103 = vmatprep.mubr.bf16.mxu0 0
      %1104 = vmatmul.mubr.bf16.gmra.mrb[0].mxu0 %v1055
      %v1105 = vpop.f32.mrb[0].mxu0
      %v1106 = vadd.f32 %v1017, %v1105
      %v1107 = vpop.f32.mrb[0].mxu0
      %v1108 = vpop.f32.mrb[0].mxu0
      %v1109 = vadd.f32 %v1020, %v1108
      %v1110 = vpop.f32.mrb[0].mxu0
      %1111 = vmatprep.mubr.bf16.mxu0 0
      %1112 = vmatmul.mubr.bf16.gmra.mrb[0].mxu0 %v1058
      %v1113 = vpop.f32.mrb[0].mxu0
      %v1114 = vadd.f32 %v1025, %v1113
      %v1115 = vpop.f32.mrb[0].mxu0
      %v1116 = vpop.f32.mrb[0].mxu0
      %v1117 = vadd.f32 %v1028, %v1116
      %v1118 = vpop.f32.mrb[0].mxu0
      %1119 = vmatprep.mubr.bf16.mxu0 0
      %1120 = vmatmul.mubr.bf16.gmra.mrb[0].mxu0 %v1061
      %v1121 = vpop.f32.mrb[0].mxu0
      %v1122 = vadd.f32 %v1033, %v1121
      %v1123 = vpop.f32.mrb[0].mxu0
      %v1124 = vpop.f32.mrb[0].mxu0
      %v1125 = vadd.f32 %v1036, %v1124
      %v1126 = vpop.f32.mrb[0].mxu0
      %1127 = vdwg.mxu0
      %v1128 = vld [vmem:[%s3] sm:$0x1]
      %v1130 = vlaneseq
      %v1131 = vshrl.u32 %v1130, 7
      %v1132 = vsub.s32 0, %v1131
      %v1133 = vrot.slane %v1128, %v1132
      %v1135 = vadd.f32 %v1098, %v1133
      %v1136 = vadd.f32 %v1101, %v1133
      %v1137 = vadd.f32 %v1106, %v1133
      %v1138 = vadd.f32 %v1109, %v1133
      %v1139 = vadd.f32 %v1114, %v1133
      %v1140 = vadd.f32 %v1117, %v1133
      %v1141 = vadd.f32 %v1122, %v1133
      %v1142 = vadd.f32 %v1125, %v1133
      %1143 = vst.msk [vmem:[%s197] sm:$0xff] %vm546, %v1135
      %1144 = vst.msk [vmem:[%s197 + $0x8] sm:$0xff] %vm546, %v1136
      %1145 = vst.msk [vmem:[%s197 + $0x10] sm:$0xff] %vm546, %v1137
      %1146 = vst.msk [vmem:[%s197 + $0x18] sm:$0xff] %vm546, %v1138
      %1147 = vst.msk [vmem:[%s197 + $0x20] sm:$0xff] %vm546, %v1139
      %1148 = vst.msk [vmem:[%s197 + $0x28] sm:$0xff] %vm546, %v1140
      %1149 = vst.msk [vmem:[%s197 + $0x30] sm:$0xff] %vm546, %v1141
      %1150 = vst.msk [vmem:[%s197 + $0x38] sm:$0xff] %vm546, %v1142
      %p1151 = scmp.lt.s32.totalorder %s15, 1
      %s1152 = scalar_select %p1151, %s15, 1
      %s1153 = smul.addr %s1152, 8
      %s1154 = smul.addr %s1153, 8
      %s1155 = scalar_lea.vmem %s4, %s1154
      // Predicated region
      $region37: #{transformer_forward.16} parent=35 // pred_check
        %p1156 = pneg %p122
      $region38: #{transformer_forward.16} parent=35 // pred_check_branch
        %1158 = sbr.rel (%p1156) target = $region40
      $region39: #{transformer_forward.16} parent=35 // pred_region
        _
      $region40: #{transformer_forward.16} parent=35 // pred_fallthru
        _
    $region36: #{transformer_forward.16} parent=5 // pred_fallthru
      _
    %p1159 = scmp.le.s32.totalorder 2, %s10
    // Predicated region
    $region41: #{transformer_forward.16} parent=5 // pred_check
      %p1160 = pneg %p1159
    $region42: #{transformer_forward.16} parent=5 // pred_check_branch
      %1162 = sbr.rel (%p1160) target = $region44
    $region43: #{transformer_forward.16} parent=5 // pred_region
      %s1163 = ssub.s32 %s10, 2
      // Predicated region
      $region45: #{transformer_forward.16} parent=43 // pred_check
        %p1164 = pneg %p128
      $region46: #{transformer_forward.16} parent=43 // pred_check_branch
        %1166 = sbr.rel (%p1164) target = $region48
      $region47: #{transformer_forward.16} parent=43 // pred_region
        %p1167 = scmp.lt.s32.totalorder %s16, 1
        %s1168 = scalar_select %p1167, %s16, 1
        %s1169 = smul.addr %s1168, 8
        %s1170 = smul.addr %s1169, 8
        %s1171 = scalar_lea.vmem %s4, %s1170
      $region48: #{transformer_forward.16} parent=43 // pred_fallthru
        _
    $region44: #{transformer_forward.16} parent=5 // pred_fallthru
      _
  $region6: #{transformer_forward.16} parent=0 // loop_footer
    %s14 = sadd.s32 1, %s10
  $region7: #{transformer_forward.16} parent=0 // loop_footer_branch
    %9 = sbr.rel target = $region3
  $region8: #{transformer_forward.16} parent=0 // loop_exit
    _

// kernel: transformer_forward.23
$region0: #{transformer_forward.23}
  #allocation0 [shape = 'u32[]', space=smem, size = 0x4, offset = 0x4, fixed_abs, tag = 'smem constant byte address 0x4 - core index']
  #allocation1 [shape = 'u32[144,128]{1,0:T(1,128)}', space=vmem, size = 0x12000, scoped, tag = 'internal scratch']
  %s0 = inlined_call_operand.vmem [shape: f32[128,64], index: 0, kind: input, shape index: {}]
  %s1 = inlined_call_operand.vmem [shape: f32[1,64], index: 1, kind: input, shape index: {}]
  %s2 = inlined_call_operand.vmem [shape: f32[1,64], index: 2, kind: input, shape index: {}]
  %s3 = inlined_call_operand.vmem [shape: bf16[64,256], index: 3, kind: input, shape index: {}]
  %s4 = inlined_call_operand.vmem [shape: f32[1,256], index: 4, kind: input, shape index: {}]
  %s5 = inlined_call_operand.vmem [shape: bf16[256,64], index: 5, kind: input, shape index: {}]
  %s6 = inlined_call_operand.vmem [shape: f32[1,64], index: 6, kind: input, shape index: {}]
  %s7 = inlined_call_operand.hbm [shape: f32[128,64], index: 7, kind: output, shape index: {}]
  %s8 = sld [smem:[#allocation0]]
  $region61: #{transformer_forward.23} parent=0
    _
  %s10 = ssub.s32 1, %s8
  %s11 = scalar_select 0, %s10, %s8
  $region1: #{transformer_forward.23} parent=0
    #allocation2 [shape = 'u8[65536]{0}', space=vmem, size = 0x10000, scoped, tag = 'output window, operand 0']
    #allocation3 [shape = 's32[2]{0}', space=sflag, size = 0x8, scoped, tag = 'scoped memory for transformer_forward.23']
    %12 = vsyncpa [#allocation3], 0
    %s13 = scalar_lea.sflag [#allocation3], 1
    %14 = vsyncpa %s13, 0
    loop: start=0, step=1, limit=4
    $region2: #{transformer_forward.23} parent=1 // loop_pre_header
      _
    $region3: #{transformer_forward.23} parent=1 // loop_header
      %s16 = sphi 0, %s20
      %p17 = scmp.ge.s32.totalorder %s16, 4
      %s26 = sphi 0, %s28
      %s29 = sphi 0, %s26
      %s30 = sphi 0, %s29
      %s46 = sphi 0, %s30
      %s50 = sphi 0, %s50
      %s52 = sphi 0, %s50
      %s53 = sphi 0, %s52
      %s67 = sphi 0, %s53
      %s71 = sphi 0, %s71
      %s73 = sphi 0, %s71
      %s74 = sphi 0, %s73
      %s88 = sphi 0, %s74
      %s92 = sphi 0, %s92
      %s94 = sphi 0, %s92
      %s95 = sphi 0, %s94
      %s109 = sphi 0, %s95
      %s113 = sphi 0, %s113
      %s115 = sphi 0, %s113
      %s116 = sphi 0, %s115
      %s130 = sphi 0, %s116
      %s134 = sphi 0, %s134
      %s136 = sphi 0, %s134
      %s137 = sphi 0, %s136
      %s151 = sphi 0, %s137
      %s155 = sphi 0, %s155
      %s157 = sphi 0, %s155
      %s158 = sphi 0, %s157
      %s172 = sphi 0, %s158
      %s178 = sphi 0, %s180
      %s181 = sphi 0, %s178
      %s182 = sphi 0, %s181
      %s198 = sphi 0, %s182
    $region4: #{transformer_forward.23} parent=1 // loop_header_branch
      %19 = sbr.rel (%p17) target = $region8
    $region5: #{transformer_forward.23} parent=1 // loop_body
      %s21 = ssub.s32 %s16, 1
      %s22 = ssub.s32 %s16, 2
      %s23 = sadd.s32 %s16, 1
      %s24 = ssub.s32 %s16, %s23
      %p25 = scmp.eq.s32.totalorder %s24, 0
      %s27 = sadd.s32 %s26, 1
      %s28 = scalar_select %p25, %s26, %s27
      %p31 = pneg %p25
      %p32 = scmp.eq.s32.totalorder %s16, 1
      %p33 = por %p31, %p32
      %p34 = scmp.ne.s32.totalorder %s26, %s29
      %p35 = scmp.eq.s32.totalorder %s16, 0
      %p36 = por %p34, %p35
      %p37 = scmp.ne.s32.totalorder %s26, %s29
      %p38 = scmp.eq.s32.totalorder %s21, 1
      %p39 = por %p37, %p38
      %p40 = scmp.ne.s32.totalorder %s29, %s30
      %p41 = scmp.eq.s32.totalorder %s21, 0
      %p42 = por %p40, %p41
      %p43 = scmp.ne.s32.totalorder %s29, %s30
      %p44 = scmp.eq.s32.totalorder %s22, 1
      %p45 = por %p43, %p44
      %p47 = scmp.ne.s32.totalorder %s30, %s46
      %p48 = scmp.eq.s32.totalorder %s22, 0
      %p49 = por %p47, %p48
      %s51 = sadd.s32 %s50, 1
      %p54 = scmp.eq.s32.totalorder %s16, 1
      %p55 = scmp.ne.s32.totalorder %s50, %s52
      %p56 = scmp.eq.s32.totalorder %s16, 0
      %p57 = por %p55, %p56
      %p58 = scmp.ne.s32.totalorder %s50, %s52
      %p59 = scmp.eq.s32.totalorder %s21, 1
      %p60 = por %p58, %p59
      %p61 = scmp.ne.s32.totalorder %s52, %s53
      %p62 = scmp.eq.s32.totalorder %s21, 0
      %p63 = por %p61, %p62
      %p64 = scmp.ne.s32.totalorder %s52, %s53
      %p65 = scmp.eq.s32.totalorder %s22, 1
      %p66 = por %p64, %p65
      %p68 = scmp.ne.s32.totalorder %s53, %s67
      %p69 = scmp.eq.s32.totalorder %s22, 0
      %p70 = por %p68, %p69
      %s72 = sadd.s32 %s71, 1
      %p75 = scmp.eq.s32.totalorder %s16, 1
      %p76 = scmp.ne.s32.totalorder %s71, %s73
      %p77 = scmp.eq.s32.totalorder %s16, 0
      %p78 = por %p76, %p77
      %p79 = scmp.ne.s32.totalorder %s71, %s73
      %p80 = scmp.eq.s32.totalorder %s21, 1
      %p81 = por %p79, %p80
      %p82 = scmp.ne.s32.totalorder %s73, %s74
      %p83 = scmp.eq.s32.totalorder %s21, 0
      %p84 = por %p82, %p83
      %p85 = scmp.ne.s32.totalorder %s73, %s74
      %p86 = scmp.eq.s32.totalorder %s22, 1
      %p87 = por %p85, %p86
      %p89 = scmp.ne.s32.totalorder %s74, %s88
      %p90 = scmp.eq.s32.totalorder %s22, 0
      %p91 = por %p89, %p90
      %s93 = sadd.s32 %s92, 1
      %p96 = scmp.eq.s32.totalorder %s16, 1
      %p97 = scmp.ne.s32.totalorder %s92, %s94
      %p98 = scmp.eq.s32.totalorder %s16, 0
      %p99 = por %p97, %p98
      %p100 = scmp.ne.s32.totalorder %s92, %s94
      %p101 = scmp.eq.s32.totalorder %s21, 1
      %p102 = por %p100, %p101
      %p103 = scmp.ne.s32.totalorder %s94, %s95
      %p104 = scmp.eq.s32.totalorder %s21, 0
      %p105 = por %p103, %p104
      %p106 = scmp.ne.s32.totalorder %s94, %s95
      %p107 = scmp.eq.s32.totalorder %s22, 1
      %p108 = por %p106, %p107
      %p110 = scmp.ne.s32.totalorder %s95, %s109
      %p111 = scmp.eq.s32.totalorder %s22, 0
      %p112 = por %p110, %p111
      %s114 = sadd.s32 %s113, 1
      %p117 = scmp.eq.s32.totalorder %s16, 1
      %p118 = scmp.ne.s32.totalorder %s113, %s115
      %p119 = scmp.eq.s32.totalorder %s16, 0
      %p120 = por %p118, %p119
      %p121 = scmp.ne.s32.totalorder %s113, %s115
      %p122 = scmp.eq.s32.totalorder %s21, 1
      %p123 = por %p121, %p122
      %p124 = scmp.ne.s32.totalorder %s115, %s116
      %p125 = scmp.eq.s32.totalorder %s21, 0
      %p126 = por %p124, %p125
      %p127 = scmp.ne.s32.totalorder %s115, %s116
      %p128 = scmp.eq.s32.totalorder %s22, 1
      %p129 = por %p127, %p128
      %p131 = scmp.ne.s32.totalorder %s116, %s130
      %p132 = scmp.eq.s32.totalorder %s22, 0
      %p133 = por %p131, %p132
      %s135 = sadd.s32 %s134, 1
      %p138 = scmp.eq.s32.totalorder %s16, 1
      %p139 = scmp.ne.s32.totalorder %s134, %s136
      %p140 = scmp.eq.s32.totalorder %s16, 0
      %p141 = por %p139, %p140
      %p142 = scmp.ne.s32.totalorder %s134, %s136
      %p143 = scmp.eq.s32.totalorder %s21, 1
      %p144 = por %p142, %p143
      %p145 = scmp.ne.s32.totalorder %s136, %s137
      %p146 = scmp.eq.s32.totalorder %s21, 0
      %p147 = por %p145, %p146
      %p148 = scmp.ne.s32.totalorder %s136, %s137
      %p149 = scmp.eq.s32.totalorder %s22, 1
      %p150 = por %p148, %p149
      %p152 = scmp.ne.s32.totalorder %s137, %s151
      %p153 = scmp.eq.s32.totalorder %s22, 0
      %p154 = por %p152, %p153
      %s156 = sadd.s32 %s155, 1
      %p159 = scmp.eq.s32.totalorder %s16, 1
      %p160 = scmp.ne.s32.totalorder %s155, %s157
      %p161 = scmp.eq.s32.totalorder %s16, 0
      %p162 = por %p160, %p161
      %p163 = scmp.ne.s32.totalorder %s155, %s157
      %p164 = scmp.eq.s32.totalorder %s21, 1
      %p165 = por %p163, %p164
      %p166 = scmp.ne.s32.totalorder %s157, %s158
      %p167 = scmp.eq.s32.totalorder %s21, 0
      %p168 = por %p166, %p167
      %p169 = scmp.ne.s32.totalorder %s157, %s158
      %p170 = scmp.eq.s32.totalorder %s22, 1
      %p171 = por %p169, %p170
      %p173 = scmp.ne.s32.totalorder %s158, %s172
      %p174 = scmp.eq.s32.totalorder %s22, 0
      %p175 = por %p173, %p174
      %s176 = ssub.s32 %s16, %s23
      %p177 = scmp.eq.s32.totalorder %s176, 0
      %s179 = sadd.s32 %s178, 1
      %s180 = scalar_select %p177, %s178, %s179
      %p183 = pneg %p177
      %p184 = scmp.eq.s32.totalorder %s16, 1
      %p185 = por %p183, %p184
      %p186 = scmp.ne.s32.totalorder %s178, %s181
      %p187 = scmp.eq.s32.totalorder %s16, 0
      %p188 = por %p186, %p187
      %p189 = scmp.ne.s32.totalorder %s178, %s181
      %p190 = scmp.eq.s32.totalorder %s21, 1
      %p191 = por %p189, %p190
      %p192 = scmp.ne.s32.totalorder %s181, %s182
      %p193 = scmp.eq.s32.totalorder %s21, 0
      %p194 = por %p192, %p193
      %p195 = scmp.ne.s32.totalorder %s181, %s182
      %p196 = scmp.eq.s32.totalorder %s22, 1
      %p197 = por %p195, %p196
      %p199 = scmp.ne.s32.totalorder %s182, %s198
      %p200 = scmp.eq.s32.totalorder %s22, 0
      %p201 = por %p199, %p200
      %p202 = scmp.le.s32.totalorder 1, %s16
      %p203 = scmp.lt.s32.totalorder %s16, 3
      %p204 = pnand %p202, %p203
      %p205 = pneg %p204
      // Predicated region
      $region9: #{transformer_forward.23} parent=5 // pred_check
        _
      $region10: #{transformer_forward.23} parent=5 // pred_check_branch
        %207 = sbr.rel (%p204) target = $region12
      $region11: #{transformer_forward.23} parent=5 // pred_region
        %s208 = ssub.s32 %s16, 1
        // Predicated region
        $region13: #{transformer_forward.23} parent=11 // pred_check
          %p209 = pneg %p63
        $region14: #{transformer_forward.23} parent=11 // pred_check_branch
          %211 = sbr.rel (%p209) target = $region16
        $region15: #{transformer_forward.23} parent=11 // pred_region
          _
        $region16: #{transformer_forward.23} parent=11 // pred_fallthru
          _
        // Predicated region
        $region17: #{transformer_forward.23} parent=11 // pred_check
          %p212 = pneg %p84
        $region18: #{transformer_forward.23} parent=11 // pred_check_branch
          %214 = sbr.rel (%p212) target = $region20
        $region19: #{transformer_forward.23} parent=11 // pred_region
          _
        $region20: #{transformer_forward.23} parent=11 // pred_fallthru
          _
        // Predicated region
        $region21: #{transformer_forward.23} parent=11 // pred_check
          %p215 = pneg %p105
        $region22: #{transformer_forward.23} parent=11 // pred_check_branch
          %217 = sbr.rel (%p215) target = $region24
        $region23: #{transformer_forward.23} parent=11 // pred_region
          _
        $region24: #{transformer_forward.23} parent=11 // pred_fallthru
          _
        // Predicated region
        $region25: #{transformer_forward.23} parent=11 // pred_check
          %p218 = pneg %p126
        $region26: #{transformer_forward.23} parent=11 // pred_check_branch
          %220 = sbr.rel (%p218) target = $region28
        $region27: #{transformer_forward.23} parent=11 // pred_region
          _
        $region28: #{transformer_forward.23} parent=11 // pred_fallthru
          _
        // Predicated region
        $region29: #{transformer_forward.23} parent=11 // pred_check
          %p221 = pneg %p147
        $region30: #{transformer_forward.23} parent=11 // pred_check_branch
          %223 = sbr.rel (%p221) target = $region32
        $region31: #{transformer_forward.23} parent=11 // pred_region
          _
        $region32: #{transformer_forward.23} parent=11 // pred_fallthru
          _
        // Predicated region
        $region33: #{transformer_forward.23} parent=11 // pred_check
          %p224 = pneg %p168
        $region34: #{transformer_forward.23} parent=11 // pred_check_branch
          %226 = sbr.rel (%p224) target = $region36
        $region35: #{transformer_forward.23} parent=11 // pred_region
          _
        $region36: #{transformer_forward.23} parent=11 // pred_fallthru
          _
      $region12: #{transformer_forward.23} parent=5 // pred_fallthru
        _
      %p227 = scmp.lt.s32.totalorder %s16, 2
      // Predicated region
      $region37: #{transformer_forward.23} parent=5 // pred_check
        %p228 = pneg %p227
      $region38: #{transformer_forward.23} parent=5 // pred_check_branch
        %230 = sbr.rel (%p228) target = $region40
      $region39: #{transformer_forward.23} parent=5 // pred_region
        // Predicated region
        $region41: #{transformer_forward.23} parent=39 // pred_check
          %p231 = pneg %p36
        $region42: #{transformer_forward.23} parent=39 // pred_check_branch
          %233 = sbr.rel (%p231) target = $region44
        $region43: #{transformer_forward.23} parent=39 // pred_region
          %s234 = smul.u32 8, %s16
          %p235 = scmp.lt.s32.totalorder %s234, 15
          %s236 = scalar_select %p235, %s234, 15
          %s237 = smul.addr %s236, 8
          %s238 = scalar_lea.vmem %s0, %s237
          %s239 = smul.u32 8, %s16
        $region44: #{transformer_forward.23} parent=39 // pred_fallthru
          _
      $region40: #{transformer_forward.23} parent=5 // pred_fallthru
        _
      %p240 = scmp.le.s32.totalorder 1, %s16
      %p241 = scmp.lt.s32.totalorder %s16, 3
      %p242 = pnand %p240, %p241
      %p243 = pneg %p242
      // Predicated region
      $region45: #{transformer_forward.23} parent=5 // pred_check
        _
      $region46: #{transformer_forward.23} parent=5 // pred_check_branch
        %245 = sbr.rel (%p242) target = $region48
      $region47: #{transformer_forward.23} parent=5 // pred_region
        %s246 = ssub.s32 %s16, 1
        %s247 = smul.u32 8, %s21
        %p248 = scmp.lt.s32.totalorder %s247, 15
        %s249 = scalar_select %p248, %s247, 15
        %s250 = smul.addr %s249, 8
        %s251 = scalar_lea.vmem %s0, %s250
        %p252 = pneg %p42
        %p253 = pneg %p39
        %p254 = pneg %p63
        %p255 = pneg %p60
        %p256 = pneg %p84
        %p257 = pneg %p81
        %p258 = pneg %p105
        %p259 = pneg %p102
        %p260 = pneg %p126
        %p261 = pneg %p123
        %p262 = pneg %p147
        %p263 = pneg %p144
        %p264 = pneg %p168
        %p265 = pneg %p165
        %p266 = pneg %p194
        %p267 = pneg %p191
        %s268 = sand.u32 %s181, 1
        %s269 = scalar_lea.sflag [#allocation3], %s268
        %s270 = sand.u32 %s181, 1
        %s271 = smul.addr %s270, 64
        %s272 = scalar_lea.vmem [#allocation2], %s271
        %s273 = smul.u32 8, %s21
        %p274 = scmp.lt.s32.totalorder %s273, 15
        %s275 = scalar_select %p274, %s273, 15
        %s276 = smul.addr %s275, 8
        %s277 = scalar_lea.vmem %s0, %s276
        %s278 = smul.u32 8, %s21
        %s279 = smul.u32 8, %s21
        %v281 = vld [vmem:[%s277] sm:$0xff]
        %v282 = vld [vmem:[%s277 + $0x8] sm:$0xff]
        %v283 = vld [vmem:[%s277 + $0x10] sm:$0xff]
        %v284 = vld [vmem:[%s277 + $0x18] sm:$0xff]
        %v285 = vld [vmem:[%s277 + $0x20] sm:$0xff]
        %v286 = vld [vmem:[%s277 + $0x28] sm:$0xff]
        %v287 = vld [vmem:[%s277 + $0x30] sm:$0xff]
        %v288 = vld [vmem:[%s277 + $0x38] sm:$0xff]
        %v289 = vld [vmem:[%s1] sm:$0x1]
        %v290 = vld [vmem:[%s2] sm:$0x1]
        %vm291 = vcmask 523264
        %v292 = vsel %vm291, %v281, 0.0
        %293 = vadd.xlane.f32.xlu0 %v292
        %v294 = vpop.xlane.xlu0 %293
        %v295 = vsel %vm291, %v282, 0.0
        %296 = vadd.xlane.f32.xlu0 %v295
        %v297 = vpop.xlane.xlu0 %296
        %v298 = vsel %vm291, %v283, 0.0
        %299 = vadd.xlane.f32.xlu0 %v298
        %v300 = vpop.xlane.xlu0 %299
        %v301 = vsel %vm291, %v284, 0.0
        %302 = vadd.xlane.f32.xlu0 %v301
        %v303 = vpop.xlane.xlu0 %302
        %v304 = vsel %vm291, %v285, 0.0
        %305 = vadd.xlane.f32.xlu0 %v304
        %v306 = vpop.xlane.xlu0 %305
        %v307 = vsel %vm291, %v286, 0.0
        %308 = vadd.xlane.f32.xlu0 %v307
        %v309 = vpop.xlane.xlu0 %308
        %v310 = vsel %vm291, %v287, 0.0
        %311 = vadd.xlane.f32.xlu0 %v310
        %v312 = vpop.xlane.xlu0 %311
        %v313 = vsel %vm291, %v288, 0.0
        %314 = vadd.xlane.f32.xlu0 %v313
        %v315 = vpop.xlane.xlu0 %314
        %v316 = vrcp.pop 64.0
        %v317 = vmul.f32 %v294, %v316
        %v318 = vmul.f32 %v297, %v316
        %v319 = vmul.f32 %v300, %v316
        %v320 = vmul.f32 %v303, %v316
        %v321 = vmul.f32 %v306, %v316
        %v322 = vmul.f32 %v309, %v316
        %v323 = vmul.f32 %v312, %v316
        %v324 = vmul.f32 %v315, %v316
        %v325 = vsub.f32 %v281, %v317
        %v326 = vsub.f32 %v282, %v318
        %v327 = vsub.f32 %v283, %v319
        %v328 = vsub.f32 %v284, %v320
        %v329 = vsub.f32 %v285, %v321
        %v330 = vsub.f32 %v286, %v322
        %v331 = vsub.f32 %v287, %v323
        %v332 = vsub.f32 %v288, %v324
        %v333 = vmul.f32 %v325, %v325
        %v334 = vmul.f32 %v326, %v326
        %v335 = vmul.f32 %v327, %v327
        %v336 = vmul.f32 %v328, %v328
        %v337 = vmul.f32 %v329, %v329
        %v338 = vmul.f32 %v330, %v330
        %v339 = vmul.f32 %v331, %v331
        %v340 = vmul.f32 %v332, %v332
        %v341 = vsel %vm291, %v333, 0.0
        %342 = vadd.xlane.f32.xlu0 %v341
        %v343 = vpop.xlane.xlu0 %342
        %v344 = vsel %vm291, %v334, 0.0
        %345 = vadd.xlane.f32.xlu0 %v344
        %v346 = vpop.xlane.xlu0 %345
        %v347 = vsel %vm291, %v335, 0.0
        %348 = vadd.xlane.f32.xlu0 %v347
        %v349 = vpop.xlane.xlu0 %348
        %v350 = vsel %vm291, %v336, 0.0
        %351 = vadd.xlane.f32.xlu0 %v350
        %v352 = vpop.xlane.xlu0 %351
        %v353 = vsel %vm291, %v337, 0.0
        %354 = vadd.xlane.f32.xlu0 %v353
        %v355 = vpop.xlane.xlu0 %354
        %v356 = vsel %vm291, %v338, 0.0
        %357 = vadd.xlane.f32.xlu0 %v356
        %v358 = vpop.xlane.xlu0 %357
        %v359 = vsel %vm291, %v339, 0.0
        %360 = vadd.xlane.f32.xlu0 %v359
        %v361 = vpop.xlane.xlu0 %360
        %v362 = vsel %vm291, %v340, 0.0
        %363 = vadd.xlane.f32.xlu0 %v362
        %v364 = vpop.xlane.xlu0 %363
        %v365 = vmul.f32 %v343, %v316
        %v366 = vmul.f32 %v346, %v316
        %v367 = vmul.f32 %v349, %v316
        %v368 = vmul.f32 %v352, %v316
        %v369 = vmul.f32 %v355, %v316
        %v370 = vmul.f32 %v358, %v316
        %v371 = vmul.f32 %v361, %v316
        %v372 = vmul.f32 %v364, %v316
        %v373 = vadd.f32 %v365, 1e-05
        %v374 = vadd.f32 %v366, 1e-05
        %v375 = vadd.f32 %v367, 1e-05
        %v376 = vadd.f32 %v368, 1e-05
        %v377 = vadd.f32 %v369, 1e-05
        %v378 = vadd.f32 %v370, 1e-05
        %v379 = vadd.f32 %v371, 1e-05
        %v380 = vadd.f32 %v372, 1e-05
        %v381 = vrsqrt.pop %v373
        %v382 = vmul.f32 %v373, %v381
        %vm383 = vcmp.eq.f32.partialorder %v373, inf
        %v384 = vsel %vm383, %v373, %v382
        %vm385 = vcmp.eq.f32.partialorder %v373, 0.0
        %v386 = vand.u32 %v373, 2147483648
        %v387 = vsel %vm385, %v386, %v384
        %v388 = vrsqrt.pop %v374
        %v389 = vmul.f32 %v374, %v388
        %vm390 = vcmp.eq.f32.partialorder %v374, inf
        %v391 = vsel %vm390, %v374, %v389
        %vm392 = vcmp.eq.f32.partialorder %v374, 0.0
        %v393 = vand.u32 %v374, 2147483648
        %v394 = vsel %vm392, %v393, %v391
        %v395 = vrsqrt.pop %v375
        %v396 = vmul.f32 %v375, %v395
        %vm397 = vcmp.eq.f32.partialorder %v375, inf
        %v398 = vsel %vm397, %v375, %v396
        %vm399 = vcmp.eq.f32.partialorder %v375, 0.0
        %v400 = vand.u32 %v375, 2147483648
        %v401 = vsel %vm399, %v400, %v398
        %v402 = vrsqrt.pop %v376
        %v403 = vmul.f32 %v376, %v402
        %vm404 = vcmp.eq.f32.partialorder %v376, inf
        %v405 = vsel %vm404, %v376, %v403
        %vm406 = vcmp.eq.f32.partialorder %v376, 0.0
        %v407 = vand.u32 %v376, 2147483648
        %v408 = vsel %vm406, %v407, %v405
        %v409 = vrsqrt.pop %v377
        %v410 = vmul.f32 %v377, %v409
        %vm411 = vcmp.eq.f32.partialorder %v377, inf
        %v412 = vsel %vm411, %v377, %v410
        %vm413 = vcmp.eq.f32.partialorder %v377, 0.0
        %v414 = vand.u32 %v377, 2147483648
        %v415 = vsel %vm413, %v414, %v412
        %v416 = vrsqrt.pop %v378
        %v417 = vmul.f32 %v378, %v416
        %vm418 = vcmp.eq.f32.partialorder %v378, inf
        %v419 = vsel %vm418, %v378, %v417
        %vm420 = vcmp.eq.f32.partialorder %v378, 0.0
        %v421 = vand.u32 %v378, 2147483648
        %v422 = vsel %vm420, %v421, %v419
        %v423 = vrsqrt.pop %v379
        %v424 = vmul.f32 %v379, %v423
        %vm425 = vcmp.eq.f32.partialorder %v379, inf
        %v426 = vsel %vm425, %v379, %v424
        %vm427 = vcmp.eq.f32.partialorder %v379, 0.0
        %v428 = vand.u32 %v379, 2147483648
        %v429 = vsel %vm427, %v428, %v426
        %v430 = vrsqrt.pop %v380
        %v431 = vmul.f32 %v380, %v430
        %vm432 = vcmp.eq.f32.partialorder %v380, inf
        %v433 = vsel %vm432, %v380, %v431
        %vm434 = vcmp.eq.f32.partialorder %v380, 0.0
        %v435 = vand.u32 %v380, 2147483648
        %v436 = vsel %vm434, %v435, %v433
        %v437 = vrcp.pop %v387
        %v438 = vmul.f32 %v325, %v437
        %v439 = vrcp.pop %v394
        %v440 = vmul.f32 %v326, %v439
        %v441 = vrcp.pop %v401
        %v442 = vmul.f32 %v327, %v441
        %v443 = vrcp.pop %v408
        %v444 = vmul.f32 %v328, %v443
        %v445 = vrcp.pop %v415
        %v446 = vmul.f32 %v329, %v445
        %v447 = vrcp.pop %v422
        %v448 = vmul.f32 %v330, %v447
        %v449 = vrcp.pop %v429
        %v450 = vmul.f32 %v331, %v449
        %v451 = vrcp.pop %v436
        %v452 = vmul.f32 %v332, %v451
        %v454 = vlaneseq
        %v455 = vshrl.u32 %v454, 7
        %v456 = vsub.s32 0, %v455
        %v457 = vrot.slane %v289, %v456
        %v459 = vmul.f32 %v438, %v457
        %v460 = vmul.f32 %v440, %v457
        %v461 = vmul.f32 %v442, %v457
        %v462 = vmul.f32 %v444, %v457
        %v463 = vmul.f32 %v446, %v457
        %v464 = vmul.f32 %v448, %v457
        %v465 = vmul.f32 %v450, %v457
        %v466 = vmul.f32 %v452, %v457
        %v468 = vlaneseq
        %v469 = vshrl.u32 %v468, 7
        %v470 = vsub.s32 0, %v469
        %v471 = vrot.slane %v290, %v470
        %v473 = vadd.f32 %v459, %v471
        %v474 = vadd.f32 %v460, %v471
        %v475 = vadd.f32 %v461, %v471
        %v476 = vadd.f32 %v462, %v471
        %v477 = vadd.f32 %v463, %v471
        %v478 = vadd.f32 %v464, %v471
        %v479 = vadd.f32 %v465, %v471
        %v480 = vadd.f32 %v466, %v471
        %v481 = vpack.c.bf16 %v474, %v473
        %v482 = vpack.c.bf16 %v476, %v475
        %v483 = vpack.c.bf16 %v478, %v477
        %v484 = vpack.c.bf16 %v480, %v479
        %v485 = vld [vmem:[%s3] sm:$0xff]
        %v486 = vld [vmem:[%s3 + $0x8] sm:$0xff]
        %v487 = vld [vmem:[%s3 + $0x10] sm:$0xff]
        %v488 = vld [vmem:[%s3 + $0x18] sm:$0xff]
        %v489 = vld [vmem:[%s3 + $0x20] sm:$0xff]
        %v490 = vld [vmem:[%s3 + $0x28] sm:$0xff]
        %v491 = vld [vmem:[%s3 + $0x30] sm:$0xff]
        %v492 = vld [vmem:[%s3 + $0x38] sm:$0xff]
        %v493 = vld [vmem:[%s4] sm:$0x3]
        %v495 = vlaneseq
        %v496 = vshrl.u32 %v495, 7
        %v497 = vsub.s32 0, %v496
        %v498 = vrot.slane %v493, %v497
        %v499 = vlaneseq
        %v500 = vshrl.u32 %v499, 7
        %v501 = vsub.s32 1, %v500
        %v502 = vrot.slane %v493, %v501
        %v513 = vunpack.c.l.b16 %v485
        %v514 = vunpack.c.h.b16 %v485
        %v515 = vunpack.c.l.b16 %v486
        %v516 = vunpack.c.h.b16 %v486
        %v517 = vunpack.c.l.b16 %v487
        %v518 = vunpack.c.h.b16 %v487
        %v519 = vunpack.c.l.b16 %v488
        %v520 = vunpack.c.h.b16 %v488
        %v521 = vunpack.c.l.b16 %v489
        %v522 = vunpack.c.h.b16 %v489
        %v523 = vunpack.c.l.b16 %v490
        %v524 = vunpack.c.h.b16 %v490
        %v525 = vunpack.c.l.b16 %v491
        %v526 = vunpack.c.h.b16 %v491
        %v527 = vunpack.c.l.b16 %v492
        %v528 = vunpack.c.h.b16 %v492
        %v529 = vpack.c.b16 %v515, %v513
        %v530 = vpack.c.b16 %v516, %v514
        %v531 = vpack.c.b16 %v519, %v517
        %v532 = vpack.c.b16 %v520, %v518
        %v533 = vpack.c.b16 %v523, %v521
        %v534 = vpack.c.b16 %v524, %v522
        %v535 = vpack.c.b16 %v527, %v525
        %v536 = vpack.c.b16 %v528, %v526
        %v546 = vsel %vm291, %v481, 0
        %v549 = vsel %vm291, %v482, 0
        %v552 = vsel %vm291, %v483, 0
        %v555 = vsel %vm291, %v484, 0
        %557 = vmatprep.subr.bf16.mxu0 %v530
        %558 = vmatpush1.bf16.msra.mxu0 %v529
        %559 = vmatprep.subr.bf16.mxu0 %v532
        %560 = vmatpush1.bf16.msra.mxu0 %v531
        %561 = vmatprep.subr.bf16.mxu0 %v534
        %562 = vmatpush1.bf16.msra.mxu0 %v533
        %563 = vmatprep.subr.bf16.mxu0 %v536
        %564 = vmatpush1.bf16.msra.mxu0 %v535
        %565 = vmatprep.subr.bf16.mxu0 0
        %566 = vmatpush1.bf16.msra.mxu0 0
        %567 = vmatprep.subr.bf16.mxu0 0
        %568 = vmatpush1.bf16.msra.mxu0 0
        %569 = vmatprep.subr.bf16.mxu0 0
        %570 = vmatpush1.bf16.msra.mxu0 0
        %571 = vmatprep.subr.bf16.mxu0 0
        %572 = vmatpush1.bf16.msra.mxu0 0
        %573 = vmatprep.subr.bf16.mxu0 0
        %574 = vmatpush1.bf16.msra.mxu0 0
        %575 = vmatprep.subr.bf16.mxu0 0
        %576 = vmatpush1.bf16.msra.mxu0 0
        %577 = vmatprep.subr.bf16.mxu0 0
        %578 = vmatpush1.bf16.msra.mxu0 0
        %579 = vmatprep.subr.bf16.mxu0 0
        %580 = vmatpush1.bf16.msra.mxu0 0
        %581 = vmatprep.subr.bf16.mxu0 0
        %582 = vmatpush1.bf16.msra.mxu0 0
        %583 = vmatprep.subr.bf16.mxu0 0
        %584 = vmatpush1.bf16.msra.mxu0 0
        %585 = vmatprep.subr.bf16.mxu0 0
        %586 = vmatpush1.bf16.msra.mxu0 0
        %587 = vmatprep.subr.bf16.mxu0 0
        %588 = vmatpush1.bf16.msra.mxu0 0
        %589 = vmatprep.mubr.bf16.mxu0 0
        %590 = vmatmul.mubr.bf16.gmra.mrb[0].mxu0 %v546
        %v591 = vpop.f32.mrb[0].mxu0
        %v592 = vadd.f32 %v498, %v591
        %v593 = vpop.f32.mrb[0].mxu0
        %v594 = vadd.f32 %v502, %v593
        %v595 = vpop.f32.mrb[0].mxu0
        %v596 = vadd.f32 %v498, %v595
        %v597 = vpop.f32.mrb[0].mxu0
        %v598 = vadd.f32 %v502, %v597
        %599 = vmatprep.mubr.bf16.mxu0 0
        %600 = vmatmul.mubr.bf16.gmra.mrb[0].mxu0 %v549
        %v601 = vpop.f32.mrb[0].mxu0
        %v602 = vadd.f32 %v498, %v601
        %v603 = vpop.f32.mrb[0].mxu0
        %v604 = vadd.f32 %v502, %v603
        %v605 = vpop.f32.mrb[0].mxu0
        %v606 = vadd.f32 %v498, %v605
        %v607 = vpop.f32.mrb[0].mxu0
        %v608 = vadd.f32 %v502, %v607
        %609 = vmatprep.mubr.bf16.mxu0 0
        %610 = vmatmul.mubr.bf16.gmra.mrb[0].mxu0 %v552
        %v611 = vpop.f32.mrb[0].mxu0
        %v612 = vadd.f32 %v498, %v611
        %v613 = vpop.f32.mrb[0].mxu0
        %v614 = vadd.f32 %v502, %v613
        %v615 = vpop.f32.mrb[0].mxu0
        %v616 = vadd.f32 %v498, %v615
        %v617 = vpop.f32.mrb[0].mxu0
        %v618 = vadd.f32 %v502, %v617
        %619 = vmatprep.mubr.bf16.mxu0 0
        %620 = vmatmul.mubr.bf16.gmra.mrb[0].mxu0 %v555
        %v621 = vpop.f32.mrb[0].mxu0
        %v622 = vadd.f32 %v498, %v621
        %v623 = vpop.f32.mrb[0].mxu0
        %v624 = vadd.f32 %v502, %v623
        %v625 = vpop.f32.mrb[0].mxu0
        %v626 = vadd.f32 %v498, %v625
        %v627 = vpop.f32.mrb[0].mxu0
        %v628 = vadd.f32 %v502, %v627
        %629 = vdwg.mxu0
        %v630 = vmul.f32 %v592, 0.5
        %v631 = vmul.f32 %v594, 0.5
        %v632 = vmul.f32 %v596, 0.5
        %v633 = vmul.f32 %v598, 0.5
        %v634 = vmul.f32 %v602, 0.5
        %v635 = vmul.f32 %v604, 0.5
        %v636 = vmul.f32 %v606, 0.5
        %v637 = vmul.f32 %v608, 0.5
        %v638 = vmul.f32 %v612, 0.5
        %v639 = vmul.f32 %v614, 0.5
        %v640 = vmul.f32 %v616, 0.5
        %v641 = vmul.f32 %v618, 0.5
        %v642 = vmul.f32 %v622, 0.5
        %v643 = vmul.f32 %v624, 0.5
        %v644 = vmul.f32 %v626, 0.5
        %v645 = vmul.f32 %v628, 0.5
        %v646 = vmul.f32 %v592, 0.70710677
        %v647 = vmul.f32 %v594, 0.70710677
        %v648 = vmul.f32 %v596, 0.70710677
        %v649 = vmul.f32 %v598, 0.70710677
        %v650 = vmul.f32 %v602, 0.70710677
        %v651 = vmul.f32 %v604, 0.70710677
        %v652 = vmul.f32 %v606, 0.70710677
        %v653 = vmul.f32 %v608, 0.70710677
        %v654 = vmul.f32 %v612, 0.70710677
        %v655 = vmul.f32 %v614, 0.70710677
        %v656 = vmul.f32 %v616, 0.70710677
        %v657 = vmul.f32 %v618, 0.70710677
        %v658 = vmul.f32 %v622, 0.70710677
        %v659 = vmul.f32 %v624, 0.70710677
        %v660 = vmul.f32 %v626, 0.70710677
        %v661 = vmul.f32 %v628, 0.70710677
        %vm662 = vcmp.ge.f32.partialorder %v646, 0.0
        %vm663 = vcmp.ge.f32.partialorder %v647, 0.0
        %vm664 = vcmp.ge.f32.partialorder %v648, 0.0
        %vm665 = vcmp.ge.f32.partialorder %v649, 0.0
        %vm666 = vcmp.ge.f32.partialorder %v650, 0.0
        %vm667 = vcmp.ge.f32.partialorder %v651, 0.0
        %vm668 = vcmp.ge.f32.partialorder %v652, 0.0
        %vm669 = vcmp.ge.f32.partialorder %v653, 0.0
        %vm670 = vcmp.ge.f32.partialorder %v654, 0.0
        %vm671 = vcmp.ge.f32.partialorder %v655, 0.0
        %vm672 = vcmp.ge.f32.partialorder %v656, 0.0
        %vm673 = vcmp.ge.f32.partialorder %v657, 0.0
        %vm674 = vcmp.ge.f32.partialorder %v658, 0.0
        %vm675 = vcmp.ge.f32.partialorder %v659, 0.0
        %vm676 = vcmp.ge.f32.partialorder %v660, 0.0
        %vm677 = vcmp.ge.f32.partialorder %v661, 0.0
        %v678 = vsel %vm662, 1.0, -1.0
        %v679 = vsel %vm663, 1.0, -1.0
        %v680 = vsel %vm664, 1.0, -1.0
        %v681 = vsel %vm665, 1.0, -1.0
        %v682 = vsel %vm666, 1.0, -1.0
        %v683 = vsel %vm667, 1.0, -1.0
        %v684 = vsel %vm668, 1.0, -1.0
        %v685 = vsel %vm669, 1.0, -1.0
        %v686 = vsel %vm670, 1.0, -1.0
        %v687 = vsel %vm671, 1.0, -1.0
        %v688 = vsel %vm672, 1.0, -1.0
        %v689 = vsel %vm673, 1.0, -1.0
        %v690 = vsel %vm674, 1.0, -1.0
        %v691 = vsel %vm675, 1.0, -1.0
        %v692 = vsel %vm676, 1.0, -1.0
        %v693 = vsel %vm677, 1.0, -1.0
        %v694 = vand.u32 2147483647, %v646
        %v695 = vand.u32 2147483647, %v647
        %v696 = vand.u32 2147483647, %v648
        %v697 = vand.u32 2147483647, %v649
        %v698 = vand.u32 2147483647, %v650
        %v699 = vand.u32 2147483647, %v651
        %v700 = vand.u32 2147483647, %v652
        %v701 = vand.u32 2147483647, %v653
        %v702 = vand.u32 2147483647, %v654
        %v703 = vand.u32 2147483647, %v655
        %v704 = vand.u32 2147483647, %v656
        %v705 = vand.u32 2147483647, %v657
        %v706 = vand.u32 2147483647, %v658
        %v707 = vand.u32 2147483647, %v659
        %v708 = vand.u32 2147483647, %v660
        %v709 = vand.u32 2147483647, %v661
        %v710 = vmul.f32 %v694, 0.3275911
        %v711 = vmul.f32 %v695, 0.3275911
        %v712 = vmul.f32 %v696, 0.3275911
        %v713 = vmul.f32 %v697, 0.3275911
        %v714 = vmul.f32 %v698, 0.3275911
        %v715 = vmul.f32 %v699, 0.3275911
        %v716 = vmul.f32 %v700, 0.3275911
        %v717 = vmul.f32 %v701, 0.3275911
        %v718 = vmul.f32 %v702, 0.3275911
        %v719 = vmul.f32 %v703, 0.3275911
        %v720 = vmul.f32 %v704, 0.3275911
        %v721 = vmul.f32 %v705, 0.3275911
        %v722 = vmul.f32 %v706, 0.3275911
        %v723 = vmul.f32 %v707, 0.3275911
        %v724 = vmul.f32 %v708, 0.3275911
        %v725 = vmul.f32 %v709, 0.3275911
        %v726 = vadd.f32 %v710, 1.0
        %v727 = vadd.f32 %v711, 1.0
        %v728 = vadd.f32 %v712, 1.0
        %v729 = vadd.f32 %v713, 1.0
        %v730 = vadd.f32 %v714, 1.0
        %v731 = vadd.f32 %v715, 1.0
        %v732 = vadd.f32 %v716, 1.0
        %v733 = vadd.f32 %v717, 1.0
        %v734 = vadd.f32 %v718, 1.0
        %v735 = vadd.f32 %v719, 1.0
        %v736 = vadd.f32 %v720, 1.0
        %v737 = vadd.f32 %v721, 1.0
        %v738 = vadd.f32 %v722, 1.0
        %v739 = vadd.f32 %v723, 1.0
        %v740 = vadd.f32 %v724, 1.0
        %v741 = vadd.f32 %v725, 1.0
        %v742 = vrcp.pop %v726
        %v743 = vmul.f32 1.0, %v742
        %v744 = vrcp.pop %v727
        %v745 = vmul.f32 1.0, %v744
        %v746 = vrcp.pop %v728
        %v747 = vmul.f32 1.0, %v746
        %v748 = vrcp.pop %v729
        %v749 = vmul.f32 1.0, %v748
        %v750 = vrcp.pop %v730
        %v751 = vmul.f32 1.0, %v750
        %v752 = vrcp.pop %v731
        %v753 = vmul.f32 1.0, %v752
        %v754 = vrcp.pop %v732
        %v755 = vmul.f32 1.0, %v754
        %v756 = vrcp.pop %v733
        %v757 = vmul.f32 1.0, %v756
        %v758 = vrcp.pop %v734
        %v759 = vmul.f32 1.0, %v758
        %v760 = vrcp.pop %v735
        %v761 = vmul.f32 1.0, %v760
        %v762 = vrcp.pop %v736
        %v763 = vmul.f32 1.0, %v762
        %v764 = vrcp.pop %v737
        %v765 = vmul.f32 1.0, %v764
        %v766 = vrcp.pop %v738
        %v767 = vmul.f32 1.0, %v766
        %v768 = vrcp.pop %v739
        %v769 = vmul.f32 1.0, %v768
        %v770 = vrcp.pop %v740
        %v771 = vmul.f32 1.0, %v770
        %v772 = vrcp.pop %v741
        %v773 = vmul.f32 1.0, %v772
        %v774 = vmul.f32 %v743, 1.0614054
        %v775 = vmul.f32 %v745, 1.0614054
        %v776 = vmul.f32 %v747, 1.0614054
        %v777 = vmul.f32 %v749, 1.0614054
        %v778 = vmul.f32 %v751, 1.0614054
        %v779 = vmul.f32 %v753, 1.0614054
        %v780 = vmul.f32 %v755, 1.0614054
        %v781 = vmul.f32 %v757, 1.0614054
        %v782 = vmul.f32 %v759, 1.0614054
        %v783 = vmul.f32 %v761, 1.0614054
        %v784 = vmul.f32 %v763, 1.0614054
        %v785 = vmul.f32 %v765, 1.0614054
        %v786 = vmul.f32 %v767, 1.0614054
        %v787 = vmul.f32 %v769, 1.0614054
        %v788 = vmul.f32 %v771, 1.0614054
        %v789 = vmul.f32 %v773, 1.0614054
        %v790 = vadd.f32 %v774, -1.4531521
        %v791 = vadd.f32 %v775, -1.4531521
        %v792 = vadd.f32 %v776, -1.4531521
        %v793 = vadd.f32 %v777, -1.4531521
        %v794 = vadd.f32 %v778, -1.4531521
        %v795 = vadd.f32 %v779, -1.4531521
        %v796 = vadd.f32 %v780, -1.4531521
        %v797 = vadd.f32 %v781, -1.4531521
        %v798 = vadd.f32 %v782, -1.4531521
        %v799 = vadd.f32 %v783, -1.4531521
        %v800 = vadd.f32 %v784, -1.4531521
        %v801 = vadd.f32 %v785, -1.4531521
        %v802 = vadd.f32 %v786, -1.4531521
        %v803 = vadd.f32 %v787, -1.4531521
        %v804 = vadd.f32 %v788, -1.4531521
        %v805 = vadd.f32 %v789, -1.4531521
        %v806 = vmul.f32 %v790, %v743
        %v807 = vmul.f32 %v791, %v745
        %v808 = vmul.f32 %v792, %v747
        %v809 = vmul.f32 %v793, %v749
        %v810 = vmul.f32 %v794, %v751
        %v811 = vmul.f32 %v795, %v753
        %v812 = vmul.f32 %v796, %v755
        %v813 = vmul.f32 %v797, %v757
        %v814 = vmul.f32 %v798, %v759
        %v815 = vmul.f32 %v799, %v761
        %v816 = vmul.f32 %v800, %v763
        %v817 = vmul.f32 %v801, %v765
        %v818 = vmul.f32 %v802, %v767
        %v819 = vmul.f32 %v803, %v769
        %v820 = vmul.f32 %v804, %v771
        %v821 = vmul.f32 %v805, %v773
        %v822 = vadd.f32 %v806, 1.4214138
        %v823 = vadd.f32 %v807, 1.4214138
        %v824 = vadd.f32 %v808, 1.4214138
        %v825 = vadd.f32 %v809, 1.4214138
        %v826 = vadd.f32 %v810, 1.4214138
        %v827 = vadd.f32 %v811, 1.4214138
        %v828 = vadd.f32 %v812, 1.4214138
        %v829 = vadd.f32 %v813, 1.4214138
        %v830 = vadd.f32 %v814, 1.4214138
        %v831 = vadd.f32 %v815, 1.4214138
        %v832 = vadd.f32 %v816, 1.4214138
        %v833 = vadd.f32 %v817, 1.4214138
        %v834 = vadd.f32 %v818, 1.4214138
        %v835 = vadd.f32 %v819, 1.4214138
        %v836 = vadd.f32 %v820, 1.4214138
        %v837 = vadd.f32 %v821, 1.4214138
        %v838 = vmul.f32 %v822, %v743
        %v839 = vmul.f32 %v823, %v745
        %v840 = vmul.f32 %v824, %v747
        %v841 = vmul.f32 %v825, %v749
        %v842 = vmul.f32 %v826, %v751
        %v843 = vmul.f32 %v827, %v753
        %v844 = vmul.f32 %v828, %v755
        %v845 = vmul.f32 %v829, %v757
        %v846 = vmul.f32 %v830, %v759
        %v847 = vmul.f32 %v831, %v761
        %v848 = vmul.f32 %v832, %v763
        %v849 = vmul.f32 %v833, %v765
        %v850 = vmul.f32 %v834, %v767
        %v851 = vmul.f32 %v835, %v769
        %v852 = vmul.f32 %v836, %v771
        %v853 = vmul.f32 %v837, %v773
        %v854 = vadd.f32 %v838, -0.28449672
        %v855 = vadd.f32 %v839, -0.28449672
        %v856 = vadd.f32 %v840, -0.28449672
        %v857 = vadd.f32 %v841, -0.28449672
        %v858 = vadd.f32 %v842, -0.28449672
        %v859 = vadd.f32 %v843, -0.28449672
        %v860 = vadd.f32 %v844, -0.28449672
        %v861 = vadd.f32 %v845, -0.28449672
        %v862 = vadd.f32 %v846, -0.28449672
        %v863 = vadd.f32 %v847, -0.28449672
        %v864 = vadd.f32 %v848, -0.28449672
        %v865 = vadd.f32 %v849, -0.28449672
        %v866 = vadd.f32 %v850, -0.28449672
        %v867 = vadd.f32 %v851, -0.28449672
        %v868 = vadd.f32 %v852, -0.28449672
        %v869 = vadd.f32 %v853, -0.28449672
        %v870 = vmul.f32 %v854, %v743
        %v871 = vmul.f32 %v855, %v745
        %v872 = vmul.f32 %v856, %v747
        %v873 = vmul.f32 %v857, %v749
        %v874 = vmul.f32 %v858, %v751
        %v875 = vmul.f32 %v859, %v753
        %v876 = vmul.f32 %v860, %v755
        %v877 = vmul.f32 %v861, %v757
        %v878 = vmul.f32 %v862, %v759
        %v879 = vmul.f32 %v863, %v761
        %v880 = vmul.f32 %v864, %v763
        %v881 = vmul.f32 %v865, %v765
        %v882 = vmul.f32 %v866, %v767
        %v883 = vmul.f32 %v867, %v769
        %v884 = vmul.f32 %v868, %v771
        %v885 = vmul.f32 %v869, %v773
        %v886 = vadd.f32 %v870, 0.2548296
        %v887 = vadd.f32 %v871, 0.2548296
        %v888 = vadd.f32 %v872, 0.2548296
        %v889 = vadd.f32 %v873, 0.2548296
        %v890 = vadd.f32 %v874, 0.2548296
        %v891 = vadd.f32 %v875, 0.2548296
        %v892 = vadd.f32 %v876, 0.2548296
        %v893 = vadd.f32 %v877, 0.2548296
        %v894 = vadd.f32 %v878, 0.2548296
        %v895 = vadd.f32 %v879, 0.2548296
        %v896 = vadd.f32 %v880, 0.2548296
        %v897 = vadd.f32 %v881, 0.2548296
        %v898 = vadd.f32 %v882, 0.2548296
        %v899 = vadd.f32 %v883, 0.2548296
        %v900 = vadd.f32 %v884, 0.2548296
        %v901 = vadd.f32 %v885, 0.2548296
        %v902 = vmul.f32 %v886, %v743
        %v903 = vmul.f32 %v887, %v745
        %v904 = vmul.f32 %v888, %v747
        %v905 = vmul.f32 %v889, %v749
        %v906 = vmul.f32 %v890, %v751
        %v907 = vmul.f32 %v891, %v753
        %v908 = vmul.f32 %v892, %v755
        %v909 = vmul.f32 %v893, %v757
        %v910 = vmul.f32 %v894, %v759
        %v911 = vmul.f32 %v895, %v761
        %v912 = vmul.f32 %v896, %v763
        %v913 = vmul.f32 %v897, %v765
        %v914 = vmul.f32 %v898, %v767
        %v915 = vmul.f32 %v899, %v769
        %v916 = vmul.f32 %v900, %v771
        %v917 = vmul.f32 %v901, %v773
        %v918 = vsub.f32 0.0, %v694
        %v919 = vsub.f32 0.0, %v695
        %v920 = vsub.f32 0.0, %v696
        %v921 = vsub.f32 0.0, %v697
        %v922 = vsub.f32 0.0, %v698
        %v923 = vsub.f32 0.0, %v699
        %v924 = vsub.f32 0.0, %v700
        %v925 = vsub.f32 0.0, %v701
        %v926 = vsub.f32 0.0, %v702
        %v927 = vsub.f32 0.0, %v703
        %v928 = vsub.f32 0.0, %v704
        %v929 = vsub.f32 0.0, %v705
        %v930 = vsub.f32 0.0, %v706
        %v931 = vsub.f32 0.0, %v707
        %v932 = vsub.f32 0.0, %v708
        %v933 = vsub.f32 0.0, %v709
        %v934 = vmul.f32 %v918, %v694
        %v935 = vmul.f32 %v919, %v695
        %v936 = vmul.f32 %v920, %v696
        %v937 = vmul.f32 %v921, %v697
        %v938 = vmul.f32 %v922, %v698
        %v939 = vmul.f32 %v923, %v699
        %v940 = vmul.f32 %v924, %v700
        %v941 = vmul.f32 %v925, %v701
        %v942 = vmul.f32 %v926, %v702
        %v943 = vmul.f32 %v927, %v703
        %v944 = vmul.f32 %v928, %v704
        %v945 = vmul.f32 %v929, %v705
        %v946 = vmul.f32 %v930, %v706
        %v947 = vmul.f32 %v931, %v707
        %v948 = vmul.f32 %v932, %v708
        %v949 = vmul.f32 %v933, %v709
        %v950 = vmul.f32 %v934, 1.442695
        %v951 = vpow.pop %v950
        %v952 = vmul.f32 %v935, 1.442695
        %v953 = vpow.pop %v952
        %v954 = vmul.f32 %v936, 1.442695
        %v955 = vpow.pop %v954
        %v956 = vmul.f32 %v937, 1.442695
        %v957 = vpow.pop %v956
        %v958 = vmul.f32 %v938, 1.442695
        %v959 = vpow.pop %v958
        %v960 = vmul.f32 %v939, 1.442695
        %v961 = vpow.pop %v960
        %v962 = vmul.f32 %v940, 1.442695
        %v963 = vpow.pop %v962
        %v964 = vmul.f32 %v941, 1.442695
        %v965 = vpow.pop %v964
        %v966 = vmul.f32 %v942, 1.442695
        %v967 = vpow.pop %v966
        %v968 = vmul.f32 %v943, 1.442695
        %v969 = vpow.pop %v968
        %v970 = vmul.f32 %v944, 1.442695
        %v971 = vpow.pop %v970
        %v972 = vmul.f32 %v945, 1.442695
        %v973 = vpow.pop %v972
        %v974 = vmul.f32 %v946, 1.442695
        %v975 = vpow.pop %v974
        %v976 = vmul.f32 %v947, 1.442695
        %v977 = vpow.pop %v976
        %v978 = vmul.f32 %v948, 1.442695
        %v979 = vpow.pop %v978
        %v980 = vmul.f32 %v949, 1.442695
        %v981 = vpow.pop %v980
        %v982 = vmul.f32 %v902, %v951
        %v983 = vmul.f32 %v903, %v953
        %v984 = vmul.f32 %v904, %v955
        %v985 = vmul.f32 %v905, %v957
        %v986 = vmul.f32 %v906, %v959
        %v987 = vmul.f32 %v907, %v961
        %v988 = vmul.f32 %v908, %v963
        %v989 = vmul.f32 %v909, %v965
        %v990 = vmul.f32 %v910, %v967
        %v991 = vmul.f32 %v911, %v969
        %v992 = vmul.f32 %v912, %v971
        %v993 = vmul.f32 %v913, %v973
        %v994 = vmul.f32 %v914, %v975
        %v995 = vmul.f32 %v915, %v977
        %v996 = vmul.f32 %v916, %v979
        %v997 = vmul.f32 %v917, %v981
        %v998 = vsub.f32 1.0, %v982
        %v999 = vsub.f32 1.0, %v983
        %v1000 = vsub.f32 1.0, %v984
        %v1001 = vsub.f32 1.0, %v985
        %v1002 = vsub.f32 1.0, %v986
        %v1003 = vsub.f32 1.0, %v987
        %v1004 = vsub.f32 1.0, %v988
        %v1005 = vsub.f32 1.0, %v989
        %v1006 = vsub.f32 1.0, %v990
        %v1007 = vsub.f32 1.0, %v991
        %v1008 = vsub.f32 1.0, %v992
        %v1009 = vsub.f32 1.0, %v993
        %v1010 = vsub.f32 1.0, %v994
        %v1011 = vsub.f32 1.0, %v995
        %v1012 = vsub.f32 1.0, %v996
        %v1013 = vsub.f32 1.0, %v997
        %v1014 = vmul.f32 %v678, %v998
        %v1015 = vmul.f32 %v679, %v999
        %v1016 = vmul.f32 %v680, %v1000
        %v1017 = vmul.f32 %v681, %v1001
        %v1018 = vmul.f32 %v682, %v1002
        %v1019 = vmul.f32 %v683, %v1003
        %v1020 = vmul.f32 %v684, %v1004
        %v1021 = vmul.f32 %v685, %v1005
        %v1022 = vmul.f32 %v686, %v1006
        %v1023 = vmul.f32 %v687, %v1007
        %v1024 = vmul.f32 %v688, %v1008
        %v1025 = vmul.f32 %v689, %v1009
        %v1026 = vmul.f32 %v690, %v1010
        %v1027 = vmul.f32 %v691, %v1011
        %v1028 = vmul.f32 %v692, %v1012
        %v1029 = vmul.f32 %v693, %v1013
        %v1030 = vadd.f32 %v1014, 1.0
        %v1031 = vadd.f32 %v1015, 1.0
        %v1032 = vadd.f32 %v1016, 1.0
        %v1033 = vadd.f32 %v1017, 1.0
        %v1034 = vadd.f32 %v1018, 1.0
        %v1035 = vadd.f32 %v1019, 1.0
        %v1036 = vadd.f32 %v1020, 1.0
        %v1037 = vadd.f32 %v1021, 1.0
        %v1038 = vadd.f32 %v1022, 1.0
        %v1039 = vadd.f32 %v1023, 1.0
        %v1040 = vadd.f32 %v1024, 1.0
        %v1041 = vadd.f32 %v1025, 1.0
        %v1042 = vadd.f32 %v1026, 1.0
        %v1043 = vadd.f32 %v1027, 1.0
        %v1044 = vadd.f32 %v1028, 1.0
        %v1045 = vadd.f32 %v1029, 1.0
        %v1046 = vmul.f32 %v630, %v1030
        %v1047 = vmul.f32 %v631, %v1031
        %v1048 = vmul.f32 %v632, %v1032
        %v1049 = vmul.f32 %v633, %v1033
        %v1050 = vmul.f32 %v634, %v1034
        %v1051 = vmul.f32 %v635, %v1035
        %v1052 = vmul.f32 %v636, %v1036
        %v1053 = vmul.f32 %v637, %v1037
        %v1054 = vmul.f32 %v638, %v1038
        %v1055 = vmul.f32 %v639, %v1039
        %v1056 = vmul.f32 %v640, %v1040
        %v1057 = vmul.f32 %v641, %v1041
        %v1058 = vmul.f32 %v642, %v1042
        %v1059 = vmul.f32 %v643, %v1043
        %v1060 = vmul.f32 %v644, %v1044
        %v1061 = vmul.f32 %v645, %v1045
        %v1062 = vpack.c.bf16 %v1048, %v1046
        %v1063 = vpack.c.bf16 %v1049, %v1047
        %v1064 = vpack.c.bf16 %v1052, %v1050
        %v1065 = vpack.c.bf16 %v1053, %v1051
        %v1066 = vpack.c.bf16 %v1056, %v1054
        %v1067 = vpack.c.bf16 %v1057, %v1055
        %v1068 = vpack.c.bf16 %v1060, %v1058
        %v1069 = vpack.c.bf16 %v1061, %v1059
        %v1070 = vld [vmem:[%s5] sm:$0xf]
        %v1071 = vld [vmem:[%s5 + $0x4] sm:$0xf]
        %v1072 = vld [vmem:[%s5 + $0x8] sm:$0xf]
        %v1073 = vld [vmem:[%s5 + $0xc] sm:$0xf]
        %v1074 = vld [vmem:[%s5 + $0x10] sm:$0xf]
        %v1075 = vld [vmem:[%s5 + $0x14] sm:$0xf]
        %v1076 = vld [vmem:[%s5 + $0x18] sm:$0xf]
        %v1077 = vld [vmem:[%s5 + $0x1c] sm:$0xf]
        %v1078 = vld [vmem:[%s5 + $0x20] sm:$0xf]
        %v1079 = vld [vmem:[%s5 + $0x24] sm:$0xf]
        %v1080 = vld [vmem:[%s5 + $0x28] sm:$0xf]
        %v1081 = vld [vmem:[%s5 + $0x2c] sm:$0xf]
        %v1082 = vld [vmem:[%s5 + $0x30] sm:$0xf]
        %v1083 = vld [vmem:[%s5 + $0x34] sm:$0xf]
        %v1084 = vld [vmem:[%s5 + $0x38] sm:$0xf]
        %v1085 = vld [vmem:[%s5 + $0x3c] sm:$0xf]
        %v1086 = vld [vmem:[%s5 + $0x40] sm:$0xf]
        %v1087 = vld [vmem:[%s5 + $0x44] sm:$0xf]
        %v1088 = vld [vmem:[%s5 + $0x48] sm:$0xf]
        %v1089 = vld [vmem:[%s5 + $0x4c] sm:$0xf]
        %v1090 = vld [vmem:[%s5 + $0x50] sm:$0xf]
        %v1091 = vld [vmem:[%s5 + $0x54] sm:$0xf]
        %v1092 = vld [vmem:[%s5 + $0x58] sm:$0xf]
        %v1093 = vld [vmem:[%s5 + $0x5c] sm:$0xf]
        %v1094 = vld [vmem:[%s5 + $0x60] sm:$0xf]
        %v1095 = vld [vmem:[%s5 + $0x64] sm:$0xf]
        %v1096 = vld [vmem:[%s5 + $0x68] sm:$0xf]
        %v1097 = vld [vmem:[%s5 + $0x6c] sm:$0xf]
        %v1098 = vld [vmem:[%s5 + $0x70] sm:$0xf]
        %v1099 = vld [vmem:[%s5 + $0x74] sm:$0xf]
        %v1100 = vld [vmem:[%s5 + $0x78] sm:$0xf]
        %v1101 = vld [vmem:[%s5 + $0x7c] sm:$0xf]
        %v1102 = vld [vmem:[%s6] sm:$0x1]
        %v1104 = vlaneseq
        %v1105 = vshrl.u32 %v1104, 7
        %v1106 = vsub.s32 0, %v1105
        %v1107 = vrot.slane %v1102, %v1106
        %v1141 = vunpack.c.l.b16 %v1070
        %v1142 = vunpack.c.l.b16 %v1071
        %v1143 = vunpack.c.l.b16 %v1072
        %v1144 = vunpack.c.l.b16 %v1073
        %v1145 = vunpack.c.l.b16 %v1074
        %v1146 = vunpack.c.l.b16 %v1075
        %v1147 = vunpack.c.l.b16 %v1076
        %v1148 = vunpack.c.l.b16 %v1077
        %v1149 = vunpack.c.l.b16 %v1078
        %v1150 = vunpack.c.l.b16 %v1079
        %v1151 = vunpack.c.l.b16 %v1080
        %v1152 = vunpack.c.l.b16 %v1081
        %v1153 = vunpack.c.l.b16 %v1082
        %v1154 = vunpack.c.l.b16 %v1083
        %v1155 = vunpack.c.l.b16 %v1084
        %v1156 = vunpack.c.l.b16 %v1085
        %v1157 = vunpack.c.l.b16 %v1086
        %v1158 = vunpack.c.l.b16 %v1087
        %v1159 = vunpack.c.l.b16 %v1088
        %v1160 = vunpack.c.l.b16 %v1089
        %v1161 = vunpack.c.l.b16 %v1090
        %v1162 = vunpack.c.l.b16 %v1091
        %v1163 = vunpack.c.l.b16 %v1092
        %v1164 = vunpack.c.l.b16 %v1093
        %v1165 = vunpack.c.l.b16 %v1094
        %v1166 = vunpack.c.l.b16 %v1095
        %v1167 = vunpack.c.l.b16 %v1096
        %v1168 = vunpack.c.l.b16 %v1097
        %v1169 = vunpack.c.l.b16 %v1098
        %v1170 = vunpack.c.l.b16 %v1099
        %v1171 = vunpack.c.l.b16 %v1100
        %v1172 = vunpack.c.l.b16 %v1101
        %v1173 = vpack.c.b16 %v1142, %v1141
        %v1174 = vpack.c.b16 %v1144, %v1143
        %v1175 = vpack.c.b16 %v1146, %v1145
        %v1176 = vpack.c.b16 %v1148, %v1147
        %v1177 = vpack.c.b16 %v1150, %v1149
        %v1178 = vpack.c.b16 %v1152, %v1151
        %v1179 = vpack.c.b16 %v1154, %v1153
        %v1180 = vpack.c.b16 %v1156, %v1155
        %v1181 = vpack.c.b16 %v1158, %v1157
        %v1182 = vpack.c.b16 %v1160, %v1159
        %v1183 = vpack.c.b16 %v1162, %v1161
        %v1184 = vpack.c.b16 %v1164, %v1163
        %v1185 = vpack.c.b16 %v1166, %v1165
        %v1186 = vpack.c.b16 %v1168, %v1167
        %v1187 = vpack.c.b16 %v1170, %v1169
        %v1188 = vpack.c.b16 %v1172, %v1171
        %1205 = vmatprep.subr.bf16.mxu0 0
        %1206 = vmatpush1.bf16.msra.mxu0 %v1173
        %1207 = vmatprep.subr.bf16.mxu0 0
        %1208 = vmatpush1.bf16.msra.mxu0 %v1174
        %1209 = vmatprep.subr.bf16.mxu0 0
        %1210 = vmatpush1.bf16.msra.mxu0 %v1175
        %1211 = vmatprep.subr.bf16.mxu0 0
        %1212 = vmatpush1.bf16.msra.mxu0 %v1176
        %1213 = vmatprep.subr.bf16.mxu0 0
        %1214 = vmatpush1.bf16.msra.mxu0 %v1177
        %1215 = vmatprep.subr.bf16.mxu0 0
        %1216 = vmatpush1.bf16.msra.mxu0 %v1178
        %1217 = vmatprep.subr.bf16.mxu0 0
        %1218 = vmatpush1.bf16.msra.mxu0 %v1179
        %1219 = vmatprep.subr.bf16.mxu0 0
        %1220 = vmatpush1.bf16.msra.mxu0 %v1180
        %1221 = vmatprep.subr.bf16.mxu0 0
        %1222 = vmatpush1.bf16.msra.mxu0 %v1181
        %1223 = vmatprep.subr.bf16.mxu0 0
        %1224 = vmatpush1.bf16.msra.mxu0 %v1182
        %1225 = vmatprep.subr.bf16.mxu0 0
        %1226 = vmatpush1.bf16.msra.mxu0 %v1183
        %1227 = vmatprep.subr.bf16.mxu0 0
        %1228 = vmatpush1.bf16.msra.mxu0 %v1184
        %1229 = vmatprep.subr.bf16.mxu0 0
        %1230 = vmatpush1.bf16.msra.mxu0 %v1185
        %1231 = vmatprep.subr.bf16.mxu0 0
        %1232 = vmatpush1.bf16.msra.mxu0 %v1186
        %1233 = vmatprep.subr.bf16.mxu0 0
        %1234 = vmatpush1.bf16.msra.mxu0 %v1187
        %1235 = vmatprep.subr.bf16.mxu0 0
        %1236 = vmatpush1.bf16.msra.mxu0 %v1188
        %1237 = vmatprep.mubr.bf16.mxu0 %v1063
        %1238 = vmatmul.mubr.bf16.gmra.mrb[0].mxu0 %v1062
        %v1239 = vpop.f32.mrb[0].mxu0
        %v1240 = vadd.f32 %v1107, %v1239
        %v1241 = vpop.f32.mrb[0].mxu0
        %v1242 = vpop.f32.mrb[0].mxu0
        %v1243 = vadd.f32 %v1107, %v1242
        %v1244 = vpop.f32.mrb[0].mxu0
        %1245 = vmatprep.mubr.bf16.mxu0 %v1065
        %1246 = vmatmul.mubr.bf16.gmra.mrb[0].mxu0 %v1064
        %v1247 = vpop.f32.mrb[0].mxu0
        %v1248 = vadd.f32 %v1107, %v1247
        %v1249 = vpop.f32.mrb[0].mxu0
        %v1250 = vpop.f32.mrb[0].mxu0
        %v1251 = vadd.f32 %v1107, %v1250
        %v1252 = vpop.f32.mrb[0].mxu0
        %1253 = vmatprep.mubr.bf16.mxu0 %v1067
        %1254 = vmatmul.mubr.bf16.gmra.mrb[0].mxu0 %v1066
        %v1255 = vpop.f32.mrb[0].mxu0
        %v1256 = vadd.f32 %v1107, %v1255
        %v1257 = vpop.f32.mrb[0].mxu0
        %v1258 = vpop.f32.mrb[0].mxu0
        %v1259 = vadd.f32 %v1107, %v1258
        %v1260 = vpop.f32.mrb[0].mxu0
        %1261 = vmatprep.mubr.bf16.mxu0 %v1069
        %1262 = vmatmul.mubr.bf16.gmra.mrb[0].mxu0 %v1068
        %v1263 = vpop.f32.mrb[0].mxu0
        %v1264 = vadd.f32 %v1107, %v1263
        %v1265 = vpop.f32.mrb[0].mxu0
        %v1266 = vpop.f32.mrb[0].mxu0
        %v1267 = vadd.f32 %v1107, %v1266
        %v1268 = vpop.f32.mrb[0].mxu0
        %1269 = vdwg.mxu0
        %v1270 = vadd.f32 %v1240, %v281
        %v1271 = vadd.f32 %v1243, %v282
        %v1272 = vadd.f32 %v1248, %v283
        %v1273 = vadd.f32 %v1251, %v284
        %v1274 = vadd.f32 %v1256, %v285
        %v1275 = vadd.f32 %v1259, %v286
        %v1276 = vadd.f32 %v1264, %v287
        %v1277 = vadd.f32 %v1267, %v288
        %1278 = vst.msk [vmem:[%s272] sm:$0xff] %vm291, %v1270
        %1279 = vst.msk [vmem:[%s272 + $0x8] sm:$0xff] %vm291, %v1271
        %1280 = vst.msk [vmem:[%s272 + $0x10] sm:$0xff] %vm291, %v1272
        %1281 = vst.msk [vmem:[%s272 + $0x18] sm:$0xff] %vm291, %v1273
        %1282 = vst.msk [vmem:[%s272 + $0x20] sm:$0xff] %vm291, %v1274
        %1283 = vst.msk [vmem:[%s272 + $0x28] sm:$0xff] %vm291, %v1275
        %1284 = vst.msk [vmem:[%s272 + $0x30] sm:$0xff] %vm291, %v1276
        %1285 = vst.msk [vmem:[%s272 + $0x38] sm:$0xff] %vm291, %v1277
        %s1286 = sand.u32 %s181, 1
        %s1287 = scalar_lea.sflag [#allocation3], %s1286
        %s1288 = sand.u32 %s181, 1
        %s1289 = smul.addr %s1288, 64
        %s1290 = scalar_lea.vmem [#allocation2], %s1289
        // Predicated region
        $region49: #{transformer_forward.23} parent=47 // pred_check
          %p1291 = pneg %p191
        $region50: #{transformer_forward.23} parent=47 // pred_check_branch
          %1293 = sbr.rel (%p1291) target = $region52
        $region51: #{transformer_forward.23} parent=47 // pred_region
          %s1294 = smul.u32 8, %s21
          %s1296 = ssub.s32 1024, 1024
          %1297 = vsyncadd %s1287, %s1296
          %s1298 = smul.addr %s1294, 128
          %s1299 = scalar_lea.hbm %s7, %s1298
          %s1300 = sshll.u32 %s1290, 4
          %s1301 = int_to_ptr.vmem [resolvable:$true] %s1300
          %1306 = dma.vmem_to_hbm [thread:$0]  %s1301, 1024, %s1299, %s1287, 128, 128, 8
        $region52: #{transformer_forward.23} parent=47 // pred_fallthru
          _
      $region48: #{transformer_forward.23} parent=5 // pred_fallthru
        _
      %p1307 = scmp.le.s32.totalorder 2, %s16
      // Predicated region
      $region53: #{transformer_forward.23} parent=5 // pred_check
        %p1308 = pneg %p1307
      $region54: #{transformer_forward.23} parent=5 // pred_check_branch
        %1310 = sbr.rel (%p1308) target = $region56
      $region55: #{transformer_forward.23} parent=5 // pred_region
        %s1311 = ssub.s32 %s16, 2
        // Predicated region
        $region57: #{transformer_forward.23} parent=55 // pred_check
          %p1312 = pneg %p197
        $region58: #{transformer_forward.23} parent=55 // pred_check_branch
          %1314 = sbr.rel (%p1312) target = $region60
        $region59: #{transformer_forward.23} parent=55 // pred_region
          %s1315 = sand.u32 %s182, 1
          %s1316 = scalar_lea.sflag [#allocation3], %s1315
          %s1317 = sand.u32 %s182, 1
          %s1318 = smul.addr %s1317, 64
          %s1319 = scalar_lea.vmem [#allocation2], %s1318
          %1320 = dma.done %s1316, 1024
        $region60: #{transformer_forward.23} parent=55 // pred_fallthru
          _
      $region56: #{transformer_forward.23} parent=5 // pred_fallthru
        _
    $region6: #{transformer_forward.23} parent=1 // loop_footer
      %s20 = sadd.s32 1, %s16
    $region7: #{transformer_forward.23} parent=1 // loop_footer_branch
      %15 = sbr.rel target = $region3
    $region8: #{transformer_forward.23} parent=1 // loop_exit
      _
    %1321 = vsyncpa [#allocation3], 1
    %s1322 = scalar_lea.sflag [#allocation3], 1
    %1323 = vsyncpa %s1322, 1

</llo_original>
